<compile_context>
chip_gen: v6e
topology: v6e:2x2x1
jax: 0.10.0
libtpu: 0.0.40
codegen_flags: <defaults>
</compile_context>

<pallas_src>
import functools

import numpy as np

import jax
import jax.numpy as jnp
from jax import lax
from jax.experimental import pallas as pl
from jax.experimental.pallas import tpu as pltpu

_EPS = 1e-5
_IM2COL_MIN_COUT = 64      # vst/MXU crossover (v6e/v7x); below it use per-tap path


# --------------------------------------------------------------------------
# Helpers
# --------------------------------------------------------------------------
def _vmem_limit_bytes():
    """Generation-aware scoped-VMEM limit (leave headroom for double buffers)."""
    try:
        cap = pltpu.get_tpu_info().vmem_capacity_bytes
    except Exception:
        cap = 64 * 1024 * 1024
    return int(min(max(cap - 16 * 1024 * 1024, 32 * 1024 * 1024),
                   100 * 1024 * 1024))


def _make_coords(D, H, W):
    """(3, S) int32 table of (d, h, w) coordinates of each flattened position.
    Tiny (12 bytes/voxel) replacement for the old (27, S) f32 halo masks."""
    s = np.arange(D * H * W)
    coords = np.stack([s // (H * W), (s // W) % H, s % W]).astype(np.int32)
    return jnp.asarray(coords)


def _pick_s_tile(S, cap=32768):
    """Largest lane-dense S tile (multiple of 128) <= cap that divides S."""
    if S <= cap or (S % 128):
        return S
    t = cap
    while S % t:
        t -= 128
    return t


def _prep_weight_taps(w):
    """(Cout, Cin, 3, 3, 3) -> (27, Cout, Cin) bf16, tap-major (dd outer)."""
    cout, cin = w.shape[0], w.shape[1]
    return jnp.transpose(w, (2, 3, 4, 0, 1)).reshape(27, cout, cin).astype(jnp.bfloat16)


def _prep_weight_im2col(w, cin_pad):
    """(Cout, Cin, 3, 3, 3) -> (Cout, 27*Cin_pad) bf16, tap-major, Cin padded
    with zero columns so scratch rows are sublane-aligned for bf16."""
    cout, cin = w.shape[0], w.shape[1]
    wt = jnp.transpose(w, (0, 2, 3, 4, 1)).reshape(cout, 27, cin)
    if cin_pad > cin:
        wt = jnp.pad(wt, ((0, 0), (0, 0), (0, cin_pad - cin)))
    return wt.reshape(cout, 27 * cin_pad).astype(jnp.bfloat16)


# --------------------------------------------------------------------------
# Pallas kernels
# --------------------------------------------------------------------------
def _conv_bn_stats_kernel(*refs, cin, cin_pad, dims, fuse_in, im2col):
    """[optional fused BN-apply+ReLU prologue] -> 3x3x3 conv -> BN statistics.

    refs: x, w, coords, [scale, shift], out, sum, sumsq, [patch_scratch]

      x       (1, Cin, S)              bf16/f32  lane-dense activation
      w       (27, Cout, Cin) bf16                (per-tap path)   or
              (Cout, 27*Cin_pad) bf16             (im2col path)
      coords  (3, S)                   int32     (d, h, w) of each position
      scale/shift (Cin, 1)             f32       BN of the *input* (fused)
      out     (1, Cout, S)             bf16      pre-BN conv output (bias-free)
      sum/sumsq (1, Cout, 1)           f32       per-sample channel stats
      patch   (27*Cin_pad, S)          bf16      VMEM im2col scratch (im2col)
    """
    D, H, W = dims
    S = D * H * W
    HW = H * W

    idx = 0
    x_ref = refs[idx]; idx += 1
    w_ref = refs[idx]; idx += 1
    c_ref = refs[idx]; idx += 1
    if fuse_in:
        sc_ref = refs[idx]; idx += 1
        sh_ref = refs[idx]; idx += 1
    o_ref, sum_ref, ssq_ref = refs[idx], refs[idx + 1], refs[idx + 2]
    idx += 3
    patch_ref = refs[idx] if im2col else None

    # Prologue: fused BN-apply + ReLU of the previous layer (one FMA + max).
    xf = x_ref[0].astype(jnp.float32)                       # (Cin, S)
    if fuse_in:
        xf = jnp.maximum(xf * sc_ref[...] + sh_ref[...], 0.0)

    # Halo-validity masks derived in-kernel from coordinates (no (27,S) mask
    # tensor in HBM/VMEM): one compare per axis & direction, reused by taps.
    d_i = c_ref[pl.ds(0, 1), :]                             # (1, S) int32
    h_i = c_ref[pl.ds(1, 1), :]
    w_i = c_ref[pl.ds(2, 1), :]
    d_ok = {-1: d_i >= 1, 1: d_i < D - 1}
    h_ok = {-1: h_i >= 1, 1: h_i < H - 1}
    w_ok = {-1: w_i >= 1, 1: w_i < W - 1}

    # TODO(synk): on v6e/v7x the roll + mask could run directly in bf16 to
    # halve XLU/VPU byte movement; kept in f32 here (known-good lowering).
    def tap_value(dd, dh, dw):
        off = dd * HW + dh * W + dw
        v = xf if off == 0 else pltpu.roll(xf, shift=(-off) % S, axis=1)
        parts = []
        if dd: parts.append(d_ok[dd])
        if dh: parts.append(h_ok[dh])
        if dw: parts.append(w_ok[dw])
        if parts:                       # center tap: no mask multiply at all
            m = parts[0]
            for p in parts[1:]:
                m = m & p
            v = v * m.astype(jnp.float32)
        return v.astype(jnp.bfloat16)   # bf16 MXU operand

    taps = [(dd, dh, dw) for dd in (-1, 0, 1)
            for dh in (-1, 0, 1) for dw in (-1, 0, 1)]

    if im2col:
        # Large-Cout path: tap-major im2col scratch + ONE big-K MXU matmul
        # (bf16 in, f32 acc).  Rows per tap padded to cin_pad (bf16 sublane
        # alignment); pad rows are zeroed once so padded weight cols see 0.
        if cin_pad > cin:
            patch_ref[...] = jnp.zeros(patch_ref.shape, jnp.bfloat16)
        for t, (dd, dh, dw) in enumerate(taps):
            patch_ref[pl.ds(t * cin_pad, cin), :] = tap_value(dd, dh, dw)
        acc = jnp.dot(w_ref[...], patch_ref[...],
                      preferred_element_type=jnp.float32)    # (Cout, S) f32
    else:
        # Small-Cout path: materializing the im2col patch would saturate the
        # vst slot (27x activation volume) long before the MXU; accumulate
        # per-tap matmuls straight from the rolled vregs instead.
        cout = o_ref.shape[1]
        acc = jnp.zeros((cout, S), jnp.float32)
        for t, (dd, dh, dw) in enumerate(taps):
            acc = acc + jnp.dot(w_ref[t], tap_value(dd, dh, dw),
                                preferred_element_type=jnp.float32)

    o_ref[0] = acc.astype(o_ref.dtype)                       # bf16 to HBM
    # BatchNorm statistics as a conv epilogue (no extra full-tensor HBM pass).
    sum_ref[0] = jnp.sum(acc, axis=1, keepdims=True)
    ssq_ref[0] = jnp.sum(acc * acc, axis=1, keepdims=True)


def _bn_relu_apply_kernel(x_ref, sc_ref, sh_ref, o_ref):
    # Hoisted per-channel scale/shift -> one FMA + max per element.
    o_ref[0] = jnp.maximum(
        x_ref[0].astype(jnp.float32) * sc_ref[...] + sh_ref[...], 0.0)


# --------------------------------------------------------------------------
# Wrappers
# --------------------------------------------------------------------------
def conv3d_bn_stats(x, w5d, coords, dims, scale=None, shift=None, im2col=False):
    """x: (N, Cin, S) bf16; w5d: (Cout, Cin, 3, 3, 3) f32; coords: (3, S) i32.
    If scale/shift are given, y = relu(x*scale + shift) is applied per input
    channel before the conv (fused BN+ReLU of the previous layer).
    Returns (pre-BN conv output (N, Cout, S) bf16,
             per-sample channel sums (N, Cout, 1) f32,
             per-sample channel sum-of-squares (N, Cout, 1) f32)."""
    N, cin, S = x.shape
    cout = w5d.shape[0]
    fuse_in = scale is not None

    if im2col:
        cin_pad = ((cin + 15) // 16) * 16        # bf16 sublane alignment
        wk = _prep_weight_im2col(w5d, cin_pad)   # (Cout, 27*Cin_pad) bf16
        w_spec = pl.BlockSpec(wk.shape, lambda n: (0, 0))
        scratch = [pltpu.VMEM((27 * cin_pad, S), jnp.bfloat16)]
    else:
        cin_pad = cin
        wk = _prep_weight_taps(w5d)              # (27, Cout, Cin) bf16
        w_spec = pl.BlockSpec(wk.shape, lambda n: (0, 0, 0))
        scratch = []

    kernel = functools.partial(_conv_bn_stats_kernel, cin=cin, cin_pad=cin_pad,
                               dims=dims, fuse_in=fuse_in, im2col=im2col)

    in_specs = [pl.BlockSpec((1, cin, S), lambda n: (n, 0, 0)),
                w_spec,
                pl.BlockSpec((3, S), lambda n: (0, 0))]
    args = [x, wk, coords]
    if fuse_in:
        in_specs += [pl.BlockSpec((cin, 1), lambda n: (0, 0)),
                     pl.BlockSpec((cin, 1), lambda n: (0, 0))]
        args += [scale, shift]

    # TODO(synk): add a second "parallel" grid axis (Cout blocks / S slabs)
    # so both v7x TensorCores stay busy when N is 1 or odd.
    return pl.pallas_call(
        kernel,
        out_shape=(jax.ShapeDtypeStruct((N, cout, S), jnp.bfloat16),
                   jax.ShapeDtypeStruct((N, cout, 1), jnp.float32),
                   jax.ShapeDtypeStruct((N, cout, 1), jnp.float32)),
        grid=(N,),
        in_specs=in_specs,
        out_specs=(pl.BlockSpec((1, cout, S), lambda n: (n, 0, 0)),
                   pl.BlockSpec((1, cout, 1), lambda n: (n, 0, 0)),
                   pl.BlockSpec((1, cout, 1), lambda n: (n, 0, 0))),
        scratch_shapes=scratch,
        compiler_params=pltpu.CompilerParams(
            dimension_semantics=("parallel",),
            vmem_limit_bytes=_vmem_limit_bytes()),
    )(*args)


def bn_relu_apply(x, scale, shift):
    """x: (N, C, S) bf16; scale/shift: (C, 1) f32.  S-tiled, lane-dense."""
    N, C, S = x.shape
    s_tile = _pick_s_tile(S)
    return pl.pallas_call(
        _bn_relu_apply_kernel,
        out_shape=jax.ShapeDtypeStruct((N, C, S), jnp.float32),
        grid=(N, S // s_tile),
        in_specs=[pl.BlockSpec((1, C, s_tile), lambda n, j: (n, 0, j)),
                  pl.BlockSpec((C, 1), lambda n, j: (0, 0)),
                  pl.BlockSpec((C, 1), lambda n, j: (0, 0))],
        out_specs=pl.BlockSpec((1, C, s_tile), lambda n, j: (n, 0, j)),
        compiler_params=pltpu.CompilerParams(
            dimension_semantics=("parallel", "parallel"),
            vmem_limit_bytes=_vmem_limit_bytes()),
    )(x, scale, shift)


def _bn_scale_shift(ch_sum, ch_ssq, gamma, beta, count, eps=_EPS):
    """Hoisted per-channel BN scale/shift from accumulated sums (biased batch
    variance, matching PyTorch BN forward in train mode).  Note: E[x^2]-E[x]^2
    in f32 — fine at this scale; prefer mean-shifted accumulation if channels
    can carry a large DC offset."""
    s = jnp.sum(ch_sum, axis=0)[:, 0]          # (C,)
    q = jnp.sum(ch_ssq, axis=0)[:, 0]          # (C,)
    mean = s / count
    var = q / count - mean * mean
    scale = gamma.reshape(-1) * lax.rsqrt(var + eps)
    shift = beta.reshape(-1) - mean * scale
    return scale.reshape(-1, 1), shift.reshape(-1, 1)


def init_double_conv_params(key, in_channels, out_channels, mid_channels=True):
    if mid_channels is True:
        mid_channels = out_channels // 2
    ks = jax.random.split(key, 8)
    return {
        "w1": 0.1 * jax.random.normal(ks[0], (mid_channels, in_channels, 3, 3, 3), jnp.float32),
        "b1": 0.1 * jax.random.normal(ks[1], (mid_channels,), jnp.float32),
        "g1": 1.0 + 0.1 * jax.random.normal(ks[2], (mid_channels,), jnp.float32),
        "be1": 0.1 * jax.random.normal(ks[3], (mid_channels,), jnp.float32),
        "w2": 0.1 * jax.random.normal(ks[4], (out_channels, mid_channels, 3, 3, 3), jnp.float32),
        "b2": 0.1 * jax.random.normal(ks[5], (out_channels,), jnp.float32),
        "g2": 1.0 + 0.1 * jax.random.normal(ks[6], (out_channels,), jnp.float32),
        "be2": 0.1 * jax.random.normal(ks[7], (out_channels,), jnp.float32),
    }


@functools.partial(jax.jit, static_argnames=("im2col_min_cout",))
def double_conv_forward(params, x, im2col_min_cout=_IM2COL_MIN_COUT):
    N, cin, D, H, W = x.shape
    S = D * H * W
    coords = _make_coords(D, H, W)
    mid = params["w1"].shape[0]
    cout = params["w2"].shape[0]

    # Lane-dense bf16 activations (S is a multiple of 128 in practice).
    x_flat = x.reshape(N, cin, S).astype(jnp.bfloat16)

    # conv1 (bias dropped: exactly cancelled by BN1's batch-mean subtraction;
    # only valid for train-mode / batch-statistics BN).
    h1, s1, q1 = conv3d_bn_stats(x_flat, params["w1"], coords, (D, H, W),
                                 im2col=(mid >= im2col_min_cout))
    sc1, sh1 = _bn_scale_shift(s1, q1, params["g1"], params["be1"], N * S)

    # BN1+ReLU fused into conv2's input prologue; conv2 bias also dropped.
    h2, s2, q2 = conv3d_bn_stats(h1, params["w2"], coords, (D, H, W),
                                 scale=sc1, shift=sh1,
                                 im2col=(cout >= im2col_min_cout))
    sc2, sh2 = _bn_scale_shift(s2, q2, params["g2"], params["be2"], N * S)

    out = bn_relu_apply(h2, sc2, sh2)      # final BN2 + ReLU (f32 out)
    return out.reshape(N, cout, D, H, W)


# --------------------------------------------------------------------------
# Pure-JAX reference (forward semantics of the PyTorch module, incl. biases)
# --------------------------------------------------------------------------
def _ref_conv3d(x, w, b):
    y = lax.conv_general_dilated(
        x, w, window_strides=(1, 1, 1), padding=((1, 1), (1, 1), (1, 1)),
        dimension_numbers=("NCDHW", "OIDHW", "NCDHW"))
    return y + b.reshape(1, -1, 1, 1, 1)


def _ref_bn_relu(x, gamma, beta, eps=_EPS):
    mean = jnp.mean(x, axis=(0, 2, 3, 4), keepdims=True)
    var = jnp.mean((x - mean) ** 2, axis=(0, 2, 3, 4), keepdims=True)
    y = (x - mean) * lax.rsqrt(var + eps)
    y = y * gamma.reshape(1, -1, 1, 1, 1) + beta.reshape(1, -1, 1, 1, 1)
    return jnp.maximum(y, 0.0)


def _ref_forward(params, x):
    y = _ref_conv3d(x, params["w1"], params["b1"])
    y = _ref_bn_relu(y, params["g1"], params["be1"])
    y = _ref_conv3d(y, params["w2"], params["b2"])
    y = _ref_bn_relu(y, params["g2"], params["be2"])
    return y


# --------------------------------------------------------------------------
if __name__ == "__main__":
    key = jax.random.PRNGKey(0)
    k_x, k_p = jax.random.split(key)

    N, Cin, Cout = 2, 4, 8
    D = H = W = 8                                  # S = 512 (lane-dense)
    x = jax.random.normal(k_x, (N, Cin, D, H, W), jnp.float32)
    params = init_double_conv_params(k_p, Cin, Cout, mid_channels=True)

    ref = _ref_forward(params, x)

    # Default path: Cout below the vst/MXU crossover -> per-tap accumulation.
    out = jax.block_until_ready(double_conv_forward(params, x))
    assert out.shape == (N, Cout, D, H, W), out.shape
    err = float(jnp.max(jnp.abs(out - ref)))
    # bf16 activations + bf16 MXU operands (f32 acc) vs. a pure-f32 reference.
    assert err < 1.5e-1, err

    # Also exercise the large-Cout im2col path (forced) for coverage.
    out2 = jax.block_until_ready(double_conv_forward(params, x, im2col_min_cout=1))
    err2 = float(jnp.max(jnp.abs(out2 - ref)))
    assert err2 < 1.5e-1, err2

    print("KERNEL_OK")
</pallas_src>

<mosaic_0001>
module attributes {stable_mosaic.version = 11 : i64} {
  func.func @_conv_bn_stats_kernel(%arg0: i32, %arg1: memref<1x4x512xbf16, #tpu.memory_space<vmem>>, %arg2: memref<27x4x4xbf16, #tpu.memory_space<vmem>>, %arg3: memref<3x512xi32, #tpu.memory_space<vmem>>, %arg4: memref<1x4x512xbf16, #tpu.memory_space<vmem>>, %arg5: memref<1x4x1xf32, #tpu.memory_space<vmem>>, %arg6: memref<1x4x1xf32, #tpu.memory_space<vmem>>) attributes {dimension_semantics = [#tpu.dimension_semantics<parallel>], iteration_bounds = array<i64: 2>, scalar_prefetch = 0 : i64, scratch_operands = 0 : i64, tpu.core_type = #tpu.core_type<tc>, window_params = [{transform_indices = @transform_0, window_bounds = array<i64: 1, 4, 512>}, {pipeline_mode = #tpu.pipeline_mode<synchronous>, transform_indices = @transform_1, window_bounds = array<i64: 27, 4, 4>}, {pipeline_mode = #tpu.pipeline_mode<synchronous>, transform_indices = @transform_2, window_bounds = array<i64: 3, 512>}, {transform_indices = @transform_3, window_bounds = array<i64: 1, 4, 512>}, {transform_indices = @transform_4, window_bounds = array<i64: 1, 4, 1>}, {transform_indices = @transform_5, window_bounds = array<i64: 1, 4, 1>}]} {
    %c0 = arith.constant 0 : index
    %c0_0 = arith.constant 0 : index
    %c0_1 = arith.constant 0 : index
    %0 = vector.load %arg1[%c0, %c0_0, %c0_1] : memref<1x4x512xbf16, #tpu.memory_space<vmem>>, vector<1x4x512xbf16>
    %1 = vector.shape_cast %0 : vector<1x4x512xbf16> to vector<4x512xbf16>
    %2 = arith.extf %1 : vector<4x512xbf16> to vector<4x512xf32>
    %c0_2 = arith.constant 0 : index
    %c0_3 = arith.constant 0 : index
    %3 = vector.load %arg3[%c0_2, %c0_3] : memref<3x512xi32, #tpu.memory_space<vmem>>, vector<1x512xi32>
    %c1 = arith.constant 1 : index
    %c0_4 = arith.constant 0 : index
    %4 = vector.load %arg3[%c1, %c0_4] : memref<3x512xi32, #tpu.memory_space<vmem>>, vector<1x512xi32>
    %c2 = arith.constant 2 : index
    %c0_5 = arith.constant 0 : index
    %5 = vector.load %arg3[%c2, %c0_5] : memref<3x512xi32, #tpu.memory_space<vmem>>, vector<1x512xi32>
    %c1_i32 = arith.constant 1 : i32
    %6 = vector.broadcast %c1_i32 : i32 to vector<1x512xi32>
    %7 = arith.cmpi sge, %3, %6 : vector<1x512xi32>
    %c7_i32 = arith.constant 7 : i32
    %8 = vector.broadcast %c7_i32 : i32 to vector<1x512xi32>
    %9 = arith.cmpi slt, %3, %8 : vector<1x512xi32>
    %c1_i32_6 = arith.constant 1 : i32
    %10 = vector.broadcast %c1_i32_6 : i32 to vector<1x512xi32>
    %11 = arith.cmpi sge, %4, %10 : vector<1x512xi32>
    %c7_i32_7 = arith.constant 7 : i32
    %12 = vector.broadcast %c7_i32_7 : i32 to vector<1x512xi32>
    %13 = arith.cmpi slt, %4, %12 : vector<1x512xi32>
    %c1_i32_8 = arith.constant 1 : i32
    %14 = vector.broadcast %c1_i32_8 : i32 to vector<1x512xi32>
    %15 = arith.cmpi sge, %5, %14 : vector<1x512xi32>
    %c7_i32_9 = arith.constant 7 : i32
    %16 = vector.broadcast %c7_i32_9 : i32 to vector<1x512xi32>
    %17 = arith.cmpi slt, %5, %16 : vector<1x512xi32>
    %cst = arith.constant 0.000000e+00 : f32
    %18 = vector.broadcast %cst : f32 to vector<4x512xf32>
    %c0_10 = arith.constant 0 : index
    %c0_11 = arith.constant 0 : index
    %c0_12 = arith.constant 0 : index
    %19 = vector.load %arg2[%c0_10, %c0_11, %c0_12] : memref<27x4x4xbf16, #tpu.memory_space<vmem>>, vector<1x4x4xbf16>
    %20 = vector.shape_cast %19 : vector<1x4x4xbf16> to vector<4x4xbf16>
    %c73_i32 = arith.constant 73 : i32
    %21 = tpu.dynamic_rotate %2 by %c73_i32 dim 1 : vector<4x512xf32>, i32 -> vector<4x512xf32>
    %22 = arith.andi %7, %11 : vector<1x512xi1>
    %23 = arith.andi %22, %15 : vector<1x512xi1>
    %24 = arith.extui %23 : vector<1x512xi1> to vector<1x512xi32>
    %25 = arith.sitofp %24 : vector<1x512xi32> to vector<1x512xf32>
    %26 = vector.broadcast %25 : vector<1x512xf32> to vector<4x512xf32>
    %27 = arith.mulf %21, %26 : vector<4x512xf32>
    %28 = arith.truncf %27 : vector<4x512xf32> to vector<4x512xbf16>
    %cst_13 = arith.constant dense<0.000000e+00> : vector<4x512xf32>
    %29 = tpu.matmul %20, %28, %cst_13 {dimension_numbers = #tpu.dot_dimension_numbers<[1], [0], [0], [1], [0, 0, 1, 1], [], []>} : vector<4x4xbf16>, vector<4x512xbf16>, vector<4x512xf32> -> vector<4x512xf32>
    %30 = arith.addf %18, %29 : vector<4x512xf32>
    %c1_14 = arith.constant 1 : index
    %c0_15 = arith.constant 0 : index
    %c0_16 = arith.constant 0 : index
    %31 = vector.load %arg2[%c1_14, %c0_15, %c0_16] : memref<27x4x4xbf16, #tpu.memory_space<vmem>>, vector<1x4x4xbf16>
    %32 = vector.shape_cast %31 : vector<1x4x4xbf16> to vector<4x4xbf16>
    %c72_i32 = arith.constant 72 : i32
    %33 = tpu.dynamic_rotate %2 by %c72_i32 dim 1 : vector<4x512xf32>, i32 -> vector<4x512xf32>
    %34 = arith.andi %7, %11 : vector<1x512xi1>
    %35 = arith.extui %34 : vector<1x512xi1> to vector<1x512xi32>
    %36 = arith.sitofp %35 : vector<1x512xi32> to vector<1x512xf32>
    %37 = vector.broadcast %36 : vector<1x512xf32> to vector<4x512xf32>
    %38 = arith.mulf %33, %37 : vector<4x512xf32>
    %39 = arith.truncf %38 : vector<4x512xf32> to vector<4x512xbf16>
    %cst_17 = arith.constant dense<0.000000e+00> : vector<4x512xf32>
    %40 = tpu.matmul %32, %39, %cst_17 {dimension_numbers = #tpu.dot_dimension_numbers<[1], [0], [0], [1], [0, 0, 1, 1], [], []>} : vector<4x4xbf16>, vector<4x512xbf16>, vector<4x512xf32> -> vector<4x512xf32>
    %41 = arith.addf %30, %40 : vector<4x512xf32>
    %c2_18 = arith.constant 2 : index
    %c0_19 = arith.constant 0 : index
    %c0_20 = arith.constant 0 : index
    %42 = vector.load %arg2[%c2_18, %c0_19, %c0_20] : memref<27x4x4xbf16, #tpu.memory_space<vmem>>, vector<1x4x4xbf16>
    %43 = vector.shape_cast %42 : vector<1x4x4xbf16> to vector<4x4xbf16>
    %c71_i32 = arith.constant 71 : i32
    %44 = tpu.dynamic_rotate %2 by %c71_i32 dim 1 : vector<4x512xf32>, i32 -> vector<4x512xf32>
    %45 = arith.andi %7, %11 : vector<1x512xi1>
    %46 = arith.andi %45, %17 : vector<1x512xi1>
    %47 = arith.extui %46 : vector<1x512xi1> to vector<1x512xi32>
    %48 = arith.sitofp %47 : vector<1x512xi32> to vector<1x512xf32>
    %49 = vector.broadcast %48 : vector<1x512xf32> to vector<4x512xf32>
    %50 = arith.mulf %44, %49 : vector<4x512xf32>
    %51 = arith.truncf %50 : vector<4x512xf32> to vector<4x512xbf16>
    %cst_21 = arith.constant dense<0.000000e+00> : vector<4x512xf32>
    %52 = tpu.matmul %43, %51, %cst_21 {dimension_numbers = #tpu.dot_dimension_numbers<[1], [0], [0], [1], [0, 0, 1, 1], [], []>} : vector<4x4xbf16>, vector<4x512xbf16>, vector<4x512xf32> -> vector<4x512xf32>
    %53 = arith.addf %41, %52 : vector<4x512xf32>
    %c3 = arith.constant 3 : index
    %c0_22 = arith.constant 0 : index
    %c0_23 = arith.constant 0 : index
    %54 = vector.load %arg2[%c3, %c0_22, %c0_23] : memref<27x4x4xbf16, #tpu.memory_space<vmem>>, vector<1x4x4xbf16>
    %55 = vector.shape_cast %54 : vector<1x4x4xbf16> to vector<4x4xbf16>
    %c65_i32 = arith.constant 65 : i32
    %56 = tpu.dynamic_rotate %2 by %c65_i32 dim 1 : vector<4x512xf32>, i32 -> vector<4x512xf32>
    %57 = arith.andi %7, %15 : vector<1x512xi1>
    %58 = arith.extui %57 : vector<1x512xi1> to vector<1x512xi32>
    %59 = arith.sitofp %58 : vector<1x512xi32> to vector<1x512xf32>
    %60 = vector.broadcast %59 : vector<1x512xf32> to vector<4x512xf32>
    %61 = arith.mulf %56, %60 : vector<4x512xf32>
    %62 = arith.truncf %61 : vector<4x512xf32> to vector<4x512xbf16>
    %cst_24 = arith.constant dense<0.000000e+00> : vector<4x512xf32>
    %63 = tpu.matmul %55, %62, %cst_24 {dimension_numbers = #tpu.dot_dimension_numbers<[1], [0], [0], [1], [0, 0, 1, 1], [], []>} : vector<4x4xbf16>, vector<4x512xbf16>, vector<4x512xf32> -> vector<4x512xf32>
    %64 = arith.addf %53, %63 : vector<4x512xf32>
    %c4 = arith.constant 4 : index
    %c0_25 = arith.constant 0 : index
    %c0_26 = arith.constant 0 : index
    %65 = vector.load %arg2[%c4, %c0_25, %c0_26] : memref<27x4x4xbf16, #tpu.memory_space<vmem>>, vector<1x4x4xbf16>
    %66 = vector.shape_cast %65 : vector<1x4x4xbf16> to vector<4x4xbf16>
    %c64_i32 = arith.constant 64 : i32
    %67 = tpu.dynamic_rotate %2 by %c64_i32 dim 1 : vector<4x512xf32>, i32 -> vector<4x512xf32>
    %68 = arith.extui %7 : vector<1x512xi1> to vector<1x512xi32>
    %69 = arith.sitofp %68 : vector<1x512xi32> to vector<1x512xf32>
    %70 = vector.broadcast %69 : vector<1x512xf32> to vector<4x512xf32>
    %71 = arith.mulf %67, %70 : vector<4x512xf32>
    %72 = arith.truncf %71 : vector<4x512xf32> to vector<4x512xbf16>
    %cst_27 = arith.constant dense<0.000000e+00> : vector<4x512xf32>
    %73 = tpu.matmul %66, %72, %cst_27 {dimension_numbers = #tpu.dot_dimension_numbers<[1], [0], [0], [1], [0, 0, 1, 1], [], []>} : vector<4x4xbf16>, vector<4x512xbf16>, vector<4x512xf32> -> vector<4x512xf32>
    %74 = arith.addf %64, %73 : vector<4x512xf32>
    %c5 = arith.constant 5 : index
    %c0_28 = arith.constant 0 : index
    %c0_29 = arith.constant 0 : index
    %75 = vector.load %arg2[%c5, %c0_28, %c0_29] : memref<27x4x4xbf16, #tpu.memory_space<vmem>>, vector<1x4x4xbf16>
    %76 = vector.shape_cast %75 : vector<1x4x4xbf16> to vector<4x4xbf16>
    %c63_i32 = arith.constant 63 : i32
    %77 = tpu.dynamic_rotate %2 by %c63_i32 dim 1 : vector<4x512xf32>, i32 -> vector<4x512xf32>
    %78 = arith.andi %7, %17 : vector<1x512xi1>
    %79 = arith.extui %78 : vector<1x512xi1> to vector<1x512xi32>
    %80 = arith.sitofp %79 : vector<1x512xi32> to vector<1x512xf32>
    %81 = vector.broadcast %80 : vector<1x512xf32> to vector<4x512xf32>
    %82 = arith.mulf %77, %81 : vector<4x512xf32>
    %83 = arith.truncf %82 : vector<4x512xf32> to vector<4x512xbf16>
    %cst_30 = arith.constant dense<0.000000e+00> : vector<4x512xf32>
    %84 = tpu.matmul %76, %83, %cst_30 {dimension_numbers = #tpu.dot_dimension_numbers<[1], [0], [0], [1], [0, 0, 1, 1], [], []>} : vector<4x4xbf16>, vector<4x512xbf16>, vector<4x512xf32> -> vector<4x512xf32>
    %85 = arith.addf %74, %84 : vector<4x512xf32>
    %c6 = arith.constant 6 : index
    %c0_31 = arith.constant 0 : index
    %c0_32 = arith.constant 0 : index
    %86 = vector.load %arg2[%c6, %c0_31, %c0_32] : memref<27x4x4xbf16, #tpu.memory_space<vmem>>, vector<1x4x4xbf16>
    %87 = vector.shape_cast %86 : vector<1x4x4xbf16> to vector<4x4xbf16>
    %c57_i32 = arith.constant 57 : i32
    %88 = tpu.dynamic_rotate %2 by %c57_i32 dim 1 : vector<4x512xf32>, i32 -> vector<4x512xf32>
    %89 = arith.andi %7, %13 : vector<1x512xi1>
    %90 = arith.andi %89, %15 : vector<1x512xi1>
    %91 = arith.extui %90 : vector<1x512xi1> to vector<1x512xi32>
    %92 = arith.sitofp %91 : vector<1x512xi32> to vector<1x512xf32>
    %93 = vector.broadcast %92 : vector<1x512xf32> to vector<4x512xf32>
    %94 = arith.mulf %88, %93 : vector<4x512xf32>
    %95 = arith.truncf %94 : vector<4x512xf32> to vector<4x512xbf16>
    %cst_33 = arith.constant dense<0.000000e+00> : vector<4x512xf32>
    %96 = tpu.matmul %87, %95, %cst_33 {dimension_numbers = #tpu.dot_dimension_numbers<[1], [0], [0], [1], [0, 0, 1, 1], [], []>} : vector<4x4xbf16>, vector<4x512xbf16>, vector<4x512xf32> -> vector<4x512xf32>
    %97 = arith.addf %85, %96 : vector<4x512xf32>
    %c7 = arith.constant 7 : index
    %c0_34 = arith.constant 0 : index
    %c0_35 = arith.constant 0 : index
    %98 = vector.load %arg2[%c7, %c0_34, %c0_35] : memref<27x4x4xbf16, #tpu.memory_space<vmem>>, vector<1x4x4xbf16>
    %99 = vector.shape_cast %98 : vector<1x4x4xbf16> to vector<4x4xbf16>
    %c56_i32 = arith.constant 56 : i32
    %100 = tpu.dynamic_rotate %2 by %c56_i32 dim 1 : vector<4x512xf32>, i32 -> vector<4x512xf32>
    %101 = arith.andi %7, %13 : vector<1x512xi1>
    %102 = arith.extui %101 : vector<1x512xi1> to vector<1x512xi32>
    %103 = arith.sitofp %102 : vector<1x512xi32> to vector<1x512xf32>
    %104 = vector.broadcast %103 : vector<1x512xf32> to vector<4x512xf32>
    %105 = arith.mulf %100, %104 : vector<4x512xf32>
    %106 = arith.truncf %105 : vector<4x512xf32> to vector<4x512xbf16>
    %cst_36 = arith.constant dense<0.000000e+00> : vector<4x512xf32>
    %107 = tpu.matmul %99, %106, %cst_36 {dimension_numbers = #tpu.dot_dimension_numbers<[1], [0], [0], [1], [0, 0, 1, 1], [], []>} : vector<4x4xbf16>, vector<4x512xbf16>, vector<4x512xf32> -> vector<4x512xf32>
    %108 = arith.addf %97, %107 : vector<4x512xf32>
    %c8 = arith.constant 8 : index
    %c0_37 = arith.constant 0 : index
    %c0_38 = arith.constant 0 : index
    %109 = vector.load %arg2[%c8, %c0_37, %c0_38] : memref<27x4x4xbf16, #tpu.memory_space<vmem>>, vector<1x4x4xbf16>
    %110 = vector.shape_cast %109 : vector<1x4x4xbf16> to vector<4x4xbf16>
    %c55_i32 = arith.constant 55 : i32
    %111 = tpu.dynamic_rotate %2 by %c55_i32 dim 1 : vector<4x512xf32>, i32 -> vector<4x512xf32>
    %112 = arith.andi %7, %13 : vector<1x512xi1>
    %113 = arith.andi %112, %17 : vector<1x512xi1>
    %114 = arith.extui %113 : vector<1x512xi1> to vector<1x512xi32>
    %115 = arith.sitofp %114 : vector<1x512xi32> to vector<1x512xf32>
    %116 = vector.broadcast %115 : vector<1x512xf32> to vector<4x512xf32>
    %117 = arith.mulf %111, %116 : vector<4x512xf32>
    %118 = arith.truncf %117 : vector<4x512xf32> to vector<4x512xbf16>
    %cst_39 = arith.constant dense<0.000000e+00> : vector<4x512xf32>
    %119 = tpu.matmul %110, %118, %cst_39 {dimension_numbers = #tpu.dot_dimension_numbers<[1], [0], [0], [1], [0, 0, 1, 1], [], []>} : vector<4x4xbf16>, vector<4x512xbf16>, vector<4x512xf32> -> vector<4x512xf32>
    %120 = arith.addf %108, %119 : vector<4x512xf32>
    %c9 = arith.constant 9 : index
    %c0_40 = arith.constant 0 : index
    %c0_41 = arith.constant 0 : index
    %121 = vector.load %arg2[%c9, %c0_40, %c0_41] : memref<27x4x4xbf16, #tpu.memory_space<vmem>>, vector<1x4x4xbf16>
    %122 = vector.shape_cast %121 : vector<1x4x4xbf16> to vector<4x4xbf16>
    %c9_i32 = arith.constant 9 : i32
    %123 = tpu.dynamic_rotate %2 by %c9_i32 dim 1 : vector<4x512xf32>, i32 -> vector<4x512xf32>
    %124 = arith.andi %11, %15 : vector<1x512xi1>
    %125 = arith.extui %124 : vector<1x512xi1> to vector<1x512xi32>
    %126 = arith.sitofp %125 : vector<1x512xi32> to vector<1x512xf32>
    %127 = vector.broadcast %126 : vector<1x512xf32> to vector<4x512xf32>
    %128 = arith.mulf %123, %127 : vector<4x512xf32>
    %129 = arith.truncf %128 : vector<4x512xf32> to vector<4x512xbf16>
    %cst_42 = arith.constant dense<0.000000e+00> : vector<4x512xf32>
    %130 = tpu.matmul %122, %129, %cst_42 {dimension_numbers = #tpu.dot_dimension_numbers<[1], [0], [0], [1], [0, 0, 1, 1], [], []>} : vector<4x4xbf16>, vector<4x512xbf16>, vector<4x512xf32> -> vector<4x512xf32>
    %131 = arith.addf %120, %130 : vector<4x512xf32>
    %c10 = arith.constant 10 : index
    %c0_43 = arith.constant 0 : index
    %c0_44 = arith.constant 0 : index
    %132 = vector.load %arg2[%c10, %c0_43, %c0_44] : memref<27x4x4xbf16, #tpu.memory_space<vmem>>, vector<1x4x4xbf16>
    %133 = vector.shape_cast %132 : vector<1x4x4xbf16> to vector<4x4xbf16>
    %c8_i32 = arith.constant 8 : i32
    %134 = tpu.dynamic_rotate %2 by %c8_i32 dim 1 : vector<4x512xf32>, i32 -> vector<4x512xf32>
    %135 = arith.extui %11 : vector<1x512xi1> to vector<1x512xi32>
    %136 = arith.sitofp %135 : vector<1x512xi32> to vector<1x512xf32>
    %137 = vector.broadcast %136 : vector<1x512xf32> to vector<4x512xf32>
    %138 = arith.mulf %134, %137 : vector<4x512xf32>
    %139 = arith.truncf %138 : vector<4x512xf32> to vector<4x512xbf16>
    %cst_45 = arith.constant dense<0.000000e+00> : vector<4x512xf32>
    %140 = tpu.matmul %133, %139, %cst_45 {dimension_numbers = #tpu.dot_dimension_numbers<[1], [0], [0], [1], [0, 0, 1, 1], [], []>} : vector<4x4xbf16>, vector<4x512xbf16>, vector<4x512xf32> -> vector<4x512xf32>
    %141 = arith.addf %131, %140 : vector<4x512xf32>
    %c11 = arith.constant 11 : index
    %c0_46 = arith.constant 0 : index
    %c0_47 = arith.constant 0 : index
    %142 = vector.load %arg2[%c11, %c0_46, %c0_47] : memref<27x4x4xbf16, #tpu.memory_space<vmem>>, vector<1x4x4xbf16>
    %143 = vector.shape_cast %142 : vector<1x4x4xbf16> to vector<4x4xbf16>
    %c7_i32_48 = arith.constant 7 : i32
    %144 = tpu.dynamic_rotate %2 by %c7_i32_48 dim 1 : vector<4x512xf32>, i32 -> vector<4x512xf32>
    %145 = arith.andi %11, %17 : vector<1x512xi1>
    %146 = arith.extui %145 : vector<1x512xi1> to vector<1x512xi32>
    %147 = arith.sitofp %146 : vector<1x512xi32> to vector<1x512xf32>
    %148 = vector.broadcast %147 : vector<1x512xf32> to vector<4x512xf32>
    %149 = arith.mulf %144, %148 : vector<4x512xf32>
    %150 = arith.truncf %149 : vector<4x512xf32> to vector<4x512xbf16>
    %cst_49 = arith.constant dense<0.000000e+00> : vector<4x512xf32>
    %151 = tpu.matmul %143, %150, %cst_49 {dimension_numbers = #tpu.dot_dimension_numbers<[1], [0], [0], [1], [0, 0, 1, 1], [], []>} : vector<4x4xbf16>, vector<4x512xbf16>, vector<4x512xf32> -> vector<4x512xf32>
    %152 = arith.addf %141, %151 : vector<4x512xf32>
    %c12 = arith.constant 12 : index
    %c0_50 = arith.constant 0 : index
    %c0_51 = arith.constant 0 : index
    %153 = vector.load %arg2[%c12, %c0_50, %c0_51] : memref<27x4x4xbf16, #tpu.memory_space<vmem>>, vector<1x4x4xbf16>
    %154 = vector.shape_cast %153 : vector<1x4x4xbf16> to vector<4x4xbf16>
    %c1_i32_52 = arith.constant 1 : i32
    %155 = tpu.dynamic_rotate %2 by %c1_i32_52 dim 1 : vector<4x512xf32>, i32 -> vector<4x512xf32>
    %156 = arith.extui %15 : vector<1x512xi1> to vector<1x512xi32>
    %157 = arith.sitofp %156 : vector<1x512xi32> to vector<1x512xf32>
    %158 = vector.broadcast %157 : vector<1x512xf32> to vector<4x512xf32>
    %159 = arith.mulf %155, %158 : vector<4x512xf32>
    %160 = arith.truncf %159 : vector<4x512xf32> to vector<4x512xbf16>
    %cst_53 = arith.constant dense<0.000000e+00> : vector<4x512xf32>
    %161 = tpu.matmul %154, %160, %cst_53 {dimension_numbers = #tpu.dot_dimension_numbers<[1], [0], [0], [1], [0, 0, 1, 1], [], []>} : vector<4x4xbf16>, vector<4x512xbf16>, vector<4x512xf32> -> vector<4x512xf32>
    %162 = arith.addf %152, %161 : vector<4x512xf32>
    %c13 = arith.constant 13 : index
    %c0_54 = arith.constant 0 : index
    %c0_55 = arith.constant 0 : index
    %163 = vector.load %arg2[%c13, %c0_54, %c0_55] : memref<27x4x4xbf16, #tpu.memory_space<vmem>>, vector<1x4x4xbf16>
    %164 = vector.shape_cast %163 : vector<1x4x4xbf16> to vector<4x4xbf16>
    %165 = arith.truncf %2 : vector<4x512xf32> to vector<4x512xbf16>
    %cst_56 = arith.constant dense<0.000000e+00> : vector<4x512xf32>
    %166 = tpu.matmul %164, %165, %cst_56 {dimension_numbers = #tpu.dot_dimension_numbers<[1], [0], [0], [1], [0, 0, 1, 1], [], []>} : vector<4x4xbf16>, vector<4x512xbf16>, vector<4x512xf32> -> vector<4x512xf32>
    %167 = arith.addf %162, %166 : vector<4x512xf32>
    %c14 = arith.constant 14 : index
    %c0_57 = arith.constant 0 : index
    %c0_58 = arith.constant 0 : index
    %168 = vector.load %arg2[%c14, %c0_57, %c0_58] : memref<27x4x4xbf16, #tpu.memory_space<vmem>>, vector<1x4x4xbf16>
    %169 = vector.shape_cast %168 : vector<1x4x4xbf16> to vector<4x4xbf16>
    %c511_i32 = arith.constant 511 : i32
    %170 = tpu.dynamic_rotate %2 by %c511_i32 dim 1 : vector<4x512xf32>, i32 -> vector<4x512xf32>
    %171 = arith.extui %17 : vector<1x512xi1> to vector<1x512xi32>
    %172 = arith.sitofp %171 : vector<1x512xi32> to vector<1x512xf32>
    %173 = vector.broadcast %172 : vector<1x512xf32> to vector<4x512xf32>
    %174 = arith.mulf %170, %173 : vector<4x512xf32>
    %175 = arith.truncf %174 : vector<4x512xf32> to vector<4x512xbf16>
    %cst_59 = arith.constant dense<0.000000e+00> : vector<4x512xf32>
    %176 = tpu.matmul %169, %175, %cst_59 {dimension_numbers = #tpu.dot_dimension_numbers<[1], [0], [0], [1], [0, 0, 1, 1], [], []>} : vector<4x4xbf16>, vector<4x512xbf16>, vector<4x512xf32> -> vector<4x512xf32>
    %177 = arith.addf %167, %176 : vector<4x512xf32>
    %c15 = arith.constant 15 : index
    %c0_60 = arith.constant 0 : index
    %c0_61 = arith.constant 0 : index
    %178 = vector.load %arg2[%c15, %c0_60, %c0_61] : memref<27x4x4xbf16, #tpu.memory_space<vmem>>, vector<1x4x4xbf16>
    %179 = vector.shape_cast %178 : vector<1x4x4xbf16> to vector<4x4xbf16>
    %c505_i32 = arith.constant 505 : i32
    %180 = tpu.dynamic_rotate %2 by %c505_i32 dim 1 : vector<4x512xf32>, i32 -> vector<4x512xf32>
    %181 = arith.andi %13, %15 : vector<1x512xi1>
    %182 = arith.extui %181 : vector<1x512xi1> to vector<1x512xi32>
    %183 = arith.sitofp %182 : vector<1x512xi32> to vector<1x512xf32>
    %184 = vector.broadcast %183 : vector<1x512xf32> to vector<4x512xf32>
    %185 = arith.mulf %180, %184 : vector<4x512xf32>
    %186 = arith.truncf %185 : vector<4x512xf32> to vector<4x512xbf16>
    %cst_62 = arith.constant dense<0.000000e+00> : vector<4x512xf32>
    %187 = tpu.matmul %179, %186, %cst_62 {dimension_numbers = #tpu.dot_dimension_numbers<[1], [0], [0], [1], [0, 0, 1, 1], [], []>} : vector<4x4xbf16>, vector<4x512xbf16>, vector<4x512xf32> -> vector<4x512xf32>
    %188 = arith.addf %177, %187 : vector<4x512xf32>
    %c16 = arith.constant 16 : index
    %c0_63 = arith.constant 0 : index
    %c0_64 = arith.constant 0 : index
    %189 = vector.load %arg2[%c16, %c0_63, %c0_64] : memref<27x4x4xbf16, #tpu.memory_space<vmem>>, vector<1x4x4xbf16>
    %190 = vector.shape_cast %189 : vector<1x4x4xbf16> to vector<4x4xbf16>
    %c504_i32 = arith.constant 504 : i32
    %191 = tpu.dynamic_rotate %2 by %c504_i32 dim 1 : vector<4x512xf32>, i32 -> vector<4x512xf32>
    %192 = arith.extui %13 : vector<1x512xi1> to vector<1x512xi32>
    %193 = arith.sitofp %192 : vector<1x512xi32> to vector<1x512xf32>
    %194 = vector.broadcast %193 : vector<1x512xf32> to vector<4x512xf32>
    %195 = arith.mulf %191, %194 : vector<4x512xf32>
    %196 = arith.truncf %195 : vector<4x512xf32> to vector<4x512xbf16>
    %cst_65 = arith.constant dense<0.000000e+00> : vector<4x512xf32>
    %197 = tpu.matmul %190, %196, %cst_65 {dimension_numbers = #tpu.dot_dimension_numbers<[1], [0], [0], [1], [0, 0, 1, 1], [], []>} : vector<4x4xbf16>, vector<4x512xbf16>, vector<4x512xf32> -> vector<4x512xf32>
    %198 = arith.addf %188, %197 : vector<4x512xf32>
    %c17 = arith.constant 17 : index
    %c0_66 = arith.constant 0 : index
    %c0_67 = arith.constant 0 : index
    %199 = vector.load %arg2[%c17, %c0_66, %c0_67] : memref<27x4x4xbf16, #tpu.memory_space<vmem>>, vector<1x4x4xbf16>
    %200 = vector.shape_cast %199 : vector<1x4x4xbf16> to vector<4x4xbf16>
    %c503_i32 = arith.constant 503 : i32
    %201 = tpu.dynamic_rotate %2 by %c503_i32 dim 1 : vector<4x512xf32>, i32 -> vector<4x512xf32>
    %202 = arith.andi %13, %17 : vector<1x512xi1>
    %203 = arith.extui %202 : vector<1x512xi1> to vector<1x512xi32>
    %204 = arith.sitofp %203 : vector<1x512xi32> to vector<1x512xf32>
    %205 = vector.broadcast %204 : vector<1x512xf32> to vector<4x512xf32>
    %206 = arith.mulf %201, %205 : vector<4x512xf32>
    %207 = arith.truncf %206 : vector<4x512xf32> to vector<4x512xbf16>
    %cst_68 = arith.constant dense<0.000000e+00> : vector<4x512xf32>
    %208 = tpu.matmul %200, %207, %cst_68 {dimension_numbers = #tpu.dot_dimension_numbers<[1], [0], [0], [1], [0, 0, 1, 1], [], []>} : vector<4x4xbf16>, vector<4x512xbf16>, vector<4x512xf32> -> vector<4x512xf32>
    %209 = arith.addf %198, %208 : vector<4x512xf32>
    %c18 = arith.constant 18 : index
    %c0_69 = arith.constant 0 : index
    %c0_70 = arith.constant 0 : index
    %210 = vector.load %arg2[%c18, %c0_69, %c0_70] : memref<27x4x4xbf16, #tpu.memory_space<vmem>>, vector<1x4x4xbf16>
    %211 = vector.shape_cast %210 : vector<1x4x4xbf16> to vector<4x4xbf16>
    %c457_i32 = arith.constant 457 : i32
    %212 = tpu.dynamic_rotate %2 by %c457_i32 dim 1 : vector<4x512xf32>, i32 -> vector<4x512xf32>
    %213 = arith.andi %9, %11 : vector<1x512xi1>
    %214 = arith.andi %213, %15 : vector<1x512xi1>
    %215 = arith.extui %214 : vector<1x512xi1> to vector<1x512xi32>
    %216 = arith.sitofp %215 : vector<1x512xi32> to vector<1x512xf32>
    %217 = vector.broadcast %216 : vector<1x512xf32> to vector<4x512xf32>
    %218 = arith.mulf %212, %217 : vector<4x512xf32>
    %219 = arith.truncf %218 : vector<4x512xf32> to vector<4x512xbf16>
    %cst_71 = arith.constant dense<0.000000e+00> : vector<4x512xf32>
    %220 = tpu.matmul %211, %219, %cst_71 {dimension_numbers = #tpu.dot_dimension_numbers<[1], [0], [0], [1], [0, 0, 1, 1], [], []>} : vector<4x4xbf16>, vector<4x512xbf16>, vector<4x512xf32> -> vector<4x512xf32>
    %221 = arith.addf %209, %220 : vector<4x512xf32>
    %c19 = arith.constant 19 : index
    %c0_72 = arith.constant 0 : index
    %c0_73 = arith.constant 0 : index
    %222 = vector.load %arg2[%c19, %c0_72, %c0_73] : memref<27x4x4xbf16, #tpu.memory_space<vmem>>, vector<1x4x4xbf16>
    %223 = vector.shape_cast %222 : vector<1x4x4xbf16> to vector<4x4xbf16>
    %c456_i32 = arith.constant 456 : i32
    %224 = tpu.dynamic_rotate %2 by %c456_i32 dim 1 : vector<4x512xf32>, i32 -> vector<4x512xf32>
    %225 = arith.andi %9, %11 : vector<1x512xi1>
    %226 = arith.extui %225 : vector<1x512xi1> to vector<1x512xi32>
    %227 = arith.sitofp %226 : vector<1x512xi32> to vector<1x512xf32>
    %228 = vector.broadcast %227 : vector<1x512xf32> to vector<4x512xf32>
    %229 = arith.mulf %224, %228 : vector<4x512xf32>
    %230 = arith.truncf %229 : vector<4x512xf32> to vector<4x512xbf16>
    %cst_74 = arith.constant dense<0.000000e+00> : vector<4x512xf32>
    %231 = tpu.matmul %223, %230, %cst_74 {dimension_numbers = #tpu.dot_dimension_numbers<[1], [0], [0], [1], [0, 0, 1, 1], [], []>} : vector<4x4xbf16>, vector<4x512xbf16>, vector<4x512xf32> -> vector<4x512xf32>
    %232 = arith.addf %221, %231 : vector<4x512xf32>
    %c20 = arith.constant 20 : index
    %c0_75 = arith.constant 0 : index
    %c0_76 = arith.constant 0 : index
    %233 = vector.load %arg2[%c20, %c0_75, %c0_76] : memref<27x4x4xbf16, #tpu.memory_space<vmem>>, vector<1x4x4xbf16>
    %234 = vector.shape_cast %233 : vector<1x4x4xbf16> to vector<4x4xbf16>
    %c455_i32 = arith.constant 455 : i32
    %235 = tpu.dynamic_rotate %2 by %c455_i32 dim 1 : vector<4x512xf32>, i32 -> vector<4x512xf32>
    %236 = arith.andi %9, %11 : vector<1x512xi1>
    %237 = arith.andi %236, %17 : vector<1x512xi1>
    %238 = arith.extui %237 : vector<1x512xi1> to vector<1x512xi32>
    %239 = arith.sitofp %238 : vector<1x512xi32> to vector<1x512xf32>
    %240 = vector.broadcast %239 : vector<1x512xf32> to vector<4x512xf32>
    %241 = arith.mulf %235, %240 : vector<4x512xf32>
    %242 = arith.truncf %241 : vector<4x512xf32> to vector<4x512xbf16>
    %cst_77 = arith.constant dense<0.000000e+00> : vector<4x512xf32>
    %243 = tpu.matmul %234, %242, %cst_77 {dimension_numbers = #tpu.dot_dimension_numbers<[1], [0], [0], [1], [0, 0, 1, 1], [], []>} : vector<4x4xbf16>, vector<4x512xbf16>, vector<4x512xf32> -> vector<4x512xf32>
    %244 = arith.addf %232, %243 : vector<4x512xf32>
    %c21 = arith.constant 21 : index
    %c0_78 = arith.constant 0 : index
    %c0_79 = arith.constant 0 : index
    %245 = vector.load %arg2[%c21, %c0_78, %c0_79] : memref<27x4x4xbf16, #tpu.memory_space<vmem>>, vector<1x4x4xbf16>
    %246 = vector.shape_cast %245 : vector<1x4x4xbf16> to vector<4x4xbf16>
    %c449_i32 = arith.constant 449 : i32
    %247 = tpu.dynamic_rotate %2 by %c449_i32 dim 1 : vector<4x512xf32>, i32 -> vector<4x512xf32>
    %248 = arith.andi %9, %15 : vector<1x512xi1>
    %249 = arith.extui %248 : vector<1x512xi1> to vector<1x512xi32>
    %250 = arith.sitofp %249 : vector<1x512xi32> to vector<1x512xf32>
    %251 = vector.broadcast %250 : vector<1x512xf32> to vector<4x512xf32>
    %252 = arith.mulf %247, %251 : vector<4x512xf32>
    %253 = arith.truncf %252 : vector<4x512xf32> to vector<4x512xbf16>
    %cst_80 = arith.constant dense<0.000000e+00> : vector<4x512xf32>
    %254 = tpu.matmul %246, %253, %cst_80 {dimension_numbers = #tpu.dot_dimension_numbers<[1], [0], [0], [1], [0, 0, 1, 1], [], []>} : vector<4x4xbf16>, vector<4x512xbf16>, vector<4x512xf32> -> vector<4x512xf32>
    %255 = arith.addf %244, %254 : vector<4x512xf32>
    %c22 = arith.constant 22 : index
    %c0_81 = arith.constant 0 : index
    %c0_82 = arith.constant 0 : index
    %256 = vector.load %arg2[%c22, %c0_81, %c0_82] : memref<27x4x4xbf16, #tpu.memory_space<vmem>>, vector<1x4x4xbf16>
    %257 = vector.shape_cast %256 : vector<1x4x4xbf16> to vector<4x4xbf16>
    %c448_i32 = arith.constant 448 : i32
    %258 = tpu.dynamic_rotate %2 by %c448_i32 dim 1 : vector<4x512xf32>, i32 -> vector<4x512xf32>
    %259 = arith.extui %9 : vector<1x512xi1> to vector<1x512xi32>
    %260 = arith.sitofp %259 : vector<1x512xi32> to vector<1x512xf32>
    %261 = vector.broadcast %260 : vector<1x512xf32> to vector<4x512xf32>
    %262 = arith.mulf %258, %261 : vector<4x512xf32>
    %263 = arith.truncf %262 : vector<4x512xf32> to vector<4x512xbf16>
    %cst_83 = arith.constant dense<0.000000e+00> : vector<4x512xf32>
    %264 = tpu.matmul %257, %263, %cst_83 {dimension_numbers = #tpu.dot_dimension_numbers<[1], [0], [0], [1], [0, 0, 1, 1], [], []>} : vector<4x4xbf16>, vector<4x512xbf16>, vector<4x512xf32> -> vector<4x512xf32>
    %265 = arith.addf %255, %264 : vector<4x512xf32>
    %c23 = arith.constant 23 : index
    %c0_84 = arith.constant 0 : index
    %c0_85 = arith.constant 0 : index
    %266 = vector.load %arg2[%c23, %c0_84, %c0_85] : memref<27x4x4xbf16, #tpu.memory_space<vmem>>, vector<1x4x4xbf16>
    %267 = vector.shape_cast %266 : vector<1x4x4xbf16> to vector<4x4xbf16>
    %c447_i32 = arith.constant 447 : i32
    %268 = tpu.dynamic_rotate %2 by %c447_i32 dim 1 : vector<4x512xf32>, i32 -> vector<4x512xf32>
    %269 = arith.andi %9, %17 : vector<1x512xi1>
    %270 = arith.extui %269 : vector<1x512xi1> to vector<1x512xi32>
    %271 = arith.sitofp %270 : vector<1x512xi32> to vector<1x512xf32>
    %272 = vector.broadcast %271 : vector<1x512xf32> to vector<4x512xf32>
    %273 = arith.mulf %268, %272 : vector<4x512xf32>
    %274 = arith.truncf %273 : vector<4x512xf32> to vector<4x512xbf16>
    %cst_86 = arith.constant dense<0.000000e+00> : vector<4x512xf32>
    %275 = tpu.matmul %267, %274, %cst_86 {dimension_numbers = #tpu.dot_dimension_numbers<[1], [0], [0], [1], [0, 0, 1, 1], [], []>} : vector<4x4xbf16>, vector<4x512xbf16>, vector<4x512xf32> -> vector<4x512xf32>
    %276 = arith.addf %265, %275 : vector<4x512xf32>
    %c24 = arith.constant 24 : index
    %c0_87 = arith.constant 0 : index
    %c0_88 = arith.constant 0 : index
    %277 = vector.load %arg2[%c24, %c0_87, %c0_88] : memref<27x4x4xbf16, #tpu.memory_space<vmem>>, vector<1x4x4xbf16>
    %278 = vector.shape_cast %277 : vector<1x4x4xbf16> to vector<4x4xbf16>
    %c441_i32 = arith.constant 441 : i32
    %279 = tpu.dynamic_rotate %2 by %c441_i32 dim 1 : vector<4x512xf32>, i32 -> vector<4x512xf32>
    %280 = arith.andi %9, %13 : vector<1x512xi1>
    %281 = arith.andi %280, %15 : vector<1x512xi1>
    %282 = arith.extui %281 : vector<1x512xi1> to vector<1x512xi32>
    %283 = arith.sitofp %282 : vector<1x512xi32> to vector<1x512xf32>
    %284 = vector.broadcast %283 : vector<1x512xf32> to vector<4x512xf32>
    %285 = arith.mulf %279, %284 : vector<4x512xf32>
    %286 = arith.truncf %285 : vector<4x512xf32> to vector<4x512xbf16>
    %cst_89 = arith.constant dense<0.000000e+00> : vector<4x512xf32>
    %287 = tpu.matmul %278, %286, %cst_89 {dimension_numbers = #tpu.dot_dimension_numbers<[1], [0], [0], [1], [0, 0, 1, 1], [], []>} : vector<4x4xbf16>, vector<4x512xbf16>, vector<4x512xf32> -> vector<4x512xf32>
    %288 = arith.addf %276, %287 : vector<4x512xf32>
    %c25 = arith.constant 25 : index
    %c0_90 = arith.constant 0 : index
    %c0_91 = arith.constant 0 : index
    %289 = vector.load %arg2[%c25, %c0_90, %c0_91] : memref<27x4x4xbf16, #tpu.memory_space<vmem>>, vector<1x4x4xbf16>
    %290 = vector.shape_cast %289 : vector<1x4x4xbf16> to vector<4x4xbf16>
    %c440_i32 = arith.constant 440 : i32
    %291 = tpu.dynamic_rotate %2 by %c440_i32 dim 1 : vector<4x512xf32>, i32 -> vector<4x512xf32>
    %292 = arith.andi %9, %13 : vector<1x512xi1>
    %293 = arith.extui %292 : vector<1x512xi1> to vector<1x512xi32>
    %294 = arith.sitofp %293 : vector<1x512xi32> to vector<1x512xf32>
    %295 = vector.broadcast %294 : vector<1x512xf32> to vector<4x512xf32>
    %296 = arith.mulf %291, %295 : vector<4x512xf32>
    %297 = arith.truncf %296 : vector<4x512xf32> to vector<4x512xbf16>
    %cst_92 = arith.constant dense<0.000000e+00> : vector<4x512xf32>
    %298 = tpu.matmul %290, %297, %cst_92 {dimension_numbers = #tpu.dot_dimension_numbers<[1], [0], [0], [1], [0, 0, 1, 1], [], []>} : vector<4x4xbf16>, vector<4x512xbf16>, vector<4x512xf32> -> vector<4x512xf32>
    %299 = arith.addf %288, %298 : vector<4x512xf32>
    %c26 = arith.constant 26 : index
    %c0_93 = arith.constant 0 : index
    %c0_94 = arith.constant 0 : index
    %300 = vector.load %arg2[%c26, %c0_93, %c0_94] : memref<27x4x4xbf16, #tpu.memory_space<vmem>>, vector<1x4x4xbf16>
    %301 = vector.shape_cast %300 : vector<1x4x4xbf16> to vector<4x4xbf16>
    %c439_i32 = arith.constant 439 : i32
    %302 = tpu.dynamic_rotate %2 by %c439_i32 dim 1 : vector<4x512xf32>, i32 -> vector<4x512xf32>
    %303 = arith.andi %9, %13 : vector<1x512xi1>
    %304 = arith.andi %303, %17 : vector<1x512xi1>
    %305 = arith.extui %304 : vector<1x512xi1> to vector<1x512xi32>
    %306 = arith.sitofp %305 : vector<1x512xi32> to vector<1x512xf32>
    %307 = vector.broadcast %306 : vector<1x512xf32> to vector<4x512xf32>
    %308 = arith.mulf %302, %307 : vector<4x512xf32>
    %309 = arith.truncf %308 : vector<4x512xf32> to vector<4x512xbf16>
    %cst_95 = arith.constant dense<0.000000e+00> : vector<4x512xf32>
    %310 = tpu.matmul %301, %309, %cst_95 {dimension_numbers = #tpu.dot_dimension_numbers<[1], [0], [0], [1], [0, 0, 1, 1], [], []>} : vector<4x4xbf16>, vector<4x512xbf16>, vector<4x512xf32> -> vector<4x512xf32>
    %311 = arith.addf %299, %310 : vector<4x512xf32>
    %312 = arith.truncf %311 : vector<4x512xf32> to vector<4x512xbf16>
    %c0_96 = arith.constant 0 : index
    %c0_97 = arith.constant 0 : index
    %c0_98 = arith.constant 0 : index
    %313 = vector.load %arg4[%c0_96, %c0_97, %c0_98] : memref<1x4x512xbf16, #tpu.memory_space<vmem>>, vector<1x4x512xbf16>
    %314 = vector.shape_cast %313 : vector<1x4x512xbf16> to vector<4x512xbf16>
    %315 = vector.shape_cast %312 : vector<4x512xbf16> to vector<1x4x512xbf16>
    tpu.vector_store %arg4[%c0_96, %c0_97, %c0_98], %315 {strides = array<i32>} : memref<1x4x512xbf16, #tpu.memory_space<vmem>>, vector<1x4x512xbf16>,
    %cst_99 = arith.constant dense<0.000000e+00> : vector<4xf32>
    %316 = vector.multi_reduction <add>, %311, %cst_99 [1] : vector<4x512xf32> to vector<4xf32>
    %317 = vector.shape_cast %316 : vector<4xf32> to vector<4x1xf32>
    %c0_100 = arith.constant 0 : index
    %c0_101 = arith.constant 0 : index
    %c0_102 = arith.constant 0 : index
    %318 = vector.load %arg5[%c0_100, %c0_101, %c0_102] : memref<1x4x1xf32, #tpu.memory_space<vmem>>, vector<1x4x1xf32>
    %319 = vector.shape_cast %318 : vector<1x4x1xf32> to vector<4x1xf32>
    %320 = vector.shape_cast %317 : vector<4x1xf32> to vector<1x4x1xf32>
    tpu.vector_store %arg5[%c0_100, %c0_101, %c0_102], %320 {strides = array<i32>} : memref<1x4x1xf32, #tpu.memory_space<vmem>>, vector<1x4x1xf32>,
    %321 = arith.mulf %311, %311 : vector<4x512xf32>
    %cst_103 = arith.constant dense<0.000000e+00> : vector<4xf32>
    %322 = vector.multi_reduction <add>, %321, %cst_103 [1] : vector<4x512xf32> to vector<4xf32>
    %323 = vector.shape_cast %322 : vector<4xf32> to vector<4x1xf32>
    %c0_104 = arith.constant 0 : index
    %c0_105 = arith.constant 0 : index
    %c0_106 = arith.constant 0 : index
    %324 = vector.load %arg6[%c0_104, %c0_105, %c0_106] : memref<1x4x1xf32, #tpu.memory_space<vmem>>, vector<1x4x1xf32>
    %325 = vector.shape_cast %324 : vector<1x4x1xf32> to vector<4x1xf32>
    %326 = vector.shape_cast %323 : vector<4x1xf32> to vector<1x4x1xf32>
    tpu.vector_store %arg6[%c0_104, %c0_105, %c0_106], %326 {strides = array<i32>} : memref<1x4x1xf32, #tpu.memory_space<vmem>>, vector<1x4x1xf32>,
    return
  }
  func.func @transform_0(%arg0: i32) -> (i32, i32, i32) {
    %c0_i32 = arith.constant 0 : i32
    %c0_i32_0 = arith.constant 0 : i32
    %c0_i32_1 = arith.constant 0 : i32
    return %arg0, %c0_i32, %c0_i32_0 : i32, i32, i32
  }
  func.func @transform_1(%arg0: i32) -> (i32, i32, i32) {
    %c0_i32 = arith.constant 0 : i32
    %c0_i32_0 = arith.constant 0 : i32
    %c0_i32_1 = arith.constant 0 : i32
    %c0_i32_2 = arith.constant 0 : i32
    return %c0_i32, %c0_i32_0, %c0_i32_1 : i32, i32, i32
  }
  func.func @transform_2(%arg0: i32) -> (i32, i32) {
    %c0_i32 = arith.constant 0 : i32
    %c0_i32_0 = arith.constant 0 : i32
    %c0_i32_1 = arith.constant 0 : i32
    return %c0_i32, %c0_i32_0 : i32, i32
  }
  func.func @transform_3(%arg0: i32) -> (i32, i32, i32) {
    %c0_i32 = arith.constant 0 : i32
    %c0_i32_0 = arith.constant 0 : i32
    %c0_i32_1 = arith.constant 0 : i32
    return %arg0, %c0_i32, %c0_i32_0 : i32, i32, i32
  }
  func.func @transform_4(%arg0: i32) -> (i32, i32, i32) {
    %c0_i32 = arith.constant 0 : i32
    %c0_i32_0 = arith.constant 0 : i32
    %c0_i32_1 = arith.constant 0 : i32
    return %arg0, %c0_i32, %c0_i32_0 : i32, i32, i32
  }
  func.func @transform_5(%arg0: i32) -> (i32, i32, i32) {
    %c0_i32 = arith.constant 0 : i32
    %c0_i32_0 = arith.constant 0 : i32
    %c0_i32_1 = arith.constant 0 : i32
    return %arg0, %c0_i32, %c0_i32_0 : i32, i32, i32
  }
}

module attributes {stable_mosaic.version = 11 : i64} {
  func.func @_bn_relu_apply_kernel(%arg0: i32, %arg1: i32, %arg2: memref<1x8x512xbf16, #tpu.memory_space<vmem>>, %arg3: memref<8x1xf32, #tpu.memory_space<vmem>>, %arg4: memref<8x1xf32, #tpu.memory_space<vmem>>, %arg5: memref<1x8x512xf32, #tpu.memory_space<vmem>>) attributes {dimension_semantics = [#tpu.dimension_semantics<parallel>, #tpu.dimension_semantics<parallel>], iteration_bounds = array<i64: 2, 1>, scalar_prefetch = 0 : i64, scratch_operands = 0 : i64, tpu.core_type = #tpu.core_type<tc>, window_params = [{transform_indices = @transform_0, window_bounds = array<i64: 1, 8, 512>}, {pipeline_mode = #tpu.pipeline_mode<synchronous>, transform_indices = @transform_1, window_bounds = array<i64: 8, 1>}, {pipeline_mode = #tpu.pipeline_mode<synchronous>, transform_indices = @transform_2, window_bounds = array<i64: 8, 1>}, {transform_indices = @transform_3, window_bounds = array<i64: 1, 8, 512>}]} {
    %c0 = arith.constant 0 : index
    %c0_0 = arith.constant 0 : index
    %c0_1 = arith.constant 0 : index
    %0 = vector.load %arg2[%c0, %c0_0, %c0_1] : memref<1x8x512xbf16, #tpu.memory_space<vmem>>, vector<1x8x512xbf16>
    %1 = vector.shape_cast %0 : vector<1x8x512xbf16> to vector<8x512xbf16>
    %2 = arith.extf %1 : vector<8x512xbf16> to vector<8x512xf32>
    %c0_2 = arith.constant 0 : index
    %c0_3 = arith.constant 0 : index
    %3 = vector.load %arg3[%c0_2, %c0_3] : memref<8x1xf32, #tpu.memory_space<vmem>>, vector<8x1xf32>
    %4 = vector.broadcast %3 : vector<8x1xf32> to vector<8x512xf32>
    %5 = arith.mulf %2, %4 : vector<8x512xf32>
    %c0_4 = arith.constant 0 : index
    %c0_5 = arith.constant 0 : index
    %6 = vector.load %arg4[%c0_4, %c0_5] : memref<8x1xf32, #tpu.memory_space<vmem>>, vector<8x1xf32>
    %7 = vector.broadcast %6 : vector<8x1xf32> to vector<8x512xf32>
    %8 = arith.addf %5, %7 : vector<8x512xf32>
    %cst = arith.constant 0.000000e+00 : f32
    %9 = vector.broadcast %cst : f32 to vector<8x512xf32>
    %10 = arith.maximumf %8, %9 : vector<8x512xf32>
    %c0_6 = arith.constant 0 : index
    %c0_7 = arith.constant 0 : index
    %c0_8 = arith.constant 0 : index
    %11 = vector.load %arg5[%c0_6, %c0_7, %c0_8] : memref<1x8x512xf32, #tpu.memory_space<vmem>>, vector<1x8x512xf32>
    %12 = vector.shape_cast %11 : vector<1x8x512xf32> to vector<8x512xf32>
    %13 = vector.shape_cast %10 : vector<8x512xf32> to vector<1x8x512xf32>
    tpu.vector_store %arg5[%c0_6, %c0_7, %c0_8], %13 {strides = array<i32>} : memref<1x8x512xf32, #tpu.memory_space<vmem>>, vector<1x8x512xf32>,
    return
  }
  func.func @transform_0(%arg0: i32, %arg1: i32) -> (i32, i32, i32) {
    %c0_i32 = arith.constant 0 : i32
    %c0_i32_0 = arith.constant 0 : i32
    return %arg0, %c0_i32, %arg1 : i32, i32, i32
  }
  func.func @transform_1(%arg0: i32, %arg1: i32) -> (i32, i32) {
    %c0_i32 = arith.constant 0 : i32
    %c0_i32_0 = arith.constant 0 : i32
    %c0_i32_1 = arith.constant 0 : i32
    return %c0_i32, %c0_i32_0 : i32, i32
  }
  func.func @transform_2(%arg0: i32, %arg1: i32) -> (i32, i32) {
    %c0_i32 = arith.constant 0 : i32
    %c0_i32_0 = arith.constant 0 : i32
    %c0_i32_1 = arith.constant 0 : i32
    return %c0_i32, %c0_i32_0 : i32, i32
  }
  func.func @transform_3(%arg0: i32, %arg1: i32) -> (i32, i32, i32) {
    %c0_i32 = arith.constant 0 : i32
    %c0_i32_0 = arith.constant 0 : i32
    return %arg0, %c0_i32, %arg1 : i32, i32, i32
  }
}

module attributes {stable_mosaic.version = 11 : i64} {
  func.func @_conv_bn_stats_kernel(%arg0: i32, %arg1: memref<1x4x512xbf16, #tpu.memory_space<vmem>>, %arg2: memref<27x8x4xbf16, #tpu.memory_space<vmem>>, %arg3: memref<3x512xi32, #tpu.memory_space<vmem>>, %arg4: memref<4x1xf32, #tpu.memory_space<vmem>>, %arg5: memref<4x1xf32, #tpu.memory_space<vmem>>, %arg6: memref<1x8x512xbf16, #tpu.memory_space<vmem>>, %arg7: memref<1x8x1xf32, #tpu.memory_space<vmem>>, %arg8: memref<1x8x1xf32, #tpu.memory_space<vmem>>) attributes {dimension_semantics = [#tpu.dimension_semantics<parallel>], iteration_bounds = array<i64: 2>, scalar_prefetch = 0 : i64, scratch_operands = 0 : i64, tpu.core_type = #tpu.core_type<tc>, window_params = [{transform_indices = @transform_0, window_bounds = array<i64: 1, 4, 512>}, {pipeline_mode = #tpu.pipeline_mode<synchronous>, transform_indices = @transform_1, window_bounds = array<i64: 27, 8, 4>}, {pipeline_mode = #tpu.pipeline_mode<synchronous>, transform_indices = @transform_2, window_bounds = array<i64: 3, 512>}, {pipeline_mode = #tpu.pipeline_mode<synchronous>, transform_indices = @transform_3, window_bounds = array<i64: 4, 1>}, {pipeline_mode = #tpu.pipeline_mode<synchronous>, transform_indices = @transform_4, window_bounds = array<i64: 4, 1>}, {transform_indices = @transform_5, window_bounds = array<i64: 1, 8, 512>}, {transform_indices = @transform_6, window_bounds = array<i64: 1, 8, 1>}, {transform_indices = @transform_7, window_bounds = array<i64: 1, 8, 1>}]} {
    %c0 = arith.constant 0 : index
    %c0_0 = arith.constant 0 : index
    %c0_1 = arith.constant 0 : index
    %0 = vector.load %arg1[%c0, %c0_0, %c0_1] : memref<1x4x512xbf16, #tpu.memory_space<vmem>>, vector<1x4x512xbf16>
    %1 = vector.shape_cast %0 : vector<1x4x512xbf16> to vector<4x512xbf16>
    %2 = arith.extf %1 : vector<4x512xbf16> to vector<4x512xf32>
    %c0_2 = arith.constant 0 : index
    %c0_3 = arith.constant 0 : index
    %3 = vector.load %arg4[%c0_2, %c0_3] : memref<4x1xf32, #tpu.memory_space<vmem>>, vector<4x1xf32>
    %4 = vector.broadcast %3 : vector<4x1xf32> to vector<4x512xf32>
    %5 = arith.mulf %2, %4 : vector<4x512xf32>
    %c0_4 = arith.constant 0 : index
    %c0_5 = arith.constant 0 : index
    %6 = vector.load %arg5[%c0_4, %c0_5] : memref<4x1xf32, #tpu.memory_space<vmem>>, vector<4x1xf32>
    %7 = vector.broadcast %6 : vector<4x1xf32> to vector<4x512xf32>
    %8 = arith.addf %5, %7 : vector<4x512xf32>
    %cst = arith.constant 0.000000e+00 : f32
    %9 = vector.broadcast %cst : f32 to vector<4x512xf32>
    %10 = arith.maximumf %8, %9 : vector<4x512xf32>
    %c0_6 = arith.constant 0 : index
    %c0_7 = arith.constant 0 : index
    %11 = vector.load %arg3[%c0_6, %c0_7] : memref<3x512xi32, #tpu.memory_space<vmem>>, vector<1x512xi32>
    %c1 = arith.constant 1 : index
    %c0_8 = arith.constant 0 : index
    %12 = vector.load %arg3[%c1, %c0_8] : memref<3x512xi32, #tpu.memory_space<vmem>>, vector<1x512xi32>
    %c2 = arith.constant 2 : index
    %c0_9 = arith.constant 0 : index
    %13 = vector.load %arg3[%c2, %c0_9] : memref<3x512xi32, #tpu.memory_space<vmem>>, vector<1x512xi32>
    %c1_i32 = arith.constant 1 : i32
    %14 = vector.broadcast %c1_i32 : i32 to vector<1x512xi32>
    %15 = arith.cmpi sge, %11, %14 : vector<1x512xi32>
    %c7_i32 = arith.constant 7 : i32
    %16 = vector.broadcast %c7_i32 : i32 to vector<1x512xi32>
    %17 = arith.cmpi slt, %11, %16 : vector<1x512xi32>
    %c1_i32_10 = arith.constant 1 : i32
    %18 = vector.broadcast %c1_i32_10 : i32 to vector<1x512xi32>
    %19 = arith.cmpi sge, %12, %18 : vector<1x512xi32>
    %c7_i32_11 = arith.constant 7 : i32
    %20 = vector.broadcast %c7_i32_11 : i32 to vector<1x512xi32>
    %21 = arith.cmpi slt, %12, %20 : vector<1x512xi32>
    %c1_i32_12 = arith.constant 1 : i32
    %22 = vector.broadcast %c1_i32_12 : i32 to vector<1x512xi32>
    %23 = arith.cmpi sge, %13, %22 : vector<1x512xi32>
    %c7_i32_13 = arith.constant 7 : i32
    %24 = vector.broadcast %c7_i32_13 : i32 to vector<1x512xi32>
    %25 = arith.cmpi slt, %13, %24 : vector<1x512xi32>
    %cst_14 = arith.constant 0.000000e+00 : f32
    %26 = vector.broadcast %cst_14 : f32 to vector<8x512xf32>
    %c0_15 = arith.constant 0 : index
    %c0_16 = arith.constant 0 : index
    %c0_17 = arith.constant 0 : index
    %27 = vector.load %arg2[%c0_15, %c0_16, %c0_17] : memref<27x8x4xbf16, #tpu.memory_space<vmem>>, vector<1x8x4xbf16>
    %28 = vector.shape_cast %27 : vector<1x8x4xbf16> to vector<8x4xbf16>
    %c73_i32 = arith.constant 73 : i32
    %29 = tpu.dynamic_rotate %10 by %c73_i32 dim 1 : vector<4x512xf32>, i32 -> vector<4x512xf32>
    %30 = arith.andi %15, %19 : vector<1x512xi1>
    %31 = arith.andi %30, %23 : vector<1x512xi1>
    %32 = arith.extui %31 : vector<1x512xi1> to vector<1x512xi32>
    %33 = arith.sitofp %32 : vector<1x512xi32> to vector<1x512xf32>
    %34 = vector.broadcast %33 : vector<1x512xf32> to vector<4x512xf32>
    %35 = arith.mulf %29, %34 : vector<4x512xf32>
    %36 = arith.truncf %35 : vector<4x512xf32> to vector<4x512xbf16>
    %cst_18 = arith.constant dense<0.000000e+00> : vector<8x512xf32>
    %37 = tpu.matmul %28, %36, %cst_18 {dimension_numbers = #tpu.dot_dimension_numbers<[1], [0], [0], [1], [0, 0, 1, 1], [], []>} : vector<8x4xbf16>, vector<4x512xbf16>, vector<8x512xf32> -> vector<8x512xf32>
    %38 = arith.addf %26, %37 : vector<8x512xf32>
    %c1_19 = arith.constant 1 : index
    %c0_20 = arith.constant 0 : index
    %c0_21 = arith.constant 0 : index
    %39 = vector.load %arg2[%c1_19, %c0_20, %c0_21] : memref<27x8x4xbf16, #tpu.memory_space<vmem>>, vector<1x8x4xbf16>
    %40 = vector.shape_cast %39 : vector<1x8x4xbf16> to vector<8x4xbf16>
    %c72_i32 = arith.constant 72 : i32
    %41 = tpu.dynamic_rotate %10 by %c72_i32 dim 1 : vector<4x512xf32>, i32 -> vector<4x512xf32>
    %42 = arith.andi %15, %19 : vector<1x512xi1>
    %43 = arith.extui %42 : vector<1x512xi1> to vector<1x512xi32>
    %44 = arith.sitofp %43 : vector<1x512xi32> to vector<1x512xf32>
    %45 = vector.broadcast %44 : vector<1x512xf32> to vector<4x512xf32>
    %46 = arith.mulf %41, %45 : vector<4x512xf32>
    %47 = arith.truncf %46 : vector<4x512xf32> to vector<4x512xbf16>
    %cst_22 = arith.constant dense<0.000000e+00> : vector<8x512xf32>
    %48 = tpu.matmul %40, %47, %cst_22 {dimension_numbers = #tpu.dot_dimension_numbers<[1], [0], [0], [1], [0, 0, 1, 1], [], []>} : vector<8x4xbf16>, vector<4x512xbf16>, vector<8x512xf32> -> vector<8x512xf32>
    %49 = arith.addf %38, %48 : vector<8x512xf32>
    %c2_23 = arith.constant 2 : index
    %c0_24 = arith.constant 0 : index
    %c0_25 = arith.constant 0 : index
    %50 = vector.load %arg2[%c2_23, %c0_24, %c0_25] : memref<27x8x4xbf16, #tpu.memory_space<vmem>>, vector<1x8x4xbf16>
    %51 = vector.shape_cast %50 : vector<1x8x4xbf16> to vector<8x4xbf16>
    %c71_i32 = arith.constant 71 : i32
    %52 = tpu.dynamic_rotate %10 by %c71_i32 dim 1 : vector<4x512xf32>, i32 -> vector<4x512xf32>
    %53 = arith.andi %15, %19 : vector<1x512xi1>
    %54 = arith.andi %53, %25 : vector<1x512xi1>
    %55 = arith.extui %54 : vector<1x512xi1> to vector<1x512xi32>
    %56 = arith.sitofp %55 : vector<1x512xi32> to vector<1x512xf32>
    %57 = vector.broadcast %56 : vector<1x512xf32> to vector<4x512xf32>
    %58 = arith.mulf %52, %57 : vector<4x512xf32>
    %59 = arith.truncf %58 : vector<4x512xf32> to vector<4x512xbf16>
    %cst_26 = arith.constant dense<0.000000e+00> : vector<8x512xf32>
    %60 = tpu.matmul %51, %59, %cst_26 {dimension_numbers = #tpu.dot_dimension_numbers<[1], [0], [0], [1], [0, 0, 1, 1], [], []>} : vector<8x4xbf16>, vector<4x512xbf16>, vector<8x512xf32> -> vector<8x512xf32>
    %61 = arith.addf %49, %60 : vector<8x512xf32>
    %c3 = arith.constant 3 : index
    %c0_27 = arith.constant 0 : index
    %c0_28 = arith.constant 0 : index
    %62 = vector.load %arg2[%c3, %c0_27, %c0_28] : memref<27x8x4xbf16, #tpu.memory_space<vmem>>, vector<1x8x4xbf16>
    %63 = vector.shape_cast %62 : vector<1x8x4xbf16> to vector<8x4xbf16>
    %c65_i32 = arith.constant 65 : i32
    %64 = tpu.dynamic_rotate %10 by %c65_i32 dim 1 : vector<4x512xf32>, i32 -> vector<4x512xf32>
    %65 = arith.andi %15, %23 : vector<1x512xi1>
    %66 = arith.extui %65 : vector<1x512xi1> to vector<1x512xi32>
    %67 = arith.sitofp %66 : vector<1x512xi32> to vector<1x512xf32>
    %68 = vector.broadcast %67 : vector<1x512xf32> to vector<4x512xf32>
    %69 = arith.mulf %64, %68 : vector<4x512xf32>
    %70 = arith.truncf %69 : vector<4x512xf32> to vector<4x512xbf16>
    %cst_29 = arith.constant dense<0.000000e+00> : vector<8x512xf32>
    %71 = tpu.matmul %63, %70, %cst_29 {dimension_numbers = #tpu.dot_dimension_numbers<[1], [0], [0], [1], [0, 0, 1, 1], [], []>} : vector<8x4xbf16>, vector<4x512xbf16>, vector<8x512xf32> -> vector<8x512xf32>
    %72 = arith.addf %61, %71 : vector<8x512xf32>
    %c4 = arith.constant 4 : index
    %c0_30 = arith.constant 0 : index
    %c0_31 = arith.constant 0 : index
    %73 = vector.load %arg2[%c4, %c0_30, %c0_31] : memref<27x8x4xbf16, #tpu.memory_space<vmem>>, vector<1x8x4xbf16>
    %74 = vector.shape_cast %73 : vector<1x8x4xbf16> to vector<8x4xbf16>
    %c64_i32 = arith.constant 64 : i32
    %75 = tpu.dynamic_rotate %10 by %c64_i32 dim 1 : vector<4x512xf32>, i32 -> vector<4x512xf32>
    %76 = arith.extui %15 : vector<1x512xi1> to vector<1x512xi32>
    %77 = arith.sitofp %76 : vector<1x512xi32> to vector<1x512xf32>
    %78 = vector.broadcast %77 : vector<1x512xf32> to vector<4x512xf32>
    %79 = arith.mulf %75, %78 : vector<4x512xf32>
    %80 = arith.truncf %79 : vector<4x512xf32> to vector<4x512xbf16>
    %cst_32 = arith.constant dense<0.000000e+00> : vector<8x512xf32>
    %81 = tpu.matmul %74, %80, %cst_32 {dimension_numbers = #tpu.dot_dimension_numbers<[1], [0], [0], [1], [0, 0, 1, 1], [], []>} : vector<8x4xbf16>, vector<4x512xbf16>, vector<8x512xf32> -> vector<8x512xf32>
    %82 = arith.addf %72, %81 : vector<8x512xf32>
    %c5 = arith.constant 5 : index
    %c0_33 = arith.constant 0 : index
    %c0_34 = arith.constant 0 : index
    %83 = vector.load %arg2[%c5, %c0_33, %c0_34] : memref<27x8x4xbf16, #tpu.memory_space<vmem>>, vector<1x8x4xbf16>
    %84 = vector.shape_cast %83 : vector<1x8x4xbf16> to vector<8x4xbf16>
    %c63_i32 = arith.constant 63 : i32
    %85 = tpu.dynamic_rotate %10 by %c63_i32 dim 1 : vector<4x512xf32>, i32 -> vector<4x512xf32>
    %86 = arith.andi %15, %25 : vector<1x512xi1>
    %87 = arith.extui %86 : vector<1x512xi1> to vector<1x512xi32>
    %88 = arith.sitofp %87 : vector<1x512xi32> to vector<1x512xf32>
    %89 = vector.broadcast %88 : vector<1x512xf32> to vector<4x512xf32>
    %90 = arith.mulf %85, %89 : vector<4x512xf32>
    %91 = arith.truncf %90 : vector<4x512xf32> to vector<4x512xbf16>
    %cst_35 = arith.constant dense<0.000000e+00> : vector<8x512xf32>
    %92 = tpu.matmul %84, %91, %cst_35 {dimension_numbers = #tpu.dot_dimension_numbers<[1], [0], [0], [1], [0, 0, 1, 1], [], []>} : vector<8x4xbf16>, vector<4x512xbf16>, vector<8x512xf32> -> vector<8x512xf32>
    %93 = arith.addf %82, %92 : vector<8x512xf32>
    %c6 = arith.constant 6 : index
    %c0_36 = arith.constant 0 : index
    %c0_37 = arith.constant 0 : index
    %94 = vector.load %arg2[%c6, %c0_36, %c0_37] : memref<27x8x4xbf16, #tpu.memory_space<vmem>>, vector<1x8x4xbf16>
    %95 = vector.shape_cast %94 : vector<1x8x4xbf16> to vector<8x4xbf16>
    %c57_i32 = arith.constant 57 : i32
    %96 = tpu.dynamic_rotate %10 by %c57_i32 dim 1 : vector<4x512xf32>, i32 -> vector<4x512xf32>
    %97 = arith.andi %15, %21 : vector<1x512xi1>
    %98 = arith.andi %97, %23 : vector<1x512xi1>
    %99 = arith.extui %98 : vector<1x512xi1> to vector<1x512xi32>
    %100 = arith.sitofp %99 : vector<1x512xi32> to vector<1x512xf32>
    %101 = vector.broadcast %100 : vector<1x512xf32> to vector<4x512xf32>
    %102 = arith.mulf %96, %101 : vector<4x512xf32>
    %103 = arith.truncf %102 : vector<4x512xf32> to vector<4x512xbf16>
    %cst_38 = arith.constant dense<0.000000e+00> : vector<8x512xf32>
    %104 = tpu.matmul %95, %103, %cst_38 {dimension_numbers = #tpu.dot_dimension_numbers<[1], [0], [0], [1], [0, 0, 1, 1], [], []>} : vector<8x4xbf16>, vector<4x512xbf16>, vector<8x512xf32> -> vector<8x512xf32>
    %105 = arith.addf %93, %104 : vector<8x512xf32>
    %c7 = arith.constant 7 : index
    %c0_39 = arith.constant 0 : index
    %c0_40 = arith.constant 0 : index
    %106 = vector.load %arg2[%c7, %c0_39, %c0_40] : memref<27x8x4xbf16, #tpu.memory_space<vmem>>, vector<1x8x4xbf16>
    %107 = vector.shape_cast %106 : vector<1x8x4xbf16> to vector<8x4xbf16>
    %c56_i32 = arith.constant 56 : i32
    %108 = tpu.dynamic_rotate %10 by %c56_i32 dim 1 : vector<4x512xf32>, i32 -> vector<4x512xf32>
    %109 = arith.andi %15, %21 : vector<1x512xi1>
    %110 = arith.extui %109 : vector<1x512xi1> to vector<1x512xi32>
    %111 = arith.sitofp %110 : vector<1x512xi32> to vector<1x512xf32>
    %112 = vector.broadcast %111 : vector<1x512xf32> to vector<4x512xf32>
    %113 = arith.mulf %108, %112 : vector<4x512xf32>
    %114 = arith.truncf %113 : vector<4x512xf32> to vector<4x512xbf16>
    %cst_41 = arith.constant dense<0.000000e+00> : vector<8x512xf32>
    %115 = tpu.matmul %107, %114, %cst_41 {dimension_numbers = #tpu.dot_dimension_numbers<[1], [0], [0], [1], [0, 0, 1, 1], [], []>} : vector<8x4xbf16>, vector<4x512xbf16>, vector<8x512xf32> -> vector<8x512xf32>
    %116 = arith.addf %105, %115 : vector<8x512xf32>
    %c8 = arith.constant 8 : index
    %c0_42 = arith.constant 0 : index
    %c0_43 = arith.constant 0 : index
    %117 = vector.load %arg2[%c8, %c0_42, %c0_43] : memref<27x8x4xbf16, #tpu.memory_space<vmem>>, vector<1x8x4xbf16>
    %118 = vector.shape_cast %117 : vector<1x8x4xbf16> to vector<8x4xbf16>
    %c55_i32 = arith.constant 55 : i32
    %119 = tpu.dynamic_rotate %10 by %c55_i32 dim 1 : vector<4x512xf32>, i32 -> vector<4x512xf32>
    %120 = arith.andi %15, %21 : vector<1x512xi1>
    %121 = arith.andi %120, %25 : vector<1x512xi1>
    %122 = arith.extui %121 : vector<1x512xi1> to vector<1x512xi32>
    %123 = arith.sitofp %122 : vector<1x512xi32> to vector<1x512xf32>
    %124 = vector.broadcast %123 : vector<1x512xf32> to vector<4x512xf32>
    %125 = arith.mulf %119, %124 : vector<4x512xf32>
    %126 = arith.truncf %125 : vector<4x512xf32> to vector<4x512xbf16>
    %cst_44 = arith.constant dense<0.000000e+00> : vector<8x512xf32>
    %127 = tpu.matmul %118, %126, %cst_44 {dimension_numbers = #tpu.dot_dimension_numbers<[1], [0], [0], [1], [0, 0, 1, 1], [], []>} : vector<8x4xbf16>, vector<4x512xbf16>, vector<8x512xf32> -> vector<8x512xf32>
    %128 = arith.addf %116, %127 : vector<8x512xf32>
    %c9 = arith.constant 9 : index
    %c0_45 = arith.constant 0 : index
    %c0_46 = arith.constant 0 : index
    %129 = vector.load %arg2[%c9, %c0_45, %c0_46] : memref<27x8x4xbf16, #tpu.memory_space<vmem>>, vector<1x8x4xbf16>
    %130 = vector.shape_cast %129 : vector<1x8x4xbf16> to vector<8x4xbf16>
    %c9_i32 = arith.constant 9 : i32
    %131 = tpu.dynamic_rotate %10 by %c9_i32 dim 1 : vector<4x512xf32>, i32 -> vector<4x512xf32>
    %132 = arith.andi %19, %23 : vector<1x512xi1>
    %133 = arith.extui %132 : vector<1x512xi1> to vector<1x512xi32>
    %134 = arith.sitofp %133 : vector<1x512xi32> to vector<1x512xf32>
    %135 = vector.broadcast %134 : vector<1x512xf32> to vector<4x512xf32>
    %136 = arith.mulf %131, %135 : vector<4x512xf32>
    %137 = arith.truncf %136 : vector<4x512xf32> to vector<4x512xbf16>
    %cst_47 = arith.constant dense<0.000000e+00> : vector<8x512xf32>
    %138 = tpu.matmul %130, %137, %cst_47 {dimension_numbers = #tpu.dot_dimension_numbers<[1], [0], [0], [1], [0, 0, 1, 1], [], []>} : vector<8x4xbf16>, vector<4x512xbf16>, vector<8x512xf32> -> vector<8x512xf32>
    %139 = arith.addf %128, %138 : vector<8x512xf32>
    %c10 = arith.constant 10 : index
    %c0_48 = arith.constant 0 : index
    %c0_49 = arith.constant 0 : index
    %140 = vector.load %arg2[%c10, %c0_48, %c0_49] : memref<27x8x4xbf16, #tpu.memory_space<vmem>>, vector<1x8x4xbf16>
    %141 = vector.shape_cast %140 : vector<1x8x4xbf16> to vector<8x4xbf16>
    %c8_i32 = arith.constant 8 : i32
    %142 = tpu.dynamic_rotate %10 by %c8_i32 dim 1 : vector<4x512xf32>, i32 -> vector<4x512xf32>
    %143 = arith.extui %19 : vector<1x512xi1> to vector<1x512xi32>
    %144 = arith.sitofp %143 : vector<1x512xi32> to vector<1x512xf32>
    %145 = vector.broadcast %144 : vector<1x512xf32> to vector<4x512xf32>
    %146 = arith.mulf %142, %145 : vector<4x512xf32>
    %147 = arith.truncf %146 : vector<4x512xf32> to vector<4x512xbf16>
    %cst_50 = arith.constant dense<0.000000e+00> : vector<8x512xf32>
    %148 = tpu.matmul %141, %147, %cst_50 {dimension_numbers = #tpu.dot_dimension_numbers<[1], [0], [0], [1], [0, 0, 1, 1], [], []>} : vector<8x4xbf16>, vector<4x512xbf16>, vector<8x512xf32> -> vector<8x512xf32>
    %149 = arith.addf %139, %148 : vector<8x512xf32>
    %c11 = arith.constant 11 : index
    %c0_51 = arith.constant 0 : index
    %c0_52 = arith.constant 0 : index
    %150 = vector.load %arg2[%c11, %c0_51, %c0_52] : memref<27x8x4xbf16, #tpu.memory_space<vmem>>, vector<1x8x4xbf16>
    %151 = vector.shape_cast %150 : vector<1x8x4xbf16> to vector<8x4xbf16>
    %c7_i32_53 = arith.constant 7 : i32
    %152 = tpu.dynamic_rotate %10 by %c7_i32_53 dim 1 : vector<4x512xf32>, i32 -> vector<4x512xf32>
    %153 = arith.andi %19, %25 : vector<1x512xi1>
    %154 = arith.extui %153 : vector<1x512xi1> to vector<1x512xi32>
    %155 = arith.sitofp %154 : vector<1x512xi32> to vector<1x512xf32>
    %156 = vector.broadcast %155 : vector<1x512xf32> to vector<4x512xf32>
    %157 = arith.mulf %152, %156 : vector<4x512xf32>
    %158 = arith.truncf %157 : vector<4x512xf32> to vector<4x512xbf16>
    %cst_54 = arith.constant dense<0.000000e+00> : vector<8x512xf32>
    %159 = tpu.matmul %151, %158, %cst_54 {dimension_numbers = #tpu.dot_dimension_numbers<[1], [0], [0], [1], [0, 0, 1, 1], [], []>} : vector<8x4xbf16>, vector<4x512xbf16>, vector<8x512xf32> -> vector<8x512xf32>
    %160 = arith.addf %149, %159 : vector<8x512xf32>
    %c12 = arith.constant 12 : index
    %c0_55 = arith.constant 0 : index
    %c0_56 = arith.constant 0 : index
    %161 = vector.load %arg2[%c12, %c0_55, %c0_56] : memref<27x8x4xbf16, #tpu.memory_space<vmem>>, vector<1x8x4xbf16>
    %162 = vector.shape_cast %161 : vector<1x8x4xbf16> to vector<8x4xbf16>
    %c1_i32_57 = arith.constant 1 : i32
    %163 = tpu.dynamic_rotate %10 by %c1_i32_57 dim 1 : vector<4x512xf32>, i32 -> vector<4x512xf32>
    %164 = arith.extui %23 : vector<1x512xi1> to vector<1x512xi32>
    %165 = arith.sitofp %164 : vector<1x512xi32> to vector<1x512xf32>
    %166 = vector.broadcast %165 : vector<1x512xf32> to vector<4x512xf32>
    %167 = arith.mulf %163, %166 : vector<4x512xf32>
    %168 = arith.truncf %167 : vector<4x512xf32> to vector<4x512xbf16>
    %cst_58 = arith.constant dense<0.000000e+00> : vector<8x512xf32>
    %169 = tpu.matmul %162, %168, %cst_58 {dimension_numbers = #tpu.dot_dimension_numbers<[1], [0], [0], [1], [0, 0, 1, 1], [], []>} : vector<8x4xbf16>, vector<4x512xbf16>, vector<8x512xf32> -> vector<8x512xf32>
    %170 = arith.addf %160, %169 : vector<8x512xf32>
    %c13 = arith.constant 13 : index
    %c0_59 = arith.constant 0 : index
    %c0_60 = arith.constant 0 : index
    %171 = vector.load %arg2[%c13, %c0_59, %c0_60] : memref<27x8x4xbf16, #tpu.memory_space<vmem>>, vector<1x8x4xbf16>
    %172 = vector.shape_cast %171 : vector<1x8x4xbf16> to vector<8x4xbf16>
    %173 = arith.truncf %10 : vector<4x512xf32> to vector<4x512xbf16>
    %cst_61 = arith.constant dense<0.000000e+00> : vector<8x512xf32>
    %174 = tpu.matmul %172, %173, %cst_61 {dimension_numbers = #tpu.dot_dimension_numbers<[1], [0], [0], [1], [0, 0, 1, 1], [], []>} : vector<8x4xbf16>, vector<4x512xbf16>, vector<8x512xf32> -> vector<8x512xf32>
    %175 = arith.addf %170, %174 : vector<8x512xf32>
    %c14 = arith.constant 14 : index
    %c0_62 = arith.constant 0 : index
    %c0_63 = arith.constant 0 : index
    %176 = vector.load %arg2[%c14, %c0_62, %c0_63] : memref<27x8x4xbf16, #tpu.memory_space<vmem>>, vector<1x8x4xbf16>
    %177 = vector.shape_cast %176 : vector<1x8x4xbf16> to vector<8x4xbf16>
    %c511_i32 = arith.constant 511 : i32
    %178 = tpu.dynamic_rotate %10 by %c511_i32 dim 1 : vector<4x512xf32>, i32 -> vector<4x512xf32>
    %179 = arith.extui %25 : vector<1x512xi1> to vector<1x512xi32>
    %180 = arith.sitofp %179 : vector<1x512xi32> to vector<1x512xf32>
    %181 = vector.broadcast %180 : vector<1x512xf32> to vector<4x512xf32>
    %182 = arith.mulf %178, %181 : vector<4x512xf32>
    %183 = arith.truncf %182 : vector<4x512xf32> to vector<4x512xbf16>
    %cst_64 = arith.constant dense<0.000000e+00> : vector<8x512xf32>
    %184 = tpu.matmul %177, %183, %cst_64 {dimension_numbers = #tpu.dot_dimension_numbers<[1], [0], [0], [1], [0, 0, 1, 1], [], []>} : vector<8x4xbf16>, vector<4x512xbf16>, vector<8x512xf32> -> vector<8x512xf32>
    %185 = arith.addf %175, %184 : vector<8x512xf32>
    %c15 = arith.constant 15 : index
    %c0_65 = arith.constant 0 : index
    %c0_66 = arith.constant 0 : index
    %186 = vector.load %arg2[%c15, %c0_65, %c0_66] : memref<27x8x4xbf16, #tpu.memory_space<vmem>>, vector<1x8x4xbf16>
    %187 = vector.shape_cast %186 : vector<1x8x4xbf16> to vector<8x4xbf16>
    %c505_i32 = arith.constant 505 : i32
    %188 = tpu.dynamic_rotate %10 by %c505_i32 dim 1 : vector<4x512xf32>, i32 -> vector<4x512xf32>
    %189 = arith.andi %21, %23 : vector<1x512xi1>
    %190 = arith.extui %189 : vector<1x512xi1> to vector<1x512xi32>
    %191 = arith.sitofp %190 : vector<1x512xi32> to vector<1x512xf32>
    %192 = vector.broadcast %191 : vector<1x512xf32> to vector<4x512xf32>
    %193 = arith.mulf %188, %192 : vector<4x512xf32>
    %194 = arith.truncf %193 : vector<4x512xf32> to vector<4x512xbf16>
    %cst_67 = arith.constant dense<0.000000e+00> : vector<8x512xf32>
    %195 = tpu.matmul %187, %194, %cst_67 {dimension_numbers = #tpu.dot_dimension_numbers<[1], [0], [0], [1], [0, 0, 1, 1], [], []>} : vector<8x4xbf16>, vector<4x512xbf16>, vector<8x512xf32> -> vector<8x512xf32>
    %196 = arith.addf %185, %195 : vector<8x512xf32>
    %c16 = arith.constant 16 : index
    %c0_68 = arith.constant 0 : index
    %c0_69 = arith.constant 0 : index
    %197 = vector.load %arg2[%c16, %c0_68, %c0_69] : memref<27x8x4xbf16, #tpu.memory_space<vmem>>, vector<1x8x4xbf16>
    %198 = vector.shape_cast %197 : vector<1x8x4xbf16> to vector<8x4xbf16>
    %c504_i32 = arith.constant 504 : i32
    %199 = tpu.dynamic_rotate %10 by %c504_i32 dim 1 : vector<4x512xf32>, i32 -> vector<4x512xf32>
    %200 = arith.extui %21 : vector<1x512xi1> to vector<1x512xi32>
    %201 = arith.sitofp %200 : vector<1x512xi32> to vector<1x512xf32>
    %202 = vector.broadcast %201 : vector<1x512xf32> to vector<4x512xf32>
    %203 = arith.mulf %199, %202 : vector<4x512xf32>
    %204 = arith.truncf %203 : vector<4x512xf32> to vector<4x512xbf16>
    %cst_70 = arith.constant dense<0.000000e+00> : vector<8x512xf32>
    %205 = tpu.matmul %198, %204, %cst_70 {dimension_numbers = #tpu.dot_dimension_numbers<[1], [0], [0], [1], [0, 0, 1, 1], [], []>} : vector<8x4xbf16>, vector<4x512xbf16>, vector<8x512xf32> -> vector<8x512xf32>
    %206 = arith.addf %196, %205 : vector<8x512xf32>
    %c17 = arith.constant 17 : index
    %c0_71 = arith.constant 0 : index
    %c0_72 = arith.constant 0 : index
    %207 = vector.load %arg2[%c17, %c0_71, %c0_72] : memref<27x8x4xbf16, #tpu.memory_space<vmem>>, vector<1x8x4xbf16>
    %208 = vector.shape_cast %207 : vector<1x8x4xbf16> to vector<8x4xbf16>
    %c503_i32 = arith.constant 503 : i32
    %209 = tpu.dynamic_rotate %10 by %c503_i32 dim 1 : vector<4x512xf32>, i32 -> vector<4x512xf32>
    %210 = arith.andi %21, %25 : vector<1x512xi1>
    %211 = arith.extui %210 : vector<1x512xi1> to vector<1x512xi32>
    %212 = arith.sitofp %211 : vector<1x512xi32> to vector<1x512xf32>
    %213 = vector.broadcast %212 : vector<1x512xf32> to vector<4x512xf32>
    %214 = arith.mulf %209, %213 : vector<4x512xf32>
    %215 = arith.truncf %214 : vector<4x512xf32> to vector<4x512xbf16>
    %cst_73 = arith.constant dense<0.000000e+00> : vector<8x512xf32>
    %216 = tpu.matmul %208, %215, %cst_73 {dimension_numbers = #tpu.dot_dimension_numbers<[1], [0], [0], [1], [0, 0, 1, 1], [], []>} : vector<8x4xbf16>, vector<4x512xbf16>, vector<8x512xf32> -> vector<8x512xf32>
    %217 = arith.addf %206, %216 : vector<8x512xf32>
    %c18 = arith.constant 18 : index
    %c0_74 = arith.constant 0 : index
    %c0_75 = arith.constant 0 : index
    %218 = vector.load %arg2[%c18, %c0_74, %c0_75] : memref<27x8x4xbf16, #tpu.memory_space<vmem>>, vector<1x8x4xbf16>
    %219 = vector.shape_cast %218 : vector<1x8x4xbf16> to vector<8x4xbf16>
    %c457_i32 = arith.constant 457 : i32
    %220 = tpu.dynamic_rotate %10 by %c457_i32 dim 1 : vector<4x512xf32>, i32 -> vector<4x512xf32>
    %221 = arith.andi %17, %19 : vector<1x512xi1>
    %222 = arith.andi %221, %23 : vector<1x512xi1>
    %223 = arith.extui %222 : vector<1x512xi1> to vector<1x512xi32>
    %224 = arith.sitofp %223 : vector<1x512xi32> to vector<1x512xf32>
    %225 = vector.broadcast %224 : vector<1x512xf32> to vector<4x512xf32>
    %226 = arith.mulf %220, %225 : vector<4x512xf32>
    %227 = arith.truncf %226 : vector<4x512xf32> to vector<4x512xbf16>
    %cst_76 = arith.constant dense<0.000000e+00> : vector<8x512xf32>
    %228 = tpu.matmul %219, %227, %cst_76 {dimension_numbers = #tpu.dot_dimension_numbers<[1], [0], [0], [1], [0, 0, 1, 1], [], []>} : vector<8x4xbf16>, vector<4x512xbf16>, vector<8x512xf32> -> vector<8x512xf32>
    %229 = arith.addf %217, %228 : vector<8x512xf32>
    %c19 = arith.constant 19 : index
    %c0_77 = arith.constant 0 : index
    %c0_78 = arith.constant 0 : index
    %230 = vector.load %arg2[%c19, %c0_77, %c0_78] : memref<27x8x4xbf16, #tpu.memory_space<vmem>>, vector<1x8x4xbf16>
    %231 = vector.shape_cast %230 : vector<1x8x4xbf16> to vector<8x4xbf16>
    %c456_i32 = arith.constant 456 : i32
    %232 = tpu.dynamic_rotate %10 by %c456_i32 dim 1 : vector<4x512xf32>, i32 -> vector<4x512xf32>
    %233 = arith.andi %17, %19 : vector<1x512xi1>
    %234 = arith.extui %233 : vector<1x512xi1> to vector<1x512xi32>
    %235 = arith.sitofp %234 : vector<1x512xi32> to vector<1x512xf32>
    %236 = vector.broadcast %235 : vector<1x512xf32> to vector<4x512xf32>
    %237 = arith.mulf %232, %236 : vector<4x512xf32>
    %238 = arith.truncf %237 : vector<4x512xf32> to vector<4x512xbf16>
    %cst_79 = arith.constant dense<0.000000e+00> : vector<8x512xf32>
    %239 = tpu.matmul %231, %238, %cst_79 {dimension_numbers = #tpu.dot_dimension_numbers<[1], [0], [0], [1], [0, 0, 1, 1], [], []>} : vector<8x4xbf16>, vector<4x512xbf16>, vector<8x512xf32> -> vector<8x512xf32>
    %240 = arith.addf %229, %239 : vector<8x512xf32>
    %c20 = arith.constant 20 : index
    %c0_80 = arith.constant 0 : index
    %c0_81 = arith.constant 0 : index
    %241 = vector.load %arg2[%c20, %c0_80, %c0_81] : memref<27x8x4xbf16, #tpu.memory_space<vmem>>, vector<1x8x4xbf16>
    %242 = vector.shape_cast %241 : vector<1x8x4xbf16> to vector<8x4xbf16>
    %c455_i32 = arith.constant 455 : i32
    %243 = tpu.dynamic_rotate %10 by %c455_i32 dim 1 : vector<4x512xf32>, i32 -> vector<4x512xf32>
    %244 = arith.andi %17, %19 : vector<1x512xi1>
    %245 = arith.andi %244, %25 : vector<1x512xi1>
    %246 = arith.extui %245 : vector<1x512xi1> to vector<1x512xi32>
    %247 = arith.sitofp %246 : vector<1x512xi32> to vector<1x512xf32>
    %248 = vector.broadcast %247 : vector<1x512xf32> to vector<4x512xf32>
    %249 = arith.mulf %243, %248 : vector<4x512xf32>
    %250 = arith.truncf %249 : vector<4x512xf32> to vector<4x512xbf16>
    %cst_82 = arith.constant dense<0.000000e+00> : vector<8x512xf32>
    %251 = tpu.matmul %242, %250, %cst_82 {dimension_numbers = #tpu.dot_dimension_numbers<[1], [0], [0], [1], [0, 0, 1, 1], [], []>} : vector<8x4xbf16>, vector<4x512xbf16>, vector<8x512xf32> -> vector<8x512xf32>
    %252 = arith.addf %240, %251 : vector<8x512xf32>
    %c21 = arith.constant 21 : index
    %c0_83 = arith.constant 0 : index
    %c0_84 = arith.constant 0 : index
    %253 = vector.load %arg2[%c21, %c0_83, %c0_84] : memref<27x8x4xbf16, #tpu.memory_space<vmem>>, vector<1x8x4xbf16>
    %254 = vector.shape_cast %253 : vector<1x8x4xbf16> to vector<8x4xbf16>
    %c449_i32 = arith.constant 449 : i32
    %255 = tpu.dynamic_rotate %10 by %c449_i32 dim 1 : vector<4x512xf32>, i32 -> vector<4x512xf32>
    %256 = arith.andi %17, %23 : vector<1x512xi1>
    %257 = arith.extui %256 : vector<1x512xi1> to vector<1x512xi32>
    %258 = arith.sitofp %257 : vector<1x512xi32> to vector<1x512xf32>
    %259 = vector.broadcast %258 : vector<1x512xf32> to vector<4x512xf32>
    %260 = arith.mulf %255, %259 : vector<4x512xf32>
    %261 = arith.truncf %260 : vector<4x512xf32> to vector<4x512xbf16>
    %cst_85 = arith.constant dense<0.000000e+00> : vector<8x512xf32>
    %262 = tpu.matmul %254, %261, %cst_85 {dimension_numbers = #tpu.dot_dimension_numbers<[1], [0], [0], [1], [0, 0, 1, 1], [], []>} : vector<8x4xbf16>, vector<4x512xbf16>, vector<8x512xf32> -> vector<8x512xf32>
    %263 = arith.addf %252, %262 : vector<8x512xf32>
    %c22 = arith.constant 22 : index
    %c0_86 = arith.constant 0 : index
    %c0_87 = arith.constant 0 : index
    %264 = vector.load %arg2[%c22, %c0_86, %c0_87] : memref<27x8x4xbf16, #tpu.memory_space<vmem>>, vector<1x8x4xbf16>
    %265 = vector.shape_cast %264 : vector<1x8x4xbf16> to vector<8x4xbf16>
    %c448_i32 = arith.constant 448 : i32
    %266 = tpu.dynamic_rotate %10 by %c448_i32 dim 1 : vector<4x512xf32>, i32 -> vector<4x512xf32>
    %267 = arith.extui %17 : vector<1x512xi1> to vector<1x512xi32>
    %268 = arith.sitofp %267 : vector<1x512xi32> to vector<1x512xf32>
    %269 = vector.broadcast %268 : vector<1x512xf32> to vector<4x512xf32>
    %270 = arith.mulf %266, %269 : vector<4x512xf32>
    %271 = arith.truncf %270 : vector<4x512xf32> to vector<4x512xbf16>
    %cst_88 = arith.constant dense<0.000000e+00> : vector<8x512xf32>
    %272 = tpu.matmul %265, %271, %cst_88 {dimension_numbers = #tpu.dot_dimension_numbers<[1], [0], [0], [1], [0, 0, 1, 1], [], []>} : vector<8x4xbf16>, vector<4x512xbf16>, vector<8x512xf32> -> vector<8x512xf32>
    %273 = arith.addf %263, %272 : vector<8x512xf32>
    %c23 = arith.constant 23 : index
    %c0_89 = arith.constant 0 : index
    %c0_90 = arith.constant 0 : index
    %274 = vector.load %arg2[%c23, %c0_89, %c0_90] : memref<27x8x4xbf16, #tpu.memory_space<vmem>>, vector<1x8x4xbf16>
    %275 = vector.shape_cast %274 : vector<1x8x4xbf16> to vector<8x4xbf16>
    %c447_i32 = arith.constant 447 : i32
    %276 = tpu.dynamic_rotate %10 by %c447_i32 dim 1 : vector<4x512xf32>, i32 -> vector<4x512xf32>
    %277 = arith.andi %17, %25 : vector<1x512xi1>
    %278 = arith.extui %277 : vector<1x512xi1> to vector<1x512xi32>
    %279 = arith.sitofp %278 : vector<1x512xi32> to vector<1x512xf32>
    %280 = vector.broadcast %279 : vector<1x512xf32> to vector<4x512xf32>
    %281 = arith.mulf %276, %280 : vector<4x512xf32>
    %282 = arith.truncf %281 : vector<4x512xf32> to vector<4x512xbf16>
    %cst_91 = arith.constant dense<0.000000e+00> : vector<8x512xf32>
    %283 = tpu.matmul %275, %282, %cst_91 {dimension_numbers = #tpu.dot_dimension_numbers<[1], [0], [0], [1], [0, 0, 1, 1], [], []>} : vector<8x4xbf16>, vector<4x512xbf16>, vector<8x512xf32> -> vector<8x512xf32>
    %284 = arith.addf %273, %283 : vector<8x512xf32>
    %c24 = arith.constant 24 : index
    %c0_92 = arith.constant 0 : index
    %c0_93 = arith.constant 0 : index
    %285 = vector.load %arg2[%c24, %c0_92, %c0_93] : memref<27x8x4xbf16, #tpu.memory_space<vmem>>, vector<1x8x4xbf16>
    %286 = vector.shape_cast %285 : vector<1x8x4xbf16> to vector<8x4xbf16>
    %c441_i32 = arith.constant 441 : i32
    %287 = tpu.dynamic_rotate %10 by %c441_i32 dim 1 : vector<4x512xf32>, i32 -> vector<4x512xf32>
    %288 = arith.andi %17, %21 : vector<1x512xi1>
    %289 = arith.andi %288, %23 : vector<1x512xi1>
    %290 = arith.extui %289 : vector<1x512xi1> to vector<1x512xi32>
    %291 = arith.sitofp %290 : vector<1x512xi32> to vector<1x512xf32>
    %292 = vector.broadcast %291 : vector<1x512xf32> to vector<4x512xf32>
    %293 = arith.mulf %287, %292 : vector<4x512xf32>
    %294 = arith.truncf %293 : vector<4x512xf32> to vector<4x512xbf16>
    %cst_94 = arith.constant dense<0.000000e+00> : vector<8x512xf32>
    %295 = tpu.matmul %286, %294, %cst_94 {dimension_numbers = #tpu.dot_dimension_numbers<[1], [0], [0], [1], [0, 0, 1, 1], [], []>} : vector<8x4xbf16>, vector<4x512xbf16>, vector<8x512xf32> -> vector<8x512xf32>
    %296 = arith.addf %284, %295 : vector<8x512xf32>
    %c25 = arith.constant 25 : index
    %c0_95 = arith.constant 0 : index
    %c0_96 = arith.constant 0 : index
    %297 = vector.load %arg2[%c25, %c0_95, %c0_96] : memref<27x8x4xbf16, #tpu.memory_space<vmem>>, vector<1x8x4xbf16>
    %298 = vector.shape_cast %297 : vector<1x8x4xbf16> to vector<8x4xbf16>
    %c440_i32 = arith.constant 440 : i32
    %299 = tpu.dynamic_rotate %10 by %c440_i32 dim 1 : vector<4x512xf32>, i32 -> vector<4x512xf32>
    %300 = arith.andi %17, %21 : vector<1x512xi1>
    %301 = arith.extui %300 : vector<1x512xi1> to vector<1x512xi32>
    %302 = arith.sitofp %301 : vector<1x512xi32> to vector<1x512xf32>
    %303 = vector.broadcast %302 : vector<1x512xf32> to vector<4x512xf32>
    %304 = arith.mulf %299, %303 : vector<4x512xf32>
    %305 = arith.truncf %304 : vector<4x512xf32> to vector<4x512xbf16>
    %cst_97 = arith.constant dense<0.000000e+00> : vector<8x512xf32>
    %306 = tpu.matmul %298, %305, %cst_97 {dimension_numbers = #tpu.dot_dimension_numbers<[1], [0], [0], [1], [0, 0, 1, 1], [], []>} : vector<8x4xbf16>, vector<4x512xbf16>, vector<8x512xf32> -> vector<8x512xf32>
    %307 = arith.addf %296, %306 : vector<8x512xf32>
    %c26 = arith.constant 26 : index
    %c0_98 = arith.constant 0 : index
    %c0_99 = arith.constant 0 : index
    %308 = vector.load %arg2[%c26, %c0_98, %c0_99] : memref<27x8x4xbf16, #tpu.memory_space<vmem>>, vector<1x8x4xbf16>
    %309 = vector.shape_cast %308 : vector<1x8x4xbf16> to vector<8x4xbf16>
    %c439_i32 = arith.constant 439 : i32
    %310 = tpu.dynamic_rotate %10 by %c439_i32 dim 1 : vector<4x512xf32>, i32 -> vector<4x512xf32>
    %311 = arith.andi %17, %21 : vector<1x512xi1>
    %312 = arith.andi %311, %25 : vector<1x512xi1>
    %313 = arith.extui %312 : vector<1x512xi1> to vector<1x512xi32>
    %314 = arith.sitofp %313 : vector<1x512xi32> to vector<1x512xf32>
    %315 = vector.broadcast %314 : vector<1x512xf32> to vector<4x512xf32>
    %316 = arith.mulf %310, %315 : vector<4x512xf32>
    %317 = arith.truncf %316 : vector<4x512xf32> to vector<4x512xbf16>
    %cst_100 = arith.constant dense<0.000000e+00> : vector<8x512xf32>
    %318 = tpu.matmul %309, %317, %cst_100 {dimension_numbers = #tpu.dot_dimension_numbers<[1], [0], [0], [1], [0, 0, 1, 1], [], []>} : vector<8x4xbf16>, vector<4x512xbf16>, vector<8x512xf32> -> vector<8x512xf32>
    %319 = arith.addf %307, %318 : vector<8x512xf32>
    %320 = arith.truncf %319 : vector<8x512xf32> to vector<8x512xbf16>
    %c0_101 = arith.constant 0 : index
    %c0_102 = arith.constant 0 : index
    %c0_103 = arith.constant 0 : index
    %321 = vector.load %arg6[%c0_101, %c0_102, %c0_103] : memref<1x8x512xbf16, #tpu.memory_space<vmem>>, vector<1x8x512xbf16>
    %322 = vector.shape_cast %321 : vector<1x8x512xbf16> to vector<8x512xbf16>
    %323 = vector.shape_cast %320 : vector<8x512xbf16> to vector<1x8x512xbf16>
    tpu.vector_store %arg6[%c0_101, %c0_102, %c0_103], %323 {strides = array<i32>} : memref<1x8x512xbf16, #tpu.memory_space<vmem>>, vector<1x8x512xbf16>,
    %cst_104 = arith.constant dense<0.000000e+00> : vector<8xf32>
    %324 = vector.multi_reduction <add>, %319, %cst_104 [1] : vector<8x512xf32> to vector<8xf32>
    %325 = vector.shape_cast %324 : vector<8xf32> to vector<8x1xf32>
    %c0_105 = arith.constant 0 : index
    %c0_106 = arith.constant 0 : index
    %c0_107 = arith.constant 0 : index
    %326 = vector.load %arg7[%c0_105, %c0_106, %c0_107] : memref<1x8x1xf32, #tpu.memory_space<vmem>>, vector<1x8x1xf32>
    %327 = vector.shape_cast %326 : vector<1x8x1xf32> to vector<8x1xf32>
    %328 = vector.shape_cast %325 : vector<8x1xf32> to vector<1x8x1xf32>
    tpu.vector_store %arg7[%c0_105, %c0_106, %c0_107], %328 {strides = array<i32>} : memref<1x8x1xf32, #tpu.memory_space<vmem>>, vector<1x8x1xf32>,
    %329 = arith.mulf %319, %319 : vector<8x512xf32>
    %cst_108 = arith.constant dense<0.000000e+00> : vector<8xf32>
    %330 = vector.multi_reduction <add>, %329, %cst_108 [1] : vector<8x512xf32> to vector<8xf32>
    %331 = vector.shape_cast %330 : vector<8xf32> to vector<8x1xf32>
    %c0_109 = arith.constant 0 : index
    %c0_110 = arith.constant 0 : index
    %c0_111 = arith.constant 0 : index
    %332 = vector.load %arg8[%c0_109, %c0_110, %c0_111] : memref<1x8x1xf32, #tpu.memory_space<vmem>>, vector<1x8x1xf32>
    %333 = vector.shape_cast %332 : vector<1x8x1xf32> to vector<8x1xf32>
    %334 = vector.shape_cast %331 : vector<8x1xf32> to vector<1x8x1xf32>
    tpu.vector_store %arg8[%c0_109, %c0_110, %c0_111], %334 {strides = array<i32>} : memref<1x8x1xf32, #tpu.memory_space<vmem>>, vector<1x8x1xf32>,
    return
  }
  func.func @transform_0(%arg0: i32) -> (i32, i32, i32) {
    %c0_i32 = arith.constant 0 : i32
    %c0_i32_0 = arith.constant 0 : i32
    %c0_i32_1 = arith.constant 0 : i32
    return %arg0, %c0_i32, %c0_i32_0 : i32, i32, i32
  }
  func.func @transform_1(%arg0: i32) -> (i32, i32, i32) {
    %c0_i32 = arith.constant 0 : i32
    %c0_i32_0 = arith.constant 0 : i32
    %c0_i32_1 = arith.constant 0 : i32
    %c0_i32_2 = arith.constant 0 : i32
    return %c0_i32, %c0_i32_0, %c0_i32_1 : i32, i32, i32
  }
  func.func @transform_2(%arg0: i32) -> (i32, i32) {
    %c0_i32 = arith.constant 0 : i32
    %c0_i32_0 = arith.constant 0 : i32
    %c0_i32_1 = arith.constant 0 : i32
    return %c0_i32, %c0_i32_0 : i32, i32
  }
  func.func @transform_3(%arg0: i32) -> (i32, i32) {
    %c0_i32 = arith.constant 0 : i32
    %c0_i32_0 = arith.constant 0 : i32
    %c0_i32_1 = arith.constant 0 : i32
    return %c0_i32, %c0_i32_0 : i32, i32
  }
  func.func @transform_4(%arg0: i32) -> (i32, i32) {
    %c0_i32 = arith.constant 0 : i32
    %c0_i32_0 = arith.constant 0 : i32
    %c0_i32_1 = arith.constant 0 : i32
    return %c0_i32, %c0_i32_0 : i32, i32
  }
  func.func @transform_5(%arg0: i32) -> (i32, i32, i32) {
    %c0_i32 = arith.constant 0 : i32
    %c0_i32_0 = arith.constant 0 : i32
    %c0_i32_1 = arith.constant 0 : i32
    return %arg0, %c0_i32, %c0_i32_0 : i32, i32, i32
  }
  func.func @transform_6(%arg0: i32) -> (i32, i32, i32) {
    %c0_i32 = arith.constant 0 : i32
    %c0_i32_0 = arith.constant 0 : i32
    %c0_i32_1 = arith.constant 0 : i32
    return %arg0, %c0_i32, %c0_i32_0 : i32, i32, i32
  }
  func.func @transform_7(%arg0: i32) -> (i32, i32, i32) {
    %c0_i32 = arith.constant 0 : i32
    %c0_i32_0 = arith.constant 0 : i32
    %c0_i32_1 = arith.constant 0 : i32
    return %arg0, %c0_i32, %c0_i32_0 : i32, i32, i32
  }
}

</mosaic_0001>

<llo_original>
// kernel: double_conv_forward.5
$region0: #{double_conv_forward.5}
  #allocation0 [shape = 'u32[]', space=smem, size = 0x4, offset = 0x4, fixed_abs, tag = 'smem constant byte address 0x4 - core index']
  #allocation1 [shape = 'u32[144,128]{1,0:T(1,128)}', space=vmem, size = 0x12000, scoped, tag = 'internal scratch']
  %s0 = inlined_call_operand.vmem [shape: bf16[2,8,512], index: 0, kind: input, shape index: {}]
  %s1 = inlined_call_operand.vmem [shape: f32[8,1], index: 1, kind: input, shape index: {}]
  %s2 = inlined_call_operand.vmem [shape: f32[8,1], index: 2, kind: input, shape index: {}]
  %s3 = inlined_call_operand.vmem [shape: f32[2,8,512], index: 3, kind: output, shape index: {}]
  %s4 = sld [smem:[#allocation0]]
  $region45: #{double_conv_forward.5} parent=0
    _
  %s6 = ssub.s32 1, %s4
  %s7 = scalar_select 0, %s6, %s4
  loop: start=0, step=1, limit=4
  $region2: #{double_conv_forward.5} parent=0 // loop_pre_header
    _
  $region3: #{double_conv_forward.5} parent=0 // loop_header
    %s9 = sphi 0, %s13
    %p10 = scmp.ge.s32.totalorder %s9, 4
    %s16 = sphi 0, %s28
    %s17 = sphi 0, %s24
    %s18 = sphi 0, %s16
    %s19 = sphi 0, %s17
    %s20 = sphi 0, %s18
    %s21 = sphi 0, %s19
    %s33 = sphi 0, %s35
    %s36 = sphi 0, %s33
    %s37 = sphi 0, %s36
    %s53 = sphi 0, %s37
    %s57 = sphi 0, %s57
    %s59 = sphi 0, %s57
    %s60 = sphi 0, %s59
    %s74 = sphi 0, %s60
    %s78 = sphi 0, %s78
    %s80 = sphi 0, %s78
    %s81 = sphi 0, %s80
    %s95 = sphi 0, %s81
    %s103 = sphi 0, %s105
    %s106 = sphi 0, %s103
    %s107 = sphi 0, %s106
    %s123 = sphi 0, %s107
  $region4: #{double_conv_forward.5} parent=0 // loop_header_branch
    %12 = sbr.rel (%p10) target = $region8
  $region5: #{double_conv_forward.5} parent=0 // loop_body
    %s14 = ssub.s32 %s9, 1
    %s15 = ssub.s32 %s9, 2
    %s22 = sadd.s32 1, %s17
    %p23 = scmp.ge.s32.totalorder %s22, 1
    %s24 = scalar_select %p23, 0, %s22
    %s25 = sadd.s32 1, %s16
    %s26 = scalar_select %p23, %s25, %s16
    %p27 = scmp.ge.s32.totalorder %s26, 2
    %s28 = scalar_select %p27, 0, %s26
    %s29 = ssub.s32 %s16, %s28
    %s30 = ssub.s32 %s17, %s24
    %s31 = sor.u32 %s29, %s30
    %p32 = scmp.eq.s32.totalorder %s31, 0
    %s34 = sadd.s32 %s33, 1
    %s35 = scalar_select %p32, %s33, %s34
    %p38 = pneg %p32
    %p39 = scmp.eq.s32.totalorder %s9, 1
    %p40 = por %p38, %p39
    %p41 = scmp.ne.s32.totalorder %s33, %s36
    %p42 = scmp.eq.s32.totalorder %s9, 0
    %p43 = por %p41, %p42
    %p44 = scmp.ne.s32.totalorder %s33, %s36
    %p45 = scmp.eq.s32.totalorder %s14, 1
    %p46 = por %p44, %p45
    %p47 = scmp.ne.s32.totalorder %s36, %s37
    %p48 = scmp.eq.s32.totalorder %s14, 0
    %p49 = por %p47, %p48
    %p50 = scmp.ne.s32.totalorder %s36, %s37
    %p51 = scmp.eq.s32.totalorder %s15, 1
    %p52 = por %p50, %p51
    %p54 = scmp.ne.s32.totalorder %s37, %s53
    %p55 = scmp.eq.s32.totalorder %s15, 0
    %p56 = por %p54, %p55
    %s58 = sadd.s32 %s57, 1
    %p61 = scmp.eq.s32.totalorder %s9, 1
    %p62 = scmp.ne.s32.totalorder %s57, %s59
    %p63 = scmp.eq.s32.totalorder %s9, 0
    %p64 = por %p62, %p63
    %p65 = scmp.ne.s32.totalorder %s57, %s59
    %p66 = scmp.eq.s32.totalorder %s14, 1
    %p67 = por %p65, %p66
    %p68 = scmp.ne.s32.totalorder %s59, %s60
    %p69 = scmp.eq.s32.totalorder %s14, 0
    %p70 = por %p68, %p69
    %p71 = scmp.ne.s32.totalorder %s59, %s60
    %p72 = scmp.eq.s32.totalorder %s15, 1
    %p73 = por %p71, %p72
    %p75 = scmp.ne.s32.totalorder %s60, %s74
    %p76 = scmp.eq.s32.totalorder %s15, 0
    %p77 = por %p75, %p76
    %s79 = sadd.s32 %s78, 1
    %p82 = scmp.eq.s32.totalorder %s9, 1
    %p83 = scmp.ne.s32.totalorder %s78, %s80
    %p84 = scmp.eq.s32.totalorder %s9, 0
    %p85 = por %p83, %p84
    %p86 = scmp.ne.s32.totalorder %s78, %s80
    %p87 = scmp.eq.s32.totalorder %s14, 1
    %p88 = por %p86, %p87
    %p89 = scmp.ne.s32.totalorder %s80, %s81
    %p90 = scmp.eq.s32.totalorder %s14, 0
    %p91 = por %p89, %p90
    %p92 = scmp.ne.s32.totalorder %s80, %s81
    %p93 = scmp.eq.s32.totalorder %s15, 1
    %p94 = por %p92, %p93
    %p96 = scmp.ne.s32.totalorder %s81, %s95
    %p97 = scmp.eq.s32.totalorder %s15, 0
    %p98 = por %p96, %p97
    %s99 = ssub.s32 %s16, %s28
    %s100 = ssub.s32 %s17, %s24
    %s101 = sor.u32 %s99, %s100
    %p102 = scmp.eq.s32.totalorder %s101, 0
    %s104 = sadd.s32 %s103, 1
    %s105 = scalar_select %p102, %s103, %s104
    %p108 = pneg %p102
    %p109 = scmp.eq.s32.totalorder %s9, 1
    %p110 = por %p108, %p109
    %p111 = scmp.ne.s32.totalorder %s103, %s106
    %p112 = scmp.eq.s32.totalorder %s9, 0
    %p113 = por %p111, %p112
    %p114 = scmp.ne.s32.totalorder %s103, %s106
    %p115 = scmp.eq.s32.totalorder %s14, 1
    %p116 = por %p114, %p115
    %p117 = scmp.ne.s32.totalorder %s106, %s107
    %p118 = scmp.eq.s32.totalorder %s14, 0
    %p119 = por %p117, %p118
    %p120 = scmp.ne.s32.totalorder %s106, %s107
    %p121 = scmp.eq.s32.totalorder %s15, 1
    %p122 = por %p120, %p121
    %p124 = scmp.ne.s32.totalorder %s107, %s123
    %p125 = scmp.eq.s32.totalorder %s15, 0
    %p126 = por %p124, %p125
    %p127 = scmp.le.s32.totalorder 1, %s9
    %p128 = scmp.lt.s32.totalorder %s9, 3
    %p129 = pnand %p127, %p128
    %p130 = pneg %p129
    // Predicated region
    $region9: #{double_conv_forward.5} parent=5 // pred_check
      _
    $region10: #{double_conv_forward.5} parent=5 // pred_check_branch
      %132 = sbr.rel (%p129) target = $region12
    $region11: #{double_conv_forward.5} parent=5 // pred_region
      %s133 = ssub.s32 %s9, 1
      // Predicated region
      $region13: #{double_conv_forward.5} parent=11 // pred_check
        %p134 = pneg %p70
      $region14: #{double_conv_forward.5} parent=11 // pred_check_branch
        %136 = sbr.rel (%p134) target = $region16
      $region15: #{double_conv_forward.5} parent=11 // pred_region
        _
      $region16: #{double_conv_forward.5} parent=11 // pred_fallthru
        _
      // Predicated region
      $region17: #{double_conv_forward.5} parent=11 // pred_check
        %p137 = pneg %p91
      $region18: #{double_conv_forward.5} parent=11 // pred_check_branch
        %139 = sbr.rel (%p137) target = $region20
      $region19: #{double_conv_forward.5} parent=11 // pred_region
        _
      $region20: #{double_conv_forward.5} parent=11 // pred_fallthru
        _
    $region12: #{double_conv_forward.5} parent=5 // pred_fallthru
      _
    %p140 = scmp.lt.s32.totalorder %s9, 2
    // Predicated region
    $region21: #{double_conv_forward.5} parent=5 // pred_check
      %p141 = pneg %p140
    $region22: #{double_conv_forward.5} parent=5 // pred_check_branch
      %143 = sbr.rel (%p141) target = $region24
    $region23: #{double_conv_forward.5} parent=5 // pred_region
      // Predicated region
      $region25: #{double_conv_forward.5} parent=23 // pred_check
        %p144 = pneg %p43
      $region26: #{double_conv_forward.5} parent=23 // pred_check_branch
        %146 = sbr.rel (%p144) target = $region28
      $region27: #{double_conv_forward.5} parent=23 // pred_region
        %s147 = smul.u32 4, %s17
        %p148 = scmp.lt.s32.totalorder %s16, 1
        %s149 = scalar_select %p148, %s16, 1
        %p150 = scmp.lt.s32.totalorder %s147, 3
        %s151 = scalar_select %p150, %s147, 3
        %s152 = smul.addr %s149, 4
        %s153 = sadd.s32 %s151, %s152
        %s154 = smul.addr %s153, 4
        %s155 = scalar_lea.vmem %s0, %s154
        %s156 = smul.u32 4, %s17
      $region28: #{double_conv_forward.5} parent=23 // pred_fallthru
        _
    $region24: #{double_conv_forward.5} parent=5 // pred_fallthru
      _
    %p157 = scmp.le.s32.totalorder 1, %s9
    %p158 = scmp.lt.s32.totalorder %s9, 3
    %p159 = pnand %p157, %p158
    %p160 = pneg %p159
    // Predicated region
    $region29: #{double_conv_forward.5} parent=5 // pred_check
      _
    $region30: #{double_conv_forward.5} parent=5 // pred_check_branch
      %162 = sbr.rel (%p159) target = $region32
    $region31: #{double_conv_forward.5} parent=5 // pred_region
      %s163 = ssub.s32 %s9, 1
      %s164 = smul.u32 4, %s19
      %p165 = scmp.lt.s32.totalorder %s18, 1
      %s166 = scalar_select %p165, %s18, 1
      %p167 = scmp.lt.s32.totalorder %s164, 3
      %s168 = scalar_select %p167, %s164, 3
      %s169 = smul.addr %s166, 4
      %s170 = sadd.s32 %s168, %s169
      %s171 = smul.addr %s170, 4
      %s172 = scalar_lea.vmem %s0, %s171
      %p173 = pneg %p49
      %p174 = pneg %p46
      %p175 = pneg %p70
      %p176 = pneg %p67
      %p177 = pneg %p91
      %p178 = pneg %p88
      %p179 = pneg %p119
      %p180 = pneg %p116
      %s181 = smul.u32 4, %s19
      %p182 = scmp.lt.s32.totalorder %s18, 1
      %s183 = scalar_select %p182, %s18, 1
      %p184 = scmp.lt.s32.totalorder %s181, 3
      %s185 = scalar_select %p184, %s181, 3
      %s186 = smul.addr %s183, 4
      %s187 = sadd.s32 %s185, %s186
      %s188 = smul.addr %s187, 8
      %s189 = scalar_lea.vmem %s3, %s188
      %s190 = smul.u32 4, %s19
      %p191 = scmp.lt.s32.totalorder %s18, 1
      %s192 = scalar_select %p191, %s18, 1
      %p193 = scmp.lt.s32.totalorder %s190, 3
      %s194 = scalar_select %p193, %s190, 3
      %s195 = smul.addr %s192, 4
      %s196 = sadd.s32 %s194, %s195
      %s197 = smul.addr %s196, 4
      %s198 = scalar_lea.vmem %s0, %s197
      %s199 = smul.u32 4, %s19
      %s200 = smul.u32 4, %s19
      %p201 = scmp.lt.s32.totalorder %s18, 1
      %s202 = scalar_select %p201, %s18, 1
      %p203 = scmp.lt.s32.totalorder %s200, 3
      %s204 = scalar_select %p203, %s200, 3
      %s205 = smul.addr %s202, 4
      %s206 = sadd.s32 %s204, %s205
      %s207 = smul.addr %s206, 8
      %s208 = scalar_lea.vmem %s3, %s207
      %s209 = smul.u32 4, %s19
      %v210 = vld [vmem:[%s198] sm:$0xff]
      %v211 = vld [vmem:[%s198 + $0x8] sm:$0xff]
      %v212 = vunpack.c.l.bf16 %v210
      %v213 = vunpack.c.h.bf16 %v210
      %v214 = vunpack.c.l.bf16 %v211
      %v215 = vunpack.c.h.bf16 %v211
      %v216 = vld [vmem:[%s1] sm:$0xff]
      %218 = vset.pattern.permute.xlu0 0
      %219 = vperm.xlu0 %218, %v216
      %v220 = vpop.permute.xlu0 %219
      %v222 = vmul.f32 %v212, %v220
      %v223 = vmul.f32 %v213, %v220
      %v224 = vmul.f32 %v214, %v220
      %v225 = vmul.f32 %v215, %v220
      %v226 = vld [vmem:[%s2] sm:$0xff]
      %228 = vset.pattern.permute.xlu0 0
      %229 = vperm.xlu0 %228, %v226
      %v230 = vpop.permute.xlu0 %229
      %v232 = vadd.f32 %v222, %v230
      %v233 = vadd.f32 %v223, %v230
      %v234 = vadd.f32 %v224, %v230
      %v235 = vadd.f32 %v225, %v230
      %v236 = vmax.f32 %v232, 0.0
      %v237 = vmax.f32 %v233, 0.0
      %v238 = vmax.f32 %v234, 0.0
      %v239 = vmax.f32 %v235, 0.0
      %240 = vst [vmem:[%s208] sm:$0xff] %v236
      %241 = vst [vmem:[%s208 + $0x8] sm:$0xff] %v237
      %242 = vst [vmem:[%s208 + $0x10] sm:$0xff] %v238
      %243 = vst [vmem:[%s208 + $0x18] sm:$0xff] %v239
      %s244 = smul.u32 4, %s19
      %p245 = scmp.lt.s32.totalorder %s18, 1
      %s246 = scalar_select %p245, %s18, 1
      %p247 = scmp.lt.s32.totalorder %s244, 3
      %s248 = scalar_select %p247, %s244, 3
      %s249 = smul.addr %s246, 4
      %s250 = sadd.s32 %s248, %s249
      %s251 = smul.addr %s250, 8
      %s252 = scalar_lea.vmem %s3, %s251
      // Predicated region
      $region33: #{double_conv_forward.5} parent=31 // pred_check
        %p253 = pneg %p116
      $region34: #{double_conv_forward.5} parent=31 // pred_check_branch
        %255 = sbr.rel (%p253) target = $region36
      $region35: #{double_conv_forward.5} parent=31 // pred_region
        %s256 = smul.u32 4, %s19
      $region36: #{double_conv_forward.5} parent=31 // pred_fallthru
        _
    $region32: #{double_conv_forward.5} parent=5 // pred_fallthru
      _
    %p257 = scmp.le.s32.totalorder 2, %s9
    // Predicated region
    $region37: #{double_conv_forward.5} parent=5 // pred_check
      %p258 = pneg %p257
    $region38: #{double_conv_forward.5} parent=5 // pred_check_branch
      %260 = sbr.rel (%p258) target = $region40
    $region39: #{double_conv_forward.5} parent=5 // pred_region
      %s261 = ssub.s32 %s9, 2
      // Predicated region
      $region41: #{double_conv_forward.5} parent=39 // pred_check
        %p262 = pneg %p122
      $region42: #{double_conv_forward.5} parent=39 // pred_check_branch
        %264 = sbr.rel (%p262) target = $region44
      $region43: #{double_conv_forward.5} parent=39 // pred_region
        %s265 = smul.u32 4, %s21
        %p266 = scmp.lt.s32.totalorder %s20, 1
        %s267 = scalar_select %p266, %s20, 1
        %p268 = scmp.lt.s32.totalorder %s265, 3
        %s269 = scalar_select %p268, %s265, 3
        %s270 = smul.addr %s267, 4
        %s271 = sadd.s32 %s269, %s270
        %s272 = smul.addr %s271, 8
        %s273 = scalar_lea.vmem %s3, %s272
      $region44: #{double_conv_forward.5} parent=39 // pred_fallthru
        _
    $region40: #{double_conv_forward.5} parent=5 // pred_fallthru
      _
  $region6: #{double_conv_forward.5} parent=0 // loop_footer
    %s13 = sadd.s32 1, %s9
  $region7: #{double_conv_forward.5} parent=0 // loop_footer_branch
    %8 = sbr.rel target = $region3
  $region8: #{double_conv_forward.5} parent=0 // loop_exit
    _

// kernel: double_conv_forward.3
$region0: #{double_conv_forward.3}
  #allocation0 [shape = 'u32[]', space=smem, size = 0x4, offset = 0x4, fixed_abs, tag = 'smem constant byte address 0x4 - core index']
  #allocation1 [shape = 'u32[144,128]{1,0:T(1,128)}', space=vmem, size = 0x12000, scoped, tag = 'internal scratch']
  %s0 = inlined_call_operand.vmem [shape: bf16[2,4,512], index: 0, kind: input, shape index: {}]
  %s1 = inlined_call_operand.vmem [shape: bf16[27,4,4], index: 1, kind: input, shape index: {}]
  %s2 = inlined_call_operand.vmem [shape: s32[3,512], index: 2, kind: input, shape index: {}]
  %s3 = inlined_call_operand.vmem [shape: bf16[2,4,512], index: 3, kind: output, shape index: {0}]
  %s4 = inlined_call_operand.vmem [shape: f32[2,4,1], index: 4, kind: output, shape index: {1}]
  %s5 = inlined_call_operand.vmem [shape: f32[2,4,1], index: 5, kind: output, shape index: {2}]
  %6 = xla_tuple %s3, %s4, %s5
  %s7 = sld [smem:[#allocation0]]
  $region61: #{double_conv_forward.3} parent=0
    _
  %s9 = ssub.s32 1, %s7
  %s10 = scalar_select 0, %s9, %s7
  loop: start=0, step=1, limit=4
  $region2: #{double_conv_forward.3} parent=0 // loop_pre_header
    _
  $region3: #{double_conv_forward.3} parent=0 // loop_header
    %s12 = sphi 0, %s16
    %p13 = scmp.ge.s32.totalorder %s12, 4
    %s22 = sphi 0, %s24
    %s25 = sphi 0, %s22
    %s26 = sphi 0, %s25
    %s42 = sphi 0, %s26
    %s46 = sphi 0, %s46
    %s48 = sphi 0, %s46
    %s49 = sphi 0, %s48
    %s63 = sphi 0, %s49
    %s67 = sphi 0, %s67
    %s69 = sphi 0, %s67
    %s70 = sphi 0, %s69
    %s84 = sphi 0, %s70
    %s90 = sphi 0, %s92
    %s93 = sphi 0, %s90
    %s94 = sphi 0, %s93
    %s110 = sphi 0, %s94
    %s116 = sphi 0, %s118
    %s119 = sphi 0, %s116
    %s120 = sphi 0, %s119
    %s136 = sphi 0, %s120
    %s142 = sphi 0, %s144
    %s145 = sphi 0, %s142
    %s146 = sphi 0, %s145
    %s162 = sphi 0, %s146
  $region4: #{double_conv_forward.3} parent=0 // loop_header_branch
    %15 = sbr.rel (%p13) target = $region8
  $region5: #{double_conv_forward.3} parent=0 // loop_body
    %s17 = ssub.s32 %s12, 1
    %s18 = ssub.s32 %s12, 2
    %s19 = sadd.s32 %s12, 1
    %s20 = ssub.s32 %s12, %s19
    %p21 = scmp.eq.s32.totalorder %s20, 0
    %s23 = sadd.s32 %s22, 1
    %s24 = scalar_select %p21, %s22, %s23
    %p27 = pneg %p21
    %p28 = scmp.eq.s32.totalorder %s12, 1
    %p29 = por %p27, %p28
    %p30 = scmp.ne.s32.totalorder %s22, %s25
    %p31 = scmp.eq.s32.totalorder %s12, 0
    %p32 = por %p30, %p31
    %p33 = scmp.ne.s32.totalorder %s22, %s25
    %p34 = scmp.eq.s32.totalorder %s17, 1
    %p35 = por %p33, %p34
    %p36 = scmp.ne.s32.totalorder %s25, %s26
    %p37 = scmp.eq.s32.totalorder %s17, 0
    %p38 = por %p36, %p37
    %p39 = scmp.ne.s32.totalorder %s25, %s26
    %p40 = scmp.eq.s32.totalorder %s18, 1
    %p41 = por %p39, %p40
    %p43 = scmp.ne.s32.totalorder %s26, %s42
    %p44 = scmp.eq.s32.totalorder %s18, 0
    %p45 = por %p43, %p44
    %s47 = sadd.s32 %s46, 1
    %p50 = scmp.eq.s32.totalorder %s12, 1
    %p51 = scmp.ne.s32.totalorder %s46, %s48
    %p52 = scmp.eq.s32.totalorder %s12, 0
    %p53 = por %p51, %p52
    %p54 = scmp.ne.s32.totalorder %s46, %s48
    %p55 = scmp.eq.s32.totalorder %s17, 1
    %p56 = por %p54, %p55
    %p57 = scmp.ne.s32.totalorder %s48, %s49
    %p58 = scmp.eq.s32.totalorder %s17, 0
    %p59 = por %p57, %p58
    %p60 = scmp.ne.s32.totalorder %s48, %s49
    %p61 = scmp.eq.s32.totalorder %s18, 1
    %p62 = por %p60, %p61
    %p64 = scmp.ne.s32.totalorder %s49, %s63
    %p65 = scmp.eq.s32.totalorder %s18, 0
    %p66 = por %p64, %p65
    %s68 = sadd.s32 %s67, 1
    %p71 = scmp.eq.s32.totalorder %s12, 1
    %p72 = scmp.ne.s32.totalorder %s67, %s69
    %p73 = scmp.eq.s32.totalorder %s12, 0
    %p74 = por %p72, %p73
    %p75 = scmp.ne.s32.totalorder %s67, %s69
    %p76 = scmp.eq.s32.totalorder %s17, 1
    %p77 = por %p75, %p76
    %p78 = scmp.ne.s32.totalorder %s69, %s70
    %p79 = scmp.eq.s32.totalorder %s17, 0
    %p80 = por %p78, %p79
    %p81 = scmp.ne.s32.totalorder %s69, %s70
    %p82 = scmp.eq.s32.totalorder %s18, 1
    %p83 = por %p81, %p82
    %p85 = scmp.ne.s32.totalorder %s70, %s84
    %p86 = scmp.eq.s32.totalorder %s18, 0
    %p87 = por %p85, %p86
    %s88 = ssub.s32 %s12, %s19
    %p89 = scmp.eq.s32.totalorder %s88, 0
    %s91 = sadd.s32 %s90, 1
    %s92 = scalar_select %p89, %s90, %s91
    %p95 = pneg %p89
    %p96 = scmp.eq.s32.totalorder %s12, 1
    %p97 = por %p95, %p96
    %p98 = scmp.ne.s32.totalorder %s90, %s93
    %p99 = scmp.eq.s32.totalorder %s12, 0
    %p100 = por %p98, %p99
    %p101 = scmp.ne.s32.totalorder %s90, %s93
    %p102 = scmp.eq.s32.totalorder %s17, 1
    %p103 = por %p101, %p102
    %p104 = scmp.ne.s32.totalorder %s93, %s94
    %p105 = scmp.eq.s32.totalorder %s17, 0
    %p106 = por %p104, %p105
    %p107 = scmp.ne.s32.totalorder %s93, %s94
    %p108 = scmp.eq.s32.totalorder %s18, 1
    %p109 = por %p107, %p108
    %p111 = scmp.ne.s32.totalorder %s94, %s110
    %p112 = scmp.eq.s32.totalorder %s18, 0
    %p113 = por %p111, %p112
    %s114 = ssub.s32 %s12, %s19
    %p115 = scmp.eq.s32.totalorder %s114, 0
    %s117 = sadd.s32 %s116, 1
    %s118 = scalar_select %p115, %s116, %s117
    %p121 = pneg %p115
    %p122 = scmp.eq.s32.totalorder %s12, 1
    %p123 = por %p121, %p122
    %p124 = scmp.ne.s32.totalorder %s116, %s119
    %p125 = scmp.eq.s32.totalorder %s12, 0
    %p126 = por %p124, %p125
    %p127 = scmp.ne.s32.totalorder %s116, %s119
    %p128 = scmp.eq.s32.totalorder %s17, 1
    %p129 = por %p127, %p128
    %p130 = scmp.ne.s32.totalorder %s119, %s120
    %p131 = scmp.eq.s32.totalorder %s17, 0
    %p132 = por %p130, %p131
    %p133 = scmp.ne.s32.totalorder %s119, %s120
    %p134 = scmp.eq.s32.totalorder %s18, 1
    %p135 = por %p133, %p134
    %p137 = scmp.ne.s32.totalorder %s120, %s136
    %p138 = scmp.eq.s32.totalorder %s18, 0
    %p139 = por %p137, %p138
    %s140 = ssub.s32 %s12, %s19
    %p141 = scmp.eq.s32.totalorder %s140, 0
    %s143 = sadd.s32 %s142, 1
    %s144 = scalar_select %p141, %s142, %s143
    %p147 = pneg %p141
    %p148 = scmp.eq.s32.totalorder %s12, 1
    %p149 = por %p147, %p148
    %p150 = scmp.ne.s32.totalorder %s142, %s145
    %p151 = scmp.eq.s32.totalorder %s12, 0
    %p152 = por %p150, %p151
    %p153 = scmp.ne.s32.totalorder %s142, %s145
    %p154 = scmp.eq.s32.totalorder %s17, 1
    %p155 = por %p153, %p154
    %p156 = scmp.ne.s32.totalorder %s145, %s146
    %p157 = scmp.eq.s32.totalorder %s17, 0
    %p158 = por %p156, %p157
    %p159 = scmp.ne.s32.totalorder %s145, %s146
    %p160 = scmp.eq.s32.totalorder %s18, 1
    %p161 = por %p159, %p160
    %p163 = scmp.ne.s32.totalorder %s146, %s162
    %p164 = scmp.eq.s32.totalorder %s18, 0
    %p165 = por %p163, %p164
    %p166 = scmp.le.s32.totalorder 1, %s12
    %p167 = scmp.lt.s32.totalorder %s12, 3
    %p168 = pnand %p166, %p167
    %p169 = pneg %p168
    // Predicated region
    $region9: #{double_conv_forward.3} parent=5 // pred_check
      _
    $region10: #{double_conv_forward.3} parent=5 // pred_check_branch
      %171 = sbr.rel (%p168) target = $region12
    $region11: #{double_conv_forward.3} parent=5 // pred_region
      %s172 = ssub.s32 %s12, 1
      // Predicated region
      $region13: #{double_conv_forward.3} parent=11 // pred_check
        %p173 = pneg %p59
      $region14: #{double_conv_forward.3} parent=11 // pred_check_branch
        %175 = sbr.rel (%p173) target = $region16
      $region15: #{double_conv_forward.3} parent=11 // pred_region
        _
      $region16: #{double_conv_forward.3} parent=11 // pred_fallthru
        _
      // Predicated region
      $region17: #{double_conv_forward.3} parent=11 // pred_check
        %p176 = pneg %p80
      $region18: #{double_conv_forward.3} parent=11 // pred_check_branch
        %178 = sbr.rel (%p176) target = $region20
      $region19: #{double_conv_forward.3} parent=11 // pred_region
        _
      $region20: #{double_conv_forward.3} parent=11 // pred_fallthru
        _
    $region12: #{double_conv_forward.3} parent=5 // pred_fallthru
      _
    %p179 = scmp.lt.s32.totalorder %s12, 2
    // Predicated region
    $region21: #{double_conv_forward.3} parent=5 // pred_check
      %p180 = pneg %p179
    $region22: #{double_conv_forward.3} parent=5 // pred_check_branch
      %182 = sbr.rel (%p180) target = $region24
    $region23: #{double_conv_forward.3} parent=5 // pred_region
      // Predicated region
      $region25: #{double_conv_forward.3} parent=23 // pred_check
        %p183 = pneg %p32
      $region26: #{double_conv_forward.3} parent=23 // pred_check_branch
        %185 = sbr.rel (%p183) target = $region28
      $region27: #{double_conv_forward.3} parent=23 // pred_region
        %p186 = scmp.lt.s32.totalorder %s12, 1
        %s187 = scalar_select %p186, %s12, 1
        %s188 = smul.addr %s187, 4
        %s189 = smul.addr %s188, 2
        %s190 = scalar_lea.vmem %s0, %s189
      $region28: #{double_conv_forward.3} parent=23 // pred_fallthru
        _
    $region24: #{double_conv_forward.3} parent=5 // pred_fallthru
      _
    %p191 = scmp.le.s32.totalorder 1, %s12
    %p192 = scmp.lt.s32.totalorder %s12, 3
    %p193 = pnand %p191, %p192
    %p194 = pneg %p193
    // Predicated region
    $region29: #{double_conv_forward.3} parent=5 // pred_check
      _
    $region30: #{double_conv_forward.3} parent=5 // pred_check_branch
      %196 = sbr.rel (%p193) target = $region32
    $region31: #{double_conv_forward.3} parent=5 // pred_region
      %s197 = ssub.s32 %s12, 1
      %p198 = scmp.lt.s32.totalorder %s17, 1
      %s199 = scalar_select %p198, %s17, 1
      %s200 = smul.addr %s199, 4
      %s201 = smul.addr %s200, 2
      %s202 = scalar_lea.vmem %s0, %s201
      %p203 = pneg %p38
      %p204 = pneg %p35
      %p205 = pneg %p59
      %p206 = pneg %p56
      %p207 = pneg %p80
      %p208 = pneg %p77
      %p209 = pneg %p106
      %p210 = pneg %p103
      %p211 = scmp.lt.s32.totalorder %s17, 1
      %s212 = scalar_select %p211, %s17, 1
      %s213 = smul.addr %s212, 4
      %s214 = smul.addr %s213, 2
      %s215 = scalar_lea.vmem %s3, %s214
      %p216 = pneg %p132
      %p217 = pneg %p129
      %p218 = scmp.lt.s32.totalorder %s17, 1
      %s219 = scalar_select %p218, %s17, 1
      %s220 = smul.addr %s219, 4
      %s221 = scalar_lea.vmem %s4, %s220
      %p222 = pneg %p158
      %p223 = pneg %p155
      %p224 = scmp.lt.s32.totalorder %s17, 1
      %s225 = scalar_select %p224, %s17, 1
      %s226 = smul.addr %s225, 4
      %s227 = scalar_lea.vmem %s5, %s226
      %p228 = scmp.lt.s32.totalorder %s17, 1
      %s229 = scalar_select %p228, %s17, 1
      %s230 = smul.addr %s229, 4
      %s231 = smul.addr %s230, 2
      %s232 = scalar_lea.vmem %s0, %s231
      %p233 = scmp.lt.s32.totalorder %s17, 1
      %s234 = scalar_select %p233, %s17, 1
      %s235 = smul.addr %s234, 4
      %s236 = smul.addr %s235, 2
      %s237 = scalar_lea.vmem %s3, %s236
      %p238 = scmp.lt.s32.totalorder %s17, 1
      %s239 = scalar_select %p238, %s17, 1
      %s240 = smul.addr %s239, 4
      %s241 = scalar_lea.vmem %s4, %s240
      %p242 = scmp.lt.s32.totalorder %s17, 1
      %s243 = scalar_select %p242, %s17, 1
      %s244 = smul.addr %s243, 4
      %s245 = scalar_lea.vmem %s5, %s244
      %v247 = vld [vmem:[%s232] sm:$0xff]
      %v248 = vunpack.c.l.bf16 %v247
      %v249 = vunpack.c.h.bf16 %v247
      %v250 = vld [vmem:[%s2] ss:$4 sm:$0xf]
      %s251 = scalar_lea.vmem %s2, 1
      %v252 = vld [vmem:[%s251] ss:$4 sm:$0xf]
      %s253 = scalar_lea.vmem %s2, 2
      %v254 = vld [vmem:[%s253] ss:$4 sm:$0xf]
      %vm255 = vcmp.ge.s32.totalorder %v250, 1
      %vm256 = vcmp.lt.s32.totalorder %v250, 7
      %vm257 = vcmp.ge.s32.totalorder %v252, 1
      %vm258 = vcmp.lt.s32.totalorder %v252, 7
      %vm259 = vcmp.ge.s32.totalorder %v254, 1
      %vm260 = vcmp.lt.s32.totalorder %v254, 7
      %v261 = vld [vmem:[%s1] sm:$0x3]
      %v264 = vcombine.high %v248, %v248
      %v265 = vcombine.high %v249, %v249
      %268 = vrot.lane.b32.xlu0 %v248, 73
      %v269 = vpop.permute.xlu0 %268
      %270 = vrot.lane.b32.xlu0 %v264, 73
      %v271 = vpop.permute.xlu0 %270
      %272 = vrot.lane.b32.xlu0 %v249, 73
      %v273 = vpop.permute.xlu0 %272
      %274 = vrot.lane.b32.xlu0 %v265, 73
      %v275 = vpop.permute.xlu0 %274
      %v276 = vlaneseq
      %v277 = vand.u32 %v276, 127
      %vm278 = vcmp.lt.s32.totalorder %v277, 73
      %v279 = vsel %vm278, %v273, %v275
      %v280 = vsel %vm278, %v271, %v273
      %v281 = vsel %vm278, %v269, %v271
      %v282 = vsel %vm278, %v275, %v269
      %vm283 = vmand %vm255, %vm257
      %vm284 = vmand %vm283, %vm259
      %v285 = vsel %vm284, 1, 0
      %v286 = vcvt.s32.f32 %v285
      %v288 = vlaneseq
      %v289 = vshrl.u32 %v288, 7
      %v290 = vsub.s32 0, %v289
      %v291 = vrot.slane %v286, %v290
      %v292 = vlaneseq
      %v293 = vshrl.u32 %v292, 7
      %v294 = vsub.s32 1, %v293
      %v295 = vrot.slane %v286, %v294
      %v296 = vlaneseq
      %v297 = vshrl.u32 %v296, 7
      %v298 = vsub.s32 2, %v297
      %v299 = vrot.slane %v286, %v298
      %v300 = vlaneseq
      %v301 = vshrl.u32 %v300, 7
      %v302 = vsub.s32 3, %v301
      %v303 = vrot.slane %v286, %v302
      %v308 = vmul.f32 %v282, %v291
      %v309 = vmul.f32 %v281, %v295
      %v310 = vmul.f32 %v280, %v299
      %v311 = vmul.f32 %v279, %v303
      %v312 = vpack.c.bf16 %v308, %v308
      %v313 = vpack.c.bf16 %v309, %v309
      %v314 = vpack.c.bf16 %v310, %v310
      %v315 = vpack.c.bf16 %v311, %v311
      %s316 = scalar_lea.vmem %s1, 2
      %v317 = vld [vmem:[%s316] sm:$0x3]
      %318 = vrot.lane.b32.xlu0 %v248, 72
      %v319 = vpop.permute.xlu0 %318
      %320 = vrot.lane.b32.xlu0 %v264, 72
      %v321 = vpop.permute.xlu0 %320
      %322 = vrot.lane.b32.xlu0 %v249, 72
      %v323 = vpop.permute.xlu0 %322
      %324 = vrot.lane.b32.xlu0 %v265, 72
      %v325 = vpop.permute.xlu0 %324
      %vm326 = vcmp.lt.s32.totalorder %v277, 72
      %v327 = vsel %vm326, %v323, %v325
      %v328 = vsel %vm326, %v321, %v323
      %v329 = vsel %vm326, %v319, %v321
      %v330 = vsel %vm326, %v325, %v319
      %v331 = vsel %vm283, 1, 0
      %v332 = vcvt.s32.f32 %v331
      %v334 = vlaneseq
      %v335 = vshrl.u32 %v334, 7
      %v336 = vsub.s32 0, %v335
      %v337 = vrot.slane %v332, %v336
      %v338 = vlaneseq
      %v339 = vshrl.u32 %v338, 7
      %v340 = vsub.s32 1, %v339
      %v341 = vrot.slane %v332, %v340
      %v342 = vlaneseq
      %v343 = vshrl.u32 %v342, 7
      %v344 = vsub.s32 2, %v343
      %v345 = vrot.slane %v332, %v344
      %v346 = vlaneseq
      %v347 = vshrl.u32 %v346, 7
      %v348 = vsub.s32 3, %v347
      %v349 = vrot.slane %v332, %v348
      %v354 = vmul.f32 %v330, %v337
      %v355 = vmul.f32 %v329, %v341
      %v356 = vmul.f32 %v328, %v345
      %v357 = vmul.f32 %v327, %v349
      %v358 = vpack.c.bf16 %v354, %v354
      %v359 = vpack.c.bf16 %v355, %v355
      %v360 = vpack.c.bf16 %v356, %v356
      %v361 = vpack.c.bf16 %v357, %v357
      %vm362 = vcmask 31744
      %v364 = vsel %vm362, %v317, 0
      %vm366 = vcmask 1041408
      %v368 = vsel %vm366, %v358, 0
      %v371 = vsel %vm366, %v359, 0
      %v374 = vsel %vm366, %v360, 0
      %v377 = vsel %vm366, %v361, 0
      %379 = vmatprep.subr.bf16.mxu0 0
      %380 = vmatpush1.bf16.msra.mxu0 0
      %381 = vmatprep.subr.bf16.mxu0 0
      %382 = vmatpush1.bf16.msra.mxu0 0
      %383 = vmatprep.subr.bf16.mxu0 0
      %384 = vmatpush1.bf16.msra.mxu0 0
      %385 = vmatprep.subr.bf16.mxu0 0
      %386 = vmatpush1.bf16.msra.mxu0 0
      %387 = vmatprep.subr.bf16.mxu0 0
      %388 = vmatpush1.bf16.msra.mxu0 0
      %389 = vmatprep.subr.bf16.mxu0 0
      %390 = vmatpush1.bf16.msra.mxu0 0
      %391 = vmatprep.subr.bf16.mxu0 0
      %392 = vmatpush1.bf16.msra.mxu0 0
      %393 = vmatprep.subr.bf16.mxu0 %v371
      %394 = vmatpush1.bf16.msra.mxu0 %v368
      %395 = vmatprep.subr.bf16.mxu0 0
      %396 = vmatpush2.bf16.msra.mxu0 0
      %397 = vmatprep.subr.bf16.mxu0 0
      %398 = vmatpush2.bf16.msra.mxu0 0
      %399 = vmatprep.subr.bf16.mxu0 0
      %400 = vmatpush2.bf16.msra.mxu0 0
      %401 = vmatprep.subr.bf16.mxu0 0
      %402 = vmatpush2.bf16.msra.mxu0 0
      %403 = vmatprep.subr.bf16.mxu0 0
      %404 = vmatpush2.bf16.msra.mxu0 0
      %405 = vmatprep.subr.bf16.mxu0 0
      %406 = vmatpush2.bf16.msra.mxu0 0
      %407 = vmatprep.subr.bf16.mxu0 0
      %408 = vmatpush2.bf16.msra.mxu0 0
      %409 = vmatprep.subr.bf16.mxu0 0
      %410 = vmatpush2.bf16.msra.mxu0 0
      %411 = vmatprep.mubr.bf16.mxu0 0
      %412 = vmatmul.mubr.bf16.gmra.mxu0 %v364
      %v413 = vpop.f32.mrf.mxu0
      %v414 = vadd.f32 0.0, %v413
      %v415 = vpop.f32.mrf.mxu0
      %v416 = vadd.f32 0.0, %v415
      %v417 = vpop.f32.mrf.mxu0
      %v418 = vpop.f32.mrf.mxu0
      %419 = vdwg.mxu0
      %420 = vmatprep.subr.bf16.mxu0 0
      %421 = vmatpush1.bf16.msra.mxu0 0
      %422 = vmatprep.subr.bf16.mxu0 0
      %423 = vmatpush1.bf16.msra.mxu0 0
      %424 = vmatprep.subr.bf16.mxu0 0
      %425 = vmatpush1.bf16.msra.mxu0 0
      %426 = vmatprep.subr.bf16.mxu0 0
      %427 = vmatpush1.bf16.msra.mxu0 0
      %428 = vmatprep.subr.bf16.mxu0 0
      %429 = vmatpush1.bf16.msra.mxu0 0
      %430 = vmatprep.subr.bf16.mxu0 0
      %431 = vmatpush1.bf16.msra.mxu0 0
      %432 = vmatprep.subr.bf16.mxu0 0
      %433 = vmatpush1.bf16.msra.mxu0 0
      %434 = vmatprep.subr.bf16.mxu0 %v377
      %435 = vmatpush1.bf16.msra.mxu0 %v374
      %436 = vmatprep.subr.bf16.mxu0 0
      %437 = vmatpush2.bf16.msra.mxu0 0
      %438 = vmatprep.subr.bf16.mxu0 0
      %439 = vmatpush2.bf16.msra.mxu0 0
      %440 = vmatprep.subr.bf16.mxu0 0
      %441 = vmatpush2.bf16.msra.mxu0 0
      %442 = vmatprep.subr.bf16.mxu0 0
      %443 = vmatpush2.bf16.msra.mxu0 0
      %444 = vmatprep.subr.bf16.mxu0 0
      %445 = vmatpush2.bf16.msra.mxu0 0
      %446 = vmatprep.subr.bf16.mxu0 0
      %447 = vmatpush2.bf16.msra.mxu0 0
      %448 = vmatprep.subr.bf16.mxu0 0
      %449 = vmatpush2.bf16.msra.mxu0 0
      %450 = vmatprep.subr.bf16.mxu0 0
      %451 = vmatpush2.bf16.msra.mxu0 0
      %452 = vmatprep.mubr.bf16.mxu0 0
      %453 = vmatmul.mubr.bf16.gmra.mxu0 %v364
      %v454 = vpop.f32.mrf.mxu0
      %v455 = vadd.f32 0.0, %v454
      %v456 = vpop.f32.mrf.mxu0
      %v457 = vadd.f32 0.0, %v456
      %v458 = vpop.f32.mrf.mxu0
      %v459 = vpop.f32.mrf.mxu0
      %460 = vdwg.mxu0
      %v462 = vsel %vm362, %v261, 0
      %v465 = vsel %vm366, %v312, 0
      %v468 = vsel %vm366, %v313, 0
      %v471 = vsel %vm366, %v314, 0
      %v474 = vsel %vm366, %v315, 0
      %476 = vmatprep.subr.bf16.mxu0 0
      %477 = vmatpush1.bf16.msra.mxu0 0
      %478 = vmatprep.subr.bf16.mxu0 0
      %479 = vmatpush1.bf16.msra.mxu0 0
      %480 = vmatprep.subr.bf16.mxu0 0
      %481 = vmatpush1.bf16.msra.mxu0 0
      %482 = vmatprep.subr.bf16.mxu0 0
      %483 = vmatpush1.bf16.msra.mxu0 0
      %484 = vmatprep.subr.bf16.mxu0 0
      %485 = vmatpush1.bf16.msra.mxu0 0
      %486 = vmatprep.subr.bf16.mxu0 0
      %487 = vmatpush1.bf16.msra.mxu0 0
      %488 = vmatprep.subr.bf16.mxu0 0
      %489 = vmatpush1.bf16.msra.mxu0 0
      %490 = vmatprep.subr.bf16.mxu0 %v468
      %491 = vmatpush1.bf16.msra.mxu0 %v465
      %492 = vmatprep.subr.bf16.mxu0 0
      %493 = vmatpush2.bf16.msra.mxu0 0
      %494 = vmatprep.subr.bf16.mxu0 0
      %495 = vmatpush2.bf16.msra.mxu0 0
      %496 = vmatprep.subr.bf16.mxu0 0
      %497 = vmatpush2.bf16.msra.mxu0 0
      %498 = vmatprep.subr.bf16.mxu0 0
      %499 = vmatpush2.bf16.msra.mxu0 0
      %500 = vmatprep.subr.bf16.mxu0 0
      %501 = vmatpush2.bf16.msra.mxu0 0
      %502 = vmatprep.subr.bf16.mxu0 0
      %503 = vmatpush2.bf16.msra.mxu0 0
      %504 = vmatprep.subr.bf16.mxu0 0
      %505 = vmatpush2.bf16.msra.mxu0 0
      %506 = vmatprep.subr.bf16.mxu0 0
      %507 = vmatpush2.bf16.msra.mxu0 0
      %508 = vmatprep.mubr.bf16.mxu0 0
      %509 = vmatmul.mubr.bf16.gmra.mxu0 %v462
      %v510 = vpop.f32.mrf.mxu0
      %v511 = vadd.f32 %v414, %v510
      %v512 = vpop.f32.mrf.mxu0
      %v513 = vadd.f32 %v416, %v512
      %v514 = vpop.f32.mrf.mxu0
      %v515 = vpop.f32.mrf.mxu0
      %516 = vdwg.mxu0
      %517 = vmatprep.subr.bf16.mxu0 0
      %518 = vmatpush1.bf16.msra.mxu0 0
      %519 = vmatprep.subr.bf16.mxu0 0
      %520 = vmatpush1.bf16.msra.mxu0 0
      %521 = vmatprep.subr.bf16.mxu0 0
      %522 = vmatpush1.bf16.msra.mxu0 0
      %523 = vmatprep.subr.bf16.mxu0 0
      %524 = vmatpush1.bf16.msra.mxu0 0
      %525 = vmatprep.subr.bf16.mxu0 0
      %526 = vmatpush1.bf16.msra.mxu0 0
      %527 = vmatprep.subr.bf16.mxu0 0
      %528 = vmatpush1.bf16.msra.mxu0 0
      %529 = vmatprep.subr.bf16.mxu0 0
      %530 = vmatpush1.bf16.msra.mxu0 0
      %531 = vmatprep.subr.bf16.mxu0 %v474
      %532 = vmatpush1.bf16.msra.mxu0 %v471
      %533 = vmatprep.subr.bf16.mxu0 0
      %534 = vmatpush2.bf16.msra.mxu0 0
      %535 = vmatprep.subr.bf16.mxu0 0
      %536 = vmatpush2.bf16.msra.mxu0 0
      %537 = vmatprep.subr.bf16.mxu0 0
      %538 = vmatpush2.bf16.msra.mxu0 0
      %539 = vmatprep.subr.bf16.mxu0 0
      %540 = vmatpush2.bf16.msra.mxu0 0
      %541 = vmatprep.subr.bf16.mxu0 0
      %542 = vmatpush2.bf16.msra.mxu0 0
      %543 = vmatprep.subr.bf16.mxu0 0
      %544 = vmatpush2.bf16.msra.mxu0 0
      %545 = vmatprep.subr.bf16.mxu0 0
      %546 = vmatpush2.bf16.msra.mxu0 0
      %547 = vmatprep.subr.bf16.mxu0 0
      %548 = vmatpush2.bf16.msra.mxu0 0
      %549 = vmatprep.mubr.bf16.mxu0 0
      %550 = vmatmul.mubr.bf16.gmra.mxu0 %v462
      %v551 = vpop.f32.mrf.mxu0
      %v552 = vadd.f32 %v455, %v551
      %v553 = vpop.f32.mrf.mxu0
      %v554 = vadd.f32 %v457, %v553
      %v555 = vpop.f32.mrf.mxu0
      %v556 = vpop.f32.mrf.mxu0
      %557 = vdwg.mxu0
      %s558 = scalar_lea.vmem %s1, 4
      %v559 = vld [vmem:[%s558] sm:$0x3]
      %560 = vrot.lane.b32.xlu0 %v248, 71
      %v561 = vpop.permute.xlu0 %560
      %562 = vrot.lane.b32.xlu0 %v264, 71
      %v563 = vpop.permute.xlu0 %562
      %564 = vrot.lane.b32.xlu0 %v249, 71
      %v565 = vpop.permute.xlu0 %564
      %566 = vrot.lane.b32.xlu0 %v265, 71
      %v567 = vpop.permute.xlu0 %566
      %vm568 = vcmp.lt.s32.totalorder %v277, 71
      %v569 = vsel %vm568, %v565, %v567
      %v570 = vsel %vm568, %v563, %v565
      %v571 = vsel %vm568, %v561, %v563
      %v572 = vsel %vm568, %v567, %v561
      %vm573 = vmand %vm283, %vm260
      %v574 = vsel %vm573, 1, 0
      %v575 = vcvt.s32.f32 %v574
      %v577 = vlaneseq
      %v578 = vshrl.u32 %v577, 7
      %v579 = vsub.s32 0, %v578
      %v580 = vrot.slane %v575, %v579
      %v581 = vlaneseq
      %v582 = vshrl.u32 %v581, 7
      %v583 = vsub.s32 1, %v582
      %v584 = vrot.slane %v575, %v583
      %v585 = vlaneseq
      %v586 = vshrl.u32 %v585, 7
      %v587 = vsub.s32 2, %v586
      %v588 = vrot.slane %v575, %v587
      %v589 = vlaneseq
      %v590 = vshrl.u32 %v589, 7
      %v591 = vsub.s32 3, %v590
      %v592 = vrot.slane %v575, %v591
      %v597 = vmul.f32 %v572, %v580
      %v598 = vmul.f32 %v571, %v584
      %v599 = vmul.f32 %v570, %v588
      %v600 = vmul.f32 %v569, %v592
      %v601 = vpack.c.bf16 %v597, %v597
      %v602 = vpack.c.bf16 %v598, %v598
      %v603 = vpack.c.bf16 %v599, %v599
      %v604 = vpack.c.bf16 %v600, %v600
      %v606 = vsel %vm362, %v559, 0
      %v609 = vsel %vm366, %v601, 0
      %v612 = vsel %vm366, %v602, 0
      %v615 = vsel %vm366, %v603, 0
      %v618 = vsel %vm366, %v604, 0
      %620 = vmatprep.subr.bf16.mxu0 0
      %621 = vmatpush1.bf16.msra.mxu0 0
      %622 = vmatprep.subr.bf16.mxu0 0
      %623 = vmatpush1.bf16.msra.mxu0 0
      %624 = vmatprep.subr.bf16.mxu0 0
      %625 = vmatpush1.bf16.msra.mxu0 0
      %626 = vmatprep.subr.bf16.mxu0 0
      %627 = vmatpush1.bf16.msra.mxu0 0
      %628 = vmatprep.subr.bf16.mxu0 0
      %629 = vmatpush1.bf16.msra.mxu0 0
      %630 = vmatprep.subr.bf16.mxu0 0
      %631 = vmatpush1.bf16.msra.mxu0 0
      %632 = vmatprep.subr.bf16.mxu0 0
      %633 = vmatpush1.bf16.msra.mxu0 0
      %634 = vmatprep.subr.bf16.mxu0 %v612
      %635 = vmatpush1.bf16.msra.mxu0 %v609
      %636 = vmatprep.subr.bf16.mxu0 0
      %637 = vmatpush2.bf16.msra.mxu0 0
      %638 = vmatprep.subr.bf16.mxu0 0
      %639 = vmatpush2.bf16.msra.mxu0 0
      %640 = vmatprep.subr.bf16.mxu0 0
      %641 = vmatpush2.bf16.msra.mxu0 0
      %642 = vmatprep.subr.bf16.mxu0 0
      %643 = vmatpush2.bf16.msra.mxu0 0
      %644 = vmatprep.subr.bf16.mxu0 0
      %645 = vmatpush2.bf16.msra.mxu0 0
      %646 = vmatprep.subr.bf16.mxu0 0
      %647 = vmatpush2.bf16.msra.mxu0 0
      %648 = vmatprep.subr.bf16.mxu0 0
      %649 = vmatpush2.bf16.msra.mxu0 0
      %650 = vmatprep.subr.bf16.mxu0 0
      %651 = vmatpush2.bf16.msra.mxu0 0
      %652 = vmatprep.mubr.bf16.mxu0 0
      %653 = vmatmul.mubr.bf16.gmra.mxu0 %v606
      %v654 = vpop.f32.mrf.mxu0
      %v655 = vadd.f32 0.0, %v654
      %v656 = vpop.f32.mrf.mxu0
      %v657 = vadd.f32 0.0, %v656
      %v658 = vpop.f32.mrf.mxu0
      %v659 = vpop.f32.mrf.mxu0
      %660 = vdwg.mxu0
      %661 = vmatprep.subr.bf16.mxu0 0
      %662 = vmatpush1.bf16.msra.mxu0 0
      %663 = vmatprep.subr.bf16.mxu0 0
      %664 = vmatpush1.bf16.msra.mxu0 0
      %665 = vmatprep.subr.bf16.mxu0 0
      %666 = vmatpush1.bf16.msra.mxu0 0
      %667 = vmatprep.subr.bf16.mxu0 0
      %668 = vmatpush1.bf16.msra.mxu0 0
      %669 = vmatprep.subr.bf16.mxu0 0
      %670 = vmatpush1.bf16.msra.mxu0 0
      %671 = vmatprep.subr.bf16.mxu0 0
      %672 = vmatpush1.bf16.msra.mxu0 0
      %673 = vmatprep.subr.bf16.mxu0 0
      %674 = vmatpush1.bf16.msra.mxu0 0
      %675 = vmatprep.subr.bf16.mxu0 %v618
      %676 = vmatpush1.bf16.msra.mxu0 %v615
      %677 = vmatprep.subr.bf16.mxu0 0
      %678 = vmatpush2.bf16.msra.mxu0 0
      %679 = vmatprep.subr.bf16.mxu0 0
      %680 = vmatpush2.bf16.msra.mxu0 0
      %681 = vmatprep.subr.bf16.mxu0 0
      %682 = vmatpush2.bf16.msra.mxu0 0
      %683 = vmatprep.subr.bf16.mxu0 0
      %684 = vmatpush2.bf16.msra.mxu0 0
      %685 = vmatprep.subr.bf16.mxu0 0
      %686 = vmatpush2.bf16.msra.mxu0 0
      %687 = vmatprep.subr.bf16.mxu0 0
      %688 = vmatpush2.bf16.msra.mxu0 0
      %689 = vmatprep.subr.bf16.mxu0 0
      %690 = vmatpush2.bf16.msra.mxu0 0
      %691 = vmatprep.subr.bf16.mxu0 0
      %692 = vmatpush2.bf16.msra.mxu0 0
      %693 = vmatprep.mubr.bf16.mxu0 0
      %694 = vmatmul.mubr.bf16.gmra.mxu0 %v606
      %v695 = vpop.f32.mrf.mxu0
      %v696 = vadd.f32 0.0, %v695
      %v697 = vpop.f32.mrf.mxu0
      %v698 = vadd.f32 0.0, %v697
      %v699 = vpop.f32.mrf.mxu0
      %v700 = vpop.f32.mrf.mxu0
      %701 = vdwg.mxu0
      %v702 = vadd.f32 %v511, %v655
      %v703 = vadd.f32 %v513, %v657
      %v704 = vadd.f32 %v552, %v696
      %v705 = vadd.f32 %v554, %v698
      %s706 = scalar_lea.vmem %s1, 6
      %v707 = vld [vmem:[%s706] sm:$0x3]
      %708 = vrot.lane.b32.xlu0 %v248, 65
      %v709 = vpop.permute.xlu0 %708
      %710 = vrot.lane.b32.xlu0 %v264, 65
      %v711 = vpop.permute.xlu0 %710
      %712 = vrot.lane.b32.xlu0 %v249, 65
      %v713 = vpop.permute.xlu0 %712
      %714 = vrot.lane.b32.xlu0 %v265, 65
      %v715 = vpop.permute.xlu0 %714
      %vm716 = vcmp.lt.s32.totalorder %v277, 65
      %v717 = vsel %vm716, %v713, %v715
      %v718 = vsel %vm716, %v711, %v713
      %v719 = vsel %vm716, %v709, %v711
      %v720 = vsel %vm716, %v715, %v709
      %vm721 = vmand %vm255, %vm259
      %v722 = vsel %vm721, 1, 0
      %v723 = vcvt.s32.f32 %v722
      %v725 = vlaneseq
      %v726 = vshrl.u32 %v725, 7
      %v727 = vsub.s32 0, %v726
      %v728 = vrot.slane %v723, %v727
      %v729 = vlaneseq
      %v730 = vshrl.u32 %v729, 7
      %v731 = vsub.s32 1, %v730
      %v732 = vrot.slane %v723, %v731
      %v733 = vlaneseq
      %v734 = vshrl.u32 %v733, 7
      %v735 = vsub.s32 2, %v734
      %v736 = vrot.slane %v723, %v735
      %v737 = vlaneseq
      %v738 = vshrl.u32 %v737, 7
      %v739 = vsub.s32 3, %v738
      %v740 = vrot.slane %v723, %v739
      %v745 = vmul.f32 %v720, %v728
      %v746 = vmul.f32 %v719, %v732
      %v747 = vmul.f32 %v718, %v736
      %v748 = vmul.f32 %v717, %v740
      %v749 = vpack.c.bf16 %v745, %v745
      %v750 = vpack.c.bf16 %v746, %v746
      %v751 = vpack.c.bf16 %v747, %v747
      %v752 = vpack.c.bf16 %v748, %v748
      %v754 = vsel %vm362, %v707, 0
      %v757 = vsel %vm366, %v749, 0
      %v760 = vsel %vm366, %v750, 0
      %v763 = vsel %vm366, %v751, 0
      %v766 = vsel %vm366, %v752, 0
      %768 = vmatprep.subr.bf16.mxu0 0
      %769 = vmatpush1.bf16.msra.mxu0 0
      %770 = vmatprep.subr.bf16.mxu0 0
      %771 = vmatpush1.bf16.msra.mxu0 0
      %772 = vmatprep.subr.bf16.mxu0 0
      %773 = vmatpush1.bf16.msra.mxu0 0
      %774 = vmatprep.subr.bf16.mxu0 0
      %775 = vmatpush1.bf16.msra.mxu0 0
      %776 = vmatprep.subr.bf16.mxu0 0
      %777 = vmatpush1.bf16.msra.mxu0 0
      %778 = vmatprep.subr.bf16.mxu0 0
      %779 = vmatpush1.bf16.msra.mxu0 0
      %780 = vmatprep.subr.bf16.mxu0 0
      %781 = vmatpush1.bf16.msra.mxu0 0
      %782 = vmatprep.subr.bf16.mxu0 %v760
      %783 = vmatpush1.bf16.msra.mxu0 %v757
      %784 = vmatprep.subr.bf16.mxu0 0
      %785 = vmatpush2.bf16.msra.mxu0 0
      %786 = vmatprep.subr.bf16.mxu0 0
      %787 = vmatpush2.bf16.msra.mxu0 0
      %788 = vmatprep.subr.bf16.mxu0 0
      %789 = vmatpush2.bf16.msra.mxu0 0
      %790 = vmatprep.subr.bf16.mxu0 0
      %791 = vmatpush2.bf16.msra.mxu0 0
      %792 = vmatprep.subr.bf16.mxu0 0
      %793 = vmatpush2.bf16.msra.mxu0 0
      %794 = vmatprep.subr.bf16.mxu0 0
      %795 = vmatpush2.bf16.msra.mxu0 0
      %796 = vmatprep.subr.bf16.mxu0 0
      %797 = vmatpush2.bf16.msra.mxu0 0
      %798 = vmatprep.subr.bf16.mxu0 0
      %799 = vmatpush2.bf16.msra.mxu0 0
      %800 = vmatprep.mubr.bf16.mxu0 0
      %801 = vmatmul.mubr.bf16.gmra.mxu0 %v754
      %v802 = vpop.f32.mrf.mxu0
      %v803 = vadd.f32 0.0, %v802
      %v804 = vpop.f32.mrf.mxu0
      %v805 = vadd.f32 0.0, %v804
      %v806 = vpop.f32.mrf.mxu0
      %v807 = vpop.f32.mrf.mxu0
      %808 = vdwg.mxu0
      %809 = vmatprep.subr.bf16.mxu0 0
      %810 = vmatpush1.bf16.msra.mxu0 0
      %811 = vmatprep.subr.bf16.mxu0 0
      %812 = vmatpush1.bf16.msra.mxu0 0
      %813 = vmatprep.subr.bf16.mxu0 0
      %814 = vmatpush1.bf16.msra.mxu0 0
      %815 = vmatprep.subr.bf16.mxu0 0
      %816 = vmatpush1.bf16.msra.mxu0 0
      %817 = vmatprep.subr.bf16.mxu0 0
      %818 = vmatpush1.bf16.msra.mxu0 0
      %819 = vmatprep.subr.bf16.mxu0 0
      %820 = vmatpush1.bf16.msra.mxu0 0
      %821 = vmatprep.subr.bf16.mxu0 0
      %822 = vmatpush1.bf16.msra.mxu0 0
      %823 = vmatprep.subr.bf16.mxu0 %v766
      %824 = vmatpush1.bf16.msra.mxu0 %v763
      %825 = vmatprep.subr.bf16.mxu0 0
      %826 = vmatpush2.bf16.msra.mxu0 0
      %827 = vmatprep.subr.bf16.mxu0 0
      %828 = vmatpush2.bf16.msra.mxu0 0
      %829 = vmatprep.subr.bf16.mxu0 0
      %830 = vmatpush2.bf16.msra.mxu0 0
      %831 = vmatprep.subr.bf16.mxu0 0
      %832 = vmatpush2.bf16.msra.mxu0 0
      %833 = vmatprep.subr.bf16.mxu0 0
      %834 = vmatpush2.bf16.msra.mxu0 0
      %835 = vmatprep.subr.bf16.mxu0 0
      %836 = vmatpush2.bf16.msra.mxu0 0
      %837 = vmatprep.subr.bf16.mxu0 0
      %838 = vmatpush2.bf16.msra.mxu0 0
      %839 = vmatprep.subr.bf16.mxu0 0
      %840 = vmatpush2.bf16.msra.mxu0 0
      %841 = vmatprep.mubr.bf16.mxu0 0
      %842 = vmatmul.mubr.bf16.gmra.mxu0 %v754
      %v843 = vpop.f32.mrf.mxu0
      %v844 = vadd.f32 0.0, %v843
      %v845 = vpop.f32.mrf.mxu0
      %v846 = vadd.f32 0.0, %v845
      %v847 = vpop.f32.mrf.mxu0
      %v848 = vpop.f32.mrf.mxu0
      %849 = vdwg.mxu0
      %v850 = vadd.f32 %v702, %v803
      %v851 = vadd.f32 %v703, %v805
      %v852 = vadd.f32 %v704, %v844
      %v853 = vadd.f32 %v705, %v846
      %s854 = scalar_lea.vmem %s1, 8
      %v855 = vld [vmem:[%s854] sm:$0x3]
      %856 = vrot.lane.b32.xlu0 %v248, 64
      %v857 = vpop.permute.xlu0 %856
      %858 = vrot.lane.b32.xlu0 %v264, 64
      %v859 = vpop.permute.xlu0 %858
      %860 = vrot.lane.b32.xlu0 %v249, 64
      %v861 = vpop.permute.xlu0 %860
      %862 = vrot.lane.b32.xlu0 %v265, 64
      %v863 = vpop.permute.xlu0 %862
      %vm864 = vcmp.lt.s32.totalorder %v277, 64
      %v865 = vsel %vm864, %v861, %v863
      %v866 = vsel %vm864, %v859, %v861
      %v867 = vsel %vm864, %v857, %v859
      %v868 = vsel %vm864, %v863, %v857
      %v869 = vsel %vm255, 1, 0
      %v870 = vcvt.s32.f32 %v869
      %v872 = vlaneseq
      %v873 = vshrl.u32 %v872, 7
      %v874 = vsub.s32 0, %v873
      %v875 = vrot.slane %v870, %v874
      %v876 = vlaneseq
      %v877 = vshrl.u32 %v876, 7
      %v878 = vsub.s32 1, %v877
      %v879 = vrot.slane %v870, %v878
      %v880 = vlaneseq
      %v881 = vshrl.u32 %v880, 7
      %v882 = vsub.s32 2, %v881
      %v883 = vrot.slane %v870, %v882
      %v884 = vlaneseq
      %v885 = vshrl.u32 %v884, 7
      %v886 = vsub.s32 3, %v885
      %v887 = vrot.slane %v870, %v886
      %v892 = vmul.f32 %v868, %v875
      %v893 = vmul.f32 %v867, %v879
      %v894 = vmul.f32 %v866, %v883
      %v895 = vmul.f32 %v865, %v887
      %v896 = vpack.c.bf16 %v892, %v892
      %v897 = vpack.c.bf16 %v893, %v893
      %v898 = vpack.c.bf16 %v894, %v894
      %v899 = vpack.c.bf16 %v895, %v895
      %v901 = vsel %vm362, %v855, 0
      %v904 = vsel %vm366, %v896, 0
      %v907 = vsel %vm366, %v897, 0
      %v910 = vsel %vm366, %v898, 0
      %v913 = vsel %vm366, %v899, 0
      %915 = vmatprep.subr.bf16.mxu0 0
      %916 = vmatpush1.bf16.msra.mxu0 0
      %917 = vmatprep.subr.bf16.mxu0 0
      %918 = vmatpush1.bf16.msra.mxu0 0
      %919 = vmatprep.subr.bf16.mxu0 0
      %920 = vmatpush1.bf16.msra.mxu0 0
      %921 = vmatprep.subr.bf16.mxu0 0
      %922 = vmatpush1.bf16.msra.mxu0 0
      %923 = vmatprep.subr.bf16.mxu0 0
      %924 = vmatpush1.bf16.msra.mxu0 0
      %925 = vmatprep.subr.bf16.mxu0 0
      %926 = vmatpush1.bf16.msra.mxu0 0
      %927 = vmatprep.subr.bf16.mxu0 0
      %928 = vmatpush1.bf16.msra.mxu0 0
      %929 = vmatprep.subr.bf16.mxu0 %v907
      %930 = vmatpush1.bf16.msra.mxu0 %v904
      %931 = vmatprep.subr.bf16.mxu0 0
      %932 = vmatpush2.bf16.msra.mxu0 0
      %933 = vmatprep.subr.bf16.mxu0 0
      %934 = vmatpush2.bf16.msra.mxu0 0
      %935 = vmatprep.subr.bf16.mxu0 0
      %936 = vmatpush2.bf16.msra.mxu0 0
      %937 = vmatprep.subr.bf16.mxu0 0
      %938 = vmatpush2.bf16.msra.mxu0 0
      %939 = vmatprep.subr.bf16.mxu0 0
      %940 = vmatpush2.bf16.msra.mxu0 0
      %941 = vmatprep.subr.bf16.mxu0 0
      %942 = vmatpush2.bf16.msra.mxu0 0
      %943 = vmatprep.subr.bf16.mxu0 0
      %944 = vmatpush2.bf16.msra.mxu0 0
      %945 = vmatprep.subr.bf16.mxu0 0
      %946 = vmatpush2.bf16.msra.mxu0 0
      %947 = vmatprep.mubr.bf16.mxu0 0
      %948 = vmatmul.mubr.bf16.gmra.mxu0 %v901
      %v949 = vpop.f32.mrf.mxu0
      %v950 = vadd.f32 0.0, %v949
      %v951 = vpop.f32.mrf.mxu0
      %v952 = vadd.f32 0.0, %v951
      %v953 = vpop.f32.mrf.mxu0
      %v954 = vpop.f32.mrf.mxu0
      %955 = vdwg.mxu0
      %956 = vmatprep.subr.bf16.mxu0 0
      %957 = vmatpush1.bf16.msra.mxu0 0
      %958 = vmatprep.subr.bf16.mxu0 0
      %959 = vmatpush1.bf16.msra.mxu0 0
      %960 = vmatprep.subr.bf16.mxu0 0
      %961 = vmatpush1.bf16.msra.mxu0 0
      %962 = vmatprep.subr.bf16.mxu0 0
      %963 = vmatpush1.bf16.msra.mxu0 0
      %964 = vmatprep.subr.bf16.mxu0 0
      %965 = vmatpush1.bf16.msra.mxu0 0
      %966 = vmatprep.subr.bf16.mxu0 0
      %967 = vmatpush1.bf16.msra.mxu0 0
      %968 = vmatprep.subr.bf16.mxu0 0
      %969 = vmatpush1.bf16.msra.mxu0 0
      %970 = vmatprep.subr.bf16.mxu0 %v913
      %971 = vmatpush1.bf16.msra.mxu0 %v910
      %972 = vmatprep.subr.bf16.mxu0 0
      %973 = vmatpush2.bf16.msra.mxu0 0
      %974 = vmatprep.subr.bf16.mxu0 0
      %975 = vmatpush2.bf16.msra.mxu0 0
      %976 = vmatprep.subr.bf16.mxu0 0
      %977 = vmatpush2.bf16.msra.mxu0 0
      %978 = vmatprep.subr.bf16.mxu0 0
      %979 = vmatpush2.bf16.msra.mxu0 0
      %980 = vmatprep.subr.bf16.mxu0 0
      %981 = vmatpush2.bf16.msra.mxu0 0
      %982 = vmatprep.subr.bf16.mxu0 0
      %983 = vmatpush2.bf16.msra.mxu0 0
      %984 = vmatprep.subr.bf16.mxu0 0
      %985 = vmatpush2.bf16.msra.mxu0 0
      %986 = vmatprep.subr.bf16.mxu0 0
      %987 = vmatpush2.bf16.msra.mxu0 0
      %988 = vmatprep.mubr.bf16.mxu0 0
      %989 = vmatmul.mubr.bf16.gmra.mxu0 %v901
      %v990 = vpop.f32.mrf.mxu0
      %v991 = vadd.f32 0.0, %v990
      %v992 = vpop.f32.mrf.mxu0
      %v993 = vadd.f32 0.0, %v992
      %v994 = vpop.f32.mrf.mxu0
      %v995 = vpop.f32.mrf.mxu0
      %996 = vdwg.mxu0
      %v997 = vadd.f32 %v850, %v950
      %v998 = vadd.f32 %v851, %v952
      %v999 = vadd.f32 %v852, %v991
      %v1000 = vadd.f32 %v853, %v993
      %s1001 = scalar_lea.vmem %s1, 10
      %v1002 = vld [vmem:[%s1001] sm:$0x3]
      %1003 = vrot.lane.b32.xlu0 %v248, 63
      %v1004 = vpop.permute.xlu0 %1003
      %1005 = vrot.lane.b32.xlu0 %v264, 63
      %v1006 = vpop.permute.xlu0 %1005
      %1007 = vrot.lane.b32.xlu0 %v249, 63
      %v1008 = vpop.permute.xlu0 %1007
      %1009 = vrot.lane.b32.xlu0 %v265, 63
      %v1010 = vpop.permute.xlu0 %1009
      %vm1011 = vcmp.lt.s32.totalorder %v277, 63
      %v1012 = vsel %vm1011, %v1008, %v1010
      %v1013 = vsel %vm1011, %v1006, %v1008
      %v1014 = vsel %vm1011, %v1004, %v1006
      %v1015 = vsel %vm1011, %v1010, %v1004
      %vm1016 = vmand %vm255, %vm260
      %v1017 = vsel %vm1016, 1, 0
      %v1018 = vcvt.s32.f32 %v1017
      %v1020 = vlaneseq
      %v1021 = vshrl.u32 %v1020, 7
      %v1022 = vsub.s32 0, %v1021
      %v1023 = vrot.slane %v1018, %v1022
      %v1024 = vlaneseq
      %v1025 = vshrl.u32 %v1024, 7
      %v1026 = vsub.s32 1, %v1025
      %v1027 = vrot.slane %v1018, %v1026
      %v1028 = vlaneseq
      %v1029 = vshrl.u32 %v1028, 7
      %v1030 = vsub.s32 2, %v1029
      %v1031 = vrot.slane %v1018, %v1030
      %v1032 = vlaneseq
      %v1033 = vshrl.u32 %v1032, 7
      %v1034 = vsub.s32 3, %v1033
      %v1035 = vrot.slane %v1018, %v1034
      %v1040 = vmul.f32 %v1015, %v1023
      %v1041 = vmul.f32 %v1014, %v1027
      %v1042 = vmul.f32 %v1013, %v1031
      %v1043 = vmul.f32 %v1012, %v1035
      %v1044 = vpack.c.bf16 %v1040, %v1040
      %v1045 = vpack.c.bf16 %v1041, %v1041
      %v1046 = vpack.c.bf16 %v1042, %v1042
      %v1047 = vpack.c.bf16 %v1043, %v1043
      %v1049 = vsel %vm362, %v1002, 0
      %v1052 = vsel %vm366, %v1044, 0
      %v1055 = vsel %vm366, %v1045, 0
      %v1058 = vsel %vm366, %v1046, 0
      %v1061 = vsel %vm366, %v1047, 0
      %1063 = vmatprep.subr.bf16.mxu0 0
      %1064 = vmatpush1.bf16.msra.mxu0 0
      %1065 = vmatprep.subr.bf16.mxu0 0
      %1066 = vmatpush1.bf16.msra.mxu0 0
      %1067 = vmatprep.subr.bf16.mxu0 0
      %1068 = vmatpush1.bf16.msra.mxu0 0
      %1069 = vmatprep.subr.bf16.mxu0 0
      %1070 = vmatpush1.bf16.msra.mxu0 0
      %1071 = vmatprep.subr.bf16.mxu0 0
      %1072 = vmatpush1.bf16.msra.mxu0 0
      %1073 = vmatprep.subr.bf16.mxu0 0
      %1074 = vmatpush1.bf16.msra.mxu0 0
      %1075 = vmatprep.subr.bf16.mxu0 0
      %1076 = vmatpush1.bf16.msra.mxu0 0
      %1077 = vmatprep.subr.bf16.mxu0 %v1055
      %1078 = vmatpush1.bf16.msra.mxu0 %v1052
      %1079 = vmatprep.subr.bf16.mxu0 0
      %1080 = vmatpush2.bf16.msra.mxu0 0
      %1081 = vmatprep.subr.bf16.mxu0 0
      %1082 = vmatpush2.bf16.msra.mxu0 0
      %1083 = vmatprep.subr.bf16.mxu0 0
      %1084 = vmatpush2.bf16.msra.mxu0 0
      %1085 = vmatprep.subr.bf16.mxu0 0
      %1086 = vmatpush2.bf16.msra.mxu0 0
      %1087 = vmatprep.subr.bf16.mxu0 0
      %1088 = vmatpush2.bf16.msra.mxu0 0
      %1089 = vmatprep.subr.bf16.mxu0 0
      %1090 = vmatpush2.bf16.msra.mxu0 0
      %1091 = vmatprep.subr.bf16.mxu0 0
      %1092 = vmatpush2.bf16.msra.mxu0 0
      %1093 = vmatprep.subr.bf16.mxu0 0
      %1094 = vmatpush2.bf16.msra.mxu0 0
      %1095 = vmatprep.mubr.bf16.mxu0 0
      %1096 = vmatmul.mubr.bf16.gmra.mxu0 %v1049
      %v1097 = vpop.f32.mrf.mxu0
      %v1098 = vadd.f32 0.0, %v1097
      %v1099 = vpop.f32.mrf.mxu0
      %v1100 = vadd.f32 0.0, %v1099
      %v1101 = vpop.f32.mrf.mxu0
      %v1102 = vpop.f32.mrf.mxu0
      %1103 = vdwg.mxu0
      %1104 = vmatprep.subr.bf16.mxu0 0
      %1105 = vmatpush1.bf16.msra.mxu0 0
      %1106 = vmatprep.subr.bf16.mxu0 0
      %1107 = vmatpush1.bf16.msra.mxu0 0
      %1108 = vmatprep.subr.bf16.mxu0 0
      %1109 = vmatpush1.bf16.msra.mxu0 0
      %1110 = vmatprep.subr.bf16.mxu0 0
      %1111 = vmatpush1.bf16.msra.mxu0 0
      %1112 = vmatprep.subr.bf16.mxu0 0
      %1113 = vmatpush1.bf16.msra.mxu0 0
      %1114 = vmatprep.subr.bf16.mxu0 0
      %1115 = vmatpush1.bf16.msra.mxu0 0
      %1116 = vmatprep.subr.bf16.mxu0 0
      %1117 = vmatpush1.bf16.msra.mxu0 0
      %1118 = vmatprep.subr.bf16.mxu0 %v1061
      %1119 = vmatpush1.bf16.msra.mxu0 %v1058
      %1120 = vmatprep.subr.bf16.mxu0 0
      %1121 = vmatpush2.bf16.msra.mxu0 0
      %1122 = vmatprep.subr.bf16.mxu0 0
      %1123 = vmatpush2.bf16.msra.mxu0 0
      %1124 = vmatprep.subr.bf16.mxu0 0
      %1125 = vmatpush2.bf16.msra.mxu0 0
      %1126 = vmatprep.subr.bf16.mxu0 0
      %1127 = vmatpush2.bf16.msra.mxu0 0
      %1128 = vmatprep.subr.bf16.mxu0 0
      %1129 = vmatpush2.bf16.msra.mxu0 0
      %1130 = vmatprep.subr.bf16.mxu0 0
      %1131 = vmatpush2.bf16.msra.mxu0 0
      %1132 = vmatprep.subr.bf16.mxu0 0
      %1133 = vmatpush2.bf16.msra.mxu0 0
      %1134 = vmatprep.subr.bf16.mxu0 0
      %1135 = vmatpush2.bf16.msra.mxu0 0
      %1136 = vmatprep.mubr.bf16.mxu0 0
      %1137 = vmatmul.mubr.bf16.gmra.mxu0 %v1049
      %v1138 = vpop.f32.mrf.mxu0
      %v1139 = vadd.f32 0.0, %v1138
      %v1140 = vpop.f32.mrf.mxu0
      %v1141 = vadd.f32 0.0, %v1140
      %v1142 = vpop.f32.mrf.mxu0
      %v1143 = vpop.f32.mrf.mxu0
      %1144 = vdwg.mxu0
      %v1145 = vadd.f32 %v997, %v1098
      %v1146 = vadd.f32 %v998, %v1100
      %v1147 = vadd.f32 %v999, %v1139
      %v1148 = vadd.f32 %v1000, %v1141
      %s1149 = scalar_lea.vmem %s1, 12
      %v1150 = vld [vmem:[%s1149] sm:$0x3]
      %1151 = vrot.lane.b32.xlu0 %v248, 57
      %v1152 = vpop.permute.xlu0 %1151
      %1153 = vrot.lane.b32.xlu0 %v264, 57
      %v1154 = vpop.permute.xlu0 %1153
      %1155 = vrot.lane.b32.xlu0 %v249, 57
      %v1156 = vpop.permute.xlu0 %1155
      %1157 = vrot.lane.b32.xlu0 %v265, 57
      %v1158 = vpop.permute.xlu0 %1157
      %vm1159 = vcmp.lt.s32.totalorder %v277, 57
      %v1160 = vsel %vm1159, %v1156, %v1158
      %v1161 = vsel %vm1159, %v1154, %v1156
      %v1162 = vsel %vm1159, %v1152, %v1154
      %v1163 = vsel %vm1159, %v1158, %v1152
      %vm1164 = vmand %vm255, %vm258
      %vm1165 = vmand %vm1164, %vm259
      %v1166 = vsel %vm1165, 1, 0
      %v1167 = vcvt.s32.f32 %v1166
      %v1169 = vlaneseq
      %v1170 = vshrl.u32 %v1169, 7
      %v1171 = vsub.s32 0, %v1170
      %v1172 = vrot.slane %v1167, %v1171
      %v1173 = vlaneseq
      %v1174 = vshrl.u32 %v1173, 7
      %v1175 = vsub.s32 1, %v1174
      %v1176 = vrot.slane %v1167, %v1175
      %v1177 = vlaneseq
      %v1178 = vshrl.u32 %v1177, 7
      %v1179 = vsub.s32 2, %v1178
      %v1180 = vrot.slane %v1167, %v1179
      %v1181 = vlaneseq
      %v1182 = vshrl.u32 %v1181, 7
      %v1183 = vsub.s32 3, %v1182
      %v1184 = vrot.slane %v1167, %v1183
      %v1189 = vmul.f32 %v1163, %v1172
      %v1190 = vmul.f32 %v1162, %v1176
      %v1191 = vmul.f32 %v1161, %v1180
      %v1192 = vmul.f32 %v1160, %v1184
      %v1193 = vpack.c.bf16 %v1189, %v1189
      %v1194 = vpack.c.bf16 %v1190, %v1190
      %v1195 = vpack.c.bf16 %v1191, %v1191
      %v1196 = vpack.c.bf16 %v1192, %v1192
      %v1198 = vsel %vm362, %v1150, 0
      %v1201 = vsel %vm366, %v1193, 0
      %v1204 = vsel %vm366, %v1194, 0
      %v1207 = vsel %vm366, %v1195, 0
      %v1210 = vsel %vm366, %v1196, 0
      %1212 = vmatprep.subr.bf16.mxu0 0
      %1213 = vmatpush1.bf16.msra.mxu0 0
      %1214 = vmatprep.subr.bf16.mxu0 0
      %1215 = vmatpush1.bf16.msra.mxu0 0
      %1216 = vmatprep.subr.bf16.mxu0 0
      %1217 = vmatpush1.bf16.msra.mxu0 0
      %1218 = vmatprep.subr.bf16.mxu0 0
      %1219 = vmatpush1.bf16.msra.mxu0 0
      %1220 = vmatprep.subr.bf16.mxu0 0
      %1221 = vmatpush1.bf16.msra.mxu0 0
      %1222 = vmatprep.subr.bf16.mxu0 0
      %1223 = vmatpush1.bf16.msra.mxu0 0
      %1224 = vmatprep.subr.bf16.mxu0 0
      %1225 = vmatpush1.bf16.msra.mxu0 0
      %1226 = vmatprep.subr.bf16.mxu0 %v1204
      %1227 = vmatpush1.bf16.msra.mxu0 %v1201
      %1228 = vmatprep.subr.bf16.mxu0 0
      %1229 = vmatpush2.bf16.msra.mxu0 0
      %1230 = vmatprep.subr.bf16.mxu0 0
      %1231 = vmatpush2.bf16.msra.mxu0 0
      %1232 = vmatprep.subr.bf16.mxu0 0
      %1233 = vmatpush2.bf16.msra.mxu0 0
      %1234 = vmatprep.subr.bf16.mxu0 0
      %1235 = vmatpush2.bf16.msra.mxu0 0
      %1236 = vmatprep.subr.bf16.mxu0 0
      %1237 = vmatpush2.bf16.msra.mxu0 0
      %1238 = vmatprep.subr.bf16.mxu0 0
      %1239 = vmatpush2.bf16.msra.mxu0 0
      %1240 = vmatprep.subr.bf16.mxu0 0
      %1241 = vmatpush2.bf16.msra.mxu0 0
      %1242 = vmatprep.subr.bf16.mxu0 0
      %1243 = vmatpush2.bf16.msra.mxu0 0
      %1244 = vmatprep.mubr.bf16.mxu0 0
      %1245 = vmatmul.mubr.bf16.gmra.mxu0 %v1198
      %v1246 = vpop.f32.mrf.mxu0
      %v1247 = vadd.f32 0.0, %v1246
      %v1248 = vpop.f32.mrf.mxu0
      %v1249 = vadd.f32 0.0, %v1248
      %v1250 = vpop.f32.mrf.mxu0
      %v1251 = vpop.f32.mrf.mxu0
      %1252 = vdwg.mxu0
      %1253 = vmatprep.subr.bf16.mxu0 0
      %1254 = vmatpush1.bf16.msra.mxu0 0
      %1255 = vmatprep.subr.bf16.mxu0 0
      %1256 = vmatpush1.bf16.msra.mxu0 0
      %1257 = vmatprep.subr.bf16.mxu0 0
      %1258 = vmatpush1.bf16.msra.mxu0 0
      %1259 = vmatprep.subr.bf16.mxu0 0
      %1260 = vmatpush1.bf16.msra.mxu0 0
      %1261 = vmatprep.subr.bf16.mxu0 0
      %1262 = vmatpush1.bf16.msra.mxu0 0
      %1263 = vmatprep.subr.bf16.mxu0 0
      %1264 = vmatpush1.bf16.msra.mxu0 0
      %1265 = vmatprep.subr.bf16.mxu0 0
      %1266 = vmatpush1.bf16.msra.mxu0 0
      %1267 = vmatprep.subr.bf16.mxu0 %v1210
      %1268 = vmatpush1.bf16.msra.mxu0 %v1207
      %1269 = vmatprep.subr.bf16.mxu0 0
      %1270 = vmatpush2.bf16.msra.mxu0 0
      %1271 = vmatprep.subr.bf16.mxu0 0
      %1272 = vmatpush2.bf16.msra.mxu0 0
      %1273 = vmatprep.subr.bf16.mxu0 0
      %1274 = vmatpush2.bf16.msra.mxu0 0
      %1275 = vmatprep.subr.bf16.mxu0 0
      %1276 = vmatpush2.bf16.msra.mxu0 0
      %1277 = vmatprep.subr.bf16.mxu0 0
      %1278 = vmatpush2.bf16.msra.mxu0 0
      %1279 = vmatprep.subr.bf16.mxu0 0
      %1280 = vmatpush2.bf16.msra.mxu0 0
      %1281 = vmatprep.subr.bf16.mxu0 0
      %1282 = vmatpush2.bf16.msra.mxu0 0
      %1283 = vmatprep.subr.bf16.mxu0 0
      %1284 = vmatpush2.bf16.msra.mxu0 0
      %1285 = vmatprep.mubr.bf16.mxu0 0
      %1286 = vmatmul.mubr.bf16.gmra.mxu0 %v1198
      %v1287 = vpop.f32.mrf.mxu0
      %v1288 = vadd.f32 0.0, %v1287
      %v1289 = vpop.f32.mrf.mxu0
      %v1290 = vadd.f32 0.0, %v1289
      %v1291 = vpop.f32.mrf.mxu0
      %v1292 = vpop.f32.mrf.mxu0
      %1293 = vdwg.mxu0
      %v1294 = vadd.f32 %v1145, %v1247
      %v1295 = vadd.f32 %v1146, %v1249
      %v1296 = vadd.f32 %v1147, %v1288
      %v1297 = vadd.f32 %v1148, %v1290
      %s1298 = scalar_lea.vmem %s1, 14
      %v1299 = vld [vmem:[%s1298] sm:$0x3]
      %1300 = vrot.lane.b32.xlu0 %v248, 56
      %v1301 = vpop.permute.xlu0 %1300
      %1302 = vrot.lane.b32.xlu0 %v264, 56
      %v1303 = vpop.permute.xlu0 %1302
      %1304 = vrot.lane.b32.xlu0 %v249, 56
      %v1305 = vpop.permute.xlu0 %1304
      %1306 = vrot.lane.b32.xlu0 %v265, 56
      %v1307 = vpop.permute.xlu0 %1306
      %vm1308 = vcmp.lt.s32.totalorder %v277, 56
      %v1309 = vsel %vm1308, %v1305, %v1307
      %v1310 = vsel %vm1308, %v1303, %v1305
      %v1311 = vsel %vm1308, %v1301, %v1303
      %v1312 = vsel %vm1308, %v1307, %v1301
      %v1313 = vsel %vm1164, 1, 0
      %v1314 = vcvt.s32.f32 %v1313
      %v1316 = vlaneseq
      %v1317 = vshrl.u32 %v1316, 7
      %v1318 = vsub.s32 0, %v1317
      %v1319 = vrot.slane %v1314, %v1318
      %v1320 = vlaneseq
      %v1321 = vshrl.u32 %v1320, 7
      %v1322 = vsub.s32 1, %v1321
      %v1323 = vrot.slane %v1314, %v1322
      %v1324 = vlaneseq
      %v1325 = vshrl.u32 %v1324, 7
      %v1326 = vsub.s32 2, %v1325
      %v1327 = vrot.slane %v1314, %v1326
      %v1328 = vlaneseq
      %v1329 = vshrl.u32 %v1328, 7
      %v1330 = vsub.s32 3, %v1329
      %v1331 = vrot.slane %v1314, %v1330
      %v1336 = vmul.f32 %v1312, %v1319
      %v1337 = vmul.f32 %v1311, %v1323
      %v1338 = vmul.f32 %v1310, %v1327
      %v1339 = vmul.f32 %v1309, %v1331
      %v1340 = vpack.c.bf16 %v1336, %v1336
      %v1341 = vpack.c.bf16 %v1337, %v1337
      %v1342 = vpack.c.bf16 %v1338, %v1338
      %v1343 = vpack.c.bf16 %v1339, %v1339
      %v1345 = vsel %vm362, %v1299, 0
      %v1348 = vsel %vm366, %v1340, 0
      %v1351 = vsel %vm366, %v1341, 0
      %v1354 = vsel %vm366, %v1342, 0
      %v1357 = vsel %vm366, %v1343, 0
      %1359 = vmatprep.subr.bf16.mxu0 0
      %1360 = vmatpush1.bf16.msra.mxu0 0
      %1361 = vmatprep.subr.bf16.mxu0 0
      %1362 = vmatpush1.bf16.msra.mxu0 0
      %1363 = vmatprep.subr.bf16.mxu0 0
      %1364 = vmatpush1.bf16.msra.mxu0 0
      %1365 = vmatprep.subr.bf16.mxu0 0
      %1366 = vmatpush1.bf16.msra.mxu0 0
      %1367 = vmatprep.subr.bf16.mxu0 0
      %1368 = vmatpush1.bf16.msra.mxu0 0
      %1369 = vmatprep.subr.bf16.mxu0 0
      %1370 = vmatpush1.bf16.msra.mxu0 0
      %1371 = vmatprep.subr.bf16.mxu0 0
      %1372 = vmatpush1.bf16.msra.mxu0 0
      %1373 = vmatprep.subr.bf16.mxu0 %v1351
      %1374 = vmatpush1.bf16.msra.mxu0 %v1348
      %1375 = vmatprep.subr.bf16.mxu0 0
      %1376 = vmatpush2.bf16.msra.mxu0 0
      %1377 = vmatprep.subr.bf16.mxu0 0
      %1378 = vmatpush2.bf16.msra.mxu0 0
      %1379 = vmatprep.subr.bf16.mxu0 0
      %1380 = vmatpush2.bf16.msra.mxu0 0
      %1381 = vmatprep.subr.bf16.mxu0 0
      %1382 = vmatpush2.bf16.msra.mxu0 0
      %1383 = vmatprep.subr.bf16.mxu0 0
      %1384 = vmatpush2.bf16.msra.mxu0 0
      %1385 = vmatprep.subr.bf16.mxu0 0
      %1386 = vmatpush2.bf16.msra.mxu0 0
      %1387 = vmatprep.subr.bf16.mxu0 0
      %1388 = vmatpush2.bf16.msra.mxu0 0
      %1389 = vmatprep.subr.bf16.mxu0 0
      %1390 = vmatpush2.bf16.msra.mxu0 0
      %1391 = vmatprep.mubr.bf16.mxu0 0
      %1392 = vmatmul.mubr.bf16.gmra.mxu0 %v1345
      %v1393 = vpop.f32.mrf.mxu0
      %v1394 = vadd.f32 0.0, %v1393
      %v1395 = vpop.f32.mrf.mxu0
      %v1396 = vadd.f32 0.0, %v1395
      %v1397 = vpop.f32.mrf.mxu0
      %v1398 = vpop.f32.mrf.mxu0
      %1399 = vdwg.mxu0
      %1400 = vmatprep.subr.bf16.mxu0 0
      %1401 = vmatpush1.bf16.msra.mxu0 0
      %1402 = vmatprep.subr.bf16.mxu0 0
      %1403 = vmatpush1.bf16.msra.mxu0 0
      %1404 = vmatprep.subr.bf16.mxu0 0
      %1405 = vmatpush1.bf16.msra.mxu0 0
      %1406 = vmatprep.subr.bf16.mxu0 0
      %1407 = vmatpush1.bf16.msra.mxu0 0
      %1408 = vmatprep.subr.bf16.mxu0 0
      %1409 = vmatpush1.bf16.msra.mxu0 0
      %1410 = vmatprep.subr.bf16.mxu0 0
      %1411 = vmatpush1.bf16.msra.mxu0 0
      %1412 = vmatprep.subr.bf16.mxu0 0
      %1413 = vmatpush1.bf16.msra.mxu0 0
      %1414 = vmatprep.subr.bf16.mxu0 %v1357
      %1415 = vmatpush1.bf16.msra.mxu0 %v1354
      %1416 = vmatprep.subr.bf16.mxu0 0
      %1417 = vmatpush2.bf16.msra.mxu0 0
      %1418 = vmatprep.subr.bf16.mxu0 0
      %1419 = vmatpush2.bf16.msra.mxu0 0
      %1420 = vmatprep.subr.bf16.mxu0 0
      %1421 = vmatpush2.bf16.msra.mxu0 0
      %1422 = vmatprep.subr.bf16.mxu0 0
      %1423 = vmatpush2.bf16.msra.mxu0 0
      %1424 = vmatprep.subr.bf16.mxu0 0
      %1425 = vmatpush2.bf16.msra.mxu0 0
      %1426 = vmatprep.subr.bf16.mxu0 0
      %1427 = vmatpush2.bf16.msra.mxu0 0
      %1428 = vmatprep.subr.bf16.mxu0 0
      %1429 = vmatpush2.bf16.msra.mxu0 0
      %1430 = vmatprep.subr.bf16.mxu0 0
      %1431 = vmatpush2.bf16.msra.mxu0 0
      %1432 = vmatprep.mubr.bf16.mxu0 0
      %1433 = vmatmul.mubr.bf16.gmra.mxu0 %v1345
      %v1434 = vpop.f32.mrf.mxu0
      %v1435 = vadd.f32 0.0, %v1434
      %v1436 = vpop.f32.mrf.mxu0
      %v1437 = vadd.f32 0.0, %v1436
      %v1438 = vpop.f32.mrf.mxu0
      %v1439 = vpop.f32.mrf.mxu0
      %1440 = vdwg.mxu0
      %v1441 = vadd.f32 %v1294, %v1394
      %v1442 = vadd.f32 %v1295, %v1396
      %v1443 = vadd.f32 %v1296, %v1435
      %v1444 = vadd.f32 %v1297, %v1437
      %s1445 = scalar_lea.vmem %s1, 16
      %v1446 = vld [vmem:[%s1445] sm:$0x3]
      %1447 = vrot.lane.b32.xlu0 %v248, 55
      %v1448 = vpop.permute.xlu0 %1447
      %1449 = vrot.lane.b32.xlu0 %v264, 55
      %v1450 = vpop.permute.xlu0 %1449
      %1451 = vrot.lane.b32.xlu0 %v249, 55
      %v1452 = vpop.permute.xlu0 %1451
      %1453 = vrot.lane.b32.xlu0 %v265, 55
      %v1454 = vpop.permute.xlu0 %1453
      %vm1455 = vcmp.lt.s32.totalorder %v277, 55
      %v1456 = vsel %vm1455, %v1452, %v1454
      %v1457 = vsel %vm1455, %v1450, %v1452
      %v1458 = vsel %vm1455, %v1448, %v1450
      %v1459 = vsel %vm1455, %v1454, %v1448
      %vm1460 = vmand %vm1164, %vm260
      %v1461 = vsel %vm1460, 1, 0
      %v1462 = vcvt.s32.f32 %v1461
      %v1464 = vlaneseq
      %v1465 = vshrl.u32 %v1464, 7
      %v1466 = vsub.s32 0, %v1465
      %v1467 = vrot.slane %v1462, %v1466
      %v1468 = vlaneseq
      %v1469 = vshrl.u32 %v1468, 7
      %v1470 = vsub.s32 1, %v1469
      %v1471 = vrot.slane %v1462, %v1470
      %v1472 = vlaneseq
      %v1473 = vshrl.u32 %v1472, 7
      %v1474 = vsub.s32 2, %v1473
      %v1475 = vrot.slane %v1462, %v1474
      %v1476 = vlaneseq
      %v1477 = vshrl.u32 %v1476, 7
      %v1478 = vsub.s32 3, %v1477
      %v1479 = vrot.slane %v1462, %v1478
      %v1484 = vmul.f32 %v1459, %v1467
      %v1485 = vmul.f32 %v1458, %v1471
      %v1486 = vmul.f32 %v1457, %v1475
      %v1487 = vmul.f32 %v1456, %v1479
      %v1488 = vpack.c.bf16 %v1484, %v1484
      %v1489 = vpack.c.bf16 %v1485, %v1485
      %v1490 = vpack.c.bf16 %v1486, %v1486
      %v1491 = vpack.c.bf16 %v1487, %v1487
      %v1493 = vsel %vm362, %v1446, 0
      %v1496 = vsel %vm366, %v1488, 0
      %v1499 = vsel %vm366, %v1489, 0
      %v1502 = vsel %vm366, %v1490, 0
      %v1505 = vsel %vm366, %v1491, 0
      %1507 = vmatprep.subr.bf16.mxu0 0
      %1508 = vmatpush1.bf16.msra.mxu0 0
      %1509 = vmatprep.subr.bf16.mxu0 0
      %1510 = vmatpush1.bf16.msra.mxu0 0
      %1511 = vmatprep.subr.bf16.mxu0 0
      %1512 = vmatpush1.bf16.msra.mxu0 0
      %1513 = vmatprep.subr.bf16.mxu0 0
      %1514 = vmatpush1.bf16.msra.mxu0 0
      %1515 = vmatprep.subr.bf16.mxu0 0
      %1516 = vmatpush1.bf16.msra.mxu0 0
      %1517 = vmatprep.subr.bf16.mxu0 0
      %1518 = vmatpush1.bf16.msra.mxu0 0
      %1519 = vmatprep.subr.bf16.mxu0 0
      %1520 = vmatpush1.bf16.msra.mxu0 0
      %1521 = vmatprep.subr.bf16.mxu0 %v1499
      %1522 = vmatpush1.bf16.msra.mxu0 %v1496
      %1523 = vmatprep.subr.bf16.mxu0 0
      %1524 = vmatpush2.bf16.msra.mxu0 0
      %1525 = vmatprep.subr.bf16.mxu0 0
      %1526 = vmatpush2.bf16.msra.mxu0 0
      %1527 = vmatprep.subr.bf16.mxu0 0
      %1528 = vmatpush2.bf16.msra.mxu0 0
      %1529 = vmatprep.subr.bf16.mxu0 0
      %1530 = vmatpush2.bf16.msra.mxu0 0
      %1531 = vmatprep.subr.bf16.mxu0 0
      %1532 = vmatpush2.bf16.msra.mxu0 0
      %1533 = vmatprep.subr.bf16.mxu0 0
      %1534 = vmatpush2.bf16.msra.mxu0 0
      %1535 = vmatprep.subr.bf16.mxu0 0
      %1536 = vmatpush2.bf16.msra.mxu0 0
      %1537 = vmatprep.subr.bf16.mxu0 0
      %1538 = vmatpush2.bf16.msra.mxu0 0
      %1539 = vmatprep.mubr.bf16.mxu0 0
      %1540 = vmatmul.mubr.bf16.gmra.mxu0 %v1493
      %v1541 = vpop.f32.mrf.mxu0
      %v1542 = vadd.f32 0.0, %v1541
      %v1543 = vpop.f32.mrf.mxu0
      %v1544 = vadd.f32 0.0, %v1543
      %v1545 = vpop.f32.mrf.mxu0
      %v1546 = vpop.f32.mrf.mxu0
      %1547 = vdwg.mxu0
      %1548 = vmatprep.subr.bf16.mxu0 0
      %1549 = vmatpush1.bf16.msra.mxu0 0
      %1550 = vmatprep.subr.bf16.mxu0 0
      %1551 = vmatpush1.bf16.msra.mxu0 0
      %1552 = vmatprep.subr.bf16.mxu0 0
      %1553 = vmatpush1.bf16.msra.mxu0 0
      %1554 = vmatprep.subr.bf16.mxu0 0
      %1555 = vmatpush1.bf16.msra.mxu0 0
      %1556 = vmatprep.subr.bf16.mxu0 0
      %1557 = vmatpush1.bf16.msra.mxu0 0
      %1558 = vmatprep.subr.bf16.mxu0 0
      %1559 = vmatpush1.bf16.msra.mxu0 0
      %1560 = vmatprep.subr.bf16.mxu0 0
      %1561 = vmatpush1.bf16.msra.mxu0 0
      %1562 = vmatprep.subr.bf16.mxu0 %v1505
      %1563 = vmatpush1.bf16.msra.mxu0 %v1502
      %1564 = vmatprep.subr.bf16.mxu0 0
      %1565 = vmatpush2.bf16.msra.mxu0 0
      %1566 = vmatprep.subr.bf16.mxu0 0
      %1567 = vmatpush2.bf16.msra.mxu0 0
      %1568 = vmatprep.subr.bf16.mxu0 0
      %1569 = vmatpush2.bf16.msra.mxu0 0
      %1570 = vmatprep.subr.bf16.mxu0 0
      %1571 = vmatpush2.bf16.msra.mxu0 0
      %1572 = vmatprep.subr.bf16.mxu0 0
      %1573 = vmatpush2.bf16.msra.mxu0 0
      %1574 = vmatprep.subr.bf16.mxu0 0
      %1575 = vmatpush2.bf16.msra.mxu0 0
      %1576 = vmatprep.subr.bf16.mxu0 0
      %1577 = vmatpush2.bf16.msra.mxu0 0
      %1578 = vmatprep.subr.bf16.mxu0 0
      %1579 = vmatpush2.bf16.msra.mxu0 0
      %1580 = vmatprep.mubr.bf16.mxu0 0
      %1581 = vmatmul.mubr.bf16.gmra.mxu0 %v1493
      %v1582 = vpop.f32.mrf.mxu0
      %v1583 = vadd.f32 0.0, %v1582
      %v1584 = vpop.f32.mrf.mxu0
      %v1585 = vadd.f32 0.0, %v1584
      %v1586 = vpop.f32.mrf.mxu0
      %v1587 = vpop.f32.mrf.mxu0
      %1588 = vdwg.mxu0
      %v1589 = vadd.f32 %v1441, %v1542
      %v1590 = vadd.f32 %v1442, %v1544
      %v1591 = vadd.f32 %v1443, %v1583
      %v1592 = vadd.f32 %v1444, %v1585
      %s1593 = scalar_lea.vmem %s1, 18
      %v1594 = vld [vmem:[%s1593] sm:$0x3]
      %1595 = vrot.lane.b32.xlu0 %v248, 9
      %v1596 = vpop.permute.xlu0 %1595
      %1597 = vrot.lane.b32.xlu0 %v264, 9
      %v1598 = vpop.permute.xlu0 %1597
      %1599 = vrot.lane.b32.xlu0 %v249, 9
      %v1600 = vpop.permute.xlu0 %1599
      %1601 = vrot.lane.b32.xlu0 %v265, 9
      %v1602 = vpop.permute.xlu0 %1601
      %vm1603 = vcmp.lt.s32.totalorder %v277, 9
      %v1604 = vsel %vm1603, %v1600, %v1602
      %v1605 = vsel %vm1603, %v1598, %v1600
      %v1606 = vsel %vm1603, %v1596, %v1598
      %v1607 = vsel %vm1603, %v1602, %v1596
      %vm1608 = vmand %vm257, %vm259
      %v1609 = vsel %vm1608, 1, 0
      %v1610 = vcvt.s32.f32 %v1609
      %v1612 = vlaneseq
      %v1613 = vshrl.u32 %v1612, 7
      %v1614 = vsub.s32 0, %v1613
      %v1615 = vrot.slane %v1610, %v1614
      %v1616 = vlaneseq
      %v1617 = vshrl.u32 %v1616, 7
      %v1618 = vsub.s32 1, %v1617
      %v1619 = vrot.slane %v1610, %v1618
      %v1620 = vlaneseq
      %v1621 = vshrl.u32 %v1620, 7
      %v1622 = vsub.s32 2, %v1621
      %v1623 = vrot.slane %v1610, %v1622
      %v1624 = vlaneseq
      %v1625 = vshrl.u32 %v1624, 7
      %v1626 = vsub.s32 3, %v1625
      %v1627 = vrot.slane %v1610, %v1626
      %v1632 = vmul.f32 %v1607, %v1615
      %v1633 = vmul.f32 %v1606, %v1619
      %v1634 = vmul.f32 %v1605, %v1623
      %v1635 = vmul.f32 %v1604, %v1627
      %v1636 = vpack.c.bf16 %v1632, %v1632
      %v1637 = vpack.c.bf16 %v1633, %v1633
      %v1638 = vpack.c.bf16 %v1634, %v1634
      %v1639 = vpack.c.bf16 %v1635, %v1635
      %v1641 = vsel %vm362, %v1594, 0
      %v1644 = vsel %vm366, %v1636, 0
      %v1647 = vsel %vm366, %v1637, 0
      %v1650 = vsel %vm366, %v1638, 0
      %v1653 = vsel %vm366, %v1639, 0
      %1655 = vmatprep.subr.bf16.mxu0 0
      %1656 = vmatpush1.bf16.msra.mxu0 0
      %1657 = vmatprep.subr.bf16.mxu0 0
      %1658 = vmatpush1.bf16.msra.mxu0 0
      %1659 = vmatprep.subr.bf16.mxu0 0
      %1660 = vmatpush1.bf16.msra.mxu0 0
      %1661 = vmatprep.subr.bf16.mxu0 0
      %1662 = vmatpush1.bf16.msra.mxu0 0
      %1663 = vmatprep.subr.bf16.mxu0 0
      %1664 = vmatpush1.bf16.msra.mxu0 0
      %1665 = vmatprep.subr.bf16.mxu0 0
      %1666 = vmatpush1.bf16.msra.mxu0 0
      %1667 = vmatprep.subr.bf16.mxu0 0
      %1668 = vmatpush1.bf16.msra.mxu0 0
      %1669 = vmatprep.subr.bf16.mxu0 %v1647
      %1670 = vmatpush1.bf16.msra.mxu0 %v1644
      %1671 = vmatprep.subr.bf16.mxu0 0
      %1672 = vmatpush2.bf16.msra.mxu0 0
      %1673 = vmatprep.subr.bf16.mxu0 0
      %1674 = vmatpush2.bf16.msra.mxu0 0
      %1675 = vmatprep.subr.bf16.mxu0 0
      %1676 = vmatpush2.bf16.msra.mxu0 0
      %1677 = vmatprep.subr.bf16.mxu0 0
      %1678 = vmatpush2.bf16.msra.mxu0 0
      %1679 = vmatprep.subr.bf16.mxu0 0
      %1680 = vmatpush2.bf16.msra.mxu0 0
      %1681 = vmatprep.subr.bf16.mxu0 0
      %1682 = vmatpush2.bf16.msra.mxu0 0
      %1683 = vmatprep.subr.bf16.mxu0 0
      %1684 = vmatpush2.bf16.msra.mxu0 0
      %1685 = vmatprep.subr.bf16.mxu0 0
      %1686 = vmatpush2.bf16.msra.mxu0 0
      %1687 = vmatprep.mubr.bf16.mxu0 0
      %1688 = vmatmul.mubr.bf16.gmra.mxu0 %v1641
      %v1689 = vpop.f32.mrf.mxu0
      %v1690 = vadd.f32 0.0, %v1689
      %v1691 = vpop.f32.mrf.mxu0
      %v1692 = vadd.f32 0.0, %v1691
      %v1693 = vpop.f32.mrf.mxu0
      %v1694 = vpop.f32.mrf.mxu0
      %1695 = vdwg.mxu0
      %1696 = vmatprep.subr.bf16.mxu0 0
      %1697 = vmatpush1.bf16.msra.mxu0 0
      %1698 = vmatprep.subr.bf16.mxu0 0
      %1699 = vmatpush1.bf16.msra.mxu0 0
      %1700 = vmatprep.subr.bf16.mxu0 0
      %1701 = vmatpush1.bf16.msra.mxu0 0
      %1702 = vmatprep.subr.bf16.mxu0 0
      %1703 = vmatpush1.bf16.msra.mxu0 0
      %1704 = vmatprep.subr.bf16.mxu0 0
      %1705 = vmatpush1.bf16.msra.mxu0 0
      %1706 = vmatprep.subr.bf16.mxu0 0
      %1707 = vmatpush1.bf16.msra.mxu0 0
      %1708 = vmatprep.subr.bf16.mxu0 0
      %1709 = vmatpush1.bf16.msra.mxu0 0
      %1710 = vmatprep.subr.bf16.mxu0 %v1653
      %1711 = vmatpush1.bf16.msra.mxu0 %v1650
      %1712 = vmatprep.subr.bf16.mxu0 0
      %1713 = vmatpush2.bf16.msra.mxu0 0
      %1714 = vmatprep.subr.bf16.mxu0 0
      %1715 = vmatpush2.bf16.msra.mxu0 0
      %1716 = vmatprep.subr.bf16.mxu0 0
      %1717 = vmatpush2.bf16.msra.mxu0 0
      %1718 = vmatprep.subr.bf16.mxu0 0
      %1719 = vmatpush2.bf16.msra.mxu0 0
      %1720 = vmatprep.subr.bf16.mxu0 0
      %1721 = vmatpush2.bf16.msra.mxu0 0
      %1722 = vmatprep.subr.bf16.mxu0 0
      %1723 = vmatpush2.bf16.msra.mxu0 0
      %1724 = vmatprep.subr.bf16.mxu0 0
      %1725 = vmatpush2.bf16.msra.mxu0 0
      %1726 = vmatprep.subr.bf16.mxu0 0
      %1727 = vmatpush2.bf16.msra.mxu0 0
      %1728 = vmatprep.mubr.bf16.mxu0 0
      %1729 = vmatmul.mubr.bf16.gmra.mxu0 %v1641
      %v1730 = vpop.f32.mrf.mxu0
      %v1731 = vadd.f32 0.0, %v1730
      %v1732 = vpop.f32.mrf.mxu0
      %v1733 = vadd.f32 0.0, %v1732
      %v1734 = vpop.f32.mrf.mxu0
      %v1735 = vpop.f32.mrf.mxu0
      %1736 = vdwg.mxu0
      %v1737 = vadd.f32 %v1589, %v1690
      %v1738 = vadd.f32 %v1590, %v1692
      %v1739 = vadd.f32 %v1591, %v1731
      %v1740 = vadd.f32 %v1592, %v1733
      %s1741 = scalar_lea.vmem %s1, 20
      %v1742 = vld [vmem:[%s1741] sm:$0x3]
      %1743 = vrot.lane.b32.xlu0 %v248, 8
      %v1744 = vpop.permute.xlu0 %1743
      %1745 = vrot.lane.b32.xlu0 %v264, 8
      %v1746 = vpop.permute.xlu0 %1745
      %1747 = vrot.lane.b32.xlu0 %v249, 8
      %v1748 = vpop.permute.xlu0 %1747
      %1749 = vrot.lane.b32.xlu0 %v265, 8
      %v1750 = vpop.permute.xlu0 %1749
      %vm1751 = vcmp.lt.s32.totalorder %v277, 8
      %v1752 = vsel %vm1751, %v1748, %v1750
      %v1753 = vsel %vm1751, %v1746, %v1748
      %v1754 = vsel %vm1751, %v1744, %v1746
      %v1755 = vsel %vm1751, %v1750, %v1744
      %v1756 = vsel %vm257, 1, 0
      %v1757 = vcvt.s32.f32 %v1756
      %v1759 = vlaneseq
      %v1760 = vshrl.u32 %v1759, 7
      %v1761 = vsub.s32 0, %v1760
      %v1762 = vrot.slane %v1757, %v1761
      %v1763 = vlaneseq
      %v1764 = vshrl.u32 %v1763, 7
      %v1765 = vsub.s32 1, %v1764
      %v1766 = vrot.slane %v1757, %v1765
      %v1767 = vlaneseq
      %v1768 = vshrl.u32 %v1767, 7
      %v1769 = vsub.s32 2, %v1768
      %v1770 = vrot.slane %v1757, %v1769
      %v1771 = vlaneseq
      %v1772 = vshrl.u32 %v1771, 7
      %v1773 = vsub.s32 3, %v1772
      %v1774 = vrot.slane %v1757, %v1773
      %v1779 = vmul.f32 %v1755, %v1762
      %v1780 = vmul.f32 %v1754, %v1766
      %v1781 = vmul.f32 %v1753, %v1770
      %v1782 = vmul.f32 %v1752, %v1774
      %v1783 = vpack.c.bf16 %v1779, %v1779
      %v1784 = vpack.c.bf16 %v1780, %v1780
      %v1785 = vpack.c.bf16 %v1781, %v1781
      %v1786 = vpack.c.bf16 %v1782, %v1782
      %v1788 = vsel %vm362, %v1742, 0
      %v1791 = vsel %vm366, %v1783, 0
      %v1794 = vsel %vm366, %v1784, 0
      %v1797 = vsel %vm366, %v1785, 0
      %v1800 = vsel %vm366, %v1786, 0
      %1802 = vmatprep.subr.bf16.mxu0 0
      %1803 = vmatpush1.bf16.msra.mxu0 0
      %1804 = vmatprep.subr.bf16.mxu0 0
      %1805 = vmatpush1.bf16.msra.mxu0 0
      %1806 = vmatprep.subr.bf16.mxu0 0
      %1807 = vmatpush1.bf16.msra.mxu0 0
      %1808 = vmatprep.subr.bf16.mxu0 0
      %1809 = vmatpush1.bf16.msra.mxu0 0
      %1810 = vmatprep.subr.bf16.mxu0 0
      %1811 = vmatpush1.bf16.msra.mxu0 0
      %1812 = vmatprep.subr.bf16.mxu0 0
      %1813 = vmatpush1.bf16.msra.mxu0 0
      %1814 = vmatprep.subr.bf16.mxu0 0
      %1815 = vmatpush1.bf16.msra.mxu0 0
      %1816 = vmatprep.subr.bf16.mxu0 %v1794
      %1817 = vmatpush1.bf16.msra.mxu0 %v1791
      %1818 = vmatprep.subr.bf16.mxu0 0
      %1819 = vmatpush2.bf16.msra.mxu0 0
      %1820 = vmatprep.subr.bf16.mxu0 0
      %1821 = vmatpush2.bf16.msra.mxu0 0
      %1822 = vmatprep.subr.bf16.mxu0 0
      %1823 = vmatpush2.bf16.msra.mxu0 0
      %1824 = vmatprep.subr.bf16.mxu0 0
      %1825 = vmatpush2.bf16.msra.mxu0 0
      %1826 = vmatprep.subr.bf16.mxu0 0
      %1827 = vmatpush2.bf16.msra.mxu0 0
      %1828 = vmatprep.subr.bf16.mxu0 0
      %1829 = vmatpush2.bf16.msra.mxu0 0
      %1830 = vmatprep.subr.bf16.mxu0 0
      %1831 = vmatpush2.bf16.msra.mxu0 0
      %1832 = vmatprep.subr.bf16.mxu0 0
      %1833 = vmatpush2.bf16.msra.mxu0 0
      %1834 = vmatprep.mubr.bf16.mxu0 0
      %1835 = vmatmul.mubr.bf16.gmra.mxu0 %v1788
      %v1836 = vpop.f32.mrf.mxu0
      %v1837 = vadd.f32 0.0, %v1836
      %v1838 = vpop.f32.mrf.mxu0
      %v1839 = vadd.f32 0.0, %v1838
      %v1840 = vpop.f32.mrf.mxu0
      %v1841 = vpop.f32.mrf.mxu0
      %1842 = vdwg.mxu0
      %1843 = vmatprep.subr.bf16.mxu0 0
      %1844 = vmatpush1.bf16.msra.mxu0 0
      %1845 = vmatprep.subr.bf16.mxu0 0
      %1846 = vmatpush1.bf16.msra.mxu0 0
      %1847 = vmatprep.subr.bf16.mxu0 0
      %1848 = vmatpush1.bf16.msra.mxu0 0
      %1849 = vmatprep.subr.bf16.mxu0 0
      %1850 = vmatpush1.bf16.msra.mxu0 0
      %1851 = vmatprep.subr.bf16.mxu0 0
      %1852 = vmatpush1.bf16.msra.mxu0 0
      %1853 = vmatprep.subr.bf16.mxu0 0
      %1854 = vmatpush1.bf16.msra.mxu0 0
      %1855 = vmatprep.subr.bf16.mxu0 0
      %1856 = vmatpush1.bf16.msra.mxu0 0
      %1857 = vmatprep.subr.bf16.mxu0 %v1800
      %1858 = vmatpush1.bf16.msra.mxu0 %v1797
      %1859 = vmatprep.subr.bf16.mxu0 0
      %1860 = vmatpush2.bf16.msra.mxu0 0
      %1861 = vmatprep.subr.bf16.mxu0 0
      %1862 = vmatpush2.bf16.msra.mxu0 0
      %1863 = vmatprep.subr.bf16.mxu0 0
      %1864 = vmatpush2.bf16.msra.mxu0 0
      %1865 = vmatprep.subr.bf16.mxu0 0
      %1866 = vmatpush2.bf16.msra.mxu0 0
      %1867 = vmatprep.subr.bf16.mxu0 0
      %1868 = vmatpush2.bf16.msra.mxu0 0
      %1869 = vmatprep.subr.bf16.mxu0 0
      %1870 = vmatpush2.bf16.msra.mxu0 0
      %1871 = vmatprep.subr.bf16.mxu0 0
      %1872 = vmatpush2.bf16.msra.mxu0 0
      %1873 = vmatprep.subr.bf16.mxu0 0
      %1874 = vmatpush2.bf16.msra.mxu0 0
      %1875 = vmatprep.mubr.bf16.mxu0 0
      %1876 = vmatmul.mubr.bf16.gmra.mxu0 %v1788
      %v1877 = vpop.f32.mrf.mxu0
      %v1878 = vadd.f32 0.0, %v1877
      %v1879 = vpop.f32.mrf.mxu0
      %v1880 = vadd.f32 0.0, %v1879
      %v1881 = vpop.f32.mrf.mxu0
      %v1882 = vpop.f32.mrf.mxu0
      %1883 = vdwg.mxu0
      %v1884 = vadd.f32 %v1737, %v1837
      %v1885 = vadd.f32 %v1738, %v1839
      %v1886 = vadd.f32 %v1739, %v1878
      %v1887 = vadd.f32 %v1740, %v1880
      %s1888 = scalar_lea.vmem %s1, 22
      %v1889 = vld [vmem:[%s1888] sm:$0x3]
      %1890 = vrot.lane.b32.xlu0 %v248, 7
      %v1891 = vpop.permute.xlu0 %1890
      %1892 = vrot.lane.b32.xlu0 %v264, 7
      %v1893 = vpop.permute.xlu0 %1892
      %1894 = vrot.lane.b32.xlu0 %v249, 7
      %v1895 = vpop.permute.xlu0 %1894
      %1896 = vrot.lane.b32.xlu0 %v265, 7
      %v1897 = vpop.permute.xlu0 %1896
      %vm1898 = vcmp.lt.s32.totalorder %v277, 7
      %v1899 = vsel %vm1898, %v1895, %v1897
      %v1900 = vsel %vm1898, %v1893, %v1895
      %v1901 = vsel %vm1898, %v1891, %v1893
      %v1902 = vsel %vm1898, %v1897, %v1891
      %vm1903 = vmand %vm257, %vm260
      %v1904 = vsel %vm1903, 1, 0
      %v1905 = vcvt.s32.f32 %v1904
      %v1907 = vlaneseq
      %v1908 = vshrl.u32 %v1907, 7
      %v1909 = vsub.s32 0, %v1908
      %v1910 = vrot.slane %v1905, %v1909
      %v1911 = vlaneseq
      %v1912 = vshrl.u32 %v1911, 7
      %v1913 = vsub.s32 1, %v1912
      %v1914 = vrot.slane %v1905, %v1913
      %v1915 = vlaneseq
      %v1916 = vshrl.u32 %v1915, 7
      %v1917 = vsub.s32 2, %v1916
      %v1918 = vrot.slane %v1905, %v1917
      %v1919 = vlaneseq
      %v1920 = vshrl.u32 %v1919, 7
      %v1921 = vsub.s32 3, %v1920
      %v1922 = vrot.slane %v1905, %v1921
      %v1927 = vmul.f32 %v1902, %v1910
      %v1928 = vmul.f32 %v1901, %v1914
      %v1929 = vmul.f32 %v1900, %v1918
      %v1930 = vmul.f32 %v1899, %v1922
      %v1931 = vpack.c.bf16 %v1927, %v1927
      %v1932 = vpack.c.bf16 %v1928, %v1928
      %v1933 = vpack.c.bf16 %v1929, %v1929
      %v1934 = vpack.c.bf16 %v1930, %v1930
      %v1936 = vsel %vm362, %v1889, 0
      %v1939 = vsel %vm366, %v1931, 0
      %v1942 = vsel %vm366, %v1932, 0
      %v1945 = vsel %vm366, %v1933, 0
      %v1948 = vsel %vm366, %v1934, 0
      %1950 = vmatprep.subr.bf16.mxu0 0
      %1951 = vmatpush1.bf16.msra.mxu0 0
      %1952 = vmatprep.subr.bf16.mxu0 0
      %1953 = vmatpush1.bf16.msra.mxu0 0
      %1954 = vmatprep.subr.bf16.mxu0 0
      %1955 = vmatpush1.bf16.msra.mxu0 0
      %1956 = vmatprep.subr.bf16.mxu0 0
      %1957 = vmatpush1.bf16.msra.mxu0 0
      %1958 = vmatprep.subr.bf16.mxu0 0
      %1959 = vmatpush1.bf16.msra.mxu0 0
      %1960 = vmatprep.subr.bf16.mxu0 0
      %1961 = vmatpush1.bf16.msra.mxu0 0
      %1962 = vmatprep.subr.bf16.mxu0 0
      %1963 = vmatpush1.bf16.msra.mxu0 0
      %1964 = vmatprep.subr.bf16.mxu0 %v1942
      %1965 = vmatpush1.bf16.msra.mxu0 %v1939
      %1966 = vmatprep.subr.bf16.mxu0 0
      %1967 = vmatpush2.bf16.msra.mxu0 0
      %1968 = vmatprep.subr.bf16.mxu0 0
      %1969 = vmatpush2.bf16.msra.mxu0 0
      %1970 = vmatprep.subr.bf16.mxu0 0
      %1971 = vmatpush2.bf16.msra.mxu0 0
      %1972 = vmatprep.subr.bf16.mxu0 0
      %1973 = vmatpush2.bf16.msra.mxu0 0
      %1974 = vmatprep.subr.bf16.mxu0 0
      %1975 = vmatpush2.bf16.msra.mxu0 0
      %1976 = vmatprep.subr.bf16.mxu0 0
      %1977 = vmatpush2.bf16.msra.mxu0 0
      %1978 = vmatprep.subr.bf16.mxu0 0
      %1979 = vmatpush2.bf16.msra.mxu0 0
      %1980 = vmatprep.subr.bf16.mxu0 0
      %1981 = vmatpush2.bf16.msra.mxu0 0
      %1982 = vmatprep.mubr.bf16.mxu0 0
      %1983 = vmatmul.mubr.bf16.gmra.mxu0 %v1936
      %v1984 = vpop.f32.mrf.mxu0
      %v1985 = vadd.f32 0.0, %v1984
      %v1986 = vpop.f32.mrf.mxu0
      %v1987 = vadd.f32 0.0, %v1986
      %v1988 = vpop.f32.mrf.mxu0
      %v1989 = vpop.f32.mrf.mxu0
      %1990 = vdwg.mxu0
      %1991 = vmatprep.subr.bf16.mxu0 0
      %1992 = vmatpush1.bf16.msra.mxu0 0
      %1993 = vmatprep.subr.bf16.mxu0 0
      %1994 = vmatpush1.bf16.msra.mxu0 0
      %1995 = vmatprep.subr.bf16.mxu0 0
      %1996 = vmatpush1.bf16.msra.mxu0 0
      %1997 = vmatprep.subr.bf16.mxu0 0
      %1998 = vmatpush1.bf16.msra.mxu0 0
      %1999 = vmatprep.subr.bf16.mxu0 0
      %2000 = vmatpush1.bf16.msra.mxu0 0
      %2001 = vmatprep.subr.bf16.mxu0 0
      %2002 = vmatpush1.bf16.msra.mxu0 0
      %2003 = vmatprep.subr.bf16.mxu0 0
      %2004 = vmatpush1.bf16.msra.mxu0 0
      %2005 = vmatprep.subr.bf16.mxu0 %v1948
      %2006 = vmatpush1.bf16.msra.mxu0 %v1945
      %2007 = vmatprep.subr.bf16.mxu0 0
      %2008 = vmatpush2.bf16.msra.mxu0 0
      %2009 = vmatprep.subr.bf16.mxu0 0
      %2010 = vmatpush2.bf16.msra.mxu0 0
      %2011 = vmatprep.subr.bf16.mxu0 0
      %2012 = vmatpush2.bf16.msra.mxu0 0
      %2013 = vmatprep.subr.bf16.mxu0 0
      %2014 = vmatpush2.bf16.msra.mxu0 0
      %2015 = vmatprep.subr.bf16.mxu0 0
      %2016 = vmatpush2.bf16.msra.mxu0 0
      %2017 = vmatprep.subr.bf16.mxu0 0
      %2018 = vmatpush2.bf16.msra.mxu0 0
      %2019 = vmatprep.subr.bf16.mxu0 0
      %2020 = vmatpush2.bf16.msra.mxu0 0
      %2021 = vmatprep.subr.bf16.mxu0 0
      %2022 = vmatpush2.bf16.msra.mxu0 0
      %2023 = vmatprep.mubr.bf16.mxu0 0
      %2024 = vmatmul.mubr.bf16.gmra.mxu0 %v1936
      %v2025 = vpop.f32.mrf.mxu0
      %v2026 = vadd.f32 0.0, %v2025
      %v2027 = vpop.f32.mrf.mxu0
      %v2028 = vadd.f32 0.0, %v2027
      %v2029 = vpop.f32.mrf.mxu0
      %v2030 = vpop.f32.mrf.mxu0
      %2031 = vdwg.mxu0
      %v2032 = vadd.f32 %v1884, %v1985
      %v2033 = vadd.f32 %v1885, %v1987
      %v2034 = vadd.f32 %v1886, %v2026
      %v2035 = vadd.f32 %v1887, %v2028
      %s2036 = scalar_lea.vmem %s1, 24
      %v2037 = vld [vmem:[%s2036] sm:$0x3]
      %2038 = vrot.lane.b32.xlu0 %v248, 1
      %v2039 = vpop.permute.xlu0 %2038
      %2040 = vrot.lane.b32.xlu0 %v264, 1
      %v2041 = vpop.permute.xlu0 %2040
      %2042 = vrot.lane.b32.xlu0 %v249, 1
      %v2043 = vpop.permute.xlu0 %2042
      %2044 = vrot.lane.b32.xlu0 %v265, 1
      %v2045 = vpop.permute.xlu0 %2044
      %vm2046 = vcmp.lt.s32.totalorder %v277, 1
      %v2047 = vsel %vm2046, %v2043, %v2045
      %v2048 = vsel %vm2046, %v2041, %v2043
      %v2049 = vsel %vm2046, %v2039, %v2041
      %v2050 = vsel %vm2046, %v2045, %v2039
      %v2051 = vsel %vm259, 1, 0
      %v2052 = vcvt.s32.f32 %v2051
      %v2054 = vlaneseq
      %v2055 = vshrl.u32 %v2054, 7
      %v2056 = vsub.s32 0, %v2055
      %v2057 = vrot.slane %v2052, %v2056
      %v2058 = vlaneseq
      %v2059 = vshrl.u32 %v2058, 7
      %v2060 = vsub.s32 1, %v2059
      %v2061 = vrot.slane %v2052, %v2060
      %v2062 = vlaneseq
      %v2063 = vshrl.u32 %v2062, 7
      %v2064 = vsub.s32 2, %v2063
      %v2065 = vrot.slane %v2052, %v2064
      %v2066 = vlaneseq
      %v2067 = vshrl.u32 %v2066, 7
      %v2068 = vsub.s32 3, %v2067
      %v2069 = vrot.slane %v2052, %v2068
      %v2074 = vmul.f32 %v2050, %v2057
      %v2075 = vmul.f32 %v2049, %v2061
      %v2076 = vmul.f32 %v2048, %v2065
      %v2077 = vmul.f32 %v2047, %v2069
      %v2078 = vpack.c.bf16 %v2074, %v2074
      %v2079 = vpack.c.bf16 %v2075, %v2075
      %v2080 = vpack.c.bf16 %v2076, %v2076
      %v2081 = vpack.c.bf16 %v2077, %v2077
      %v2083 = vsel %vm362, %v2037, 0
      %v2086 = vsel %vm366, %v2078, 0
      %v2089 = vsel %vm366, %v2079, 0
      %v2092 = vsel %vm366, %v2080, 0
      %v2095 = vsel %vm366, %v2081, 0
      %2097 = vmatprep.subr.bf16.mxu0 0
      %2098 = vmatpush1.bf16.msra.mxu0 0
      %2099 = vmatprep.subr.bf16.mxu0 0
      %2100 = vmatpush1.bf16.msra.mxu0 0
      %2101 = vmatprep.subr.bf16.mxu0 0
      %2102 = vmatpush1.bf16.msra.mxu0 0
      %2103 = vmatprep.subr.bf16.mxu0 0
      %2104 = vmatpush1.bf16.msra.mxu0 0
      %2105 = vmatprep.subr.bf16.mxu0 0
      %2106 = vmatpush1.bf16.msra.mxu0 0
      %2107 = vmatprep.subr.bf16.mxu0 0
      %2108 = vmatpush1.bf16.msra.mxu0 0
      %2109 = vmatprep.subr.bf16.mxu0 0
      %2110 = vmatpush1.bf16.msra.mxu0 0
      %2111 = vmatprep.subr.bf16.mxu0 %v2089
      %2112 = vmatpush1.bf16.msra.mxu0 %v2086
      %2113 = vmatprep.subr.bf16.mxu0 0
      %2114 = vmatpush2.bf16.msra.mxu0 0
      %2115 = vmatprep.subr.bf16.mxu0 0
      %2116 = vmatpush2.bf16.msra.mxu0 0
      %2117 = vmatprep.subr.bf16.mxu0 0
      %2118 = vmatpush2.bf16.msra.mxu0 0
      %2119 = vmatprep.subr.bf16.mxu0 0
      %2120 = vmatpush2.bf16.msra.mxu0 0
      %2121 = vmatprep.subr.bf16.mxu0 0
      %2122 = vmatpush2.bf16.msra.mxu0 0
      %2123 = vmatprep.subr.bf16.mxu0 0
      %2124 = vmatpush2.bf16.msra.mxu0 0
      %2125 = vmatprep.subr.bf16.mxu0 0
      %2126 = vmatpush2.bf16.msra.mxu0 0
      %2127 = vmatprep.subr.bf16.mxu0 0
      %2128 = vmatpush2.bf16.msra.mxu0 0
      %2129 = vmatprep.mubr.bf16.mxu0 0
      %2130 = vmatmul.mubr.bf16.gmra.mxu0 %v2083
      %v2131 = vpop.f32.mrf.mxu0
      %v2132 = vadd.f32 0.0, %v2131
      %v2133 = vpop.f32.mrf.mxu0
      %v2134 = vadd.f32 0.0, %v2133
      %v2135 = vpop.f32.mrf.mxu0
      %v2136 = vpop.f32.mrf.mxu0
      %2137 = vdwg.mxu0
      %2138 = vmatprep.subr.bf16.mxu0 0
      %2139 = vmatpush1.bf16.msra.mxu0 0
      %2140 = vmatprep.subr.bf16.mxu0 0
      %2141 = vmatpush1.bf16.msra.mxu0 0
      %2142 = vmatprep.subr.bf16.mxu0 0
      %2143 = vmatpush1.bf16.msra.mxu0 0
      %2144 = vmatprep.subr.bf16.mxu0 0
      %2145 = vmatpush1.bf16.msra.mxu0 0
      %2146 = vmatprep.subr.bf16.mxu0 0
      %2147 = vmatpush1.bf16.msra.mxu0 0
      %2148 = vmatprep.subr.bf16.mxu0 0
      %2149 = vmatpush1.bf16.msra.mxu0 0
      %2150 = vmatprep.subr.bf16.mxu0 0
      %2151 = vmatpush1.bf16.msra.mxu0 0
      %2152 = vmatprep.subr.bf16.mxu0 %v2095
      %2153 = vmatpush1.bf16.msra.mxu0 %v2092
      %2154 = vmatprep.subr.bf16.mxu0 0
      %2155 = vmatpush2.bf16.msra.mxu0 0
      %2156 = vmatprep.subr.bf16.mxu0 0
      %2157 = vmatpush2.bf16.msra.mxu0 0
      %2158 = vmatprep.subr.bf16.mxu0 0
      %2159 = vmatpush2.bf16.msra.mxu0 0
      %2160 = vmatprep.subr.bf16.mxu0 0
      %2161 = vmatpush2.bf16.msra.mxu0 0
      %2162 = vmatprep.subr.bf16.mxu0 0
      %2163 = vmatpush2.bf16.msra.mxu0 0
      %2164 = vmatprep.subr.bf16.mxu0 0
      %2165 = vmatpush2.bf16.msra.mxu0 0
      %2166 = vmatprep.subr.bf16.mxu0 0
      %2167 = vmatpush2.bf16.msra.mxu0 0
      %2168 = vmatprep.subr.bf16.mxu0 0
      %2169 = vmatpush2.bf16.msra.mxu0 0
      %2170 = vmatprep.mubr.bf16.mxu0 0
      %2171 = vmatmul.mubr.bf16.gmra.mxu0 %v2083
      %v2172 = vpop.f32.mrf.mxu0
      %v2173 = vadd.f32 0.0, %v2172
      %v2174 = vpop.f32.mrf.mxu0
      %v2175 = vadd.f32 0.0, %v2174
      %v2176 = vpop.f32.mrf.mxu0
      %v2177 = vpop.f32.mrf.mxu0
      %2178 = vdwg.mxu0
      %v2179 = vadd.f32 %v2032, %v2132
      %v2180 = vadd.f32 %v2033, %v2134
      %v2181 = vadd.f32 %v2034, %v2173
      %v2182 = vadd.f32 %v2035, %v2175
      %s2183 = scalar_lea.vmem %s1, 26
      %v2184 = vld [vmem:[%s2183] sm:$0x3]
      %v2186 = vcombine.high %v247, %v247
      %v2188 = vunpack.c.l.s4 1983009808
      %v2189 = vunpack.c.0.s8 %v2188
      %v2190 = vlaneseq
      %v2191 = vshrl.u32 %v2190, 7
      %v2192 = vsub.s32 %v2189, %v2191
      %v2193 = vrot.slane %v247, %v2192
      %v2195 = vunpack.c.l.s4 1983009808
      %v2196 = vunpack.c.0.s8 %v2195
      %v2197 = vlaneseq
      %v2198 = vshrl.u32 %v2197, 7
      %v2199 = vsub.s32 %v2196, %v2198
      %v2200 = vrot.slane %v2186, %v2199
      %v2201 = vcombine.high %v2193, %v2193
      %v2202 = vcombine.high %v2200, %v2200
      %v2204 = vsel %vm362, %v2184, 0
      %v2207 = vsel %vm366, %v2193, 0
      %v2210 = vsel %vm366, %v2201, 0
      %v2213 = vsel %vm366, %v2200, 0
      %v2216 = vsel %vm366, %v2202, 0
      %2218 = vmatprep.subr.bf16.mxu0 0
      %2219 = vmatpush1.bf16.msra.mxu0 0
      %2220 = vmatprep.subr.bf16.mxu0 0
      %2221 = vmatpush1.bf16.msra.mxu0 0
      %2222 = vmatprep.subr.bf16.mxu0 0
      %2223 = vmatpush1.bf16.msra.mxu0 0
      %2224 = vmatprep.subr.bf16.mxu0 0
      %2225 = vmatpush1.bf16.msra.mxu0 0
      %2226 = vmatprep.subr.bf16.mxu0 0
      %2227 = vmatpush1.bf16.msra.mxu0 0
      %2228 = vmatprep.subr.bf16.mxu0 0
      %2229 = vmatpush1.bf16.msra.mxu0 0
      %2230 = vmatprep.subr.bf16.mxu0 0
      %2231 = vmatpush1.bf16.msra.mxu0 0
      %2232 = vmatprep.subr.bf16.mxu0 %v2210
      %2233 = vmatpush1.bf16.msra.mxu0 %v2207
      %2234 = vmatprep.subr.bf16.mxu0 0
      %2235 = vmatpush2.bf16.msra.mxu0 0
      %2236 = vmatprep.subr.bf16.mxu0 0
      %2237 = vmatpush2.bf16.msra.mxu0 0
      %2238 = vmatprep.subr.bf16.mxu0 0
      %2239 = vmatpush2.bf16.msra.mxu0 0
      %2240 = vmatprep.subr.bf16.mxu0 0
      %2241 = vmatpush2.bf16.msra.mxu0 0
      %2242 = vmatprep.subr.bf16.mxu0 0
      %2243 = vmatpush2.bf16.msra.mxu0 0
      %2244 = vmatprep.subr.bf16.mxu0 0
      %2245 = vmatpush2.bf16.msra.mxu0 0
      %2246 = vmatprep.subr.bf16.mxu0 0
      %2247 = vmatpush2.bf16.msra.mxu0 0
      %2248 = vmatprep.subr.bf16.mxu0 0
      %2249 = vmatpush2.bf16.msra.mxu0 0
      %2250 = vmatprep.mubr.bf16.mxu0 0
      %2251 = vmatmul.mubr.bf16.gmra.mxu0 %v2204
      %v2252 = vpop.f32.mrf.mxu0
      %v2253 = vadd.f32 0.0, %v2252
      %v2254 = vpop.f32.mrf.mxu0
      %v2255 = vadd.f32 0.0, %v2254
      %v2256 = vpop.f32.mrf.mxu0
      %v2257 = vpop.f32.mrf.mxu0
      %2258 = vdwg.mxu0
      %2259 = vmatprep.subr.bf16.mxu0 0
      %2260 = vmatpush1.bf16.msra.mxu0 0
      %2261 = vmatprep.subr.bf16.mxu0 0
      %2262 = vmatpush1.bf16.msra.mxu0 0
      %2263 = vmatprep.subr.bf16.mxu0 0
      %2264 = vmatpush1.bf16.msra.mxu0 0
      %2265 = vmatprep.subr.bf16.mxu0 0
      %2266 = vmatpush1.bf16.msra.mxu0 0
      %2267 = vmatprep.subr.bf16.mxu0 0
      %2268 = vmatpush1.bf16.msra.mxu0 0
      %2269 = vmatprep.subr.bf16.mxu0 0
      %2270 = vmatpush1.bf16.msra.mxu0 0
      %2271 = vmatprep.subr.bf16.mxu0 0
      %2272 = vmatpush1.bf16.msra.mxu0 0
      %2273 = vmatprep.subr.bf16.mxu0 %v2216
      %2274 = vmatpush1.bf16.msra.mxu0 %v2213
      %2275 = vmatprep.subr.bf16.mxu0 0
      %2276 = vmatpush2.bf16.msra.mxu0 0
      %2277 = vmatprep.subr.bf16.mxu0 0
      %2278 = vmatpush2.bf16.msra.mxu0 0
      %2279 = vmatprep.subr.bf16.mxu0 0
      %2280 = vmatpush2.bf16.msra.mxu0 0
      %2281 = vmatprep.subr.bf16.mxu0 0
      %2282 = vmatpush2.bf16.msra.mxu0 0
      %2283 = vmatprep.subr.bf16.mxu0 0
      %2284 = vmatpush2.bf16.msra.mxu0 0
      %2285 = vmatprep.subr.bf16.mxu0 0
      %2286 = vmatpush2.bf16.msra.mxu0 0
      %2287 = vmatprep.subr.bf16.mxu0 0
      %2288 = vmatpush2.bf16.msra.mxu0 0
      %2289 = vmatprep.subr.bf16.mxu0 0
      %2290 = vmatpush2.bf16.msra.mxu0 0
      %2291 = vmatprep.mubr.bf16.mxu0 0
      %2292 = vmatmul.mubr.bf16.gmra.mxu0 %v2204
      %v2293 = vpop.f32.mrf.mxu0
      %v2294 = vadd.f32 0.0, %v2293
      %v2295 = vpop.f32.mrf.mxu0
      %v2296 = vadd.f32 0.0, %v2295
      %v2297 = vpop.f32.mrf.mxu0
      %v2298 = vpop.f32.mrf.mxu0
      %2299 = vdwg.mxu0
      %v2300 = vadd.f32 %v2179, %v2253
      %v2301 = vadd.f32 %v2180, %v2255
      %v2302 = vadd.f32 %v2181, %v2294
      %v2303 = vadd.f32 %v2182, %v2296
      %s2304 = scalar_lea.vmem %s1, 28
      %v2305 = vld [vmem:[%s2304] sm:$0x3]
      %2306 = vrot.lane.b32.xlu0 %v248, 127
      %v2307 = vpop.permute.xlu0 %2306
      %2308 = vrot.lane.b32.xlu0 %v264, 127
      %v2309 = vpop.permute.xlu0 %2308
      %2310 = vrot.lane.b32.xlu0 %v249, 127
      %v2311 = vpop.permute.xlu0 %2310
      %2312 = vrot.lane.b32.xlu0 %v265, 127
      %v2313 = vpop.permute.xlu0 %2312
      %vm2314 = vcmp.lt.s32.totalorder %v277, 127
      %v2315 = vsel %vm2314, %v2311, %v2313
      %v2316 = vsel %vm2314, %v2309, %v2311
      %v2317 = vsel %vm2314, %v2307, %v2309
      %v2318 = vsel %vm2314, %v2313, %v2307
      %v2319 = vsel %vm260, 1, 0
      %v2320 = vcvt.s32.f32 %v2319
      %v2322 = vlaneseq
      %v2323 = vshrl.u32 %v2322, 7
      %v2324 = vsub.s32 0, %v2323
      %v2325 = vrot.slane %v2320, %v2324
      %v2326 = vlaneseq
      %v2327 = vshrl.u32 %v2326, 7
      %v2328 = vsub.s32 1, %v2327
      %v2329 = vrot.slane %v2320, %v2328
      %v2330 = vlaneseq
      %v2331 = vshrl.u32 %v2330, 7
      %v2332 = vsub.s32 2, %v2331
      %v2333 = vrot.slane %v2320, %v2332
      %v2334 = vlaneseq
      %v2335 = vshrl.u32 %v2334, 7
      %v2336 = vsub.s32 3, %v2335
      %v2337 = vrot.slane %v2320, %v2336
      %v2342 = vmul.f32 %v2317, %v2325
      %v2343 = vmul.f32 %v2316, %v2329
      %v2344 = vmul.f32 %v2315, %v2333
      %v2345 = vmul.f32 %v2318, %v2337
      %v2346 = vpack.c.bf16 %v2342, %v2342
      %v2347 = vpack.c.bf16 %v2343, %v2343
      %v2348 = vpack.c.bf16 %v2344, %v2344
      %v2349 = vpack.c.bf16 %v2345, %v2345
      %v2351 = vsel %vm362, %v2305, 0
      %v2354 = vsel %vm366, %v2346, 0
      %v2357 = vsel %vm366, %v2347, 0
      %v2360 = vsel %vm366, %v2348, 0
      %v2363 = vsel %vm366, %v2349, 0
      %2365 = vmatprep.subr.bf16.mxu0 0
      %2366 = vmatpush1.bf16.msra.mxu0 0
      %2367 = vmatprep.subr.bf16.mxu0 0
      %2368 = vmatpush1.bf16.msra.mxu0 0
      %2369 = vmatprep.subr.bf16.mxu0 0
      %2370 = vmatpush1.bf16.msra.mxu0 0
      %2371 = vmatprep.subr.bf16.mxu0 0
      %2372 = vmatpush1.bf16.msra.mxu0 0
      %2373 = vmatprep.subr.bf16.mxu0 0
      %2374 = vmatpush1.bf16.msra.mxu0 0
      %2375 = vmatprep.subr.bf16.mxu0 0
      %2376 = vmatpush1.bf16.msra.mxu0 0
      %2377 = vmatprep.subr.bf16.mxu0 0
      %2378 = vmatpush1.bf16.msra.mxu0 0
      %2379 = vmatprep.subr.bf16.mxu0 %v2357
      %2380 = vmatpush1.bf16.msra.mxu0 %v2354
      %2381 = vmatprep.subr.bf16.mxu0 0
      %2382 = vmatpush2.bf16.msra.mxu0 0
      %2383 = vmatprep.subr.bf16.mxu0 0
      %2384 = vmatpush2.bf16.msra.mxu0 0
      %2385 = vmatprep.subr.bf16.mxu0 0
      %2386 = vmatpush2.bf16.msra.mxu0 0
      %2387 = vmatprep.subr.bf16.mxu0 0
      %2388 = vmatpush2.bf16.msra.mxu0 0
      %2389 = vmatprep.subr.bf16.mxu0 0
      %2390 = vmatpush2.bf16.msra.mxu0 0
      %2391 = vmatprep.subr.bf16.mxu0 0
      %2392 = vmatpush2.bf16.msra.mxu0 0
      %2393 = vmatprep.subr.bf16.mxu0 0
      %2394 = vmatpush2.bf16.msra.mxu0 0
      %2395 = vmatprep.subr.bf16.mxu0 0
      %2396 = vmatpush2.bf16.msra.mxu0 0
      %2397 = vmatprep.mubr.bf16.mxu0 0
      %2398 = vmatmul.mubr.bf16.gmra.mxu0 %v2351
      %v2399 = vpop.f32.mrf.mxu0
      %v2400 = vadd.f32 0.0, %v2399
      %v2401 = vpop.f32.mrf.mxu0
      %v2402 = vadd.f32 0.0, %v2401
      %v2403 = vpop.f32.mrf.mxu0
      %v2404 = vpop.f32.mrf.mxu0
      %2405 = vdwg.mxu0
      %2406 = vmatprep.subr.bf16.mxu0 0
      %2407 = vmatpush1.bf16.msra.mxu0 0
      %2408 = vmatprep.subr.bf16.mxu0 0
      %2409 = vmatpush1.bf16.msra.mxu0 0
      %2410 = vmatprep.subr.bf16.mxu0 0
      %2411 = vmatpush1.bf16.msra.mxu0 0
      %2412 = vmatprep.subr.bf16.mxu0 0
      %2413 = vmatpush1.bf16.msra.mxu0 0
      %2414 = vmatprep.subr.bf16.mxu0 0
      %2415 = vmatpush1.bf16.msra.mxu0 0
      %2416 = vmatprep.subr.bf16.mxu0 0
      %2417 = vmatpush1.bf16.msra.mxu0 0
      %2418 = vmatprep.subr.bf16.mxu0 0
      %2419 = vmatpush1.bf16.msra.mxu0 0
      %2420 = vmatprep.subr.bf16.mxu0 %v2363
      %2421 = vmatpush1.bf16.msra.mxu0 %v2360
      %2422 = vmatprep.subr.bf16.mxu0 0
      %2423 = vmatpush2.bf16.msra.mxu0 0
      %2424 = vmatprep.subr.bf16.mxu0 0
      %2425 = vmatpush2.bf16.msra.mxu0 0
      %2426 = vmatprep.subr.bf16.mxu0 0
      %2427 = vmatpush2.bf16.msra.mxu0 0
      %2428 = vmatprep.subr.bf16.mxu0 0
      %2429 = vmatpush2.bf16.msra.mxu0 0
      %2430 = vmatprep.subr.bf16.mxu0 0
      %2431 = vmatpush2.bf16.msra.mxu0 0
      %2432 = vmatprep.subr.bf16.mxu0 0
      %2433 = vmatpush2.bf16.msra.mxu0 0
      %2434 = vmatprep.subr.bf16.mxu0 0
      %2435 = vmatpush2.bf16.msra.mxu0 0
      %2436 = vmatprep.subr.bf16.mxu0 0
      %2437 = vmatpush2.bf16.msra.mxu0 0
      %2438 = vmatprep.mubr.bf16.mxu0 0
      %2439 = vmatmul.mubr.bf16.gmra.mxu0 %v2351
      %v2440 = vpop.f32.mrf.mxu0
      %v2441 = vadd.f32 0.0, %v2440
      %v2442 = vpop.f32.mrf.mxu0
      %v2443 = vadd.f32 0.0, %v2442
      %v2444 = vpop.f32.mrf.mxu0
      %v2445 = vpop.f32.mrf.mxu0
      %2446 = vdwg.mxu0
      %v2447 = vadd.f32 %v2300, %v2400
      %v2448 = vadd.f32 %v2301, %v2402
      %v2449 = vadd.f32 %v2302, %v2441
      %v2450 = vadd.f32 %v2303, %v2443
      %s2451 = scalar_lea.vmem %s1, 30
      %v2452 = vld [vmem:[%s2451] sm:$0x3]
      %2453 = vrot.lane.b32.xlu0 %v248, 121
      %v2454 = vpop.permute.xlu0 %2453
      %2455 = vrot.lane.b32.xlu0 %v264, 121
      %v2456 = vpop.permute.xlu0 %2455
      %2457 = vrot.lane.b32.xlu0 %v249, 121
      %v2458 = vpop.permute.xlu0 %2457
      %2459 = vrot.lane.b32.xlu0 %v265, 121
      %v2460 = vpop.permute.xlu0 %2459
      %vm2461 = vcmp.lt.s32.totalorder %v277, 121
      %v2462 = vsel %vm2461, %v2458, %v2460
      %v2463 = vsel %vm2461, %v2456, %v2458
      %v2464 = vsel %vm2461, %v2454, %v2456
      %v2465 = vsel %vm2461, %v2460, %v2454
      %vm2466 = vmand %vm258, %vm259
      %v2467 = vsel %vm2466, 1, 0
      %v2468 = vcvt.s32.f32 %v2467
      %v2470 = vlaneseq
      %v2471 = vshrl.u32 %v2470, 7
      %v2472 = vsub.s32 0, %v2471
      %v2473 = vrot.slane %v2468, %v2472
      %v2474 = vlaneseq
      %v2475 = vshrl.u32 %v2474, 7
      %v2476 = vsub.s32 1, %v2475
      %v2477 = vrot.slane %v2468, %v2476
      %v2478 = vlaneseq
      %v2479 = vshrl.u32 %v2478, 7
      %v2480 = vsub.s32 2, %v2479
      %v2481 = vrot.slane %v2468, %v2480
      %v2482 = vlaneseq
      %v2483 = vshrl.u32 %v2482, 7
      %v2484 = vsub.s32 3, %v2483
      %v2485 = vrot.slane %v2468, %v2484
      %v2490 = vmul.f32 %v2464, %v2473
      %v2491 = vmul.f32 %v2463, %v2477
      %v2492 = vmul.f32 %v2462, %v2481
      %v2493 = vmul.f32 %v2465, %v2485
      %v2494 = vpack.c.bf16 %v2490, %v2490
      %v2495 = vpack.c.bf16 %v2491, %v2491
      %v2496 = vpack.c.bf16 %v2492, %v2492
      %v2497 = vpack.c.bf16 %v2493, %v2493
      %v2499 = vsel %vm362, %v2452, 0
      %v2502 = vsel %vm366, %v2494, 0
      %v2505 = vsel %vm366, %v2495, 0
      %v2508 = vsel %vm366, %v2496, 0
      %v2511 = vsel %vm366, %v2497, 0
      %2513 = vmatprep.subr.bf16.mxu0 0
      %2514 = vmatpush1.bf16.msra.mxu0 0
      %2515 = vmatprep.subr.bf16.mxu0 0
      %2516 = vmatpush1.bf16.msra.mxu0 0
      %2517 = vmatprep.subr.bf16.mxu0 0
      %2518 = vmatpush1.bf16.msra.mxu0 0
      %2519 = vmatprep.subr.bf16.mxu0 0
      %2520 = vmatpush1.bf16.msra.mxu0 0
      %2521 = vmatprep.subr.bf16.mxu0 0
      %2522 = vmatpush1.bf16.msra.mxu0 0
      %2523 = vmatprep.subr.bf16.mxu0 0
      %2524 = vmatpush1.bf16.msra.mxu0 0
      %2525 = vmatprep.subr.bf16.mxu0 0
      %2526 = vmatpush1.bf16.msra.mxu0 0
      %2527 = vmatprep.subr.bf16.mxu0 %v2505
      %2528 = vmatpush1.bf16.msra.mxu0 %v2502
      %2529 = vmatprep.subr.bf16.mxu0 0
      %2530 = vmatpush2.bf16.msra.mxu0 0
      %2531 = vmatprep.subr.bf16.mxu0 0
      %2532 = vmatpush2.bf16.msra.mxu0 0
      %2533 = vmatprep.subr.bf16.mxu0 0
      %2534 = vmatpush2.bf16.msra.mxu0 0
      %2535 = vmatprep.subr.bf16.mxu0 0
      %2536 = vmatpush2.bf16.msra.mxu0 0
      %2537 = vmatprep.subr.bf16.mxu0 0
      %2538 = vmatpush2.bf16.msra.mxu0 0
      %2539 = vmatprep.subr.bf16.mxu0 0
      %2540 = vmatpush2.bf16.msra.mxu0 0
      %2541 = vmatprep.subr.bf16.mxu0 0
      %2542 = vmatpush2.bf16.msra.mxu0 0
      %2543 = vmatprep.subr.bf16.mxu0 0
      %2544 = vmatpush2.bf16.msra.mxu0 0
      %2545 = vmatprep.mubr.bf16.mxu0 0
      %2546 = vmatmul.mubr.bf16.gmra.mxu0 %v2499
      %v2547 = vpop.f32.mrf.mxu0
      %v2548 = vadd.f32 0.0, %v2547
      %v2549 = vpop.f32.mrf.mxu0
      %v2550 = vadd.f32 0.0, %v2549
      %v2551 = vpop.f32.mrf.mxu0
      %v2552 = vpop.f32.mrf.mxu0
      %2553 = vdwg.mxu0
      %2554 = vmatprep.subr.bf16.mxu0 0
      %2555 = vmatpush1.bf16.msra.mxu0 0
      %2556 = vmatprep.subr.bf16.mxu0 0
      %2557 = vmatpush1.bf16.msra.mxu0 0
      %2558 = vmatprep.subr.bf16.mxu0 0
      %2559 = vmatpush1.bf16.msra.mxu0 0
      %2560 = vmatprep.subr.bf16.mxu0 0
      %2561 = vmatpush1.bf16.msra.mxu0 0
      %2562 = vmatprep.subr.bf16.mxu0 0
      %2563 = vmatpush1.bf16.msra.mxu0 0
      %2564 = vmatprep.subr.bf16.mxu0 0
      %2565 = vmatpush1.bf16.msra.mxu0 0
      %2566 = vmatprep.subr.bf16.mxu0 0
      %2567 = vmatpush1.bf16.msra.mxu0 0
      %2568 = vmatprep.subr.bf16.mxu0 %v2511
      %2569 = vmatpush1.bf16.msra.mxu0 %v2508
      %2570 = vmatprep.subr.bf16.mxu0 0
      %2571 = vmatpush2.bf16.msra.mxu0 0
      %2572 = vmatprep.subr.bf16.mxu0 0
      %2573 = vmatpush2.bf16.msra.mxu0 0
      %2574 = vmatprep.subr.bf16.mxu0 0
      %2575 = vmatpush2.bf16.msra.mxu0 0
      %2576 = vmatprep.subr.bf16.mxu0 0
      %2577 = vmatpush2.bf16.msra.mxu0 0
      %2578 = vmatprep.subr.bf16.mxu0 0
      %2579 = vmatpush2.bf16.msra.mxu0 0
      %2580 = vmatprep.subr.bf16.mxu0 0
      %2581 = vmatpush2.bf16.msra.mxu0 0
      %2582 = vmatprep.subr.bf16.mxu0 0
      %2583 = vmatpush2.bf16.msra.mxu0 0
      %2584 = vmatprep.subr.bf16.mxu0 0
      %2585 = vmatpush2.bf16.msra.mxu0 0
      %2586 = vmatprep.mubr.bf16.mxu0 0
      %2587 = vmatmul.mubr.bf16.gmra.mxu0 %v2499
      %v2588 = vpop.f32.mrf.mxu0
      %v2589 = vadd.f32 0.0, %v2588
      %v2590 = vpop.f32.mrf.mxu0
      %v2591 = vadd.f32 0.0, %v2590
      %v2592 = vpop.f32.mrf.mxu0
      %v2593 = vpop.f32.mrf.mxu0
      %2594 = vdwg.mxu0
      %v2595 = vadd.f32 %v2447, %v2548
      %v2596 = vadd.f32 %v2448, %v2550
      %v2597 = vadd.f32 %v2449, %v2589
      %v2598 = vadd.f32 %v2450, %v2591
      %s2599 = scalar_lea.vmem %s1, 32
      %v2600 = vld [vmem:[%s2599] sm:$0x3]
      %2601 = vrot.lane.b32.xlu0 %v248, 120
      %v2602 = vpop.permute.xlu0 %2601
      %2603 = vrot.lane.b32.xlu0 %v264, 120
      %v2604 = vpop.permute.xlu0 %2603
      %2605 = vrot.lane.b32.xlu0 %v249, 120
      %v2606 = vpop.permute.xlu0 %2605
      %2607 = vrot.lane.b32.xlu0 %v265, 120
      %v2608 = vpop.permute.xlu0 %2607
      %vm2609 = vcmp.lt.s32.totalorder %v277, 120
      %v2610 = vsel %vm2609, %v2606, %v2608
      %v2611 = vsel %vm2609, %v2604, %v2606
      %v2612 = vsel %vm2609, %v2602, %v2604
      %v2613 = vsel %vm2609, %v2608, %v2602
      %v2614 = vsel %vm258, 1, 0
      %v2615 = vcvt.s32.f32 %v2614
      %v2617 = vlaneseq
      %v2618 = vshrl.u32 %v2617, 7
      %v2619 = vsub.s32 0, %v2618
      %v2620 = vrot.slane %v2615, %v2619
      %v2621 = vlaneseq
      %v2622 = vshrl.u32 %v2621, 7
      %v2623 = vsub.s32 1, %v2622
      %v2624 = vrot.slane %v2615, %v2623
      %v2625 = vlaneseq
      %v2626 = vshrl.u32 %v2625, 7
      %v2627 = vsub.s32 2, %v2626
      %v2628 = vrot.slane %v2615, %v2627
      %v2629 = vlaneseq
      %v2630 = vshrl.u32 %v2629, 7
      %v2631 = vsub.s32 3, %v2630
      %v2632 = vrot.slane %v2615, %v2631
      %v2637 = vmul.f32 %v2612, %v2620
      %v2638 = vmul.f32 %v2611, %v2624
      %v2639 = vmul.f32 %v2610, %v2628
      %v2640 = vmul.f32 %v2613, %v2632
      %v2641 = vpack.c.bf16 %v2637, %v2637
      %v2642 = vpack.c.bf16 %v2638, %v2638
      %v2643 = vpack.c.bf16 %v2639, %v2639
      %v2644 = vpack.c.bf16 %v2640, %v2640
      %v2646 = vsel %vm362, %v2600, 0
      %v2649 = vsel %vm366, %v2641, 0
      %v2652 = vsel %vm366, %v2642, 0
      %v2655 = vsel %vm366, %v2643, 0
      %v2658 = vsel %vm366, %v2644, 0
      %2660 = vmatprep.subr.bf16.mxu0 0
      %2661 = vmatpush1.bf16.msra.mxu0 0
      %2662 = vmatprep.subr.bf16.mxu0 0
      %2663 = vmatpush1.bf16.msra.mxu0 0
      %2664 = vmatprep.subr.bf16.mxu0 0
      %2665 = vmatpush1.bf16.msra.mxu0 0
      %2666 = vmatprep.subr.bf16.mxu0 0
      %2667 = vmatpush1.bf16.msra.mxu0 0
      %2668 = vmatprep.subr.bf16.mxu0 0
      %2669 = vmatpush1.bf16.msra.mxu0 0
      %2670 = vmatprep.subr.bf16.mxu0 0
      %2671 = vmatpush1.bf16.msra.mxu0 0
      %2672 = vmatprep.subr.bf16.mxu0 0
      %2673 = vmatpush1.bf16.msra.mxu0 0
      %2674 = vmatprep.subr.bf16.mxu0 %v2652
      %2675 = vmatpush1.bf16.msra.mxu0 %v2649
      %2676 = vmatprep.subr.bf16.mxu0 0
      %2677 = vmatpush2.bf16.msra.mxu0 0
      %2678 = vmatprep.subr.bf16.mxu0 0
      %2679 = vmatpush2.bf16.msra.mxu0 0
      %2680 = vmatprep.subr.bf16.mxu0 0
      %2681 = vmatpush2.bf16.msra.mxu0 0
      %2682 = vmatprep.subr.bf16.mxu0 0
      %2683 = vmatpush2.bf16.msra.mxu0 0
      %2684 = vmatprep.subr.bf16.mxu0 0
      %2685 = vmatpush2.bf16.msra.mxu0 0
      %2686 = vmatprep.subr.bf16.mxu0 0
      %2687 = vmatpush2.bf16.msra.mxu0 0
      %2688 = vmatprep.subr.bf16.mxu0 0
      %2689 = vmatpush2.bf16.msra.mxu0 0
      %2690 = vmatprep.subr.bf16.mxu0 0
      %2691 = vmatpush2.bf16.msra.mxu0 0
      %2692 = vmatprep.mubr.bf16.mxu0 0
      %2693 = vmatmul.mubr.bf16.gmra.mxu0 %v2646
      %v2694 = vpop.f32.mrf.mxu0
      %v2695 = vadd.f32 0.0, %v2694
      %v2696 = vpop.f32.mrf.mxu0
      %v2697 = vadd.f32 0.0, %v2696
      %v2698 = vpop.f32.mrf.mxu0
      %v2699 = vpop.f32.mrf.mxu0
      %2700 = vdwg.mxu0
      %2701 = vmatprep.subr.bf16.mxu0 0
      %2702 = vmatpush1.bf16.msra.mxu0 0
      %2703 = vmatprep.subr.bf16.mxu0 0
      %2704 = vmatpush1.bf16.msra.mxu0 0
      %2705 = vmatprep.subr.bf16.mxu0 0
      %2706 = vmatpush1.bf16.msra.mxu0 0
      %2707 = vmatprep.subr.bf16.mxu0 0
      %2708 = vmatpush1.bf16.msra.mxu0 0
      %2709 = vmatprep.subr.bf16.mxu0 0
      %2710 = vmatpush1.bf16.msra.mxu0 0
      %2711 = vmatprep.subr.bf16.mxu0 0
      %2712 = vmatpush1.bf16.msra.mxu0 0
      %2713 = vmatprep.subr.bf16.mxu0 0
      %2714 = vmatpush1.bf16.msra.mxu0 0
      %2715 = vmatprep.subr.bf16.mxu0 %v2658
      %2716 = vmatpush1.bf16.msra.mxu0 %v2655
      %2717 = vmatprep.subr.bf16.mxu0 0
      %2718 = vmatpush2.bf16.msra.mxu0 0
      %2719 = vmatprep.subr.bf16.mxu0 0
      %2720 = vmatpush2.bf16.msra.mxu0 0
      %2721 = vmatprep.subr.bf16.mxu0 0
      %2722 = vmatpush2.bf16.msra.mxu0 0
      %2723 = vmatprep.subr.bf16.mxu0 0
      %2724 = vmatpush2.bf16.msra.mxu0 0
      %2725 = vmatprep.subr.bf16.mxu0 0
      %2726 = vmatpush2.bf16.msra.mxu0 0
      %2727 = vmatprep.subr.bf16.mxu0 0
      %2728 = vmatpush2.bf16.msra.mxu0 0
      %2729 = vmatprep.subr.bf16.mxu0 0
      %2730 = vmatpush2.bf16.msra.mxu0 0
      %2731 = vmatprep.subr.bf16.mxu0 0
      %2732 = vmatpush2.bf16.msra.mxu0 0
      %2733 = vmatprep.mubr.bf16.mxu0 0
      %2734 = vmatmul.mubr.bf16.gmra.mxu0 %v2646
      %v2735 = vpop.f32.mrf.mxu0
      %v2736 = vadd.f32 0.0, %v2735
      %v2737 = vpop.f32.mrf.mxu0
      %v2738 = vadd.f32 0.0, %v2737
      %v2739 = vpop.f32.mrf.mxu0
      %v2740 = vpop.f32.mrf.mxu0
      %2741 = vdwg.mxu0
      %v2742 = vadd.f32 %v2595, %v2695
      %v2743 = vadd.f32 %v2596, %v2697
      %v2744 = vadd.f32 %v2597, %v2736
      %v2745 = vadd.f32 %v2598, %v2738
      %s2746 = scalar_lea.vmem %s1, 34
      %v2747 = vld [vmem:[%s2746] sm:$0x3]
      %2748 = vrot.lane.b32.xlu0 %v248, 119
      %v2749 = vpop.permute.xlu0 %2748
      %2750 = vrot.lane.b32.xlu0 %v264, 119
      %v2751 = vpop.permute.xlu0 %2750
      %2752 = vrot.lane.b32.xlu0 %v249, 119
      %v2753 = vpop.permute.xlu0 %2752
      %2754 = vrot.lane.b32.xlu0 %v265, 119
      %v2755 = vpop.permute.xlu0 %2754
      %vm2756 = vcmp.lt.s32.totalorder %v277, 119
      %v2757 = vsel %vm2756, %v2753, %v2755
      %v2758 = vsel %vm2756, %v2751, %v2753
      %v2759 = vsel %vm2756, %v2749, %v2751
      %v2760 = vsel %vm2756, %v2755, %v2749
      %vm2761 = vmand %vm258, %vm260
      %v2762 = vsel %vm2761, 1, 0
      %v2763 = vcvt.s32.f32 %v2762
      %v2765 = vlaneseq
      %v2766 = vshrl.u32 %v2765, 7
      %v2767 = vsub.s32 0, %v2766
      %v2768 = vrot.slane %v2763, %v2767
      %v2769 = vlaneseq
      %v2770 = vshrl.u32 %v2769, 7
      %v2771 = vsub.s32 1, %v2770
      %v2772 = vrot.slane %v2763, %v2771
      %v2773 = vlaneseq
      %v2774 = vshrl.u32 %v2773, 7
      %v2775 = vsub.s32 2, %v2774
      %v2776 = vrot.slane %v2763, %v2775
      %v2777 = vlaneseq
      %v2778 = vshrl.u32 %v2777, 7
      %v2779 = vsub.s32 3, %v2778
      %v2780 = vrot.slane %v2763, %v2779
      %v2785 = vmul.f32 %v2759, %v2768
      %v2786 = vmul.f32 %v2758, %v2772
      %v2787 = vmul.f32 %v2757, %v2776
      %v2788 = vmul.f32 %v2760, %v2780
      %v2789 = vpack.c.bf16 %v2785, %v2785
      %v2790 = vpack.c.bf16 %v2786, %v2786
      %v2791 = vpack.c.bf16 %v2787, %v2787
      %v2792 = vpack.c.bf16 %v2788, %v2788
      %v2794 = vsel %vm362, %v2747, 0
      %v2797 = vsel %vm366, %v2789, 0
      %v2800 = vsel %vm366, %v2790, 0
      %v2803 = vsel %vm366, %v2791, 0
      %v2806 = vsel %vm366, %v2792, 0
      %2808 = vmatprep.subr.bf16.mxu0 0
      %2809 = vmatpush1.bf16.msra.mxu0 0
      %2810 = vmatprep.subr.bf16.mxu0 0
      %2811 = vmatpush1.bf16.msra.mxu0 0
      %2812 = vmatprep.subr.bf16.mxu0 0
      %2813 = vmatpush1.bf16.msra.mxu0 0
      %2814 = vmatprep.subr.bf16.mxu0 0
      %2815 = vmatpush1.bf16.msra.mxu0 0
      %2816 = vmatprep.subr.bf16.mxu0 0
      %2817 = vmatpush1.bf16.msra.mxu0 0
      %2818 = vmatprep.subr.bf16.mxu0 0
      %2819 = vmatpush1.bf16.msra.mxu0 0
      %2820 = vmatprep.subr.bf16.mxu0 0
      %2821 = vmatpush1.bf16.msra.mxu0 0
      %2822 = vmatprep.subr.bf16.mxu0 %v2800
      %2823 = vmatpush1.bf16.msra.mxu0 %v2797
      %2824 = vmatprep.subr.bf16.mxu0 0
      %2825 = vmatpush2.bf16.msra.mxu0 0
      %2826 = vmatprep.subr.bf16.mxu0 0
      %2827 = vmatpush2.bf16.msra.mxu0 0
      %2828 = vmatprep.subr.bf16.mxu0 0
      %2829 = vmatpush2.bf16.msra.mxu0 0
      %2830 = vmatprep.subr.bf16.mxu0 0
      %2831 = vmatpush2.bf16.msra.mxu0 0
      %2832 = vmatprep.subr.bf16.mxu0 0
      %2833 = vmatpush2.bf16.msra.mxu0 0
      %2834 = vmatprep.subr.bf16.mxu0 0
      %2835 = vmatpush2.bf16.msra.mxu0 0
      %2836 = vmatprep.subr.bf16.mxu0 0
      %2837 = vmatpush2.bf16.msra.mxu0 0
      %2838 = vmatprep.subr.bf16.mxu0 0
      %2839 = vmatpush2.bf16.msra.mxu0 0
      %2840 = vmatprep.mubr.bf16.mxu0 0
      %2841 = vmatmul.mubr.bf16.gmra.mxu0 %v2794
      %v2842 = vpop.f32.mrf.mxu0
      %v2843 = vadd.f32 0.0, %v2842
      %v2844 = vpop.f32.mrf.mxu0
      %v2845 = vadd.f32 0.0, %v2844
      %v2846 = vpop.f32.mrf.mxu0
      %v2847 = vpop.f32.mrf.mxu0
      %2848 = vdwg.mxu0
      %2849 = vmatprep.subr.bf16.mxu0 0
      %2850 = vmatpush1.bf16.msra.mxu0 0
      %2851 = vmatprep.subr.bf16.mxu0 0
      %2852 = vmatpush1.bf16.msra.mxu0 0
      %2853 = vmatprep.subr.bf16.mxu0 0
      %2854 = vmatpush1.bf16.msra.mxu0 0
      %2855 = vmatprep.subr.bf16.mxu0 0
      %2856 = vmatpush1.bf16.msra.mxu0 0
      %2857 = vmatprep.subr.bf16.mxu0 0
      %2858 = vmatpush1.bf16.msra.mxu0 0
      %2859 = vmatprep.subr.bf16.mxu0 0
      %2860 = vmatpush1.bf16.msra.mxu0 0
      %2861 = vmatprep.subr.bf16.mxu0 0
      %2862 = vmatpush1.bf16.msra.mxu0 0
      %2863 = vmatprep.subr.bf16.mxu0 %v2806
      %2864 = vmatpush1.bf16.msra.mxu0 %v2803
      %2865 = vmatprep.subr.bf16.mxu0 0
      %2866 = vmatpush2.bf16.msra.mxu0 0
      %2867 = vmatprep.subr.bf16.mxu0 0
      %2868 = vmatpush2.bf16.msra.mxu0 0
      %2869 = vmatprep.subr.bf16.mxu0 0
      %2870 = vmatpush2.bf16.msra.mxu0 0
      %2871 = vmatprep.subr.bf16.mxu0 0
      %2872 = vmatpush2.bf16.msra.mxu0 0
      %2873 = vmatprep.subr.bf16.mxu0 0
      %2874 = vmatpush2.bf16.msra.mxu0 0
      %2875 = vmatprep.subr.bf16.mxu0 0
      %2876 = vmatpush2.bf16.msra.mxu0 0
      %2877 = vmatprep.subr.bf16.mxu0 0
      %2878 = vmatpush2.bf16.msra.mxu0 0
      %2879 = vmatprep.subr.bf16.mxu0 0
      %2880 = vmatpush2.bf16.msra.mxu0 0
      %2881 = vmatprep.mubr.bf16.mxu0 0
      %2882 = vmatmul.mubr.bf16.gmra.mxu0 %v2794
      %v2883 = vpop.f32.mrf.mxu0
      %v2884 = vadd.f32 0.0, %v2883
      %v2885 = vpop.f32.mrf.mxu0
      %v2886 = vadd.f32 0.0, %v2885
      %v2887 = vpop.f32.mrf.mxu0
      %v2888 = vpop.f32.mrf.mxu0
      %2889 = vdwg.mxu0
      %v2890 = vadd.f32 %v2742, %v2843
      %v2891 = vadd.f32 %v2743, %v2845
      %v2892 = vadd.f32 %v2744, %v2884
      %v2893 = vadd.f32 %v2745, %v2886
      %s2894 = scalar_lea.vmem %s1, 36
      %v2895 = vld [vmem:[%s2894] sm:$0x3]
      %vm2896 = vmand %vm256, %vm257
      %vm2897 = vmand %vm2896, %vm259
      %v2898 = vsel %vm2897, 1, 0
      %v2899 = vcvt.s32.f32 %v2898
      %v2901 = vlaneseq
      %v2902 = vshrl.u32 %v2901, 7
      %v2903 = vsub.s32 0, %v2902
      %v2904 = vrot.slane %v2899, %v2903
      %v2905 = vlaneseq
      %v2906 = vshrl.u32 %v2905, 7
      %v2907 = vsub.s32 1, %v2906
      %v2908 = vrot.slane %v2899, %v2907
      %v2909 = vlaneseq
      %v2910 = vshrl.u32 %v2909, 7
      %v2911 = vsub.s32 2, %v2910
      %v2912 = vrot.slane %v2899, %v2911
      %v2913 = vlaneseq
      %v2914 = vshrl.u32 %v2913, 7
      %v2915 = vsub.s32 3, %v2914
      %v2916 = vrot.slane %v2899, %v2915
      %v2921 = vmul.f32 %v281, %v2904
      %v2922 = vmul.f32 %v280, %v2908
      %v2923 = vmul.f32 %v279, %v2912
      %v2924 = vmul.f32 %v282, %v2916
      %v2925 = vpack.c.bf16 %v2921, %v2921
      %v2926 = vpack.c.bf16 %v2922, %v2922
      %v2927 = vpack.c.bf16 %v2923, %v2923
      %v2928 = vpack.c.bf16 %v2924, %v2924
      %v2930 = vsel %vm362, %v2895, 0
      %v2933 = vsel %vm366, %v2925, 0
      %v2936 = vsel %vm366, %v2926, 0
      %v2939 = vsel %vm366, %v2927, 0
      %v2942 = vsel %vm366, %v2928, 0
      %2944 = vmatprep.subr.bf16.mxu0 0
      %2945 = vmatpush1.bf16.msra.mxu0 0
      %2946 = vmatprep.subr.bf16.mxu0 0
      %2947 = vmatpush1.bf16.msra.mxu0 0
      %2948 = vmatprep.subr.bf16.mxu0 0
      %2949 = vmatpush1.bf16.msra.mxu0 0
      %2950 = vmatprep.subr.bf16.mxu0 0
      %2951 = vmatpush1.bf16.msra.mxu0 0
      %2952 = vmatprep.subr.bf16.mxu0 0
      %2953 = vmatpush1.bf16.msra.mxu0 0
      %2954 = vmatprep.subr.bf16.mxu0 0
      %2955 = vmatpush1.bf16.msra.mxu0 0
      %2956 = vmatprep.subr.bf16.mxu0 0
      %2957 = vmatpush1.bf16.msra.mxu0 0
      %2958 = vmatprep.subr.bf16.mxu0 %v2936
      %2959 = vmatpush1.bf16.msra.mxu0 %v2933
      %2960 = vmatprep.subr.bf16.mxu0 0
      %2961 = vmatpush2.bf16.msra.mxu0 0
      %2962 = vmatprep.subr.bf16.mxu0 0
      %2963 = vmatpush2.bf16.msra.mxu0 0
      %2964 = vmatprep.subr.bf16.mxu0 0
      %2965 = vmatpush2.bf16.msra.mxu0 0
      %2966 = vmatprep.subr.bf16.mxu0 0
      %2967 = vmatpush2.bf16.msra.mxu0 0
      %2968 = vmatprep.subr.bf16.mxu0 0
      %2969 = vmatpush2.bf16.msra.mxu0 0
      %2970 = vmatprep.subr.bf16.mxu0 0
      %2971 = vmatpush2.bf16.msra.mxu0 0
      %2972 = vmatprep.subr.bf16.mxu0 0
      %2973 = vmatpush2.bf16.msra.mxu0 0
      %2974 = vmatprep.subr.bf16.mxu0 0
      %2975 = vmatpush2.bf16.msra.mxu0 0
      %2976 = vmatprep.mubr.bf16.mxu0 0
      %2977 = vmatmul.mubr.bf16.gmra.mxu0 %v2930
      %v2978 = vpop.f32.mrf.mxu0
      %v2979 = vadd.f32 0.0, %v2978
      %v2980 = vpop.f32.mrf.mxu0
      %v2981 = vadd.f32 0.0, %v2980
      %v2982 = vpop.f32.mrf.mxu0
      %v2983 = vpop.f32.mrf.mxu0
      %2984 = vdwg.mxu0
      %2985 = vmatprep.subr.bf16.mxu0 0
      %2986 = vmatpush1.bf16.msra.mxu0 0
      %2987 = vmatprep.subr.bf16.mxu0 0
      %2988 = vmatpush1.bf16.msra.mxu0 0
      %2989 = vmatprep.subr.bf16.mxu0 0
      %2990 = vmatpush1.bf16.msra.mxu0 0
      %2991 = vmatprep.subr.bf16.mxu0 0
      %2992 = vmatpush1.bf16.msra.mxu0 0
      %2993 = vmatprep.subr.bf16.mxu0 0
      %2994 = vmatpush1.bf16.msra.mxu0 0
      %2995 = vmatprep.subr.bf16.mxu0 0
      %2996 = vmatpush1.bf16.msra.mxu0 0
      %2997 = vmatprep.subr.bf16.mxu0 0
      %2998 = vmatpush1.bf16.msra.mxu0 0
      %2999 = vmatprep.subr.bf16.mxu0 %v2942
      %3000 = vmatpush1.bf16.msra.mxu0 %v2939
      %3001 = vmatprep.subr.bf16.mxu0 0
      %3002 = vmatpush2.bf16.msra.mxu0 0
      %3003 = vmatprep.subr.bf16.mxu0 0
      %3004 = vmatpush2.bf16.msra.mxu0 0
      %3005 = vmatprep.subr.bf16.mxu0 0
      %3006 = vmatpush2.bf16.msra.mxu0 0
      %3007 = vmatprep.subr.bf16.mxu0 0
      %3008 = vmatpush2.bf16.msra.mxu0 0
      %3009 = vmatprep.subr.bf16.mxu0 0
      %3010 = vmatpush2.bf16.msra.mxu0 0
      %3011 = vmatprep.subr.bf16.mxu0 0
      %3012 = vmatpush2.bf16.msra.mxu0 0
      %3013 = vmatprep.subr.bf16.mxu0 0
      %3014 = vmatpush2.bf16.msra.mxu0 0
      %3015 = vmatprep.subr.bf16.mxu0 0
      %3016 = vmatpush2.bf16.msra.mxu0 0
      %3017 = vmatprep.mubr.bf16.mxu0 0
      %3018 = vmatmul.mubr.bf16.gmra.mxu0 %v2930
      %v3019 = vpop.f32.mrf.mxu0
      %v3020 = vadd.f32 0.0, %v3019
      %v3021 = vpop.f32.mrf.mxu0
      %v3022 = vadd.f32 0.0, %v3021
      %v3023 = vpop.f32.mrf.mxu0
      %v3024 = vpop.f32.mrf.mxu0
      %3025 = vdwg.mxu0
      %v3026 = vadd.f32 %v2890, %v2979
      %v3027 = vadd.f32 %v2891, %v2981
      %v3028 = vadd.f32 %v2892, %v3020
      %v3029 = vadd.f32 %v2893, %v3022
      %s3030 = scalar_lea.vmem %s1, 38
      %v3031 = vld [vmem:[%s3030] sm:$0x3]
      %v3032 = vsel %vm2896, 1, 0
      %v3033 = vcvt.s32.f32 %v3032
      %v3035 = vlaneseq
      %v3036 = vshrl.u32 %v3035, 7
      %v3037 = vsub.s32 0, %v3036
      %v3038 = vrot.slane %v3033, %v3037
      %v3039 = vlaneseq
      %v3040 = vshrl.u32 %v3039, 7
      %v3041 = vsub.s32 1, %v3040
      %v3042 = vrot.slane %v3033, %v3041
      %v3043 = vlaneseq
      %v3044 = vshrl.u32 %v3043, 7
      %v3045 = vsub.s32 2, %v3044
      %v3046 = vrot.slane %v3033, %v3045
      %v3047 = vlaneseq
      %v3048 = vshrl.u32 %v3047, 7
      %v3049 = vsub.s32 3, %v3048
      %v3050 = vrot.slane %v3033, %v3049
      %v3055 = vmul.f32 %v329, %v3038
      %v3056 = vmul.f32 %v328, %v3042
      %v3057 = vmul.f32 %v327, %v3046
      %v3058 = vmul.f32 %v330, %v3050
      %v3059 = vpack.c.bf16 %v3055, %v3055
      %v3060 = vpack.c.bf16 %v3056, %v3056
      %v3061 = vpack.c.bf16 %v3057, %v3057
      %v3062 = vpack.c.bf16 %v3058, %v3058
      %v3064 = vsel %vm362, %v3031, 0
      %v3067 = vsel %vm366, %v3059, 0
      %v3070 = vsel %vm366, %v3060, 0
      %v3073 = vsel %vm366, %v3061, 0
      %v3076 = vsel %vm366, %v3062, 0
      %3078 = vmatprep.subr.bf16.mxu0 0
      %3079 = vmatpush1.bf16.msra.mxu0 0
      %3080 = vmatprep.subr.bf16.mxu0 0
      %3081 = vmatpush1.bf16.msra.mxu0 0
      %3082 = vmatprep.subr.bf16.mxu0 0
      %3083 = vmatpush1.bf16.msra.mxu0 0
      %3084 = vmatprep.subr.bf16.mxu0 0
      %3085 = vmatpush1.bf16.msra.mxu0 0
      %3086 = vmatprep.subr.bf16.mxu0 0
      %3087 = vmatpush1.bf16.msra.mxu0 0
      %3088 = vmatprep.subr.bf16.mxu0 0
      %3089 = vmatpush1.bf16.msra.mxu0 0
      %3090 = vmatprep.subr.bf16.mxu0 0
      %3091 = vmatpush1.bf16.msra.mxu0 0
      %3092 = vmatprep.subr.bf16.mxu0 %v3070
      %3093 = vmatpush1.bf16.msra.mxu0 %v3067
      %3094 = vmatprep.subr.bf16.mxu0 0
      %3095 = vmatpush2.bf16.msra.mxu0 0
      %3096 = vmatprep.subr.bf16.mxu0 0
      %3097 = vmatpush2.bf16.msra.mxu0 0
      %3098 = vmatprep.subr.bf16.mxu0 0
      %3099 = vmatpush2.bf16.msra.mxu0 0
      %3100 = vmatprep.subr.bf16.mxu0 0
      %3101 = vmatpush2.bf16.msra.mxu0 0
      %3102 = vmatprep.subr.bf16.mxu0 0
      %3103 = vmatpush2.bf16.msra.mxu0 0
      %3104 = vmatprep.subr.bf16.mxu0 0
      %3105 = vmatpush2.bf16.msra.mxu0 0
      %3106 = vmatprep.subr.bf16.mxu0 0
      %3107 = vmatpush2.bf16.msra.mxu0 0
      %3108 = vmatprep.subr.bf16.mxu0 0
      %3109 = vmatpush2.bf16.msra.mxu0 0
      %3110 = vmatprep.mubr.bf16.mxu0 0
      %3111 = vmatmul.mubr.bf16.gmra.mxu0 %v3064
      %v3112 = vpop.f32.mrf.mxu0
      %v3113 = vadd.f32 0.0, %v3112
      %v3114 = vpop.f32.mrf.mxu0
      %v3115 = vadd.f32 0.0, %v3114
      %v3116 = vpop.f32.mrf.mxu0
      %v3117 = vpop.f32.mrf.mxu0
      %3118 = vdwg.mxu0
      %3119 = vmatprep.subr.bf16.mxu0 0
      %3120 = vmatpush1.bf16.msra.mxu0 0
      %3121 = vmatprep.subr.bf16.mxu0 0
      %3122 = vmatpush1.bf16.msra.mxu0 0
      %3123 = vmatprep.subr.bf16.mxu0 0
      %3124 = vmatpush1.bf16.msra.mxu0 0
      %3125 = vmatprep.subr.bf16.mxu0 0
      %3126 = vmatpush1.bf16.msra.mxu0 0
      %3127 = vmatprep.subr.bf16.mxu0 0
      %3128 = vmatpush1.bf16.msra.mxu0 0
      %3129 = vmatprep.subr.bf16.mxu0 0
      %3130 = vmatpush1.bf16.msra.mxu0 0
      %3131 = vmatprep.subr.bf16.mxu0 0
      %3132 = vmatpush1.bf16.msra.mxu0 0
      %3133 = vmatprep.subr.bf16.mxu0 %v3076
      %3134 = vmatpush1.bf16.msra.mxu0 %v3073
      %3135 = vmatprep.subr.bf16.mxu0 0
      %3136 = vmatpush2.bf16.msra.mxu0 0
      %3137 = vmatprep.subr.bf16.mxu0 0
      %3138 = vmatpush2.bf16.msra.mxu0 0
      %3139 = vmatprep.subr.bf16.mxu0 0
      %3140 = vmatpush2.bf16.msra.mxu0 0
      %3141 = vmatprep.subr.bf16.mxu0 0
      %3142 = vmatpush2.bf16.msra.mxu0 0
      %3143 = vmatprep.subr.bf16.mxu0 0
      %3144 = vmatpush2.bf16.msra.mxu0 0
      %3145 = vmatprep.subr.bf16.mxu0 0
      %3146 = vmatpush2.bf16.msra.mxu0 0
      %3147 = vmatprep.subr.bf16.mxu0 0
      %3148 = vmatpush2.bf16.msra.mxu0 0
      %3149 = vmatprep.subr.bf16.mxu0 0
      %3150 = vmatpush2.bf16.msra.mxu0 0
      %3151 = vmatprep.mubr.bf16.mxu0 0
      %3152 = vmatmul.mubr.bf16.gmra.mxu0 %v3064
      %v3153 = vpop.f32.mrf.mxu0
      %v3154 = vadd.f32 0.0, %v3153
      %v3155 = vpop.f32.mrf.mxu0
      %v3156 = vadd.f32 0.0, %v3155
      %v3157 = vpop.f32.mrf.mxu0
      %v3158 = vpop.f32.mrf.mxu0
      %3159 = vdwg.mxu0
      %v3160 = vadd.f32 %v3026, %v3113
      %v3161 = vadd.f32 %v3027, %v3115
      %v3162 = vadd.f32 %v3028, %v3154
      %v3163 = vadd.f32 %v3029, %v3156
      %s3164 = scalar_lea.vmem %s1, 40
      %v3165 = vld [vmem:[%s3164] sm:$0x3]
      %vm3166 = vmand %vm2896, %vm260
      %v3167 = vsel %vm3166, 1, 0
      %v3168 = vcvt.s32.f32 %v3167
      %v3170 = vlaneseq
      %v3171 = vshrl.u32 %v3170, 7
      %v3172 = vsub.s32 0, %v3171
      %v3173 = vrot.slane %v3168, %v3172
      %v3174 = vlaneseq
      %v3175 = vshrl.u32 %v3174, 7
      %v3176 = vsub.s32 1, %v3175
      %v3177 = vrot.slane %v3168, %v3176
      %v3178 = vlaneseq
      %v3179 = vshrl.u32 %v3178, 7
      %v3180 = vsub.s32 2, %v3179
      %v3181 = vrot.slane %v3168, %v3180
      %v3182 = vlaneseq
      %v3183 = vshrl.u32 %v3182, 7
      %v3184 = vsub.s32 3, %v3183
      %v3185 = vrot.slane %v3168, %v3184
      %v3190 = vmul.f32 %v571, %v3173
      %v3191 = vmul.f32 %v570, %v3177
      %v3192 = vmul.f32 %v569, %v3181
      %v3193 = vmul.f32 %v572, %v3185
      %v3194 = vpack.c.bf16 %v3190, %v3190
      %v3195 = vpack.c.bf16 %v3191, %v3191
      %v3196 = vpack.c.bf16 %v3192, %v3192
      %v3197 = vpack.c.bf16 %v3193, %v3193
      %v3199 = vsel %vm362, %v3165, 0
      %v3202 = vsel %vm366, %v3194, 0
      %v3205 = vsel %vm366, %v3195, 0
      %v3208 = vsel %vm366, %v3196, 0
      %v3211 = vsel %vm366, %v3197, 0
      %3213 = vmatprep.subr.bf16.mxu0 0
      %3214 = vmatpush1.bf16.msra.mxu0 0
      %3215 = vmatprep.subr.bf16.mxu0 0
      %3216 = vmatpush1.bf16.msra.mxu0 0
      %3217 = vmatprep.subr.bf16.mxu0 0
      %3218 = vmatpush1.bf16.msra.mxu0 0
      %3219 = vmatprep.subr.bf16.mxu0 0
      %3220 = vmatpush1.bf16.msra.mxu0 0
      %3221 = vmatprep.subr.bf16.mxu0 0
      %3222 = vmatpush1.bf16.msra.mxu0 0
      %3223 = vmatprep.subr.bf16.mxu0 0
      %3224 = vmatpush1.bf16.msra.mxu0 0
      %3225 = vmatprep.subr.bf16.mxu0 0
      %3226 = vmatpush1.bf16.msra.mxu0 0
      %3227 = vmatprep.subr.bf16.mxu0 %v3205
      %3228 = vmatpush1.bf16.msra.mxu0 %v3202
      %3229 = vmatprep.subr.bf16.mxu0 0
      %3230 = vmatpush2.bf16.msra.mxu0 0
      %3231 = vmatprep.subr.bf16.mxu0 0
      %3232 = vmatpush2.bf16.msra.mxu0 0
      %3233 = vmatprep.subr.bf16.mxu0 0
      %3234 = vmatpush2.bf16.msra.mxu0 0
      %3235 = vmatprep.subr.bf16.mxu0 0
      %3236 = vmatpush2.bf16.msra.mxu0 0
      %3237 = vmatprep.subr.bf16.mxu0 0
      %3238 = vmatpush2.bf16.msra.mxu0 0
      %3239 = vmatprep.subr.bf16.mxu0 0
      %3240 = vmatpush2.bf16.msra.mxu0 0
      %3241 = vmatprep.subr.bf16.mxu0 0
      %3242 = vmatpush2.bf16.msra.mxu0 0
      %3243 = vmatprep.subr.bf16.mxu0 0
      %3244 = vmatpush2.bf16.msra.mxu0 0
      %3245 = vmatprep.mubr.bf16.mxu0 0
      %3246 = vmatmul.mubr.bf16.gmra.mxu0 %v3199
      %v3247 = vpop.f32.mrf.mxu0
      %v3248 = vadd.f32 0.0, %v3247
      %v3249 = vpop.f32.mrf.mxu0
      %v3250 = vadd.f32 0.0, %v3249
      %v3251 = vpop.f32.mrf.mxu0
      %v3252 = vpop.f32.mrf.mxu0
      %3253 = vdwg.mxu0
      %3254 = vmatprep.subr.bf16.mxu0 0
      %3255 = vmatpush1.bf16.msra.mxu0 0
      %3256 = vmatprep.subr.bf16.mxu0 0
      %3257 = vmatpush1.bf16.msra.mxu0 0
      %3258 = vmatprep.subr.bf16.mxu0 0
      %3259 = vmatpush1.bf16.msra.mxu0 0
      %3260 = vmatprep.subr.bf16.mxu0 0
      %3261 = vmatpush1.bf16.msra.mxu0 0
      %3262 = vmatprep.subr.bf16.mxu0 0
      %3263 = vmatpush1.bf16.msra.mxu0 0
      %3264 = vmatprep.subr.bf16.mxu0 0
      %3265 = vmatpush1.bf16.msra.mxu0 0
      %3266 = vmatprep.subr.bf16.mxu0 0
      %3267 = vmatpush1.bf16.msra.mxu0 0
      %3268 = vmatprep.subr.bf16.mxu0 %v3211
      %3269 = vmatpush1.bf16.msra.mxu0 %v3208
      %3270 = vmatprep.subr.bf16.mxu0 0
      %3271 = vmatpush2.bf16.msra.mxu0 0
      %3272 = vmatprep.subr.bf16.mxu0 0
      %3273 = vmatpush2.bf16.msra.mxu0 0
      %3274 = vmatprep.subr.bf16.mxu0 0
      %3275 = vmatpush2.bf16.msra.mxu0 0
      %3276 = vmatprep.subr.bf16.mxu0 0
      %3277 = vmatpush2.bf16.msra.mxu0 0
      %3278 = vmatprep.subr.bf16.mxu0 0
      %3279 = vmatpush2.bf16.msra.mxu0 0
      %3280 = vmatprep.subr.bf16.mxu0 0
      %3281 = vmatpush2.bf16.msra.mxu0 0
      %3282 = vmatprep.subr.bf16.mxu0 0
      %3283 = vmatpush2.bf16.msra.mxu0 0
      %3284 = vmatprep.subr.bf16.mxu0 0
      %3285 = vmatpush2.bf16.msra.mxu0 0
      %3286 = vmatprep.mubr.bf16.mxu0 0
      %3287 = vmatmul.mubr.bf16.gmra.mxu0 %v3199
      %v3288 = vpop.f32.mrf.mxu0
      %v3289 = vadd.f32 0.0, %v3288
      %v3290 = vpop.f32.mrf.mxu0
      %v3291 = vadd.f32 0.0, %v3290
      %v3292 = vpop.f32.mrf.mxu0
      %v3293 = vpop.f32.mrf.mxu0
      %3294 = vdwg.mxu0
      %v3295 = vadd.f32 %v3160, %v3248
      %v3296 = vadd.f32 %v3161, %v3250
      %v3297 = vadd.f32 %v3162, %v3289
      %v3298 = vadd.f32 %v3163, %v3291
      %s3299 = scalar_lea.vmem %s1, 42
      %v3300 = vld [vmem:[%s3299] sm:$0x3]
      %vm3301 = vmand %vm256, %vm259
      %v3302 = vsel %vm3301, 1, 0
      %v3303 = vcvt.s32.f32 %v3302
      %v3305 = vlaneseq
      %v3306 = vshrl.u32 %v3305, 7
      %v3307 = vsub.s32 0, %v3306
      %v3308 = vrot.slane %v3303, %v3307
      %v3309 = vlaneseq
      %v3310 = vshrl.u32 %v3309, 7
      %v3311 = vsub.s32 1, %v3310
      %v3312 = vrot.slane %v3303, %v3311
      %v3313 = vlaneseq
      %v3314 = vshrl.u32 %v3313, 7
      %v3315 = vsub.s32 2, %v3314
      %v3316 = vrot.slane %v3303, %v3315
      %v3317 = vlaneseq
      %v3318 = vshrl.u32 %v3317, 7
      %v3319 = vsub.s32 3, %v3318
      %v3320 = vrot.slane %v3303, %v3319
      %v3325 = vmul.f32 %v719, %v3308
      %v3326 = vmul.f32 %v718, %v3312
      %v3327 = vmul.f32 %v717, %v3316
      %v3328 = vmul.f32 %v720, %v3320
      %v3329 = vpack.c.bf16 %v3325, %v3325
      %v3330 = vpack.c.bf16 %v3326, %v3326
      %v3331 = vpack.c.bf16 %v3327, %v3327
      %v3332 = vpack.c.bf16 %v3328, %v3328
      %v3334 = vsel %vm362, %v3300, 0
      %v3337 = vsel %vm366, %v3329, 0
      %v3340 = vsel %vm366, %v3330, 0
      %v3343 = vsel %vm366, %v3331, 0
      %v3346 = vsel %vm366, %v3332, 0
      %3348 = vmatprep.subr.bf16.mxu0 0
      %3349 = vmatpush1.bf16.msra.mxu0 0
      %3350 = vmatprep.subr.bf16.mxu0 0
      %3351 = vmatpush1.bf16.msra.mxu0 0
      %3352 = vmatprep.subr.bf16.mxu0 0
      %3353 = vmatpush1.bf16.msra.mxu0 0
      %3354 = vmatprep.subr.bf16.mxu0 0
      %3355 = vmatpush1.bf16.msra.mxu0 0
      %3356 = vmatprep.subr.bf16.mxu0 0
      %3357 = vmatpush1.bf16.msra.mxu0 0
      %3358 = vmatprep.subr.bf16.mxu0 0
      %3359 = vmatpush1.bf16.msra.mxu0 0
      %3360 = vmatprep.subr.bf16.mxu0 0
      %3361 = vmatpush1.bf16.msra.mxu0 0
      %3362 = vmatprep.subr.bf16.mxu0 %v3340
      %3363 = vmatpush1.bf16.msra.mxu0 %v3337
      %3364 = vmatprep.subr.bf16.mxu0 0
      %3365 = vmatpush2.bf16.msra.mxu0 0
      %3366 = vmatprep.subr.bf16.mxu0 0
      %3367 = vmatpush2.bf16.msra.mxu0 0
      %3368 = vmatprep.subr.bf16.mxu0 0
      %3369 = vmatpush2.bf16.msra.mxu0 0
      %3370 = vmatprep.subr.bf16.mxu0 0
      %3371 = vmatpush2.bf16.msra.mxu0 0
      %3372 = vmatprep.subr.bf16.mxu0 0
      %3373 = vmatpush2.bf16.msra.mxu0 0
      %3374 = vmatprep.subr.bf16.mxu0 0
      %3375 = vmatpush2.bf16.msra.mxu0 0
      %3376 = vmatprep.subr.bf16.mxu0 0
      %3377 = vmatpush2.bf16.msra.mxu0 0
      %3378 = vmatprep.subr.bf16.mxu0 0
      %3379 = vmatpush2.bf16.msra.mxu0 0
      %3380 = vmatprep.mubr.bf16.mxu0 0
      %3381 = vmatmul.mubr.bf16.gmra.mxu0 %v3334
      %v3382 = vpop.f32.mrf.mxu0
      %v3383 = vadd.f32 0.0, %v3382
      %v3384 = vpop.f32.mrf.mxu0
      %v3385 = vadd.f32 0.0, %v3384
      %v3386 = vpop.f32.mrf.mxu0
      %v3387 = vpop.f32.mrf.mxu0
      %3388 = vdwg.mxu0
      %3389 = vmatprep.subr.bf16.mxu0 0
      %3390 = vmatpush1.bf16.msra.mxu0 0
      %3391 = vmatprep.subr.bf16.mxu0 0
      %3392 = vmatpush1.bf16.msra.mxu0 0
      %3393 = vmatprep.subr.bf16.mxu0 0
      %3394 = vmatpush1.bf16.msra.mxu0 0
      %3395 = vmatprep.subr.bf16.mxu0 0
      %3396 = vmatpush1.bf16.msra.mxu0 0
      %3397 = vmatprep.subr.bf16.mxu0 0
      %3398 = vmatpush1.bf16.msra.mxu0 0
      %3399 = vmatprep.subr.bf16.mxu0 0
      %3400 = vmatpush1.bf16.msra.mxu0 0
      %3401 = vmatprep.subr.bf16.mxu0 0
      %3402 = vmatpush1.bf16.msra.mxu0 0
      %3403 = vmatprep.subr.bf16.mxu0 %v3346
      %3404 = vmatpush1.bf16.msra.mxu0 %v3343
      %3405 = vmatprep.subr.bf16.mxu0 0
      %3406 = vmatpush2.bf16.msra.mxu0 0
      %3407 = vmatprep.subr.bf16.mxu0 0
      %3408 = vmatpush2.bf16.msra.mxu0 0
      %3409 = vmatprep.subr.bf16.mxu0 0
      %3410 = vmatpush2.bf16.msra.mxu0 0
      %3411 = vmatprep.subr.bf16.mxu0 0
      %3412 = vmatpush2.bf16.msra.mxu0 0
      %3413 = vmatprep.subr.bf16.mxu0 0
      %3414 = vmatpush2.bf16.msra.mxu0 0
      %3415 = vmatprep.subr.bf16.mxu0 0
      %3416 = vmatpush2.bf16.msra.mxu0 0
      %3417 = vmatprep.subr.bf16.mxu0 0
      %3418 = vmatpush2.bf16.msra.mxu0 0
      %3419 = vmatprep.subr.bf16.mxu0 0
      %3420 = vmatpush2.bf16.msra.mxu0 0
      %3421 = vmatprep.mubr.bf16.mxu0 0
      %3422 = vmatmul.mubr.bf16.gmra.mxu0 %v3334
      %v3423 = vpop.f32.mrf.mxu0
      %v3424 = vadd.f32 0.0, %v3423
      %v3425 = vpop.f32.mrf.mxu0
      %v3426 = vadd.f32 0.0, %v3425
      %v3427 = vpop.f32.mrf.mxu0
      %v3428 = vpop.f32.mrf.mxu0
      %3429 = vdwg.mxu0
      %v3430 = vadd.f32 %v3295, %v3383
      %v3431 = vadd.f32 %v3296, %v3385
      %v3432 = vadd.f32 %v3297, %v3424
      %v3433 = vadd.f32 %v3298, %v3426
      %s3434 = scalar_lea.vmem %s1, 44
      %v3435 = vld [vmem:[%s3434] sm:$0x3]
      %v3436 = vsel %vm256, 1, 0
      %v3437 = vcvt.s32.f32 %v3436
      %v3439 = vlaneseq
      %v3440 = vshrl.u32 %v3439, 7
      %v3441 = vsub.s32 0, %v3440
      %v3442 = vrot.slane %v3437, %v3441
      %v3443 = vlaneseq
      %v3444 = vshrl.u32 %v3443, 7
      %v3445 = vsub.s32 1, %v3444
      %v3446 = vrot.slane %v3437, %v3445
      %v3447 = vlaneseq
      %v3448 = vshrl.u32 %v3447, 7
      %v3449 = vsub.s32 2, %v3448
      %v3450 = vrot.slane %v3437, %v3449
      %v3451 = vlaneseq
      %v3452 = vshrl.u32 %v3451, 7
      %v3453 = vsub.s32 3, %v3452
      %v3454 = vrot.slane %v3437, %v3453
      %v3459 = vmul.f32 %v867, %v3442
      %v3460 = vmul.f32 %v866, %v3446
      %v3461 = vmul.f32 %v865, %v3450
      %v3462 = vmul.f32 %v868, %v3454
      %v3463 = vpack.c.bf16 %v3459, %v3459
      %v3464 = vpack.c.bf16 %v3460, %v3460
      %v3465 = vpack.c.bf16 %v3461, %v3461
      %v3466 = vpack.c.bf16 %v3462, %v3462
      %v3468 = vsel %vm362, %v3435, 0
      %v3471 = vsel %vm366, %v3463, 0
      %v3474 = vsel %vm366, %v3464, 0
      %v3477 = vsel %vm366, %v3465, 0
      %v3480 = vsel %vm366, %v3466, 0
      %3482 = vmatprep.subr.bf16.mxu0 0
      %3483 = vmatpush1.bf16.msra.mxu0 0
      %3484 = vmatprep.subr.bf16.mxu0 0
      %3485 = vmatpush1.bf16.msra.mxu0 0
      %3486 = vmatprep.subr.bf16.mxu0 0
      %3487 = vmatpush1.bf16.msra.mxu0 0
      %3488 = vmatprep.subr.bf16.mxu0 0
      %3489 = vmatpush1.bf16.msra.mxu0 0
      %3490 = vmatprep.subr.bf16.mxu0 0
      %3491 = vmatpush1.bf16.msra.mxu0 0
      %3492 = vmatprep.subr.bf16.mxu0 0
      %3493 = vmatpush1.bf16.msra.mxu0 0
      %3494 = vmatprep.subr.bf16.mxu0 0
      %3495 = vmatpush1.bf16.msra.mxu0 0
      %3496 = vmatprep.subr.bf16.mxu0 %v3474
      %3497 = vmatpush1.bf16.msra.mxu0 %v3471
      %3498 = vmatprep.subr.bf16.mxu0 0
      %3499 = vmatpush2.bf16.msra.mxu0 0
      %3500 = vmatprep.subr.bf16.mxu0 0
      %3501 = vmatpush2.bf16.msra.mxu0 0
      %3502 = vmatprep.subr.bf16.mxu0 0
      %3503 = vmatpush2.bf16.msra.mxu0 0
      %3504 = vmatprep.subr.bf16.mxu0 0
      %3505 = vmatpush2.bf16.msra.mxu0 0
      %3506 = vmatprep.subr.bf16.mxu0 0
      %3507 = vmatpush2.bf16.msra.mxu0 0
      %3508 = vmatprep.subr.bf16.mxu0 0
      %3509 = vmatpush2.bf16.msra.mxu0 0
      %3510 = vmatprep.subr.bf16.mxu0 0
      %3511 = vmatpush2.bf16.msra.mxu0 0
      %3512 = vmatprep.subr.bf16.mxu0 0
      %3513 = vmatpush2.bf16.msra.mxu0 0
      %3514 = vmatprep.mubr.bf16.mxu0 0
      %3515 = vmatmul.mubr.bf16.gmra.mxu0 %v3468
      %v3516 = vpop.f32.mrf.mxu0
      %v3517 = vadd.f32 0.0, %v3516
      %v3518 = vpop.f32.mrf.mxu0
      %v3519 = vadd.f32 0.0, %v3518
      %v3520 = vpop.f32.mrf.mxu0
      %v3521 = vpop.f32.mrf.mxu0
      %3522 = vdwg.mxu0
      %3523 = vmatprep.subr.bf16.mxu0 0
      %3524 = vmatpush1.bf16.msra.mxu0 0
      %3525 = vmatprep.subr.bf16.mxu0 0
      %3526 = vmatpush1.bf16.msra.mxu0 0
      %3527 = vmatprep.subr.bf16.mxu0 0
      %3528 = vmatpush1.bf16.msra.mxu0 0
      %3529 = vmatprep.subr.bf16.mxu0 0
      %3530 = vmatpush1.bf16.msra.mxu0 0
      %3531 = vmatprep.subr.bf16.mxu0 0
      %3532 = vmatpush1.bf16.msra.mxu0 0
      %3533 = vmatprep.subr.bf16.mxu0 0
      %3534 = vmatpush1.bf16.msra.mxu0 0
      %3535 = vmatprep.subr.bf16.mxu0 0
      %3536 = vmatpush1.bf16.msra.mxu0 0
      %3537 = vmatprep.subr.bf16.mxu0 %v3480
      %3538 = vmatpush1.bf16.msra.mxu0 %v3477
      %3539 = vmatprep.subr.bf16.mxu0 0
      %3540 = vmatpush2.bf16.msra.mxu0 0
      %3541 = vmatprep.subr.bf16.mxu0 0
      %3542 = vmatpush2.bf16.msra.mxu0 0
      %3543 = vmatprep.subr.bf16.mxu0 0
      %3544 = vmatpush2.bf16.msra.mxu0 0
      %3545 = vmatprep.subr.bf16.mxu0 0
      %3546 = vmatpush2.bf16.msra.mxu0 0
      %3547 = vmatprep.subr.bf16.mxu0 0
      %3548 = vmatpush2.bf16.msra.mxu0 0
      %3549 = vmatprep.subr.bf16.mxu0 0
      %3550 = vmatpush2.bf16.msra.mxu0 0
      %3551 = vmatprep.subr.bf16.mxu0 0
      %3552 = vmatpush2.bf16.msra.mxu0 0
      %3553 = vmatprep.subr.bf16.mxu0 0
      %3554 = vmatpush2.bf16.msra.mxu0 0
      %3555 = vmatprep.mubr.bf16.mxu0 0
      %3556 = vmatmul.mubr.bf16.gmra.mxu0 %v3468
      %v3557 = vpop.f32.mrf.mxu0
      %v3558 = vadd.f32 0.0, %v3557
      %v3559 = vpop.f32.mrf.mxu0
      %v3560 = vadd.f32 0.0, %v3559
      %v3561 = vpop.f32.mrf.mxu0
      %v3562 = vpop.f32.mrf.mxu0
      %3563 = vdwg.mxu0
      %v3564 = vadd.f32 %v3430, %v3517
      %v3565 = vadd.f32 %v3431, %v3519
      %v3566 = vadd.f32 %v3432, %v3558
      %v3567 = vadd.f32 %v3433, %v3560
      %s3568 = scalar_lea.vmem %s1, 46
      %v3569 = vld [vmem:[%s3568] sm:$0x3]
      %vm3570 = vmand %vm256, %vm260
      %v3571 = vsel %vm3570, 1, 0
      %v3572 = vcvt.s32.f32 %v3571
      %v3574 = vlaneseq
      %v3575 = vshrl.u32 %v3574, 7
      %v3576 = vsub.s32 0, %v3575
      %v3577 = vrot.slane %v3572, %v3576
      %v3578 = vlaneseq
      %v3579 = vshrl.u32 %v3578, 7
      %v3580 = vsub.s32 1, %v3579
      %v3581 = vrot.slane %v3572, %v3580
      %v3582 = vlaneseq
      %v3583 = vshrl.u32 %v3582, 7
      %v3584 = vsub.s32 2, %v3583
      %v3585 = vrot.slane %v3572, %v3584
      %v3586 = vlaneseq
      %v3587 = vshrl.u32 %v3586, 7
      %v3588 = vsub.s32 3, %v3587
      %v3589 = vrot.slane %v3572, %v3588
      %v3594 = vmul.f32 %v1014, %v3577
      %v3595 = vmul.f32 %v1013, %v3581
      %v3596 = vmul.f32 %v1012, %v3585
      %v3597 = vmul.f32 %v1015, %v3589
      %v3598 = vpack.c.bf16 %v3594, %v3594
      %v3599 = vpack.c.bf16 %v3595, %v3595
      %v3600 = vpack.c.bf16 %v3596, %v3596
      %v3601 = vpack.c.bf16 %v3597, %v3597
      %v3603 = vsel %vm362, %v3569, 0
      %v3606 = vsel %vm366, %v3598, 0
      %v3609 = vsel %vm366, %v3599, 0
      %v3612 = vsel %vm366, %v3600, 0
      %v3615 = vsel %vm366, %v3601, 0
      %3617 = vmatprep.subr.bf16.mxu0 0
      %3618 = vmatpush1.bf16.msra.mxu0 0
      %3619 = vmatprep.subr.bf16.mxu0 0
      %3620 = vmatpush1.bf16.msra.mxu0 0
      %3621 = vmatprep.subr.bf16.mxu0 0
      %3622 = vmatpush1.bf16.msra.mxu0 0
      %3623 = vmatprep.subr.bf16.mxu0 0
      %3624 = vmatpush1.bf16.msra.mxu0 0
      %3625 = vmatprep.subr.bf16.mxu0 0
      %3626 = vmatpush1.bf16.msra.mxu0 0
      %3627 = vmatprep.subr.bf16.mxu0 0
      %3628 = vmatpush1.bf16.msra.mxu0 0
      %3629 = vmatprep.subr.bf16.mxu0 0
      %3630 = vmatpush1.bf16.msra.mxu0 0
      %3631 = vmatprep.subr.bf16.mxu0 %v3609
      %3632 = vmatpush1.bf16.msra.mxu0 %v3606
      %3633 = vmatprep.subr.bf16.mxu0 0
      %3634 = vmatpush2.bf16.msra.mxu0 0
      %3635 = vmatprep.subr.bf16.mxu0 0
      %3636 = vmatpush2.bf16.msra.mxu0 0
      %3637 = vmatprep.subr.bf16.mxu0 0
      %3638 = vmatpush2.bf16.msra.mxu0 0
      %3639 = vmatprep.subr.bf16.mxu0 0
      %3640 = vmatpush2.bf16.msra.mxu0 0
      %3641 = vmatprep.subr.bf16.mxu0 0
      %3642 = vmatpush2.bf16.msra.mxu0 0
      %3643 = vmatprep.subr.bf16.mxu0 0
      %3644 = vmatpush2.bf16.msra.mxu0 0
      %3645 = vmatprep.subr.bf16.mxu0 0
      %3646 = vmatpush2.bf16.msra.mxu0 0
      %3647 = vmatprep.subr.bf16.mxu0 0
      %3648 = vmatpush2.bf16.msra.mxu0 0
      %3649 = vmatprep.mubr.bf16.mxu0 0
      %3650 = vmatmul.mubr.bf16.gmra.mxu0 %v3603
      %v3651 = vpop.f32.mrf.mxu0
      %v3652 = vadd.f32 0.0, %v3651
      %v3653 = vpop.f32.mrf.mxu0
      %v3654 = vadd.f32 0.0, %v3653
      %v3655 = vpop.f32.mrf.mxu0
      %v3656 = vpop.f32.mrf.mxu0
      %3657 = vdwg.mxu0
      %3658 = vmatprep.subr.bf16.mxu0 0
      %3659 = vmatpush1.bf16.msra.mxu0 0
      %3660 = vmatprep.subr.bf16.mxu0 0
      %3661 = vmatpush1.bf16.msra.mxu0 0
      %3662 = vmatprep.subr.bf16.mxu0 0
      %3663 = vmatpush1.bf16.msra.mxu0 0
      %3664 = vmatprep.subr.bf16.mxu0 0
      %3665 = vmatpush1.bf16.msra.mxu0 0
      %3666 = vmatprep.subr.bf16.mxu0 0
      %3667 = vmatpush1.bf16.msra.mxu0 0
      %3668 = vmatprep.subr.bf16.mxu0 0
      %3669 = vmatpush1.bf16.msra.mxu0 0
      %3670 = vmatprep.subr.bf16.mxu0 0
      %3671 = vmatpush1.bf16.msra.mxu0 0
      %3672 = vmatprep.subr.bf16.mxu0 %v3615
      %3673 = vmatpush1.bf16.msra.mxu0 %v3612
      %3674 = vmatprep.subr.bf16.mxu0 0
      %3675 = vmatpush2.bf16.msra.mxu0 0
      %3676 = vmatprep.subr.bf16.mxu0 0
      %3677 = vmatpush2.bf16.msra.mxu0 0
      %3678 = vmatprep.subr.bf16.mxu0 0
      %3679 = vmatpush2.bf16.msra.mxu0 0
      %3680 = vmatprep.subr.bf16.mxu0 0
      %3681 = vmatpush2.bf16.msra.mxu0 0
      %3682 = vmatprep.subr.bf16.mxu0 0
      %3683 = vmatpush2.bf16.msra.mxu0 0
      %3684 = vmatprep.subr.bf16.mxu0 0
      %3685 = vmatpush2.bf16.msra.mxu0 0
      %3686 = vmatprep.subr.bf16.mxu0 0
      %3687 = vmatpush2.bf16.msra.mxu0 0
      %3688 = vmatprep.subr.bf16.mxu0 0
      %3689 = vmatpush2.bf16.msra.mxu0 0
      %3690 = vmatprep.mubr.bf16.mxu0 0
      %3691 = vmatmul.mubr.bf16.gmra.mxu0 %v3603
      %v3692 = vpop.f32.mrf.mxu0
      %v3693 = vadd.f32 0.0, %v3692
      %v3694 = vpop.f32.mrf.mxu0
      %v3695 = vadd.f32 0.0, %v3694
      %v3696 = vpop.f32.mrf.mxu0
      %v3697 = vpop.f32.mrf.mxu0
      %3698 = vdwg.mxu0
      %v3699 = vadd.f32 %v3564, %v3652
      %v3700 = vadd.f32 %v3565, %v3654
      %v3701 = vadd.f32 %v3566, %v3693
      %v3702 = vadd.f32 %v3567, %v3695
      %s3703 = scalar_lea.vmem %s1, 48
      %v3704 = vld [vmem:[%s3703] sm:$0x3]
      %vm3705 = vmand %vm256, %vm258
      %vm3706 = vmand %vm3705, %vm259
      %v3707 = vsel %vm3706, 1, 0
      %v3708 = vcvt.s32.f32 %v3707
      %v3710 = vlaneseq
      %v3711 = vshrl.u32 %v3710, 7
      %v3712 = vsub.s32 0, %v3711
      %v3713 = vrot.slane %v3708, %v3712
      %v3714 = vlaneseq
      %v3715 = vshrl.u32 %v3714, 7
      %v3716 = vsub.s32 1, %v3715
      %v3717 = vrot.slane %v3708, %v3716
      %v3718 = vlaneseq
      %v3719 = vshrl.u32 %v3718, 7
      %v3720 = vsub.s32 2, %v3719
      %v3721 = vrot.slane %v3708, %v3720
      %v3722 = vlaneseq
      %v3723 = vshrl.u32 %v3722, 7
      %v3724 = vsub.s32 3, %v3723
      %v3725 = vrot.slane %v3708, %v3724
      %v3730 = vmul.f32 %v1162, %v3713
      %v3731 = vmul.f32 %v1161, %v3717
      %v3732 = vmul.f32 %v1160, %v3721
      %v3733 = vmul.f32 %v1163, %v3725
      %v3734 = vpack.c.bf16 %v3730, %v3730
      %v3735 = vpack.c.bf16 %v3731, %v3731
      %v3736 = vpack.c.bf16 %v3732, %v3732
      %v3737 = vpack.c.bf16 %v3733, %v3733
      %v3739 = vsel %vm362, %v3704, 0
      %v3742 = vsel %vm366, %v3734, 0
      %v3745 = vsel %vm366, %v3735, 0
      %v3748 = vsel %vm366, %v3736, 0
      %v3751 = vsel %vm366, %v3737, 0
      %3753 = vmatprep.subr.bf16.mxu0 0
      %3754 = vmatpush1.bf16.msra.mxu0 0
      %3755 = vmatprep.subr.bf16.mxu0 0
      %3756 = vmatpush1.bf16.msra.mxu0 0
      %3757 = vmatprep.subr.bf16.mxu0 0
      %3758 = vmatpush1.bf16.msra.mxu0 0
      %3759 = vmatprep.subr.bf16.mxu0 0
      %3760 = vmatpush1.bf16.msra.mxu0 0
      %3761 = vmatprep.subr.bf16.mxu0 0
      %3762 = vmatpush1.bf16.msra.mxu0 0
      %3763 = vmatprep.subr.bf16.mxu0 0
      %3764 = vmatpush1.bf16.msra.mxu0 0
      %3765 = vmatprep.subr.bf16.mxu0 0
      %3766 = vmatpush1.bf16.msra.mxu0 0
      %3767 = vmatprep.subr.bf16.mxu0 %v3745
      %3768 = vmatpush1.bf16.msra.mxu0 %v3742
      %3769 = vmatprep.subr.bf16.mxu0 0
      %3770 = vmatpush2.bf16.msra.mxu0 0
      %3771 = vmatprep.subr.bf16.mxu0 0
      %3772 = vmatpush2.bf16.msra.mxu0 0
      %3773 = vmatprep.subr.bf16.mxu0 0
      %3774 = vmatpush2.bf16.msra.mxu0 0
      %3775 = vmatprep.subr.bf16.mxu0 0
      %3776 = vmatpush2.bf16.msra.mxu0 0
      %3777 = vmatprep.subr.bf16.mxu0 0
      %3778 = vmatpush2.bf16.msra.mxu0 0
      %3779 = vmatprep.subr.bf16.mxu0 0
      %3780 = vmatpush2.bf16.msra.mxu0 0
      %3781 = vmatprep.subr.bf16.mxu0 0
      %3782 = vmatpush2.bf16.msra.mxu0 0
      %3783 = vmatprep.subr.bf16.mxu0 0
      %3784 = vmatpush2.bf16.msra.mxu0 0
      %3785 = vmatprep.mubr.bf16.mxu0 0
      %3786 = vmatmul.mubr.bf16.gmra.mxu0 %v3739
      %v3787 = vpop.f32.mrf.mxu0
      %v3788 = vadd.f32 0.0, %v3787
      %v3789 = vpop.f32.mrf.mxu0
      %v3790 = vadd.f32 0.0, %v3789
      %v3791 = vpop.f32.mrf.mxu0
      %v3792 = vpop.f32.mrf.mxu0
      %3793 = vdwg.mxu0
      %3794 = vmatprep.subr.bf16.mxu0 0
      %3795 = vmatpush1.bf16.msra.mxu0 0
      %3796 = vmatprep.subr.bf16.mxu0 0
      %3797 = vmatpush1.bf16.msra.mxu0 0
      %3798 = vmatprep.subr.bf16.mxu0 0
      %3799 = vmatpush1.bf16.msra.mxu0 0
      %3800 = vmatprep.subr.bf16.mxu0 0
      %3801 = vmatpush1.bf16.msra.mxu0 0
      %3802 = vmatprep.subr.bf16.mxu0 0
      %3803 = vmatpush1.bf16.msra.mxu0 0
      %3804 = vmatprep.subr.bf16.mxu0 0
      %3805 = vmatpush1.bf16.msra.mxu0 0
      %3806 = vmatprep.subr.bf16.mxu0 0
      %3807 = vmatpush1.bf16.msra.mxu0 0
      %3808 = vmatprep.subr.bf16.mxu0 %v3751
      %3809 = vmatpush1.bf16.msra.mxu0 %v3748
      %3810 = vmatprep.subr.bf16.mxu0 0
      %3811 = vmatpush2.bf16.msra.mxu0 0
      %3812 = vmatprep.subr.bf16.mxu0 0
      %3813 = vmatpush2.bf16.msra.mxu0 0
      %3814 = vmatprep.subr.bf16.mxu0 0
      %3815 = vmatpush2.bf16.msra.mxu0 0
      %3816 = vmatprep.subr.bf16.mxu0 0
      %3817 = vmatpush2.bf16.msra.mxu0 0
      %3818 = vmatprep.subr.bf16.mxu0 0
      %3819 = vmatpush2.bf16.msra.mxu0 0
      %3820 = vmatprep.subr.bf16.mxu0 0
      %3821 = vmatpush2.bf16.msra.mxu0 0
      %3822 = vmatprep.subr.bf16.mxu0 0
      %3823 = vmatpush2.bf16.msra.mxu0 0
      %3824 = vmatprep.subr.bf16.mxu0 0
      %3825 = vmatpush2.bf16.msra.mxu0 0
      %3826 = vmatprep.mubr.bf16.mxu0 0
      %3827 = vmatmul.mubr.bf16.gmra.mxu0 %v3739
      %v3828 = vpop.f32.mrf.mxu0
      %v3829 = vadd.f32 0.0, %v3828
      %v3830 = vpop.f32.mrf.mxu0
      %v3831 = vadd.f32 0.0, %v3830
      %v3832 = vpop.f32.mrf.mxu0
      %v3833 = vpop.f32.mrf.mxu0
      %3834 = vdwg.mxu0
      %v3835 = vadd.f32 %v3699, %v3788
      %v3836 = vadd.f32 %v3700, %v3790
      %v3837 = vadd.f32 %v3701, %v3829
      %v3838 = vadd.f32 %v3702, %v3831
      %s3839 = scalar_lea.vmem %s1, 50
      %v3840 = vld [vmem:[%s3839] sm:$0x3]
      %v3841 = vsel %vm3705, 1, 0
      %v3842 = vcvt.s32.f32 %v3841
      %v3844 = vlaneseq
      %v3845 = vshrl.u32 %v3844, 7
      %v3846 = vsub.s32 0, %v3845
      %v3847 = vrot.slane %v3842, %v3846
      %v3848 = vlaneseq
      %v3849 = vshrl.u32 %v3848, 7
      %v3850 = vsub.s32 1, %v3849
      %v3851 = vrot.slane %v3842, %v3850
      %v3852 = vlaneseq
      %v3853 = vshrl.u32 %v3852, 7
      %v3854 = vsub.s32 2, %v3853
      %v3855 = vrot.slane %v3842, %v3854
      %v3856 = vlaneseq
      %v3857 = vshrl.u32 %v3856, 7
      %v3858 = vsub.s32 3, %v3857
      %v3859 = vrot.slane %v3842, %v3858
      %v3864 = vmul.f32 %v1311, %v3847
      %v3865 = vmul.f32 %v1310, %v3851
      %v3866 = vmul.f32 %v1309, %v3855
      %v3867 = vmul.f32 %v1312, %v3859
      %v3868 = vpack.c.bf16 %v3864, %v3864
      %v3869 = vpack.c.bf16 %v3865, %v3865
      %v3870 = vpack.c.bf16 %v3866, %v3866
      %v3871 = vpack.c.bf16 %v3867, %v3867
      %v3873 = vsel %vm362, %v3840, 0
      %v3876 = vsel %vm366, %v3868, 0
      %v3879 = vsel %vm366, %v3869, 0
      %v3882 = vsel %vm366, %v3870, 0
      %v3885 = vsel %vm366, %v3871, 0
      %3887 = vmatprep.subr.bf16.mxu0 0
      %3888 = vmatpush1.bf16.msra.mxu0 0
      %3889 = vmatprep.subr.bf16.mxu0 0
      %3890 = vmatpush1.bf16.msra.mxu0 0
      %3891 = vmatprep.subr.bf16.mxu0 0
      %3892 = vmatpush1.bf16.msra.mxu0 0
      %3893 = vmatprep.subr.bf16.mxu0 0
      %3894 = vmatpush1.bf16.msra.mxu0 0
      %3895 = vmatprep.subr.bf16.mxu0 0
      %3896 = vmatpush1.bf16.msra.mxu0 0
      %3897 = vmatprep.subr.bf16.mxu0 0
      %3898 = vmatpush1.bf16.msra.mxu0 0
      %3899 = vmatprep.subr.bf16.mxu0 0
      %3900 = vmatpush1.bf16.msra.mxu0 0
      %3901 = vmatprep.subr.bf16.mxu0 %v3879
      %3902 = vmatpush1.bf16.msra.mxu0 %v3876
      %3903 = vmatprep.subr.bf16.mxu0 0
      %3904 = vmatpush2.bf16.msra.mxu0 0
      %3905 = vmatprep.subr.bf16.mxu0 0
      %3906 = vmatpush2.bf16.msra.mxu0 0
      %3907 = vmatprep.subr.bf16.mxu0 0
      %3908 = vmatpush2.bf16.msra.mxu0 0
      %3909 = vmatprep.subr.bf16.mxu0 0
      %3910 = vmatpush2.bf16.msra.mxu0 0
      %3911 = vmatprep.subr.bf16.mxu0 0
      %3912 = vmatpush2.bf16.msra.mxu0 0
      %3913 = vmatprep.subr.bf16.mxu0 0
      %3914 = vmatpush2.bf16.msra.mxu0 0
      %3915 = vmatprep.subr.bf16.mxu0 0
      %3916 = vmatpush2.bf16.msra.mxu0 0
      %3917 = vmatprep.subr.bf16.mxu0 0
      %3918 = vmatpush2.bf16.msra.mxu0 0
      %3919 = vmatprep.mubr.bf16.mxu0 0
      %3920 = vmatmul.mubr.bf16.gmra.mxu0 %v3873
      %v3921 = vpop.f32.mrf.mxu0
      %v3922 = vadd.f32 0.0, %v3921
      %v3923 = vpop.f32.mrf.mxu0
      %v3924 = vadd.f32 0.0, %v3923
      %v3925 = vpop.f32.mrf.mxu0
      %v3926 = vpop.f32.mrf.mxu0
      %3927 = vdwg.mxu0
      %3928 = vmatprep.subr.bf16.mxu0 0
      %3929 = vmatpush1.bf16.msra.mxu0 0
      %3930 = vmatprep.subr.bf16.mxu0 0
      %3931 = vmatpush1.bf16.msra.mxu0 0
      %3932 = vmatprep.subr.bf16.mxu0 0
      %3933 = vmatpush1.bf16.msra.mxu0 0
      %3934 = vmatprep.subr.bf16.mxu0 0
      %3935 = vmatpush1.bf16.msra.mxu0 0
      %3936 = vmatprep.subr.bf16.mxu0 0
      %3937 = vmatpush1.bf16.msra.mxu0 0
      %3938 = vmatprep.subr.bf16.mxu0 0
      %3939 = vmatpush1.bf16.msra.mxu0 0
      %3940 = vmatprep.subr.bf16.mxu0 0
      %3941 = vmatpush1.bf16.msra.mxu0 0
      %3942 = vmatprep.subr.bf16.mxu0 %v3885
      %3943 = vmatpush1.bf16.msra.mxu0 %v3882
      %3944 = vmatprep.subr.bf16.mxu0 0
      %3945 = vmatpush2.bf16.msra.mxu0 0
      %3946 = vmatprep.subr.bf16.mxu0 0
      %3947 = vmatpush2.bf16.msra.mxu0 0
      %3948 = vmatprep.subr.bf16.mxu0 0
      %3949 = vmatpush2.bf16.msra.mxu0 0
      %3950 = vmatprep.subr.bf16.mxu0 0
      %3951 = vmatpush2.bf16.msra.mxu0 0
      %3952 = vmatprep.subr.bf16.mxu0 0
      %3953 = vmatpush2.bf16.msra.mxu0 0
      %3954 = vmatprep.subr.bf16.mxu0 0
      %3955 = vmatpush2.bf16.msra.mxu0 0
      %3956 = vmatprep.subr.bf16.mxu0 0
      %3957 = vmatpush2.bf16.msra.mxu0 0
      %3958 = vmatprep.subr.bf16.mxu0 0
      %3959 = vmatpush2.bf16.msra.mxu0 0
      %3960 = vmatprep.mubr.bf16.mxu0 0
      %3961 = vmatmul.mubr.bf16.gmra.mxu0 %v3873
      %v3962 = vpop.f32.mrf.mxu0
      %v3963 = vadd.f32 0.0, %v3962
      %v3964 = vpop.f32.mrf.mxu0
      %v3965 = vadd.f32 0.0, %v3964
      %v3966 = vpop.f32.mrf.mxu0
      %v3967 = vpop.f32.mrf.mxu0
      %3968 = vdwg.mxu0
      %v3969 = vadd.f32 %v3835, %v3922
      %v3970 = vadd.f32 %v3836, %v3924
      %v3971 = vadd.f32 %v3837, %v3963
      %v3972 = vadd.f32 %v3838, %v3965
      %s3973 = scalar_lea.vmem %s1, 52
      %v3974 = vld [vmem:[%s3973] sm:$0x3]
      %vm3975 = vmand %vm3705, %vm260
      %v3976 = vsel %vm3975, 1, 0
      %v3977 = vcvt.s32.f32 %v3976
      %v3979 = vlaneseq
      %v3980 = vshrl.u32 %v3979, 7
      %v3981 = vsub.s32 0, %v3980
      %v3982 = vrot.slane %v3977, %v3981
      %v3983 = vlaneseq
      %v3984 = vshrl.u32 %v3983, 7
      %v3985 = vsub.s32 1, %v3984
      %v3986 = vrot.slane %v3977, %v3985
      %v3987 = vlaneseq
      %v3988 = vshrl.u32 %v3987, 7
      %v3989 = vsub.s32 2, %v3988
      %v3990 = vrot.slane %v3977, %v3989
      %v3991 = vlaneseq
      %v3992 = vshrl.u32 %v3991, 7
      %v3993 = vsub.s32 3, %v3992
      %v3994 = vrot.slane %v3977, %v3993
      %v3999 = vmul.f32 %v1458, %v3982
      %v4000 = vmul.f32 %v1457, %v3986
      %v4001 = vmul.f32 %v1456, %v3990
      %v4002 = vmul.f32 %v1459, %v3994
      %v4003 = vpack.c.bf16 %v3999, %v3999
      %v4004 = vpack.c.bf16 %v4000, %v4000
      %v4005 = vpack.c.bf16 %v4001, %v4001
      %v4006 = vpack.c.bf16 %v4002, %v4002
      %v4008 = vsel %vm362, %v3974, 0
      %v4011 = vsel %vm366, %v4003, 0
      %v4014 = vsel %vm366, %v4004, 0
      %v4017 = vsel %vm366, %v4005, 0
      %v4020 = vsel %vm366, %v4006, 0
      %4022 = vmatprep.subr.bf16.mxu0 0
      %4023 = vmatpush1.bf16.msra.mxu0 0
      %4024 = vmatprep.subr.bf16.mxu0 0
      %4025 = vmatpush1.bf16.msra.mxu0 0
      %4026 = vmatprep.subr.bf16.mxu0 0
      %4027 = vmatpush1.bf16.msra.mxu0 0
      %4028 = vmatprep.subr.bf16.mxu0 0
      %4029 = vmatpush1.bf16.msra.mxu0 0
      %4030 = vmatprep.subr.bf16.mxu0 0
      %4031 = vmatpush1.bf16.msra.mxu0 0
      %4032 = vmatprep.subr.bf16.mxu0 0
      %4033 = vmatpush1.bf16.msra.mxu0 0
      %4034 = vmatprep.subr.bf16.mxu0 0
      %4035 = vmatpush1.bf16.msra.mxu0 0
      %4036 = vmatprep.subr.bf16.mxu0 %v4014
      %4037 = vmatpush1.bf16.msra.mxu0 %v4011
      %4038 = vmatprep.subr.bf16.mxu0 0
      %4039 = vmatpush2.bf16.msra.mxu0 0
      %4040 = vmatprep.subr.bf16.mxu0 0
      %4041 = vmatpush2.bf16.msra.mxu0 0
      %4042 = vmatprep.subr.bf16.mxu0 0
      %4043 = vmatpush2.bf16.msra.mxu0 0
      %4044 = vmatprep.subr.bf16.mxu0 0
      %4045 = vmatpush2.bf16.msra.mxu0 0
      %4046 = vmatprep.subr.bf16.mxu0 0
      %4047 = vmatpush2.bf16.msra.mxu0 0
      %4048 = vmatprep.subr.bf16.mxu0 0
      %4049 = vmatpush2.bf16.msra.mxu0 0
      %4050 = vmatprep.subr.bf16.mxu0 0
      %4051 = vmatpush2.bf16.msra.mxu0 0
      %4052 = vmatprep.subr.bf16.mxu0 0
      %4053 = vmatpush2.bf16.msra.mxu0 0
      %4054 = vmatprep.mubr.bf16.mxu0 0
      %4055 = vmatmul.mubr.bf16.gmra.mxu0 %v4008
      %v4056 = vpop.f32.mrf.mxu0
      %v4057 = vadd.f32 0.0, %v4056
      %v4058 = vpop.f32.mrf.mxu0
      %v4059 = vadd.f32 0.0, %v4058
      %v4060 = vpop.f32.mrf.mxu0
      %v4061 = vpop.f32.mrf.mxu0
      %4062 = vdwg.mxu0
      %4063 = vmatprep.subr.bf16.mxu0 0
      %4064 = vmatpush1.bf16.msra.mxu0 0
      %4065 = vmatprep.subr.bf16.mxu0 0
      %4066 = vmatpush1.bf16.msra.mxu0 0
      %4067 = vmatprep.subr.bf16.mxu0 0
      %4068 = vmatpush1.bf16.msra.mxu0 0
      %4069 = vmatprep.subr.bf16.mxu0 0
      %4070 = vmatpush1.bf16.msra.mxu0 0
      %4071 = vmatprep.subr.bf16.mxu0 0
      %4072 = vmatpush1.bf16.msra.mxu0 0
      %4073 = vmatprep.subr.bf16.mxu0 0
      %4074 = vmatpush1.bf16.msra.mxu0 0
      %4075 = vmatprep.subr.bf16.mxu0 0
      %4076 = vmatpush1.bf16.msra.mxu0 0
      %4077 = vmatprep.subr.bf16.mxu0 %v4020
      %4078 = vmatpush1.bf16.msra.mxu0 %v4017
      %4079 = vmatprep.subr.bf16.mxu0 0
      %4080 = vmatpush2.bf16.msra.mxu0 0
      %4081 = vmatprep.subr.bf16.mxu0 0
      %4082 = vmatpush2.bf16.msra.mxu0 0
      %4083 = vmatprep.subr.bf16.mxu0 0
      %4084 = vmatpush2.bf16.msra.mxu0 0
      %4085 = vmatprep.subr.bf16.mxu0 0
      %4086 = vmatpush2.bf16.msra.mxu0 0
      %4087 = vmatprep.subr.bf16.mxu0 0
      %4088 = vmatpush2.bf16.msra.mxu0 0
      %4089 = vmatprep.subr.bf16.mxu0 0
      %4090 = vmatpush2.bf16.msra.mxu0 0
      %4091 = vmatprep.subr.bf16.mxu0 0
      %4092 = vmatpush2.bf16.msra.mxu0 0
      %4093 = vmatprep.subr.bf16.mxu0 0
      %4094 = vmatpush2.bf16.msra.mxu0 0
      %4095 = vmatprep.mubr.bf16.mxu0 0
      %4096 = vmatmul.mubr.bf16.gmra.mxu0 %v4008
      %v4097 = vpop.f32.mrf.mxu0
      %v4098 = vadd.f32 0.0, %v4097
      %v4099 = vpop.f32.mrf.mxu0
      %v4100 = vadd.f32 0.0, %v4099
      %v4101 = vpop.f32.mrf.mxu0
      %v4102 = vpop.f32.mrf.mxu0
      %4103 = vdwg.mxu0
      %v4104 = vadd.f32 %v3969, %v4057
      %v4105 = vadd.f32 %v3970, %v4059
      %v4106 = vadd.f32 %v3971, %v4098
      %v4107 = vadd.f32 %v3972, %v4100
      %v4108 = vpack.c.bf16 %v4104, %v4104
      %v4109 = vpack.c.bf16 %v4105, %v4105
      %v4110 = vpack.c.bf16 %v4106, %v4106
      %v4111 = vpack.c.bf16 %v4107, %v4107
      %v4116 = vcombine.low %v4108, %v4109
      %v4117 = vcombine.low %v4110, %v4111
      %v4119 = vunpack.c.l.s4 1983009808
      %v4120 = vunpack.c.0.s8 %v4119
      %v4121 = vlaneseq
      %v4122 = vshrl.u32 %v4121, 7
      %v4123 = vsub.s32 %v4120, %v4122
      %v4124 = vrot.slane %v4116, %v4123
      %v4126 = vunpack.c.l.s4 1983009808
      %v4127 = vunpack.c.0.s8 %v4126
      %v4128 = vlaneseq
      %v4129 = vshrl.u32 %v4128, 7
      %v4130 = vsub.s32 %v4127, %v4129
      %v4131 = vrot.slane %v4117, %v4130
      %v4132 = vcombine.low %v4124, %v4131
      %4134 = vst [vmem:[%s237] sm:$0xff] %v4132
      %vm4135 = vcmask 1043456
      %v4136 = vsel %vm4135, %v4104, 0.0
      %v4137 = vsel %vm4135, %v4105, 0.0
      %v4138 = vadd.f32 %v4136, %v4137
      %v4139 = vsel %vm4135, %v4106, 0.0
      %v4140 = vadd.f32 %v4138, %v4139
      %v4141 = vsel %vm4135, %v4107, 0.0
      %v4142 = vadd.f32 %v4140, %v4141
      %4143 = vadd.xlane.f32.xlu0 %v4142
      %v4144 = vpop.xlane.xlu0 %4143
      %vm4145 = vcmask 3072
      %4146 = vst.msk [vmem:[%s241] sm:$0xf] %vm4145, %v4144
      %v4147 = vmul.f32 %v4104, %v4104
      %v4148 = vmul.f32 %v4105, %v4105
      %v4149 = vmul.f32 %v4106, %v4106
      %v4150 = vmul.f32 %v4107, %v4107
      %v4151 = vsel %vm4135, %v4147, 0.0
      %v4152 = vsel %vm4135, %v4148, 0.0
      %v4153 = vadd.f32 %v4151, %v4152
      %v4154 = vsel %vm4135, %v4149, 0.0
      %v4155 = vadd.f32 %v4153, %v4154
      %v4156 = vsel %vm4135, %v4150, 0.0
      %v4157 = vadd.f32 %v4155, %v4156
      %4158 = vadd.xlane.f32.xlu0 %v4157
      %v4159 = vpop.xlane.xlu0 %4158
      %4160 = vst.msk [vmem:[%s245] sm:$0xf] %vm4145, %v4159
      %p4161 = scmp.lt.s32.totalorder %s17, 1
      %s4162 = scalar_select %p4161, %s17, 1
      %s4163 = smul.addr %s4162, 4
      %s4164 = smul.addr %s4163, 2
      %s4165 = scalar_lea.vmem %s3, %s4164
      %p4166 = scmp.lt.s32.totalorder %s17, 1
      %s4167 = scalar_select %p4166, %s17, 1
      %s4168 = smul.addr %s4167, 4
      %s4169 = scalar_lea.vmem %s4, %s4168
      %p4170 = scmp.lt.s32.totalorder %s17, 1
      %s4171 = scalar_select %p4170, %s17, 1
      %s4172 = smul.addr %s4171, 4
      %s4173 = scalar_lea.vmem %s5, %s4172
      // Predicated region
      $region33: #{double_conv_forward.3} parent=31 // pred_check
        %p4174 = pneg %p103
      $region34: #{double_conv_forward.3} parent=31 // pred_check_branch
        %4176 = sbr.rel (%p4174) target = $region36
      $region35: #{double_conv_forward.3} parent=31 // pred_region
        _
      $region36: #{double_conv_forward.3} parent=31 // pred_fallthru
        _
      // Predicated region
      $region37: #{double_conv_forward.3} parent=31 // pred_check
        %p4177 = pneg %p129
      $region38: #{double_conv_forward.3} parent=31 // pred_check_branch
        %4179 = sbr.rel (%p4177) target = $region40
      $region39: #{double_conv_forward.3} parent=31 // pred_region
        _
      $region40: #{double_conv_forward.3} parent=31 // pred_fallthru
        _
      // Predicated region
      $region41: #{double_conv_forward.3} parent=31 // pred_check
        %p4180 = pneg %p155
      $region42: #{double_conv_forward.3} parent=31 // pred_check_branch
        %4182 = sbr.rel (%p4180) target = $region44
      $region43: #{double_conv_forward.3} parent=31 // pred_region
        _
      $region44: #{double_conv_forward.3} parent=31 // pred_fallthru
        _
    $region32: #{double_conv_forward.3} parent=5 // pred_fallthru
      _
    %p4183 = scmp.le.s32.totalorder 2, %s12
    // Predicated region
    $region45: #{double_conv_forward.3} parent=5 // pred_check
      %p4184 = pneg %p4183
    $region46: #{double_conv_forward.3} parent=5 // pred_check_branch
      %4186 = sbr.rel (%p4184) target = $region48
    $region47: #{double_conv_forward.3} parent=5 // pred_region
      %s4187 = ssub.s32 %s12, 2
      // Predicated region
      $region49: #{double_conv_forward.3} parent=47 // pred_check
        %p4188 = pneg %p109
      $region50: #{double_conv_forward.3} parent=47 // pred_check_branch
        %4190 = sbr.rel (%p4188) target = $region52
      $region51: #{double_conv_forward.3} parent=47 // pred_region
        %p4191 = scmp.lt.s32.totalorder %s18, 1
        %s4192 = scalar_select %p4191, %s18, 1
        %s4193 = smul.addr %s4192, 4
        %s4194 = smul.addr %s4193, 2
        %s4195 = scalar_lea.vmem %s3, %s4194
      $region52: #{double_conv_forward.3} parent=47 // pred_fallthru
        _
      // Predicated region
      $region53: #{double_conv_forward.3} parent=47 // pred_check
        %p4196 = pneg %p135
      $region54: #{double_conv_forward.3} parent=47 // pred_check_branch
        %4198 = sbr.rel (%p4196) target = $region56
      $region55: #{double_conv_forward.3} parent=47 // pred_region
        %p4199 = scmp.lt.s32.totalorder %s18, 1
        %s4200 = scalar_select %p4199, %s18, 1
        %s4201 = smul.addr %s4200, 4
        %s4202 = scalar_lea.vmem %s4, %s4201
      $region56: #{double_conv_forward.3} parent=47 // pred_fallthru
        _
      // Predicated region
      $region57: #{double_conv_forward.3} parent=47 // pred_check
        %p4203 = pneg %p161
      $region58: #{double_conv_forward.3} parent=47 // pred_check_branch
        %4205 = sbr.rel (%p4203) target = $region60
      $region59: #{double_conv_forward.3} parent=47 // pred_region
        %p4206 = scmp.lt.s32.totalorder %s18, 1
        %s4207 = scalar_select %p4206, %s18, 1
        %s4208 = smul.addr %s4207, 4
        %s4209 = scalar_lea.vmem %s5, %s4208
      $region60: #{double_conv_forward.3} parent=47 // pred_fallthru
        _
    $region48: #{double_conv_forward.3} parent=5 // pred_fallthru
      _
  $region6: #{double_conv_forward.3} parent=0 // loop_footer
    %s16 = sadd.s32 1, %s12
  $region7: #{double_conv_forward.3} parent=0 // loop_footer_branch
    %11 = sbr.rel target = $region3
  $region8: #{double_conv_forward.3} parent=0 // loop_exit
    _

// kernel: double_conv_forward.4
$region0: #{double_conv_forward.4}
  #allocation0 [shape = 'u32[]', space=smem, size = 0x4, offset = 0x4, fixed_abs, tag = 'smem constant byte address 0x4 - core index']
  #allocation1 [shape = 'u32[144,128]{1,0:T(1,128)}', space=vmem, size = 0x12000, scoped, tag = 'internal scratch']
  %s0 = inlined_call_operand.vmem [shape: bf16[2,4,512], index: 0, kind: input, shape index: {}]
  %s1 = inlined_call_operand.vmem [shape: bf16[27,8,4], index: 1, kind: input, shape index: {}]
  %s2 = inlined_call_operand.vmem [shape: s32[3,512], index: 2, kind: input, shape index: {}]
  %s3 = inlined_call_operand.vmem [shape: f32[4,1], index: 3, kind: input, shape index: {}]
  %s4 = inlined_call_operand.vmem [shape: f32[4,1], index: 4, kind: input, shape index: {}]
  %s5 = inlined_call_operand.vmem [shape: bf16[2,8,512], index: 5, kind: output, shape index: {0}]
  %s6 = inlined_call_operand.vmem [shape: f32[2,8,1], index: 6, kind: output, shape index: {1}]
  %s7 = inlined_call_operand.vmem [shape: f32[2,8,1], index: 7, kind: output, shape index: {2}]
  %8 = xla_tuple %s5, %s6, %s7
  %s9 = sld [smem:[#allocation0]]
  $region69: #{double_conv_forward.4} parent=0
    _
  %s11 = ssub.s32 1, %s9
  %s12 = scalar_select 0, %s11, %s9
  loop: start=0, step=1, limit=4
  $region2: #{double_conv_forward.4} parent=0 // loop_pre_header
    _
  $region3: #{double_conv_forward.4} parent=0 // loop_header
    %s14 = sphi 0, %s18
    %p15 = scmp.ge.s32.totalorder %s14, 4
    %s24 = sphi 0, %s26
    %s27 = sphi 0, %s24
    %s28 = sphi 0, %s27
    %s44 = sphi 0, %s28
    %s48 = sphi 0, %s48
    %s50 = sphi 0, %s48
    %s51 = sphi 0, %s50
    %s65 = sphi 0, %s51
    %s69 = sphi 0, %s69
    %s71 = sphi 0, %s69
    %s72 = sphi 0, %s71
    %s86 = sphi 0, %s72
    %s90 = sphi 0, %s90
    %s92 = sphi 0, %s90
    %s93 = sphi 0, %s92
    %s107 = sphi 0, %s93
    %s111 = sphi 0, %s111
    %s113 = sphi 0, %s111
    %s114 = sphi 0, %s113
    %s128 = sphi 0, %s114
    %s134 = sphi 0, %s136
    %s137 = sphi 0, %s134
    %s138 = sphi 0, %s137
    %s154 = sphi 0, %s138
    %s160 = sphi 0, %s162
    %s163 = sphi 0, %s160
    %s164 = sphi 0, %s163
    %s180 = sphi 0, %s164
    %s186 = sphi 0, %s188
    %s189 = sphi 0, %s186
    %s190 = sphi 0, %s189
    %s206 = sphi 0, %s190
  $region4: #{double_conv_forward.4} parent=0 // loop_header_branch
    %17 = sbr.rel (%p15) target = $region8
  $region5: #{double_conv_forward.4} parent=0 // loop_body
    %s19 = ssub.s32 %s14, 1
    %s20 = ssub.s32 %s14, 2
    %s21 = sadd.s32 %s14, 1
    %s22 = ssub.s32 %s14, %s21
    %p23 = scmp.eq.s32.totalorder %s22, 0
    %s25 = sadd.s32 %s24, 1
    %s26 = scalar_select %p23, %s24, %s25
    %p29 = pneg %p23
    %p30 = scmp.eq.s32.totalorder %s14, 1
    %p31 = por %p29, %p30
    %p32 = scmp.ne.s32.totalorder %s24, %s27
    %p33 = scmp.eq.s32.totalorder %s14, 0
    %p34 = por %p32, %p33
    %p35 = scmp.ne.s32.totalorder %s24, %s27
    %p36 = scmp.eq.s32.totalorder %s19, 1
    %p37 = por %p35, %p36
    %p38 = scmp.ne.s32.totalorder %s27, %s28
    %p39 = scmp.eq.s32.totalorder %s19, 0
    %p40 = por %p38, %p39
    %p41 = scmp.ne.s32.totalorder %s27, %s28
    %p42 = scmp.eq.s32.totalorder %s20, 1
    %p43 = por %p41, %p42
    %p45 = scmp.ne.s32.totalorder %s28, %s44
    %p46 = scmp.eq.s32.totalorder %s20, 0
    %p47 = por %p45, %p46
    %s49 = sadd.s32 %s48, 1
    %p52 = scmp.eq.s32.totalorder %s14, 1
    %p53 = scmp.ne.s32.totalorder %s48, %s50
    %p54 = scmp.eq.s32.totalorder %s14, 0
    %p55 = por %p53, %p54
    %p56 = scmp.ne.s32.totalorder %s48, %s50
    %p57 = scmp.eq.s32.totalorder %s19, 1
    %p58 = por %p56, %p57
    %p59 = scmp.ne.s32.totalorder %s50, %s51
    %p60 = scmp.eq.s32.totalorder %s19, 0
    %p61 = por %p59, %p60
    %p62 = scmp.ne.s32.totalorder %s50, %s51
    %p63 = scmp.eq.s32.totalorder %s20, 1
    %p64 = por %p62, %p63
    %p66 = scmp.ne.s32.totalorder %s51, %s65
    %p67 = scmp.eq.s32.totalorder %s20, 0
    %p68 = por %p66, %p67
    %s70 = sadd.s32 %s69, 1
    %p73 = scmp.eq.s32.totalorder %s14, 1
    %p74 = scmp.ne.s32.totalorder %s69, %s71
    %p75 = scmp.eq.s32.totalorder %s14, 0
    %p76 = por %p74, %p75
    %p77 = scmp.ne.s32.totalorder %s69, %s71
    %p78 = scmp.eq.s32.totalorder %s19, 1
    %p79 = por %p77, %p78
    %p80 = scmp.ne.s32.totalorder %s71, %s72
    %p81 = scmp.eq.s32.totalorder %s19, 0
    %p82 = por %p80, %p81
    %p83 = scmp.ne.s32.totalorder %s71, %s72
    %p84 = scmp.eq.s32.totalorder %s20, 1
    %p85 = por %p83, %p84
    %p87 = scmp.ne.s32.totalorder %s72, %s86
    %p88 = scmp.eq.s32.totalorder %s20, 0
    %p89 = por %p87, %p88
    %s91 = sadd.s32 %s90, 1
    %p94 = scmp.eq.s32.totalorder %s14, 1
    %p95 = scmp.ne.s32.totalorder %s90, %s92
    %p96 = scmp.eq.s32.totalorder %s14, 0
    %p97 = por %p95, %p96
    %p98 = scmp.ne.s32.totalorder %s90, %s92
    %p99 = scmp.eq.s32.totalorder %s19, 1
    %p100 = por %p98, %p99
    %p101 = scmp.ne.s32.totalorder %s92, %s93
    %p102 = scmp.eq.s32.totalorder %s19, 0
    %p103 = por %p101, %p102
    %p104 = scmp.ne.s32.totalorder %s92, %s93
    %p105 = scmp.eq.s32.totalorder %s20, 1
    %p106 = por %p104, %p105
    %p108 = scmp.ne.s32.totalorder %s93, %s107
    %p109 = scmp.eq.s32.totalorder %s20, 0
    %p110 = por %p108, %p109
    %s112 = sadd.s32 %s111, 1
    %p115 = scmp.eq.s32.totalorder %s14, 1
    %p116 = scmp.ne.s32.totalorder %s111, %s113
    %p117 = scmp.eq.s32.totalorder %s14, 0
    %p118 = por %p116, %p117
    %p119 = scmp.ne.s32.totalorder %s111, %s113
    %p120 = scmp.eq.s32.totalorder %s19, 1
    %p121 = por %p119, %p120
    %p122 = scmp.ne.s32.totalorder %s113, %s114
    %p123 = scmp.eq.s32.totalorder %s19, 0
    %p124 = por %p122, %p123
    %p125 = scmp.ne.s32.totalorder %s113, %s114
    %p126 = scmp.eq.s32.totalorder %s20, 1
    %p127 = por %p125, %p126
    %p129 = scmp.ne.s32.totalorder %s114, %s128
    %p130 = scmp.eq.s32.totalorder %s20, 0
    %p131 = por %p129, %p130
    %s132 = ssub.s32 %s14, %s21
    %p133 = scmp.eq.s32.totalorder %s132, 0
    %s135 = sadd.s32 %s134, 1
    %s136 = scalar_select %p133, %s134, %s135
    %p139 = pneg %p133
    %p140 = scmp.eq.s32.totalorder %s14, 1
    %p141 = por %p139, %p140
    %p142 = scmp.ne.s32.totalorder %s134, %s137
    %p143 = scmp.eq.s32.totalorder %s14, 0
    %p144 = por %p142, %p143
    %p145 = scmp.ne.s32.totalorder %s134, %s137
    %p146 = scmp.eq.s32.totalorder %s19, 1
    %p147 = por %p145, %p146
    %p148 = scmp.ne.s32.totalorder %s137, %s138
    %p149 = scmp.eq.s32.totalorder %s19, 0
    %p150 = por %p148, %p149
    %p151 = scmp.ne.s32.totalorder %s137, %s138
    %p152 = scmp.eq.s32.totalorder %s20, 1
    %p153 = por %p151, %p152
    %p155 = scmp.ne.s32.totalorder %s138, %s154
    %p156 = scmp.eq.s32.totalorder %s20, 0
    %p157 = por %p155, %p156
    %s158 = ssub.s32 %s14, %s21
    %p159 = scmp.eq.s32.totalorder %s158, 0
    %s161 = sadd.s32 %s160, 1
    %s162 = scalar_select %p159, %s160, %s161
    %p165 = pneg %p159
    %p166 = scmp.eq.s32.totalorder %s14, 1
    %p167 = por %p165, %p166
    %p168 = scmp.ne.s32.totalorder %s160, %s163
    %p169 = scmp.eq.s32.totalorder %s14, 0
    %p170 = por %p168, %p169
    %p171 = scmp.ne.s32.totalorder %s160, %s163
    %p172 = scmp.eq.s32.totalorder %s19, 1
    %p173 = por %p171, %p172
    %p174 = scmp.ne.s32.totalorder %s163, %s164
    %p175 = scmp.eq.s32.totalorder %s19, 0
    %p176 = por %p174, %p175
    %p177 = scmp.ne.s32.totalorder %s163, %s164
    %p178 = scmp.eq.s32.totalorder %s20, 1
    %p179 = por %p177, %p178
    %p181 = scmp.ne.s32.totalorder %s164, %s180
    %p182 = scmp.eq.s32.totalorder %s20, 0
    %p183 = por %p181, %p182
    %s184 = ssub.s32 %s14, %s21
    %p185 = scmp.eq.s32.totalorder %s184, 0
    %s187 = sadd.s32 %s186, 1
    %s188 = scalar_select %p185, %s186, %s187
    %p191 = pneg %p185
    %p192 = scmp.eq.s32.totalorder %s14, 1
    %p193 = por %p191, %p192
    %p194 = scmp.ne.s32.totalorder %s186, %s189
    %p195 = scmp.eq.s32.totalorder %s14, 0
    %p196 = por %p194, %p195
    %p197 = scmp.ne.s32.totalorder %s186, %s189
    %p198 = scmp.eq.s32.totalorder %s19, 1
    %p199 = por %p197, %p198
    %p200 = scmp.ne.s32.totalorder %s189, %s190
    %p201 = scmp.eq.s32.totalorder %s19, 0
    %p202 = por %p200, %p201
    %p203 = scmp.ne.s32.totalorder %s189, %s190
    %p204 = scmp.eq.s32.totalorder %s20, 1
    %p205 = por %p203, %p204
    %p207 = scmp.ne.s32.totalorder %s190, %s206
    %p208 = scmp.eq.s32.totalorder %s20, 0
    %p209 = por %p207, %p208
    %p210 = scmp.le.s32.totalorder 1, %s14
    %p211 = scmp.lt.s32.totalorder %s14, 3
    %p212 = pnand %p210, %p211
    %p213 = pneg %p212
    // Predicated region
    $region9: #{double_conv_forward.4} parent=5 // pred_check
      _
    $region10: #{double_conv_forward.4} parent=5 // pred_check_branch
      %215 = sbr.rel (%p212) target = $region12
    $region11: #{double_conv_forward.4} parent=5 // pred_region
      %s216 = ssub.s32 %s14, 1
      // Predicated region
      $region13: #{double_conv_forward.4} parent=11 // pred_check
        %p217 = pneg %p61
      $region14: #{double_conv_forward.4} parent=11 // pred_check_branch
        %219 = sbr.rel (%p217) target = $region16
      $region15: #{double_conv_forward.4} parent=11 // pred_region
        _
      $region16: #{double_conv_forward.4} parent=11 // pred_fallthru
        _
      // Predicated region
      $region17: #{double_conv_forward.4} parent=11 // pred_check
        %p220 = pneg %p82
      $region18: #{double_conv_forward.4} parent=11 // pred_check_branch
        %222 = sbr.rel (%p220) target = $region20
      $region19: #{double_conv_forward.4} parent=11 // pred_region
        _
      $region20: #{double_conv_forward.4} parent=11 // pred_fallthru
        _
      // Predicated region
      $region21: #{double_conv_forward.4} parent=11 // pred_check
        %p223 = pneg %p103
      $region22: #{double_conv_forward.4} parent=11 // pred_check_branch
        %225 = sbr.rel (%p223) target = $region24
      $region23: #{double_conv_forward.4} parent=11 // pred_region
        _
      $region24: #{double_conv_forward.4} parent=11 // pred_fallthru
        _
      // Predicated region
      $region25: #{double_conv_forward.4} parent=11 // pred_check
        %p226 = pneg %p124
      $region26: #{double_conv_forward.4} parent=11 // pred_check_branch
        %228 = sbr.rel (%p226) target = $region28
      $region27: #{double_conv_forward.4} parent=11 // pred_region
        _
      $region28: #{double_conv_forward.4} parent=11 // pred_fallthru
        _
    $region12: #{double_conv_forward.4} parent=5 // pred_fallthru
      _
    %p229 = scmp.lt.s32.totalorder %s14, 2
    // Predicated region
    $region29: #{double_conv_forward.4} parent=5 // pred_check
      %p230 = pneg %p229
    $region30: #{double_conv_forward.4} parent=5 // pred_check_branch
      %232 = sbr.rel (%p230) target = $region32
    $region31: #{double_conv_forward.4} parent=5 // pred_region
      // Predicated region
      $region33: #{double_conv_forward.4} parent=31 // pred_check
        %p233 = pneg %p34
      $region34: #{double_conv_forward.4} parent=31 // pred_check_branch
        %235 = sbr.rel (%p233) target = $region36
      $region35: #{double_conv_forward.4} parent=31 // pred_region
        %p236 = scmp.lt.s32.totalorder %s14, 1
        %s237 = scalar_select %p236, %s14, 1
        %s238 = smul.addr %s237, 4
        %s239 = smul.addr %s238, 2
        %s240 = scalar_lea.vmem %s0, %s239
      $region36: #{double_conv_forward.4} parent=31 // pred_fallthru
        _
    $region32: #{double_conv_forward.4} parent=5 // pred_fallthru
      _
    %p241 = scmp.le.s32.totalorder 1, %s14
    %p242 = scmp.lt.s32.totalorder %s14, 3
    %p243 = pnand %p241, %p242
    %p244 = pneg %p243
    // Predicated region
    $region37: #{double_conv_forward.4} parent=5 // pred_check
      _
    $region38: #{double_conv_forward.4} parent=5 // pred_check_branch
      %246 = sbr.rel (%p243) target = $region40
    $region39: #{double_conv_forward.4} parent=5 // pred_region
      %s247 = ssub.s32 %s14, 1
      %p248 = scmp.lt.s32.totalorder %s19, 1
      %s249 = scalar_select %p248, %s19, 1
      %s250 = smul.addr %s249, 4
      %s251 = smul.addr %s250, 2
      %s252 = scalar_lea.vmem %s0, %s251
      %p253 = pneg %p40
      %p254 = pneg %p37
      %p255 = pneg %p61
      %p256 = pneg %p58
      %p257 = pneg %p82
      %p258 = pneg %p79
      %p259 = pneg %p103
      %p260 = pneg %p100
      %p261 = pneg %p124
      %p262 = pneg %p121
      %p263 = pneg %p150
      %p264 = pneg %p147
      %p265 = scmp.lt.s32.totalorder %s19, 1
      %s266 = scalar_select %p265, %s19, 1
      %s267 = smul.addr %s266, 4
      %s268 = smul.addr %s267, 4
      %s269 = scalar_lea.vmem %s5, %s268
      %p270 = pneg %p176
      %p271 = pneg %p173
      %p272 = scmp.lt.s32.totalorder %s19, 1
      %s273 = scalar_select %p272, %s19, 1
      %s274 = smul.addr %s273, 8
      %s275 = scalar_lea.vmem %s6, %s274
      %p276 = pneg %p202
      %p277 = pneg %p199
      %p278 = scmp.lt.s32.totalorder %s19, 1
      %s279 = scalar_select %p278, %s19, 1
      %s280 = smul.addr %s279, 8
      %s281 = scalar_lea.vmem %s7, %s280
      %p282 = scmp.lt.s32.totalorder %s19, 1
      %s283 = scalar_select %p282, %s19, 1
      %s284 = smul.addr %s283, 4
      %s285 = smul.addr %s284, 2
      %s286 = scalar_lea.vmem %s0, %s285
      %p287 = scmp.lt.s32.totalorder %s19, 1
      %s288 = scalar_select %p287, %s19, 1
      %s289 = smul.addr %s288, 4
      %s290 = smul.addr %s289, 4
      %s291 = scalar_lea.vmem %s5, %s290
      %p292 = scmp.lt.s32.totalorder %s19, 1
      %s293 = scalar_select %p292, %s19, 1
      %s294 = smul.addr %s293, 8
      %s295 = scalar_lea.vmem %s6, %s294
      %p296 = scmp.lt.s32.totalorder %s19, 1
      %s297 = scalar_select %p296, %s19, 1
      %s298 = smul.addr %s297, 8
      %s299 = scalar_lea.vmem %s7, %s298
      %v301 = vld [vmem:[%s286] sm:$0xff]
      %v302 = vunpack.c.l.bf16 %v301
      %v303 = vunpack.c.h.bf16 %v301
      %v304 = vld [vmem:[%s3] sm:$0xf]
      %306 = vset.pattern.permute.xlu0 0
      %307 = vperm.xlu0 %306, %v304
      %v308 = vpop.permute.xlu0 %307
      %v310 = vunpack.c.l.s4 839922192
      %v311 = vunpack.c.0.s8 %v310
      %v312 = vlaneseq
      %v313 = vshrl.u32 %v312, 7
      %v314 = vsub.s32 %v311, %v313
      %v315 = vrot.slane %v308, %v314
      %v317 = vmul.f32 %v302, %v315
      %v318 = vmul.f32 %v303, %v315
      %v319 = vld [vmem:[%s4] sm:$0xf]
      %321 = vset.pattern.permute.xlu0 0
      %322 = vperm.xlu0 %321, %v319
      %v323 = vpop.permute.xlu0 %322
      %v325 = vunpack.c.l.s4 839922192
      %v326 = vunpack.c.0.s8 %v325
      %v327 = vlaneseq
      %v328 = vshrl.u32 %v327, 7
      %v329 = vsub.s32 %v326, %v328
      %v330 = vrot.slane %v323, %v329
      %v332 = vadd.f32 %v317, %v330
      %v333 = vadd.f32 %v318, %v330
      %v334 = vmax.f32 %v332, 0.0
      %v335 = vmax.f32 %v333, 0.0
      %v336 = vld [vmem:[%s2] ss:$4 sm:$0xf]
      %s337 = scalar_lea.vmem %s2, 1
      %v338 = vld [vmem:[%s337] ss:$4 sm:$0xf]
      %s339 = scalar_lea.vmem %s2, 2
      %v340 = vld [vmem:[%s339] ss:$4 sm:$0xf]
      %vm341 = vcmp.ge.s32.totalorder %v336, 1
      %vm342 = vcmp.lt.s32.totalorder %v336, 7
      %vm343 = vcmp.ge.s32.totalorder %v338, 1
      %vm344 = vcmp.lt.s32.totalorder %v338, 7
      %vm345 = vcmp.ge.s32.totalorder %v340, 1
      %vm346 = vcmp.lt.s32.totalorder %v340, 7
      %v347 = vld [vmem:[%s1] sm:$0xf]
      %v350 = vcombine.high %v334, %v334
      %v351 = vcombine.high %v335, %v335
      %354 = vrot.lane.b32.xlu0 %v334, 73
      %v355 = vpop.permute.xlu0 %354
      %356 = vrot.lane.b32.xlu0 %v350, 73
      %v357 = vpop.permute.xlu0 %356
      %358 = vrot.lane.b32.xlu0 %v335, 73
      %v359 = vpop.permute.xlu0 %358
      %360 = vrot.lane.b32.xlu0 %v351, 73
      %v361 = vpop.permute.xlu0 %360
      %v362 = vlaneseq
      %v363 = vand.u32 %v362, 127
      %vm364 = vcmp.lt.s32.totalorder %v363, 73
      %v365 = vsel %vm364, %v359, %v361
      %v366 = vsel %vm364, %v357, %v359
      %v367 = vsel %vm364, %v355, %v357
      %v368 = vsel %vm364, %v361, %v355
      %vm369 = vmand %vm341, %vm343
      %vm370 = vmand %vm369, %vm345
      %v371 = vsel %vm370, 1, 0
      %v372 = vcvt.s32.f32 %v371
      %v374 = vlaneseq
      %v375 = vshrl.u32 %v374, 7
      %v376 = vsub.s32 0, %v375
      %v377 = vrot.slane %v372, %v376
      %v378 = vlaneseq
      %v379 = vshrl.u32 %v378, 7
      %v380 = vsub.s32 1, %v379
      %v381 = vrot.slane %v372, %v380
      %v382 = vlaneseq
      %v383 = vshrl.u32 %v382, 7
      %v384 = vsub.s32 2, %v383
      %v385 = vrot.slane %v372, %v384
      %v386 = vlaneseq
      %v387 = vshrl.u32 %v386, 7
      %v388 = vsub.s32 3, %v387
      %v389 = vrot.slane %v372, %v388
      %v394 = vmul.f32 %v368, %v377
      %v395 = vmul.f32 %v367, %v381
      %v396 = vmul.f32 %v366, %v385
      %v397 = vmul.f32 %v365, %v389
      %v398 = vpack.c.bf16 %v394, %v394
      %v399 = vpack.c.bf16 %v395, %v395
      %v400 = vpack.c.bf16 %v396, %v396
      %v401 = vpack.c.bf16 %v397, %v397
      %s402 = scalar_lea.vmem %s1, 4
      %v403 = vld [vmem:[%s402] sm:$0xf]
      %404 = vrot.lane.b32.xlu0 %v334, 72
      %v405 = vpop.permute.xlu0 %404
      %406 = vrot.lane.b32.xlu0 %v350, 72
      %v407 = vpop.permute.xlu0 %406
      %408 = vrot.lane.b32.xlu0 %v335, 72
      %v409 = vpop.permute.xlu0 %408
      %410 = vrot.lane.b32.xlu0 %v351, 72
      %v411 = vpop.permute.xlu0 %410
      %vm412 = vcmp.lt.s32.totalorder %v363, 72
      %v413 = vsel %vm412, %v409, %v411
      %v414 = vsel %vm412, %v407, %v409
      %v415 = vsel %vm412, %v405, %v407
      %v416 = vsel %vm412, %v411, %v405
      %v417 = vsel %vm369, 1, 0
      %v418 = vcvt.s32.f32 %v417
      %v420 = vlaneseq
      %v421 = vshrl.u32 %v420, 7
      %v422 = vsub.s32 0, %v421
      %v423 = vrot.slane %v418, %v422
      %v424 = vlaneseq
      %v425 = vshrl.u32 %v424, 7
      %v426 = vsub.s32 1, %v425
      %v427 = vrot.slane %v418, %v426
      %v428 = vlaneseq
      %v429 = vshrl.u32 %v428, 7
      %v430 = vsub.s32 2, %v429
      %v431 = vrot.slane %v418, %v430
      %v432 = vlaneseq
      %v433 = vshrl.u32 %v432, 7
      %v434 = vsub.s32 3, %v433
      %v435 = vrot.slane %v418, %v434
      %v440 = vmul.f32 %v416, %v423
      %v441 = vmul.f32 %v415, %v427
      %v442 = vmul.f32 %v414, %v431
      %v443 = vmul.f32 %v413, %v435
      %v444 = vpack.c.bf16 %v440, %v440
      %v445 = vpack.c.bf16 %v441, %v441
      %v446 = vpack.c.bf16 %v442, %v442
      %v447 = vpack.c.bf16 %v443, %v443
      %vm448 = vcmask 31744
      %v450 = vsel %vm448, %v403, 0
      %vm452 = vcmask 1041408
      %v454 = vsel %vm452, %v444, 0
      %v457 = vsel %vm452, %v445, 0
      %v460 = vsel %vm452, %v446, 0
      %v463 = vsel %vm452, %v447, 0
      %465 = vmatprep.subr.bf16.mxu0 0
      %466 = vmatpush1.bf16.msra.mxu0 0
      %467 = vmatprep.subr.bf16.mxu0 0
      %468 = vmatpush1.bf16.msra.mxu0 0
      %469 = vmatprep.subr.bf16.mxu0 0
      %470 = vmatpush1.bf16.msra.mxu0 0
      %471 = vmatprep.subr.bf16.mxu0 0
      %472 = vmatpush1.bf16.msra.mxu0 0
      %473 = vmatprep.subr.bf16.mxu0 0
      %474 = vmatpush1.bf16.msra.mxu0 0
      %475 = vmatprep.subr.bf16.mxu0 0
      %476 = vmatpush1.bf16.msra.mxu0 0
      %477 = vmatprep.subr.bf16.mxu0 0
      %478 = vmatpush1.bf16.msra.mxu0 0
      %479 = vmatprep.subr.bf16.mxu0 %v457
      %480 = vmatpush1.bf16.msra.mxu0 %v454
      %481 = vmatprep.subr.bf16.mxu0 0
      %482 = vmatpush2.bf16.msra.mxu0 0
      %483 = vmatprep.subr.bf16.mxu0 0
      %484 = vmatpush2.bf16.msra.mxu0 0
      %485 = vmatprep.subr.bf16.mxu0 0
      %486 = vmatpush2.bf16.msra.mxu0 0
      %487 = vmatprep.subr.bf16.mxu0 0
      %488 = vmatpush2.bf16.msra.mxu0 0
      %489 = vmatprep.subr.bf16.mxu0 0
      %490 = vmatpush2.bf16.msra.mxu0 0
      %491 = vmatprep.subr.bf16.mxu0 0
      %492 = vmatpush2.bf16.msra.mxu0 0
      %493 = vmatprep.subr.bf16.mxu0 0
      %494 = vmatpush2.bf16.msra.mxu0 0
      %495 = vmatprep.subr.bf16.mxu0 0
      %496 = vmatpush2.bf16.msra.mxu0 0
      %497 = vmatprep.mubr.bf16.mxu0 0
      %498 = vmatmul.mubr.bf16.gmra.mxu0 %v450
      %v499 = vpop.f32.mrf.mxu0
      %v500 = vadd.f32 0.0, %v499
      %v501 = vpop.f32.mrf.mxu0
      %v502 = vadd.f32 0.0, %v501
      %v503 = vpop.f32.mrf.mxu0
      %v504 = vpop.f32.mrf.mxu0
      %505 = vdwg.mxu0
      %506 = vmatprep.subr.bf16.mxu0 0
      %507 = vmatpush1.bf16.msra.mxu0 0
      %508 = vmatprep.subr.bf16.mxu0 0
      %509 = vmatpush1.bf16.msra.mxu0 0
      %510 = vmatprep.subr.bf16.mxu0 0
      %511 = vmatpush1.bf16.msra.mxu0 0
      %512 = vmatprep.subr.bf16.mxu0 0
      %513 = vmatpush1.bf16.msra.mxu0 0
      %514 = vmatprep.subr.bf16.mxu0 0
      %515 = vmatpush1.bf16.msra.mxu0 0
      %516 = vmatprep.subr.bf16.mxu0 0
      %517 = vmatpush1.bf16.msra.mxu0 0
      %518 = vmatprep.subr.bf16.mxu0 0
      %519 = vmatpush1.bf16.msra.mxu0 0
      %520 = vmatprep.subr.bf16.mxu0 %v463
      %521 = vmatpush1.bf16.msra.mxu0 %v460
      %522 = vmatprep.subr.bf16.mxu0 0
      %523 = vmatpush2.bf16.msra.mxu0 0
      %524 = vmatprep.subr.bf16.mxu0 0
      %525 = vmatpush2.bf16.msra.mxu0 0
      %526 = vmatprep.subr.bf16.mxu0 0
      %527 = vmatpush2.bf16.msra.mxu0 0
      %528 = vmatprep.subr.bf16.mxu0 0
      %529 = vmatpush2.bf16.msra.mxu0 0
      %530 = vmatprep.subr.bf16.mxu0 0
      %531 = vmatpush2.bf16.msra.mxu0 0
      %532 = vmatprep.subr.bf16.mxu0 0
      %533 = vmatpush2.bf16.msra.mxu0 0
      %534 = vmatprep.subr.bf16.mxu0 0
      %535 = vmatpush2.bf16.msra.mxu0 0
      %536 = vmatprep.subr.bf16.mxu0 0
      %537 = vmatpush2.bf16.msra.mxu0 0
      %538 = vmatprep.mubr.bf16.mxu0 0
      %539 = vmatmul.mubr.bf16.gmra.mxu0 %v450
      %v540 = vpop.f32.mrf.mxu0
      %v541 = vadd.f32 0.0, %v540
      %v542 = vpop.f32.mrf.mxu0
      %v543 = vadd.f32 0.0, %v542
      %v544 = vpop.f32.mrf.mxu0
      %v545 = vpop.f32.mrf.mxu0
      %546 = vdwg.mxu0
      %v548 = vsel %vm448, %v347, 0
      %v551 = vsel %vm452, %v398, 0
      %v554 = vsel %vm452, %v399, 0
      %v557 = vsel %vm452, %v400, 0
      %v560 = vsel %vm452, %v401, 0
      %562 = vmatprep.subr.bf16.mxu0 0
      %563 = vmatpush1.bf16.msra.mxu0 0
      %564 = vmatprep.subr.bf16.mxu0 0
      %565 = vmatpush1.bf16.msra.mxu0 0
      %566 = vmatprep.subr.bf16.mxu0 0
      %567 = vmatpush1.bf16.msra.mxu0 0
      %568 = vmatprep.subr.bf16.mxu0 0
      %569 = vmatpush1.bf16.msra.mxu0 0
      %570 = vmatprep.subr.bf16.mxu0 0
      %571 = vmatpush1.bf16.msra.mxu0 0
      %572 = vmatprep.subr.bf16.mxu0 0
      %573 = vmatpush1.bf16.msra.mxu0 0
      %574 = vmatprep.subr.bf16.mxu0 0
      %575 = vmatpush1.bf16.msra.mxu0 0
      %576 = vmatprep.subr.bf16.mxu0 %v554
      %577 = vmatpush1.bf16.msra.mxu0 %v551
      %578 = vmatprep.subr.bf16.mxu0 0
      %579 = vmatpush2.bf16.msra.mxu0 0
      %580 = vmatprep.subr.bf16.mxu0 0
      %581 = vmatpush2.bf16.msra.mxu0 0
      %582 = vmatprep.subr.bf16.mxu0 0
      %583 = vmatpush2.bf16.msra.mxu0 0
      %584 = vmatprep.subr.bf16.mxu0 0
      %585 = vmatpush2.bf16.msra.mxu0 0
      %586 = vmatprep.subr.bf16.mxu0 0
      %587 = vmatpush2.bf16.msra.mxu0 0
      %588 = vmatprep.subr.bf16.mxu0 0
      %589 = vmatpush2.bf16.msra.mxu0 0
      %590 = vmatprep.subr.bf16.mxu0 0
      %591 = vmatpush2.bf16.msra.mxu0 0
      %592 = vmatprep.subr.bf16.mxu0 0
      %593 = vmatpush2.bf16.msra.mxu0 0
      %594 = vmatprep.mubr.bf16.mxu0 0
      %595 = vmatmul.mubr.bf16.gmra.mxu0 %v548
      %v596 = vpop.f32.mrf.mxu0
      %v597 = vadd.f32 %v500, %v596
      %v598 = vpop.f32.mrf.mxu0
      %v599 = vadd.f32 %v502, %v598
      %v600 = vpop.f32.mrf.mxu0
      %v601 = vpop.f32.mrf.mxu0
      %602 = vdwg.mxu0
      %603 = vmatprep.subr.bf16.mxu0 0
      %604 = vmatpush1.bf16.msra.mxu0 0
      %605 = vmatprep.subr.bf16.mxu0 0
      %606 = vmatpush1.bf16.msra.mxu0 0
      %607 = vmatprep.subr.bf16.mxu0 0
      %608 = vmatpush1.bf16.msra.mxu0 0
      %609 = vmatprep.subr.bf16.mxu0 0
      %610 = vmatpush1.bf16.msra.mxu0 0
      %611 = vmatprep.subr.bf16.mxu0 0
      %612 = vmatpush1.bf16.msra.mxu0 0
      %613 = vmatprep.subr.bf16.mxu0 0
      %614 = vmatpush1.bf16.msra.mxu0 0
      %615 = vmatprep.subr.bf16.mxu0 0
      %616 = vmatpush1.bf16.msra.mxu0 0
      %617 = vmatprep.subr.bf16.mxu0 %v560
      %618 = vmatpush1.bf16.msra.mxu0 %v557
      %619 = vmatprep.subr.bf16.mxu0 0
      %620 = vmatpush2.bf16.msra.mxu0 0
      %621 = vmatprep.subr.bf16.mxu0 0
      %622 = vmatpush2.bf16.msra.mxu0 0
      %623 = vmatprep.subr.bf16.mxu0 0
      %624 = vmatpush2.bf16.msra.mxu0 0
      %625 = vmatprep.subr.bf16.mxu0 0
      %626 = vmatpush2.bf16.msra.mxu0 0
      %627 = vmatprep.subr.bf16.mxu0 0
      %628 = vmatpush2.bf16.msra.mxu0 0
      %629 = vmatprep.subr.bf16.mxu0 0
      %630 = vmatpush2.bf16.msra.mxu0 0
      %631 = vmatprep.subr.bf16.mxu0 0
      %632 = vmatpush2.bf16.msra.mxu0 0
      %633 = vmatprep.subr.bf16.mxu0 0
      %634 = vmatpush2.bf16.msra.mxu0 0
      %635 = vmatprep.mubr.bf16.mxu0 0
      %636 = vmatmul.mubr.bf16.gmra.mxu0 %v548
      %v637 = vpop.f32.mrf.mxu0
      %v638 = vadd.f32 %v541, %v637
      %v639 = vpop.f32.mrf.mxu0
      %v640 = vadd.f32 %v543, %v639
      %v641 = vpop.f32.mrf.mxu0
      %v642 = vpop.f32.mrf.mxu0
      %643 = vdwg.mxu0
      %s644 = scalar_lea.vmem %s1, 8
      %v645 = vld [vmem:[%s644] sm:$0xf]
      %646 = vrot.lane.b32.xlu0 %v334, 71
      %v647 = vpop.permute.xlu0 %646
      %648 = vrot.lane.b32.xlu0 %v350, 71
      %v649 = vpop.permute.xlu0 %648
      %650 = vrot.lane.b32.xlu0 %v335, 71
      %v651 = vpop.permute.xlu0 %650
      %652 = vrot.lane.b32.xlu0 %v351, 71
      %v653 = vpop.permute.xlu0 %652
      %vm654 = vcmp.lt.s32.totalorder %v363, 71
      %v655 = vsel %vm654, %v651, %v653
      %v656 = vsel %vm654, %v649, %v651
      %v657 = vsel %vm654, %v647, %v649
      %v658 = vsel %vm654, %v653, %v647
      %vm659 = vmand %vm369, %vm346
      %v660 = vsel %vm659, 1, 0
      %v661 = vcvt.s32.f32 %v660
      %v663 = vlaneseq
      %v664 = vshrl.u32 %v663, 7
      %v665 = vsub.s32 0, %v664
      %v666 = vrot.slane %v661, %v665
      %v667 = vlaneseq
      %v668 = vshrl.u32 %v667, 7
      %v669 = vsub.s32 1, %v668
      %v670 = vrot.slane %v661, %v669
      %v671 = vlaneseq
      %v672 = vshrl.u32 %v671, 7
      %v673 = vsub.s32 2, %v672
      %v674 = vrot.slane %v661, %v673
      %v675 = vlaneseq
      %v676 = vshrl.u32 %v675, 7
      %v677 = vsub.s32 3, %v676
      %v678 = vrot.slane %v661, %v677
      %v683 = vmul.f32 %v658, %v666
      %v684 = vmul.f32 %v657, %v670
      %v685 = vmul.f32 %v656, %v674
      %v686 = vmul.f32 %v655, %v678
      %v687 = vpack.c.bf16 %v683, %v683
      %v688 = vpack.c.bf16 %v684, %v684
      %v689 = vpack.c.bf16 %v685, %v685
      %v690 = vpack.c.bf16 %v686, %v686
      %v692 = vsel %vm448, %v645, 0
      %v695 = vsel %vm452, %v687, 0
      %v698 = vsel %vm452, %v688, 0
      %v701 = vsel %vm452, %v689, 0
      %v704 = vsel %vm452, %v690, 0
      %706 = vmatprep.subr.bf16.mxu0 0
      %707 = vmatpush1.bf16.msra.mxu0 0
      %708 = vmatprep.subr.bf16.mxu0 0
      %709 = vmatpush1.bf16.msra.mxu0 0
      %710 = vmatprep.subr.bf16.mxu0 0
      %711 = vmatpush1.bf16.msra.mxu0 0
      %712 = vmatprep.subr.bf16.mxu0 0
      %713 = vmatpush1.bf16.msra.mxu0 0
      %714 = vmatprep.subr.bf16.mxu0 0
      %715 = vmatpush1.bf16.msra.mxu0 0
      %716 = vmatprep.subr.bf16.mxu0 0
      %717 = vmatpush1.bf16.msra.mxu0 0
      %718 = vmatprep.subr.bf16.mxu0 0
      %719 = vmatpush1.bf16.msra.mxu0 0
      %720 = vmatprep.subr.bf16.mxu0 %v698
      %721 = vmatpush1.bf16.msra.mxu0 %v695
      %722 = vmatprep.subr.bf16.mxu0 0
      %723 = vmatpush2.bf16.msra.mxu0 0
      %724 = vmatprep.subr.bf16.mxu0 0
      %725 = vmatpush2.bf16.msra.mxu0 0
      %726 = vmatprep.subr.bf16.mxu0 0
      %727 = vmatpush2.bf16.msra.mxu0 0
      %728 = vmatprep.subr.bf16.mxu0 0
      %729 = vmatpush2.bf16.msra.mxu0 0
      %730 = vmatprep.subr.bf16.mxu0 0
      %731 = vmatpush2.bf16.msra.mxu0 0
      %732 = vmatprep.subr.bf16.mxu0 0
      %733 = vmatpush2.bf16.msra.mxu0 0
      %734 = vmatprep.subr.bf16.mxu0 0
      %735 = vmatpush2.bf16.msra.mxu0 0
      %736 = vmatprep.subr.bf16.mxu0 0
      %737 = vmatpush2.bf16.msra.mxu0 0
      %738 = vmatprep.mubr.bf16.mxu0 0
      %739 = vmatmul.mubr.bf16.gmra.mxu0 %v692
      %v740 = vpop.f32.mrf.mxu0
      %v741 = vadd.f32 0.0, %v740
      %v742 = vpop.f32.mrf.mxu0
      %v743 = vadd.f32 0.0, %v742
      %v744 = vpop.f32.mrf.mxu0
      %v745 = vpop.f32.mrf.mxu0
      %746 = vdwg.mxu0
      %747 = vmatprep.subr.bf16.mxu0 0
      %748 = vmatpush1.bf16.msra.mxu0 0
      %749 = vmatprep.subr.bf16.mxu0 0
      %750 = vmatpush1.bf16.msra.mxu0 0
      %751 = vmatprep.subr.bf16.mxu0 0
      %752 = vmatpush1.bf16.msra.mxu0 0
      %753 = vmatprep.subr.bf16.mxu0 0
      %754 = vmatpush1.bf16.msra.mxu0 0
      %755 = vmatprep.subr.bf16.mxu0 0
      %756 = vmatpush1.bf16.msra.mxu0 0
      %757 = vmatprep.subr.bf16.mxu0 0
      %758 = vmatpush1.bf16.msra.mxu0 0
      %759 = vmatprep.subr.bf16.mxu0 0
      %760 = vmatpush1.bf16.msra.mxu0 0
      %761 = vmatprep.subr.bf16.mxu0 %v704
      %762 = vmatpush1.bf16.msra.mxu0 %v701
      %763 = vmatprep.subr.bf16.mxu0 0
      %764 = vmatpush2.bf16.msra.mxu0 0
      %765 = vmatprep.subr.bf16.mxu0 0
      %766 = vmatpush2.bf16.msra.mxu0 0
      %767 = vmatprep.subr.bf16.mxu0 0
      %768 = vmatpush2.bf16.msra.mxu0 0
      %769 = vmatprep.subr.bf16.mxu0 0
      %770 = vmatpush2.bf16.msra.mxu0 0
      %771 = vmatprep.subr.bf16.mxu0 0
      %772 = vmatpush2.bf16.msra.mxu0 0
      %773 = vmatprep.subr.bf16.mxu0 0
      %774 = vmatpush2.bf16.msra.mxu0 0
      %775 = vmatprep.subr.bf16.mxu0 0
      %776 = vmatpush2.bf16.msra.mxu0 0
      %777 = vmatprep.subr.bf16.mxu0 0
      %778 = vmatpush2.bf16.msra.mxu0 0
      %779 = vmatprep.mubr.bf16.mxu0 0
      %780 = vmatmul.mubr.bf16.gmra.mxu0 %v692
      %v781 = vpop.f32.mrf.mxu0
      %v782 = vadd.f32 0.0, %v781
      %v783 = vpop.f32.mrf.mxu0
      %v784 = vadd.f32 0.0, %v783
      %v785 = vpop.f32.mrf.mxu0
      %v786 = vpop.f32.mrf.mxu0
      %787 = vdwg.mxu0
      %v788 = vadd.f32 %v597, %v741
      %v789 = vadd.f32 %v599, %v743
      %v790 = vadd.f32 %v638, %v782
      %v791 = vadd.f32 %v640, %v784
      %s792 = scalar_lea.vmem %s1, 12
      %v793 = vld [vmem:[%s792] sm:$0xf]
      %794 = vrot.lane.b32.xlu0 %v334, 65
      %v795 = vpop.permute.xlu0 %794
      %796 = vrot.lane.b32.xlu0 %v350, 65
      %v797 = vpop.permute.xlu0 %796
      %798 = vrot.lane.b32.xlu0 %v335, 65
      %v799 = vpop.permute.xlu0 %798
      %800 = vrot.lane.b32.xlu0 %v351, 65
      %v801 = vpop.permute.xlu0 %800
      %vm802 = vcmp.lt.s32.totalorder %v363, 65
      %v803 = vsel %vm802, %v799, %v801
      %v804 = vsel %vm802, %v797, %v799
      %v805 = vsel %vm802, %v795, %v797
      %v806 = vsel %vm802, %v801, %v795
      %vm807 = vmand %vm341, %vm345
      %v808 = vsel %vm807, 1, 0
      %v809 = vcvt.s32.f32 %v808
      %v811 = vlaneseq
      %v812 = vshrl.u32 %v811, 7
      %v813 = vsub.s32 0, %v812
      %v814 = vrot.slane %v809, %v813
      %v815 = vlaneseq
      %v816 = vshrl.u32 %v815, 7
      %v817 = vsub.s32 1, %v816
      %v818 = vrot.slane %v809, %v817
      %v819 = vlaneseq
      %v820 = vshrl.u32 %v819, 7
      %v821 = vsub.s32 2, %v820
      %v822 = vrot.slane %v809, %v821
      %v823 = vlaneseq
      %v824 = vshrl.u32 %v823, 7
      %v825 = vsub.s32 3, %v824
      %v826 = vrot.slane %v809, %v825
      %v831 = vmul.f32 %v806, %v814
      %v832 = vmul.f32 %v805, %v818
      %v833 = vmul.f32 %v804, %v822
      %v834 = vmul.f32 %v803, %v826
      %v835 = vpack.c.bf16 %v831, %v831
      %v836 = vpack.c.bf16 %v832, %v832
      %v837 = vpack.c.bf16 %v833, %v833
      %v838 = vpack.c.bf16 %v834, %v834
      %v840 = vsel %vm448, %v793, 0
      %v843 = vsel %vm452, %v835, 0
      %v846 = vsel %vm452, %v836, 0
      %v849 = vsel %vm452, %v837, 0
      %v852 = vsel %vm452, %v838, 0
      %854 = vmatprep.subr.bf16.mxu0 0
      %855 = vmatpush1.bf16.msra.mxu0 0
      %856 = vmatprep.subr.bf16.mxu0 0
      %857 = vmatpush1.bf16.msra.mxu0 0
      %858 = vmatprep.subr.bf16.mxu0 0
      %859 = vmatpush1.bf16.msra.mxu0 0
      %860 = vmatprep.subr.bf16.mxu0 0
      %861 = vmatpush1.bf16.msra.mxu0 0
      %862 = vmatprep.subr.bf16.mxu0 0
      %863 = vmatpush1.bf16.msra.mxu0 0
      %864 = vmatprep.subr.bf16.mxu0 0
      %865 = vmatpush1.bf16.msra.mxu0 0
      %866 = vmatprep.subr.bf16.mxu0 0
      %867 = vmatpush1.bf16.msra.mxu0 0
      %868 = vmatprep.subr.bf16.mxu0 %v846
      %869 = vmatpush1.bf16.msra.mxu0 %v843
      %870 = vmatprep.subr.bf16.mxu0 0
      %871 = vmatpush2.bf16.msra.mxu0 0
      %872 = vmatprep.subr.bf16.mxu0 0
      %873 = vmatpush2.bf16.msra.mxu0 0
      %874 = vmatprep.subr.bf16.mxu0 0
      %875 = vmatpush2.bf16.msra.mxu0 0
      %876 = vmatprep.subr.bf16.mxu0 0
      %877 = vmatpush2.bf16.msra.mxu0 0
      %878 = vmatprep.subr.bf16.mxu0 0
      %879 = vmatpush2.bf16.msra.mxu0 0
      %880 = vmatprep.subr.bf16.mxu0 0
      %881 = vmatpush2.bf16.msra.mxu0 0
      %882 = vmatprep.subr.bf16.mxu0 0
      %883 = vmatpush2.bf16.msra.mxu0 0
      %884 = vmatprep.subr.bf16.mxu0 0
      %885 = vmatpush2.bf16.msra.mxu0 0
      %886 = vmatprep.mubr.bf16.mxu0 0
      %887 = vmatmul.mubr.bf16.gmra.mxu0 %v840
      %v888 = vpop.f32.mrf.mxu0
      %v889 = vadd.f32 0.0, %v888
      %v890 = vpop.f32.mrf.mxu0
      %v891 = vadd.f32 0.0, %v890
      %v892 = vpop.f32.mrf.mxu0
      %v893 = vpop.f32.mrf.mxu0
      %894 = vdwg.mxu0
      %895 = vmatprep.subr.bf16.mxu0 0
      %896 = vmatpush1.bf16.msra.mxu0 0
      %897 = vmatprep.subr.bf16.mxu0 0
      %898 = vmatpush1.bf16.msra.mxu0 0
      %899 = vmatprep.subr.bf16.mxu0 0
      %900 = vmatpush1.bf16.msra.mxu0 0
      %901 = vmatprep.subr.bf16.mxu0 0
      %902 = vmatpush1.bf16.msra.mxu0 0
      %903 = vmatprep.subr.bf16.mxu0 0
      %904 = vmatpush1.bf16.msra.mxu0 0
      %905 = vmatprep.subr.bf16.mxu0 0
      %906 = vmatpush1.bf16.msra.mxu0 0
      %907 = vmatprep.subr.bf16.mxu0 0
      %908 = vmatpush1.bf16.msra.mxu0 0
      %909 = vmatprep.subr.bf16.mxu0 %v852
      %910 = vmatpush1.bf16.msra.mxu0 %v849
      %911 = vmatprep.subr.bf16.mxu0 0
      %912 = vmatpush2.bf16.msra.mxu0 0
      %913 = vmatprep.subr.bf16.mxu0 0
      %914 = vmatpush2.bf16.msra.mxu0 0
      %915 = vmatprep.subr.bf16.mxu0 0
      %916 = vmatpush2.bf16.msra.mxu0 0
      %917 = vmatprep.subr.bf16.mxu0 0
      %918 = vmatpush2.bf16.msra.mxu0 0
      %919 = vmatprep.subr.bf16.mxu0 0
      %920 = vmatpush2.bf16.msra.mxu0 0
      %921 = vmatprep.subr.bf16.mxu0 0
      %922 = vmatpush2.bf16.msra.mxu0 0
      %923 = vmatprep.subr.bf16.mxu0 0
      %924 = vmatpush2.bf16.msra.mxu0 0
      %925 = vmatprep.subr.bf16.mxu0 0
      %926 = vmatpush2.bf16.msra.mxu0 0
      %927 = vmatprep.mubr.bf16.mxu0 0
      %928 = vmatmul.mubr.bf16.gmra.mxu0 %v840
      %v929 = vpop.f32.mrf.mxu0
      %v930 = vadd.f32 0.0, %v929
      %v931 = vpop.f32.mrf.mxu0
      %v932 = vadd.f32 0.0, %v931
      %v933 = vpop.f32.mrf.mxu0
      %v934 = vpop.f32.mrf.mxu0
      %935 = vdwg.mxu0
      %v936 = vadd.f32 %v788, %v889
      %v937 = vadd.f32 %v789, %v891
      %v938 = vadd.f32 %v790, %v930
      %v939 = vadd.f32 %v791, %v932
      %s940 = scalar_lea.vmem %s1, 16
      %v941 = vld [vmem:[%s940] sm:$0xf]
      %942 = vrot.lane.b32.xlu0 %v334, 64
      %v943 = vpop.permute.xlu0 %942
      %944 = vrot.lane.b32.xlu0 %v350, 64
      %v945 = vpop.permute.xlu0 %944
      %946 = vrot.lane.b32.xlu0 %v335, 64
      %v947 = vpop.permute.xlu0 %946
      %948 = vrot.lane.b32.xlu0 %v351, 64
      %v949 = vpop.permute.xlu0 %948
      %vm950 = vcmp.lt.s32.totalorder %v363, 64
      %v951 = vsel %vm950, %v947, %v949
      %v952 = vsel %vm950, %v945, %v947
      %v953 = vsel %vm950, %v943, %v945
      %v954 = vsel %vm950, %v949, %v943
      %v955 = vsel %vm341, 1, 0
      %v956 = vcvt.s32.f32 %v955
      %v958 = vlaneseq
      %v959 = vshrl.u32 %v958, 7
      %v960 = vsub.s32 0, %v959
      %v961 = vrot.slane %v956, %v960
      %v962 = vlaneseq
      %v963 = vshrl.u32 %v962, 7
      %v964 = vsub.s32 1, %v963
      %v965 = vrot.slane %v956, %v964
      %v966 = vlaneseq
      %v967 = vshrl.u32 %v966, 7
      %v968 = vsub.s32 2, %v967
      %v969 = vrot.slane %v956, %v968
      %v970 = vlaneseq
      %v971 = vshrl.u32 %v970, 7
      %v972 = vsub.s32 3, %v971
      %v973 = vrot.slane %v956, %v972
      %v978 = vmul.f32 %v954, %v961
      %v979 = vmul.f32 %v953, %v965
      %v980 = vmul.f32 %v952, %v969
      %v981 = vmul.f32 %v951, %v973
      %v982 = vpack.c.bf16 %v978, %v978
      %v983 = vpack.c.bf16 %v979, %v979
      %v984 = vpack.c.bf16 %v980, %v980
      %v985 = vpack.c.bf16 %v981, %v981
      %v987 = vsel %vm448, %v941, 0
      %v990 = vsel %vm452, %v982, 0
      %v993 = vsel %vm452, %v983, 0
      %v996 = vsel %vm452, %v984, 0
      %v999 = vsel %vm452, %v985, 0
      %1001 = vmatprep.subr.bf16.mxu0 0
      %1002 = vmatpush1.bf16.msra.mxu0 0
      %1003 = vmatprep.subr.bf16.mxu0 0
      %1004 = vmatpush1.bf16.msra.mxu0 0
      %1005 = vmatprep.subr.bf16.mxu0 0
      %1006 = vmatpush1.bf16.msra.mxu0 0
      %1007 = vmatprep.subr.bf16.mxu0 0
      %1008 = vmatpush1.bf16.msra.mxu0 0
      %1009 = vmatprep.subr.bf16.mxu0 0
      %1010 = vmatpush1.bf16.msra.mxu0 0
      %1011 = vmatprep.subr.bf16.mxu0 0
      %1012 = vmatpush1.bf16.msra.mxu0 0
      %1013 = vmatprep.subr.bf16.mxu0 0
      %1014 = vmatpush1.bf16.msra.mxu0 0
      %1015 = vmatprep.subr.bf16.mxu0 %v993
      %1016 = vmatpush1.bf16.msra.mxu0 %v990
      %1017 = vmatprep.subr.bf16.mxu0 0
      %1018 = vmatpush2.bf16.msra.mxu0 0
      %1019 = vmatprep.subr.bf16.mxu0 0
      %1020 = vmatpush2.bf16.msra.mxu0 0
      %1021 = vmatprep.subr.bf16.mxu0 0
      %1022 = vmatpush2.bf16.msra.mxu0 0
      %1023 = vmatprep.subr.bf16.mxu0 0
      %1024 = vmatpush2.bf16.msra.mxu0 0
      %1025 = vmatprep.subr.bf16.mxu0 0
      %1026 = vmatpush2.bf16.msra.mxu0 0
      %1027 = vmatprep.subr.bf16.mxu0 0
      %1028 = vmatpush2.bf16.msra.mxu0 0
      %1029 = vmatprep.subr.bf16.mxu0 0
      %1030 = vmatpush2.bf16.msra.mxu0 0
      %1031 = vmatprep.subr.bf16.mxu0 0
      %1032 = vmatpush2.bf16.msra.mxu0 0
      %1033 = vmatprep.mubr.bf16.mxu0 0
      %1034 = vmatmul.mubr.bf16.gmra.mxu0 %v987
      %v1035 = vpop.f32.mrf.mxu0
      %v1036 = vadd.f32 0.0, %v1035
      %v1037 = vpop.f32.mrf.mxu0
      %v1038 = vadd.f32 0.0, %v1037
      %v1039 = vpop.f32.mrf.mxu0
      %v1040 = vpop.f32.mrf.mxu0
      %1041 = vdwg.mxu0
      %1042 = vmatprep.subr.bf16.mxu0 0
      %1043 = vmatpush1.bf16.msra.mxu0 0
      %1044 = vmatprep.subr.bf16.mxu0 0
      %1045 = vmatpush1.bf16.msra.mxu0 0
      %1046 = vmatprep.subr.bf16.mxu0 0
      %1047 = vmatpush1.bf16.msra.mxu0 0
      %1048 = vmatprep.subr.bf16.mxu0 0
      %1049 = vmatpush1.bf16.msra.mxu0 0
      %1050 = vmatprep.subr.bf16.mxu0 0
      %1051 = vmatpush1.bf16.msra.mxu0 0
      %1052 = vmatprep.subr.bf16.mxu0 0
      %1053 = vmatpush1.bf16.msra.mxu0 0
      %1054 = vmatprep.subr.bf16.mxu0 0
      %1055 = vmatpush1.bf16.msra.mxu0 0
      %1056 = vmatprep.subr.bf16.mxu0 %v999
      %1057 = vmatpush1.bf16.msra.mxu0 %v996
      %1058 = vmatprep.subr.bf16.mxu0 0
      %1059 = vmatpush2.bf16.msra.mxu0 0
      %1060 = vmatprep.subr.bf16.mxu0 0
      %1061 = vmatpush2.bf16.msra.mxu0 0
      %1062 = vmatprep.subr.bf16.mxu0 0
      %1063 = vmatpush2.bf16.msra.mxu0 0
      %1064 = vmatprep.subr.bf16.mxu0 0
      %1065 = vmatpush2.bf16.msra.mxu0 0
      %1066 = vmatprep.subr.bf16.mxu0 0
      %1067 = vmatpush2.bf16.msra.mxu0 0
      %1068 = vmatprep.subr.bf16.mxu0 0
      %1069 = vmatpush2.bf16.msra.mxu0 0
      %1070 = vmatprep.subr.bf16.mxu0 0
      %1071 = vmatpush2.bf16.msra.mxu0 0
      %1072 = vmatprep.subr.bf16.mxu0 0
      %1073 = vmatpush2.bf16.msra.mxu0 0
      %1074 = vmatprep.mubr.bf16.mxu0 0
      %1075 = vmatmul.mubr.bf16.gmra.mxu0 %v987
      %v1076 = vpop.f32.mrf.mxu0
      %v1077 = vadd.f32 0.0, %v1076
      %v1078 = vpop.f32.mrf.mxu0
      %v1079 = vadd.f32 0.0, %v1078
      %v1080 = vpop.f32.mrf.mxu0
      %v1081 = vpop.f32.mrf.mxu0
      %1082 = vdwg.mxu0
      %v1083 = vadd.f32 %v936, %v1036
      %v1084 = vadd.f32 %v937, %v1038
      %v1085 = vadd.f32 %v938, %v1077
      %v1086 = vadd.f32 %v939, %v1079
      %s1087 = scalar_lea.vmem %s1, 20
      %v1088 = vld [vmem:[%s1087] sm:$0xf]
      %1089 = vrot.lane.b32.xlu0 %v334, 63
      %v1090 = vpop.permute.xlu0 %1089
      %1091 = vrot.lane.b32.xlu0 %v350, 63
      %v1092 = vpop.permute.xlu0 %1091
      %1093 = vrot.lane.b32.xlu0 %v335, 63
      %v1094 = vpop.permute.xlu0 %1093
      %1095 = vrot.lane.b32.xlu0 %v351, 63
      %v1096 = vpop.permute.xlu0 %1095
      %vm1097 = vcmp.lt.s32.totalorder %v363, 63
      %v1098 = vsel %vm1097, %v1094, %v1096
      %v1099 = vsel %vm1097, %v1092, %v1094
      %v1100 = vsel %vm1097, %v1090, %v1092
      %v1101 = vsel %vm1097, %v1096, %v1090
      %vm1102 = vmand %vm341, %vm346
      %v1103 = vsel %vm1102, 1, 0
      %v1104 = vcvt.s32.f32 %v1103
      %v1106 = vlaneseq
      %v1107 = vshrl.u32 %v1106, 7
      %v1108 = vsub.s32 0, %v1107
      %v1109 = vrot.slane %v1104, %v1108
      %v1110 = vlaneseq
      %v1111 = vshrl.u32 %v1110, 7
      %v1112 = vsub.s32 1, %v1111
      %v1113 = vrot.slane %v1104, %v1112
      %v1114 = vlaneseq
      %v1115 = vshrl.u32 %v1114, 7
      %v1116 = vsub.s32 2, %v1115
      %v1117 = vrot.slane %v1104, %v1116
      %v1118 = vlaneseq
      %v1119 = vshrl.u32 %v1118, 7
      %v1120 = vsub.s32 3, %v1119
      %v1121 = vrot.slane %v1104, %v1120
      %v1126 = vmul.f32 %v1101, %v1109
      %v1127 = vmul.f32 %v1100, %v1113
      %v1128 = vmul.f32 %v1099, %v1117
      %v1129 = vmul.f32 %v1098, %v1121
      %v1130 = vpack.c.bf16 %v1126, %v1126
      %v1131 = vpack.c.bf16 %v1127, %v1127
      %v1132 = vpack.c.bf16 %v1128, %v1128
      %v1133 = vpack.c.bf16 %v1129, %v1129
      %v1135 = vsel %vm448, %v1088, 0
      %v1138 = vsel %vm452, %v1130, 0
      %v1141 = vsel %vm452, %v1131, 0
      %v1144 = vsel %vm452, %v1132, 0
      %v1147 = vsel %vm452, %v1133, 0
      %1149 = vmatprep.subr.bf16.mxu0 0
      %1150 = vmatpush1.bf16.msra.mxu0 0
      %1151 = vmatprep.subr.bf16.mxu0 0
      %1152 = vmatpush1.bf16.msra.mxu0 0
      %1153 = vmatprep.subr.bf16.mxu0 0
      %1154 = vmatpush1.bf16.msra.mxu0 0
      %1155 = vmatprep.subr.bf16.mxu0 0
      %1156 = vmatpush1.bf16.msra.mxu0 0
      %1157 = vmatprep.subr.bf16.mxu0 0
      %1158 = vmatpush1.bf16.msra.mxu0 0
      %1159 = vmatprep.subr.bf16.mxu0 0
      %1160 = vmatpush1.bf16.msra.mxu0 0
      %1161 = vmatprep.subr.bf16.mxu0 0
      %1162 = vmatpush1.bf16.msra.mxu0 0
      %1163 = vmatprep.subr.bf16.mxu0 %v1141
      %1164 = vmatpush1.bf16.msra.mxu0 %v1138
      %1165 = vmatprep.subr.bf16.mxu0 0
      %1166 = vmatpush2.bf16.msra.mxu0 0
      %1167 = vmatprep.subr.bf16.mxu0 0
      %1168 = vmatpush2.bf16.msra.mxu0 0
      %1169 = vmatprep.subr.bf16.mxu0 0
      %1170 = vmatpush2.bf16.msra.mxu0 0
      %1171 = vmatprep.subr.bf16.mxu0 0
      %1172 = vmatpush2.bf16.msra.mxu0 0
      %1173 = vmatprep.subr.bf16.mxu0 0
      %1174 = vmatpush2.bf16.msra.mxu0 0
      %1175 = vmatprep.subr.bf16.mxu0 0
      %1176 = vmatpush2.bf16.msra.mxu0 0
      %1177 = vmatprep.subr.bf16.mxu0 0
      %1178 = vmatpush2.bf16.msra.mxu0 0
      %1179 = vmatprep.subr.bf16.mxu0 0
      %1180 = vmatpush2.bf16.msra.mxu0 0
      %1181 = vmatprep.mubr.bf16.mxu0 0
      %1182 = vmatmul.mubr.bf16.gmra.mxu0 %v1135
      %v1183 = vpop.f32.mrf.mxu0
      %v1184 = vadd.f32 0.0, %v1183
      %v1185 = vpop.f32.mrf.mxu0
      %v1186 = vadd.f32 0.0, %v1185
      %v1187 = vpop.f32.mrf.mxu0
      %v1188 = vpop.f32.mrf.mxu0
      %1189 = vdwg.mxu0
      %1190 = vmatprep.subr.bf16.mxu0 0
      %1191 = vmatpush1.bf16.msra.mxu0 0
      %1192 = vmatprep.subr.bf16.mxu0 0
      %1193 = vmatpush1.bf16.msra.mxu0 0
      %1194 = vmatprep.subr.bf16.mxu0 0
      %1195 = vmatpush1.bf16.msra.mxu0 0
      %1196 = vmatprep.subr.bf16.mxu0 0
      %1197 = vmatpush1.bf16.msra.mxu0 0
      %1198 = vmatprep.subr.bf16.mxu0 0
      %1199 = vmatpush1.bf16.msra.mxu0 0
      %1200 = vmatprep.subr.bf16.mxu0 0
      %1201 = vmatpush1.bf16.msra.mxu0 0
      %1202 = vmatprep.subr.bf16.mxu0 0
      %1203 = vmatpush1.bf16.msra.mxu0 0
      %1204 = vmatprep.subr.bf16.mxu0 %v1147
      %1205 = vmatpush1.bf16.msra.mxu0 %v1144
      %1206 = vmatprep.subr.bf16.mxu0 0
      %1207 = vmatpush2.bf16.msra.mxu0 0
      %1208 = vmatprep.subr.bf16.mxu0 0
      %1209 = vmatpush2.bf16.msra.mxu0 0
      %1210 = vmatprep.subr.bf16.mxu0 0
      %1211 = vmatpush2.bf16.msra.mxu0 0
      %1212 = vmatprep.subr.bf16.mxu0 0
      %1213 = vmatpush2.bf16.msra.mxu0 0
      %1214 = vmatprep.subr.bf16.mxu0 0
      %1215 = vmatpush2.bf16.msra.mxu0 0
      %1216 = vmatprep.subr.bf16.mxu0 0
      %1217 = vmatpush2.bf16.msra.mxu0 0
      %1218 = vmatprep.subr.bf16.mxu0 0
      %1219 = vmatpush2.bf16.msra.mxu0 0
      %1220 = vmatprep.subr.bf16.mxu0 0
      %1221 = vmatpush2.bf16.msra.mxu0 0
      %1222 = vmatprep.mubr.bf16.mxu0 0
      %1223 = vmatmul.mubr.bf16.gmra.mxu0 %v1135
      %v1224 = vpop.f32.mrf.mxu0
      %v1225 = vadd.f32 0.0, %v1224
      %v1226 = vpop.f32.mrf.mxu0
      %v1227 = vadd.f32 0.0, %v1226
      %v1228 = vpop.f32.mrf.mxu0
      %v1229 = vpop.f32.mrf.mxu0
      %1230 = vdwg.mxu0
      %v1231 = vadd.f32 %v1083, %v1184
      %v1232 = vadd.f32 %v1084, %v1186
      %v1233 = vadd.f32 %v1085, %v1225
      %v1234 = vadd.f32 %v1086, %v1227
      %s1235 = scalar_lea.vmem %s1, 24
      %v1236 = vld [vmem:[%s1235] sm:$0xf]
      %1237 = vrot.lane.b32.xlu0 %v334, 57
      %v1238 = vpop.permute.xlu0 %1237
      %1239 = vrot.lane.b32.xlu0 %v350, 57
      %v1240 = vpop.permute.xlu0 %1239
      %1241 = vrot.lane.b32.xlu0 %v335, 57
      %v1242 = vpop.permute.xlu0 %1241
      %1243 = vrot.lane.b32.xlu0 %v351, 57
      %v1244 = vpop.permute.xlu0 %1243
      %vm1245 = vcmp.lt.s32.totalorder %v363, 57
      %v1246 = vsel %vm1245, %v1242, %v1244
      %v1247 = vsel %vm1245, %v1240, %v1242
      %v1248 = vsel %vm1245, %v1238, %v1240
      %v1249 = vsel %vm1245, %v1244, %v1238
      %vm1250 = vmand %vm341, %vm344
      %vm1251 = vmand %vm1250, %vm345
      %v1252 = vsel %vm1251, 1, 0
      %v1253 = vcvt.s32.f32 %v1252
      %v1255 = vlaneseq
      %v1256 = vshrl.u32 %v1255, 7
      %v1257 = vsub.s32 0, %v1256
      %v1258 = vrot.slane %v1253, %v1257
      %v1259 = vlaneseq
      %v1260 = vshrl.u32 %v1259, 7
      %v1261 = vsub.s32 1, %v1260
      %v1262 = vrot.slane %v1253, %v1261
      %v1263 = vlaneseq
      %v1264 = vshrl.u32 %v1263, 7
      %v1265 = vsub.s32 2, %v1264
      %v1266 = vrot.slane %v1253, %v1265
      %v1267 = vlaneseq
      %v1268 = vshrl.u32 %v1267, 7
      %v1269 = vsub.s32 3, %v1268
      %v1270 = vrot.slane %v1253, %v1269
      %v1275 = vmul.f32 %v1249, %v1258
      %v1276 = vmul.f32 %v1248, %v1262
      %v1277 = vmul.f32 %v1247, %v1266
      %v1278 = vmul.f32 %v1246, %v1270
      %v1279 = vpack.c.bf16 %v1275, %v1275
      %v1280 = vpack.c.bf16 %v1276, %v1276
      %v1281 = vpack.c.bf16 %v1277, %v1277
      %v1282 = vpack.c.bf16 %v1278, %v1278
      %v1284 = vsel %vm448, %v1236, 0
      %v1287 = vsel %vm452, %v1279, 0
      %v1290 = vsel %vm452, %v1280, 0
      %v1293 = vsel %vm452, %v1281, 0
      %v1296 = vsel %vm452, %v1282, 0
      %1298 = vmatprep.subr.bf16.mxu0 0
      %1299 = vmatpush1.bf16.msra.mxu0 0
      %1300 = vmatprep.subr.bf16.mxu0 0
      %1301 = vmatpush1.bf16.msra.mxu0 0
      %1302 = vmatprep.subr.bf16.mxu0 0
      %1303 = vmatpush1.bf16.msra.mxu0 0
      %1304 = vmatprep.subr.bf16.mxu0 0
      %1305 = vmatpush1.bf16.msra.mxu0 0
      %1306 = vmatprep.subr.bf16.mxu0 0
      %1307 = vmatpush1.bf16.msra.mxu0 0
      %1308 = vmatprep.subr.bf16.mxu0 0
      %1309 = vmatpush1.bf16.msra.mxu0 0
      %1310 = vmatprep.subr.bf16.mxu0 0
      %1311 = vmatpush1.bf16.msra.mxu0 0
      %1312 = vmatprep.subr.bf16.mxu0 %v1290
      %1313 = vmatpush1.bf16.msra.mxu0 %v1287
      %1314 = vmatprep.subr.bf16.mxu0 0
      %1315 = vmatpush2.bf16.msra.mxu0 0
      %1316 = vmatprep.subr.bf16.mxu0 0
      %1317 = vmatpush2.bf16.msra.mxu0 0
      %1318 = vmatprep.subr.bf16.mxu0 0
      %1319 = vmatpush2.bf16.msra.mxu0 0
      %1320 = vmatprep.subr.bf16.mxu0 0
      %1321 = vmatpush2.bf16.msra.mxu0 0
      %1322 = vmatprep.subr.bf16.mxu0 0
      %1323 = vmatpush2.bf16.msra.mxu0 0
      %1324 = vmatprep.subr.bf16.mxu0 0
      %1325 = vmatpush2.bf16.msra.mxu0 0
      %1326 = vmatprep.subr.bf16.mxu0 0
      %1327 = vmatpush2.bf16.msra.mxu0 0
      %1328 = vmatprep.subr.bf16.mxu0 0
      %1329 = vmatpush2.bf16.msra.mxu0 0
      %1330 = vmatprep.mubr.bf16.mxu0 0
      %1331 = vmatmul.mubr.bf16.gmra.mxu0 %v1284
      %v1332 = vpop.f32.mrf.mxu0
      %v1333 = vadd.f32 0.0, %v1332
      %v1334 = vpop.f32.mrf.mxu0
      %v1335 = vadd.f32 0.0, %v1334
      %v1336 = vpop.f32.mrf.mxu0
      %v1337 = vpop.f32.mrf.mxu0
      %1338 = vdwg.mxu0
      %1339 = vmatprep.subr.bf16.mxu0 0
      %1340 = vmatpush1.bf16.msra.mxu0 0
      %1341 = vmatprep.subr.bf16.mxu0 0
      %1342 = vmatpush1.bf16.msra.mxu0 0
      %1343 = vmatprep.subr.bf16.mxu0 0
      %1344 = vmatpush1.bf16.msra.mxu0 0
      %1345 = vmatprep.subr.bf16.mxu0 0
      %1346 = vmatpush1.bf16.msra.mxu0 0
      %1347 = vmatprep.subr.bf16.mxu0 0
      %1348 = vmatpush1.bf16.msra.mxu0 0
      %1349 = vmatprep.subr.bf16.mxu0 0
      %1350 = vmatpush1.bf16.msra.mxu0 0
      %1351 = vmatprep.subr.bf16.mxu0 0
      %1352 = vmatpush1.bf16.msra.mxu0 0
      %1353 = vmatprep.subr.bf16.mxu0 %v1296
      %1354 = vmatpush1.bf16.msra.mxu0 %v1293
      %1355 = vmatprep.subr.bf16.mxu0 0
      %1356 = vmatpush2.bf16.msra.mxu0 0
      %1357 = vmatprep.subr.bf16.mxu0 0
      %1358 = vmatpush2.bf16.msra.mxu0 0
      %1359 = vmatprep.subr.bf16.mxu0 0
      %1360 = vmatpush2.bf16.msra.mxu0 0
      %1361 = vmatprep.subr.bf16.mxu0 0
      %1362 = vmatpush2.bf16.msra.mxu0 0
      %1363 = vmatprep.subr.bf16.mxu0 0
      %1364 = vmatpush2.bf16.msra.mxu0 0
      %1365 = vmatprep.subr.bf16.mxu0 0
      %1366 = vmatpush2.bf16.msra.mxu0 0
      %1367 = vmatprep.subr.bf16.mxu0 0
      %1368 = vmatpush2.bf16.msra.mxu0 0
      %1369 = vmatprep.subr.bf16.mxu0 0
      %1370 = vmatpush2.bf16.msra.mxu0 0
      %1371 = vmatprep.mubr.bf16.mxu0 0
      %1372 = vmatmul.mubr.bf16.gmra.mxu0 %v1284
      %v1373 = vpop.f32.mrf.mxu0
      %v1374 = vadd.f32 0.0, %v1373
      %v1375 = vpop.f32.mrf.mxu0
      %v1376 = vadd.f32 0.0, %v1375
      %v1377 = vpop.f32.mrf.mxu0
      %v1378 = vpop.f32.mrf.mxu0
      %1379 = vdwg.mxu0
      %v1380 = vadd.f32 %v1231, %v1333
      %v1381 = vadd.f32 %v1232, %v1335
      %v1382 = vadd.f32 %v1233, %v1374
      %v1383 = vadd.f32 %v1234, %v1376
      %s1384 = scalar_lea.vmem %s1, 28
      %v1385 = vld [vmem:[%s1384] sm:$0xf]
      %1386 = vrot.lane.b32.xlu0 %v334, 56
      %v1387 = vpop.permute.xlu0 %1386
      %1388 = vrot.lane.b32.xlu0 %v350, 56
      %v1389 = vpop.permute.xlu0 %1388
      %1390 = vrot.lane.b32.xlu0 %v335, 56
      %v1391 = vpop.permute.xlu0 %1390
      %1392 = vrot.lane.b32.xlu0 %v351, 56
      %v1393 = vpop.permute.xlu0 %1392
      %vm1394 = vcmp.lt.s32.totalorder %v363, 56
      %v1395 = vsel %vm1394, %v1391, %v1393
      %v1396 = vsel %vm1394, %v1389, %v1391
      %v1397 = vsel %vm1394, %v1387, %v1389
      %v1398 = vsel %vm1394, %v1393, %v1387
      %v1399 = vsel %vm1250, 1, 0
      %v1400 = vcvt.s32.f32 %v1399
      %v1402 = vlaneseq
      %v1403 = vshrl.u32 %v1402, 7
      %v1404 = vsub.s32 0, %v1403
      %v1405 = vrot.slane %v1400, %v1404
      %v1406 = vlaneseq
      %v1407 = vshrl.u32 %v1406, 7
      %v1408 = vsub.s32 1, %v1407
      %v1409 = vrot.slane %v1400, %v1408
      %v1410 = vlaneseq
      %v1411 = vshrl.u32 %v1410, 7
      %v1412 = vsub.s32 2, %v1411
      %v1413 = vrot.slane %v1400, %v1412
      %v1414 = vlaneseq
      %v1415 = vshrl.u32 %v1414, 7
      %v1416 = vsub.s32 3, %v1415
      %v1417 = vrot.slane %v1400, %v1416
      %v1422 = vmul.f32 %v1398, %v1405
      %v1423 = vmul.f32 %v1397, %v1409
      %v1424 = vmul.f32 %v1396, %v1413
      %v1425 = vmul.f32 %v1395, %v1417
      %v1426 = vpack.c.bf16 %v1422, %v1422
      %v1427 = vpack.c.bf16 %v1423, %v1423
      %v1428 = vpack.c.bf16 %v1424, %v1424
      %v1429 = vpack.c.bf16 %v1425, %v1425
      %v1431 = vsel %vm448, %v1385, 0
      %v1434 = vsel %vm452, %v1426, 0
      %v1437 = vsel %vm452, %v1427, 0
      %v1440 = vsel %vm452, %v1428, 0
      %v1443 = vsel %vm452, %v1429, 0
      %1445 = vmatprep.subr.bf16.mxu0 0
      %1446 = vmatpush1.bf16.msra.mxu0 0
      %1447 = vmatprep.subr.bf16.mxu0 0
      %1448 = vmatpush1.bf16.msra.mxu0 0
      %1449 = vmatprep.subr.bf16.mxu0 0
      %1450 = vmatpush1.bf16.msra.mxu0 0
      %1451 = vmatprep.subr.bf16.mxu0 0
      %1452 = vmatpush1.bf16.msra.mxu0 0
      %1453 = vmatprep.subr.bf16.mxu0 0
      %1454 = vmatpush1.bf16.msra.mxu0 0
      %1455 = vmatprep.subr.bf16.mxu0 0
      %1456 = vmatpush1.bf16.msra.mxu0 0
      %1457 = vmatprep.subr.bf16.mxu0 0
      %1458 = vmatpush1.bf16.msra.mxu0 0
      %1459 = vmatprep.subr.bf16.mxu0 %v1437
      %1460 = vmatpush1.bf16.msra.mxu0 %v1434
      %1461 = vmatprep.subr.bf16.mxu0 0
      %1462 = vmatpush2.bf16.msra.mxu0 0
      %1463 = vmatprep.subr.bf16.mxu0 0
      %1464 = vmatpush2.bf16.msra.mxu0 0
      %1465 = vmatprep.subr.bf16.mxu0 0
      %1466 = vmatpush2.bf16.msra.mxu0 0
      %1467 = vmatprep.subr.bf16.mxu0 0
      %1468 = vmatpush2.bf16.msra.mxu0 0
      %1469 = vmatprep.subr.bf16.mxu0 0
      %1470 = vmatpush2.bf16.msra.mxu0 0
      %1471 = vmatprep.subr.bf16.mxu0 0
      %1472 = vmatpush2.bf16.msra.mxu0 0
      %1473 = vmatprep.subr.bf16.mxu0 0
      %1474 = vmatpush2.bf16.msra.mxu0 0
      %1475 = vmatprep.subr.bf16.mxu0 0
      %1476 = vmatpush2.bf16.msra.mxu0 0
      %1477 = vmatprep.mubr.bf16.mxu0 0
      %1478 = vmatmul.mubr.bf16.gmra.mxu0 %v1431
      %v1479 = vpop.f32.mrf.mxu0
      %v1480 = vadd.f32 0.0, %v1479
      %v1481 = vpop.f32.mrf.mxu0
      %v1482 = vadd.f32 0.0, %v1481
      %v1483 = vpop.f32.mrf.mxu0
      %v1484 = vpop.f32.mrf.mxu0
      %1485 = vdwg.mxu0
      %1486 = vmatprep.subr.bf16.mxu0 0
      %1487 = vmatpush1.bf16.msra.mxu0 0
      %1488 = vmatprep.subr.bf16.mxu0 0
      %1489 = vmatpush1.bf16.msra.mxu0 0
      %1490 = vmatprep.subr.bf16.mxu0 0
      %1491 = vmatpush1.bf16.msra.mxu0 0
      %1492 = vmatprep.subr.bf16.mxu0 0
      %1493 = vmatpush1.bf16.msra.mxu0 0
      %1494 = vmatprep.subr.bf16.mxu0 0
      %1495 = vmatpush1.bf16.msra.mxu0 0
      %1496 = vmatprep.subr.bf16.mxu0 0
      %1497 = vmatpush1.bf16.msra.mxu0 0
      %1498 = vmatprep.subr.bf16.mxu0 0
      %1499 = vmatpush1.bf16.msra.mxu0 0
      %1500 = vmatprep.subr.bf16.mxu0 %v1443
      %1501 = vmatpush1.bf16.msra.mxu0 %v1440
      %1502 = vmatprep.subr.bf16.mxu0 0
      %1503 = vmatpush2.bf16.msra.mxu0 0
      %1504 = vmatprep.subr.bf16.mxu0 0
      %1505 = vmatpush2.bf16.msra.mxu0 0
      %1506 = vmatprep.subr.bf16.mxu0 0
      %1507 = vmatpush2.bf16.msra.mxu0 0
      %1508 = vmatprep.subr.bf16.mxu0 0
      %1509 = vmatpush2.bf16.msra.mxu0 0
      %1510 = vmatprep.subr.bf16.mxu0 0
      %1511 = vmatpush2.bf16.msra.mxu0 0
      %1512 = vmatprep.subr.bf16.mxu0 0
      %1513 = vmatpush2.bf16.msra.mxu0 0
      %1514 = vmatprep.subr.bf16.mxu0 0
      %1515 = vmatpush2.bf16.msra.mxu0 0
      %1516 = vmatprep.subr.bf16.mxu0 0
      %1517 = vmatpush2.bf16.msra.mxu0 0
      %1518 = vmatprep.mubr.bf16.mxu0 0
      %1519 = vmatmul.mubr.bf16.gmra.mxu0 %v1431
      %v1520 = vpop.f32.mrf.mxu0
      %v1521 = vadd.f32 0.0, %v1520
      %v1522 = vpop.f32.mrf.mxu0
      %v1523 = vadd.f32 0.0, %v1522
      %v1524 = vpop.f32.mrf.mxu0
      %v1525 = vpop.f32.mrf.mxu0
      %1526 = vdwg.mxu0
      %v1527 = vadd.f32 %v1380, %v1480
      %v1528 = vadd.f32 %v1381, %v1482
      %v1529 = vadd.f32 %v1382, %v1521
      %v1530 = vadd.f32 %v1383, %v1523
      %s1531 = scalar_lea.vmem %s1, 32
      %v1532 = vld [vmem:[%s1531] sm:$0xf]
      %1533 = vrot.lane.b32.xlu0 %v334, 55
      %v1534 = vpop.permute.xlu0 %1533
      %1535 = vrot.lane.b32.xlu0 %v350, 55
      %v1536 = vpop.permute.xlu0 %1535
      %1537 = vrot.lane.b32.xlu0 %v335, 55
      %v1538 = vpop.permute.xlu0 %1537
      %1539 = vrot.lane.b32.xlu0 %v351, 55
      %v1540 = vpop.permute.xlu0 %1539
      %vm1541 = vcmp.lt.s32.totalorder %v363, 55
      %v1542 = vsel %vm1541, %v1538, %v1540
      %v1543 = vsel %vm1541, %v1536, %v1538
      %v1544 = vsel %vm1541, %v1534, %v1536
      %v1545 = vsel %vm1541, %v1540, %v1534
      %vm1546 = vmand %vm1250, %vm346
      %v1547 = vsel %vm1546, 1, 0
      %v1548 = vcvt.s32.f32 %v1547
      %v1550 = vlaneseq
      %v1551 = vshrl.u32 %v1550, 7
      %v1552 = vsub.s32 0, %v1551
      %v1553 = vrot.slane %v1548, %v1552
      %v1554 = vlaneseq
      %v1555 = vshrl.u32 %v1554, 7
      %v1556 = vsub.s32 1, %v1555
      %v1557 = vrot.slane %v1548, %v1556
      %v1558 = vlaneseq
      %v1559 = vshrl.u32 %v1558, 7
      %v1560 = vsub.s32 2, %v1559
      %v1561 = vrot.slane %v1548, %v1560
      %v1562 = vlaneseq
      %v1563 = vshrl.u32 %v1562, 7
      %v1564 = vsub.s32 3, %v1563
      %v1565 = vrot.slane %v1548, %v1564
      %v1570 = vmul.f32 %v1545, %v1553
      %v1571 = vmul.f32 %v1544, %v1557
      %v1572 = vmul.f32 %v1543, %v1561
      %v1573 = vmul.f32 %v1542, %v1565
      %v1574 = vpack.c.bf16 %v1570, %v1570
      %v1575 = vpack.c.bf16 %v1571, %v1571
      %v1576 = vpack.c.bf16 %v1572, %v1572
      %v1577 = vpack.c.bf16 %v1573, %v1573
      %v1579 = vsel %vm448, %v1532, 0
      %v1582 = vsel %vm452, %v1574, 0
      %v1585 = vsel %vm452, %v1575, 0
      %v1588 = vsel %vm452, %v1576, 0
      %v1591 = vsel %vm452, %v1577, 0
      %1593 = vmatprep.subr.bf16.mxu0 0
      %1594 = vmatpush1.bf16.msra.mxu0 0
      %1595 = vmatprep.subr.bf16.mxu0 0
      %1596 = vmatpush1.bf16.msra.mxu0 0
      %1597 = vmatprep.subr.bf16.mxu0 0
      %1598 = vmatpush1.bf16.msra.mxu0 0
      %1599 = vmatprep.subr.bf16.mxu0 0
      %1600 = vmatpush1.bf16.msra.mxu0 0
      %1601 = vmatprep.subr.bf16.mxu0 0
      %1602 = vmatpush1.bf16.msra.mxu0 0
      %1603 = vmatprep.subr.bf16.mxu0 0
      %1604 = vmatpush1.bf16.msra.mxu0 0
      %1605 = vmatprep.subr.bf16.mxu0 0
      %1606 = vmatpush1.bf16.msra.mxu0 0
      %1607 = vmatprep.subr.bf16.mxu0 %v1585
      %1608 = vmatpush1.bf16.msra.mxu0 %v1582
      %1609 = vmatprep.subr.bf16.mxu0 0
      %1610 = vmatpush2.bf16.msra.mxu0 0
      %1611 = vmatprep.subr.bf16.mxu0 0
      %1612 = vmatpush2.bf16.msra.mxu0 0
      %1613 = vmatprep.subr.bf16.mxu0 0
      %1614 = vmatpush2.bf16.msra.mxu0 0
      %1615 = vmatprep.subr.bf16.mxu0 0
      %1616 = vmatpush2.bf16.msra.mxu0 0
      %1617 = vmatprep.subr.bf16.mxu0 0
      %1618 = vmatpush2.bf16.msra.mxu0 0
      %1619 = vmatprep.subr.bf16.mxu0 0
      %1620 = vmatpush2.bf16.msra.mxu0 0
      %1621 = vmatprep.subr.bf16.mxu0 0
      %1622 = vmatpush2.bf16.msra.mxu0 0
      %1623 = vmatprep.subr.bf16.mxu0 0
      %1624 = vmatpush2.bf16.msra.mxu0 0
      %1625 = vmatprep.mubr.bf16.mxu0 0
      %1626 = vmatmul.mubr.bf16.gmra.mxu0 %v1579
      %v1627 = vpop.f32.mrf.mxu0
      %v1628 = vadd.f32 0.0, %v1627
      %v1629 = vpop.f32.mrf.mxu0
      %v1630 = vadd.f32 0.0, %v1629
      %v1631 = vpop.f32.mrf.mxu0
      %v1632 = vpop.f32.mrf.mxu0
      %1633 = vdwg.mxu0
      %1634 = vmatprep.subr.bf16.mxu0 0
      %1635 = vmatpush1.bf16.msra.mxu0 0
      %1636 = vmatprep.subr.bf16.mxu0 0
      %1637 = vmatpush1.bf16.msra.mxu0 0
      %1638 = vmatprep.subr.bf16.mxu0 0
      %1639 = vmatpush1.bf16.msra.mxu0 0
      %1640 = vmatprep.subr.bf16.mxu0 0
      %1641 = vmatpush1.bf16.msra.mxu0 0
      %1642 = vmatprep.subr.bf16.mxu0 0
      %1643 = vmatpush1.bf16.msra.mxu0 0
      %1644 = vmatprep.subr.bf16.mxu0 0
      %1645 = vmatpush1.bf16.msra.mxu0 0
      %1646 = vmatprep.subr.bf16.mxu0 0
      %1647 = vmatpush1.bf16.msra.mxu0 0
      %1648 = vmatprep.subr.bf16.mxu0 %v1591
      %1649 = vmatpush1.bf16.msra.mxu0 %v1588
      %1650 = vmatprep.subr.bf16.mxu0 0
      %1651 = vmatpush2.bf16.msra.mxu0 0
      %1652 = vmatprep.subr.bf16.mxu0 0
      %1653 = vmatpush2.bf16.msra.mxu0 0
      %1654 = vmatprep.subr.bf16.mxu0 0
      %1655 = vmatpush2.bf16.msra.mxu0 0
      %1656 = vmatprep.subr.bf16.mxu0 0
      %1657 = vmatpush2.bf16.msra.mxu0 0
      %1658 = vmatprep.subr.bf16.mxu0 0
      %1659 = vmatpush2.bf16.msra.mxu0 0
      %1660 = vmatprep.subr.bf16.mxu0 0
      %1661 = vmatpush2.bf16.msra.mxu0 0
      %1662 = vmatprep.subr.bf16.mxu0 0
      %1663 = vmatpush2.bf16.msra.mxu0 0
      %1664 = vmatprep.subr.bf16.mxu0 0
      %1665 = vmatpush2.bf16.msra.mxu0 0
      %1666 = vmatprep.mubr.bf16.mxu0 0
      %1667 = vmatmul.mubr.bf16.gmra.mxu0 %v1579
      %v1668 = vpop.f32.mrf.mxu0
      %v1669 = vadd.f32 0.0, %v1668
      %v1670 = vpop.f32.mrf.mxu0
      %v1671 = vadd.f32 0.0, %v1670
      %v1672 = vpop.f32.mrf.mxu0
      %v1673 = vpop.f32.mrf.mxu0
      %1674 = vdwg.mxu0
      %v1675 = vadd.f32 %v1527, %v1628
      %v1676 = vadd.f32 %v1528, %v1630
      %v1677 = vadd.f32 %v1529, %v1669
      %v1678 = vadd.f32 %v1530, %v1671
      %s1679 = scalar_lea.vmem %s1, 36
      %v1680 = vld [vmem:[%s1679] sm:$0xf]
      %1681 = vrot.lane.b32.xlu0 %v334, 9
      %v1682 = vpop.permute.xlu0 %1681
      %1683 = vrot.lane.b32.xlu0 %v350, 9
      %v1684 = vpop.permute.xlu0 %1683
      %1685 = vrot.lane.b32.xlu0 %v335, 9
      %v1686 = vpop.permute.xlu0 %1685
      %1687 = vrot.lane.b32.xlu0 %v351, 9
      %v1688 = vpop.permute.xlu0 %1687
      %vm1689 = vcmp.lt.s32.totalorder %v363, 9
      %v1690 = vsel %vm1689, %v1686, %v1688
      %v1691 = vsel %vm1689, %v1684, %v1686
      %v1692 = vsel %vm1689, %v1682, %v1684
      %v1693 = vsel %vm1689, %v1688, %v1682
      %vm1694 = vmand %vm343, %vm345
      %v1695 = vsel %vm1694, 1, 0
      %v1696 = vcvt.s32.f32 %v1695
      %v1698 = vlaneseq
      %v1699 = vshrl.u32 %v1698, 7
      %v1700 = vsub.s32 0, %v1699
      %v1701 = vrot.slane %v1696, %v1700
      %v1702 = vlaneseq
      %v1703 = vshrl.u32 %v1702, 7
      %v1704 = vsub.s32 1, %v1703
      %v1705 = vrot.slane %v1696, %v1704
      %v1706 = vlaneseq
      %v1707 = vshrl.u32 %v1706, 7
      %v1708 = vsub.s32 2, %v1707
      %v1709 = vrot.slane %v1696, %v1708
      %v1710 = vlaneseq
      %v1711 = vshrl.u32 %v1710, 7
      %v1712 = vsub.s32 3, %v1711
      %v1713 = vrot.slane %v1696, %v1712
      %v1718 = vmul.f32 %v1693, %v1701
      %v1719 = vmul.f32 %v1692, %v1705
      %v1720 = vmul.f32 %v1691, %v1709
      %v1721 = vmul.f32 %v1690, %v1713
      %v1722 = vpack.c.bf16 %v1718, %v1718
      %v1723 = vpack.c.bf16 %v1719, %v1719
      %v1724 = vpack.c.bf16 %v1720, %v1720
      %v1725 = vpack.c.bf16 %v1721, %v1721
      %v1727 = vsel %vm448, %v1680, 0
      %v1730 = vsel %vm452, %v1722, 0
      %v1733 = vsel %vm452, %v1723, 0
      %v1736 = vsel %vm452, %v1724, 0
      %v1739 = vsel %vm452, %v1725, 0
      %1741 = vmatprep.subr.bf16.mxu0 0
      %1742 = vmatpush1.bf16.msra.mxu0 0
      %1743 = vmatprep.subr.bf16.mxu0 0
      %1744 = vmatpush1.bf16.msra.mxu0 0
      %1745 = vmatprep.subr.bf16.mxu0 0
      %1746 = vmatpush1.bf16.msra.mxu0 0
      %1747 = vmatprep.subr.bf16.mxu0 0
      %1748 = vmatpush1.bf16.msra.mxu0 0
      %1749 = vmatprep.subr.bf16.mxu0 0
      %1750 = vmatpush1.bf16.msra.mxu0 0
      %1751 = vmatprep.subr.bf16.mxu0 0
      %1752 = vmatpush1.bf16.msra.mxu0 0
      %1753 = vmatprep.subr.bf16.mxu0 0
      %1754 = vmatpush1.bf16.msra.mxu0 0
      %1755 = vmatprep.subr.bf16.mxu0 %v1733
      %1756 = vmatpush1.bf16.msra.mxu0 %v1730
      %1757 = vmatprep.subr.bf16.mxu0 0
      %1758 = vmatpush2.bf16.msra.mxu0 0
      %1759 = vmatprep.subr.bf16.mxu0 0
      %1760 = vmatpush2.bf16.msra.mxu0 0
      %1761 = vmatprep.subr.bf16.mxu0 0
      %1762 = vmatpush2.bf16.msra.mxu0 0
      %1763 = vmatprep.subr.bf16.mxu0 0
      %1764 = vmatpush2.bf16.msra.mxu0 0
      %1765 = vmatprep.subr.bf16.mxu0 0
      %1766 = vmatpush2.bf16.msra.mxu0 0
      %1767 = vmatprep.subr.bf16.mxu0 0
      %1768 = vmatpush2.bf16.msra.mxu0 0
      %1769 = vmatprep.subr.bf16.mxu0 0
      %1770 = vmatpush2.bf16.msra.mxu0 0
      %1771 = vmatprep.subr.bf16.mxu0 0
      %1772 = vmatpush2.bf16.msra.mxu0 0
      %1773 = vmatprep.mubr.bf16.mxu0 0
      %1774 = vmatmul.mubr.bf16.gmra.mxu0 %v1727
      %v1775 = vpop.f32.mrf.mxu0
      %v1776 = vadd.f32 0.0, %v1775
      %v1777 = vpop.f32.mrf.mxu0
      %v1778 = vadd.f32 0.0, %v1777
      %v1779 = vpop.f32.mrf.mxu0
      %v1780 = vpop.f32.mrf.mxu0
      %1781 = vdwg.mxu0
      %1782 = vmatprep.subr.bf16.mxu0 0
      %1783 = vmatpush1.bf16.msra.mxu0 0
      %1784 = vmatprep.subr.bf16.mxu0 0
      %1785 = vmatpush1.bf16.msra.mxu0 0
      %1786 = vmatprep.subr.bf16.mxu0 0
      %1787 = vmatpush1.bf16.msra.mxu0 0
      %1788 = vmatprep.subr.bf16.mxu0 0
      %1789 = vmatpush1.bf16.msra.mxu0 0
      %1790 = vmatprep.subr.bf16.mxu0 0
      %1791 = vmatpush1.bf16.msra.mxu0 0
      %1792 = vmatprep.subr.bf16.mxu0 0
      %1793 = vmatpush1.bf16.msra.mxu0 0
      %1794 = vmatprep.subr.bf16.mxu0 0
      %1795 = vmatpush1.bf16.msra.mxu0 0
      %1796 = vmatprep.subr.bf16.mxu0 %v1739
      %1797 = vmatpush1.bf16.msra.mxu0 %v1736
      %1798 = vmatprep.subr.bf16.mxu0 0
      %1799 = vmatpush2.bf16.msra.mxu0 0
      %1800 = vmatprep.subr.bf16.mxu0 0
      %1801 = vmatpush2.bf16.msra.mxu0 0
      %1802 = vmatprep.subr.bf16.mxu0 0
      %1803 = vmatpush2.bf16.msra.mxu0 0
      %1804 = vmatprep.subr.bf16.mxu0 0
      %1805 = vmatpush2.bf16.msra.mxu0 0
      %1806 = vmatprep.subr.bf16.mxu0 0
      %1807 = vmatpush2.bf16.msra.mxu0 0
      %1808 = vmatprep.subr.bf16.mxu0 0
      %1809 = vmatpush2.bf16.msra.mxu0 0
      %1810 = vmatprep.subr.bf16.mxu0 0
      %1811 = vmatpush2.bf16.msra.mxu0 0
      %1812 = vmatprep.subr.bf16.mxu0 0
      %1813 = vmatpush2.bf16.msra.mxu0 0
      %1814 = vmatprep.mubr.bf16.mxu0 0
      %1815 = vmatmul.mubr.bf16.gmra.mxu0 %v1727
      %v1816 = vpop.f32.mrf.mxu0
      %v1817 = vadd.f32 0.0, %v1816
      %v1818 = vpop.f32.mrf.mxu0
      %v1819 = vadd.f32 0.0, %v1818
      %v1820 = vpop.f32.mrf.mxu0
      %v1821 = vpop.f32.mrf.mxu0
      %1822 = vdwg.mxu0
      %v1823 = vadd.f32 %v1675, %v1776
      %v1824 = vadd.f32 %v1676, %v1778
      %v1825 = vadd.f32 %v1677, %v1817
      %v1826 = vadd.f32 %v1678, %v1819
      %s1827 = scalar_lea.vmem %s1, 40
      %v1828 = vld [vmem:[%s1827] sm:$0xf]
      %1829 = vrot.lane.b32.xlu0 %v334, 8
      %v1830 = vpop.permute.xlu0 %1829
      %1831 = vrot.lane.b32.xlu0 %v350, 8
      %v1832 = vpop.permute.xlu0 %1831
      %1833 = vrot.lane.b32.xlu0 %v335, 8
      %v1834 = vpop.permute.xlu0 %1833
      %1835 = vrot.lane.b32.xlu0 %v351, 8
      %v1836 = vpop.permute.xlu0 %1835
      %vm1837 = vcmp.lt.s32.totalorder %v363, 8
      %v1838 = vsel %vm1837, %v1834, %v1836
      %v1839 = vsel %vm1837, %v1832, %v1834
      %v1840 = vsel %vm1837, %v1830, %v1832
      %v1841 = vsel %vm1837, %v1836, %v1830
      %v1842 = vsel %vm343, 1, 0
      %v1843 = vcvt.s32.f32 %v1842
      %v1845 = vlaneseq
      %v1846 = vshrl.u32 %v1845, 7
      %v1847 = vsub.s32 0, %v1846
      %v1848 = vrot.slane %v1843, %v1847
      %v1849 = vlaneseq
      %v1850 = vshrl.u32 %v1849, 7
      %v1851 = vsub.s32 1, %v1850
      %v1852 = vrot.slane %v1843, %v1851
      %v1853 = vlaneseq
      %v1854 = vshrl.u32 %v1853, 7
      %v1855 = vsub.s32 2, %v1854
      %v1856 = vrot.slane %v1843, %v1855
      %v1857 = vlaneseq
      %v1858 = vshrl.u32 %v1857, 7
      %v1859 = vsub.s32 3, %v1858
      %v1860 = vrot.slane %v1843, %v1859
      %v1865 = vmul.f32 %v1841, %v1848
      %v1866 = vmul.f32 %v1840, %v1852
      %v1867 = vmul.f32 %v1839, %v1856
      %v1868 = vmul.f32 %v1838, %v1860
      %v1869 = vpack.c.bf16 %v1865, %v1865
      %v1870 = vpack.c.bf16 %v1866, %v1866
      %v1871 = vpack.c.bf16 %v1867, %v1867
      %v1872 = vpack.c.bf16 %v1868, %v1868
      %v1874 = vsel %vm448, %v1828, 0
      %v1877 = vsel %vm452, %v1869, 0
      %v1880 = vsel %vm452, %v1870, 0
      %v1883 = vsel %vm452, %v1871, 0
      %v1886 = vsel %vm452, %v1872, 0
      %1888 = vmatprep.subr.bf16.mxu0 0
      %1889 = vmatpush1.bf16.msra.mxu0 0
      %1890 = vmatprep.subr.bf16.mxu0 0
      %1891 = vmatpush1.bf16.msra.mxu0 0
      %1892 = vmatprep.subr.bf16.mxu0 0
      %1893 = vmatpush1.bf16.msra.mxu0 0
      %1894 = vmatprep.subr.bf16.mxu0 0
      %1895 = vmatpush1.bf16.msra.mxu0 0
      %1896 = vmatprep.subr.bf16.mxu0 0
      %1897 = vmatpush1.bf16.msra.mxu0 0
      %1898 = vmatprep.subr.bf16.mxu0 0
      %1899 = vmatpush1.bf16.msra.mxu0 0
      %1900 = vmatprep.subr.bf16.mxu0 0
      %1901 = vmatpush1.bf16.msra.mxu0 0
      %1902 = vmatprep.subr.bf16.mxu0 %v1880
      %1903 = vmatpush1.bf16.msra.mxu0 %v1877
      %1904 = vmatprep.subr.bf16.mxu0 0
      %1905 = vmatpush2.bf16.msra.mxu0 0
      %1906 = vmatprep.subr.bf16.mxu0 0
      %1907 = vmatpush2.bf16.msra.mxu0 0
      %1908 = vmatprep.subr.bf16.mxu0 0
      %1909 = vmatpush2.bf16.msra.mxu0 0
      %1910 = vmatprep.subr.bf16.mxu0 0
      %1911 = vmatpush2.bf16.msra.mxu0 0
      %1912 = vmatprep.subr.bf16.mxu0 0
      %1913 = vmatpush2.bf16.msra.mxu0 0
      %1914 = vmatprep.subr.bf16.mxu0 0
      %1915 = vmatpush2.bf16.msra.mxu0 0
      %1916 = vmatprep.subr.bf16.mxu0 0
      %1917 = vmatpush2.bf16.msra.mxu0 0
      %1918 = vmatprep.subr.bf16.mxu0 0
      %1919 = vmatpush2.bf16.msra.mxu0 0
      %1920 = vmatprep.mubr.bf16.mxu0 0
      %1921 = vmatmul.mubr.bf16.gmra.mxu0 %v1874
      %v1922 = vpop.f32.mrf.mxu0
      %v1923 = vadd.f32 0.0, %v1922
      %v1924 = vpop.f32.mrf.mxu0
      %v1925 = vadd.f32 0.0, %v1924
      %v1926 = vpop.f32.mrf.mxu0
      %v1927 = vpop.f32.mrf.mxu0
      %1928 = vdwg.mxu0
      %1929 = vmatprep.subr.bf16.mxu0 0
      %1930 = vmatpush1.bf16.msra.mxu0 0
      %1931 = vmatprep.subr.bf16.mxu0 0
      %1932 = vmatpush1.bf16.msra.mxu0 0
      %1933 = vmatprep.subr.bf16.mxu0 0
      %1934 = vmatpush1.bf16.msra.mxu0 0
      %1935 = vmatprep.subr.bf16.mxu0 0
      %1936 = vmatpush1.bf16.msra.mxu0 0
      %1937 = vmatprep.subr.bf16.mxu0 0
      %1938 = vmatpush1.bf16.msra.mxu0 0
      %1939 = vmatprep.subr.bf16.mxu0 0
      %1940 = vmatpush1.bf16.msra.mxu0 0
      %1941 = vmatprep.subr.bf16.mxu0 0
      %1942 = vmatpush1.bf16.msra.mxu0 0
      %1943 = vmatprep.subr.bf16.mxu0 %v1886
      %1944 = vmatpush1.bf16.msra.mxu0 %v1883
      %1945 = vmatprep.subr.bf16.mxu0 0
      %1946 = vmatpush2.bf16.msra.mxu0 0
      %1947 = vmatprep.subr.bf16.mxu0 0
      %1948 = vmatpush2.bf16.msra.mxu0 0
      %1949 = vmatprep.subr.bf16.mxu0 0
      %1950 = vmatpush2.bf16.msra.mxu0 0
      %1951 = vmatprep.subr.bf16.mxu0 0
      %1952 = vmatpush2.bf16.msra.mxu0 0
      %1953 = vmatprep.subr.bf16.mxu0 0
      %1954 = vmatpush2.bf16.msra.mxu0 0
      %1955 = vmatprep.subr.bf16.mxu0 0
      %1956 = vmatpush2.bf16.msra.mxu0 0
      %1957 = vmatprep.subr.bf16.mxu0 0
      %1958 = vmatpush2.bf16.msra.mxu0 0
      %1959 = vmatprep.subr.bf16.mxu0 0
      %1960 = vmatpush2.bf16.msra.mxu0 0
      %1961 = vmatprep.mubr.bf16.mxu0 0
      %1962 = vmatmul.mubr.bf16.gmra.mxu0 %v1874
      %v1963 = vpop.f32.mrf.mxu0
      %v1964 = vadd.f32 0.0, %v1963
      %v1965 = vpop.f32.mrf.mxu0
      %v1966 = vadd.f32 0.0, %v1965
      %v1967 = vpop.f32.mrf.mxu0
      %v1968 = vpop.f32.mrf.mxu0
      %1969 = vdwg.mxu0
      %v1970 = vadd.f32 %v1823, %v1923
      %v1971 = vadd.f32 %v1824, %v1925
      %v1972 = vadd.f32 %v1825, %v1964
      %v1973 = vadd.f32 %v1826, %v1966
      %s1974 = scalar_lea.vmem %s1, 44
      %v1975 = vld [vmem:[%s1974] sm:$0xf]
      %1976 = vrot.lane.b32.xlu0 %v334, 7
      %v1977 = vpop.permute.xlu0 %1976
      %1978 = vrot.lane.b32.xlu0 %v350, 7
      %v1979 = vpop.permute.xlu0 %1978
      %1980 = vrot.lane.b32.xlu0 %v335, 7
      %v1981 = vpop.permute.xlu0 %1980
      %1982 = vrot.lane.b32.xlu0 %v351, 7
      %v1983 = vpop.permute.xlu0 %1982
      %vm1984 = vcmp.lt.s32.totalorder %v363, 7
      %v1985 = vsel %vm1984, %v1981, %v1983
      %v1986 = vsel %vm1984, %v1979, %v1981
      %v1987 = vsel %vm1984, %v1977, %v1979
      %v1988 = vsel %vm1984, %v1983, %v1977
      %vm1989 = vmand %vm343, %vm346
      %v1990 = vsel %vm1989, 1, 0
      %v1991 = vcvt.s32.f32 %v1990
      %v1993 = vlaneseq
      %v1994 = vshrl.u32 %v1993, 7
      %v1995 = vsub.s32 0, %v1994
      %v1996 = vrot.slane %v1991, %v1995
      %v1997 = vlaneseq
      %v1998 = vshrl.u32 %v1997, 7
      %v1999 = vsub.s32 1, %v1998
      %v2000 = vrot.slane %v1991, %v1999
      %v2001 = vlaneseq
      %v2002 = vshrl.u32 %v2001, 7
      %v2003 = vsub.s32 2, %v2002
      %v2004 = vrot.slane %v1991, %v2003
      %v2005 = vlaneseq
      %v2006 = vshrl.u32 %v2005, 7
      %v2007 = vsub.s32 3, %v2006
      %v2008 = vrot.slane %v1991, %v2007
      %v2013 = vmul.f32 %v1988, %v1996
      %v2014 = vmul.f32 %v1987, %v2000
      %v2015 = vmul.f32 %v1986, %v2004
      %v2016 = vmul.f32 %v1985, %v2008
      %v2017 = vpack.c.bf16 %v2013, %v2013
      %v2018 = vpack.c.bf16 %v2014, %v2014
      %v2019 = vpack.c.bf16 %v2015, %v2015
      %v2020 = vpack.c.bf16 %v2016, %v2016
      %v2022 = vsel %vm448, %v1975, 0
      %v2025 = vsel %vm452, %v2017, 0
      %v2028 = vsel %vm452, %v2018, 0
      %v2031 = vsel %vm452, %v2019, 0
      %v2034 = vsel %vm452, %v2020, 0
      %2036 = vmatprep.subr.bf16.mxu0 0
      %2037 = vmatpush1.bf16.msra.mxu0 0
      %2038 = vmatprep.subr.bf16.mxu0 0
      %2039 = vmatpush1.bf16.msra.mxu0 0
      %2040 = vmatprep.subr.bf16.mxu0 0
      %2041 = vmatpush1.bf16.msra.mxu0 0
      %2042 = vmatprep.subr.bf16.mxu0 0
      %2043 = vmatpush1.bf16.msra.mxu0 0
      %2044 = vmatprep.subr.bf16.mxu0 0
      %2045 = vmatpush1.bf16.msra.mxu0 0
      %2046 = vmatprep.subr.bf16.mxu0 0
      %2047 = vmatpush1.bf16.msra.mxu0 0
      %2048 = vmatprep.subr.bf16.mxu0 0
      %2049 = vmatpush1.bf16.msra.mxu0 0
      %2050 = vmatprep.subr.bf16.mxu0 %v2028
      %2051 = vmatpush1.bf16.msra.mxu0 %v2025
      %2052 = vmatprep.subr.bf16.mxu0 0
      %2053 = vmatpush2.bf16.msra.mxu0 0
      %2054 = vmatprep.subr.bf16.mxu0 0
      %2055 = vmatpush2.bf16.msra.mxu0 0
      %2056 = vmatprep.subr.bf16.mxu0 0
      %2057 = vmatpush2.bf16.msra.mxu0 0
      %2058 = vmatprep.subr.bf16.mxu0 0
      %2059 = vmatpush2.bf16.msra.mxu0 0
      %2060 = vmatprep.subr.bf16.mxu0 0
      %2061 = vmatpush2.bf16.msra.mxu0 0
      %2062 = vmatprep.subr.bf16.mxu0 0
      %2063 = vmatpush2.bf16.msra.mxu0 0
      %2064 = vmatprep.subr.bf16.mxu0 0
      %2065 = vmatpush2.bf16.msra.mxu0 0
      %2066 = vmatprep.subr.bf16.mxu0 0
      %2067 = vmatpush2.bf16.msra.mxu0 0
      %2068 = vmatprep.mubr.bf16.mxu0 0
      %2069 = vmatmul.mubr.bf16.gmra.mxu0 %v2022
      %v2070 = vpop.f32.mrf.mxu0
      %v2071 = vadd.f32 0.0, %v2070
      %v2072 = vpop.f32.mrf.mxu0
      %v2073 = vadd.f32 0.0, %v2072
      %v2074 = vpop.f32.mrf.mxu0
      %v2075 = vpop.f32.mrf.mxu0
      %2076 = vdwg.mxu0
      %2077 = vmatprep.subr.bf16.mxu0 0
      %2078 = vmatpush1.bf16.msra.mxu0 0
      %2079 = vmatprep.subr.bf16.mxu0 0
      %2080 = vmatpush1.bf16.msra.mxu0 0
      %2081 = vmatprep.subr.bf16.mxu0 0
      %2082 = vmatpush1.bf16.msra.mxu0 0
      %2083 = vmatprep.subr.bf16.mxu0 0
      %2084 = vmatpush1.bf16.msra.mxu0 0
      %2085 = vmatprep.subr.bf16.mxu0 0
      %2086 = vmatpush1.bf16.msra.mxu0 0
      %2087 = vmatprep.subr.bf16.mxu0 0
      %2088 = vmatpush1.bf16.msra.mxu0 0
      %2089 = vmatprep.subr.bf16.mxu0 0
      %2090 = vmatpush1.bf16.msra.mxu0 0
      %2091 = vmatprep.subr.bf16.mxu0 %v2034
      %2092 = vmatpush1.bf16.msra.mxu0 %v2031
      %2093 = vmatprep.subr.bf16.mxu0 0
      %2094 = vmatpush2.bf16.msra.mxu0 0
      %2095 = vmatprep.subr.bf16.mxu0 0
      %2096 = vmatpush2.bf16.msra.mxu0 0
      %2097 = vmatprep.subr.bf16.mxu0 0
      %2098 = vmatpush2.bf16.msra.mxu0 0
      %2099 = vmatprep.subr.bf16.mxu0 0
      %2100 = vmatpush2.bf16.msra.mxu0 0
      %2101 = vmatprep.subr.bf16.mxu0 0
      %2102 = vmatpush2.bf16.msra.mxu0 0
      %2103 = vmatprep.subr.bf16.mxu0 0
      %2104 = vmatpush2.bf16.msra.mxu0 0
      %2105 = vmatprep.subr.bf16.mxu0 0
      %2106 = vmatpush2.bf16.msra.mxu0 0
      %2107 = vmatprep.subr.bf16.mxu0 0
      %2108 = vmatpush2.bf16.msra.mxu0 0
      %2109 = vmatprep.mubr.bf16.mxu0 0
      %2110 = vmatmul.mubr.bf16.gmra.mxu0 %v2022
      %v2111 = vpop.f32.mrf.mxu0
      %v2112 = vadd.f32 0.0, %v2111
      %v2113 = vpop.f32.mrf.mxu0
      %v2114 = vadd.f32 0.0, %v2113
      %v2115 = vpop.f32.mrf.mxu0
      %v2116 = vpop.f32.mrf.mxu0
      %2117 = vdwg.mxu0
      %v2118 = vadd.f32 %v1970, %v2071
      %v2119 = vadd.f32 %v1971, %v2073
      %v2120 = vadd.f32 %v1972, %v2112
      %v2121 = vadd.f32 %v1973, %v2114
      %s2122 = scalar_lea.vmem %s1, 48
      %v2123 = vld [vmem:[%s2122] sm:$0xf]
      %2124 = vrot.lane.b32.xlu0 %v334, 1
      %v2125 = vpop.permute.xlu0 %2124
      %2126 = vrot.lane.b32.xlu0 %v350, 1
      %v2127 = vpop.permute.xlu0 %2126
      %2128 = vrot.lane.b32.xlu0 %v335, 1
      %v2129 = vpop.permute.xlu0 %2128
      %2130 = vrot.lane.b32.xlu0 %v351, 1
      %v2131 = vpop.permute.xlu0 %2130
      %vm2132 = vcmp.lt.s32.totalorder %v363, 1
      %v2133 = vsel %vm2132, %v2129, %v2131
      %v2134 = vsel %vm2132, %v2127, %v2129
      %v2135 = vsel %vm2132, %v2125, %v2127
      %v2136 = vsel %vm2132, %v2131, %v2125
      %v2137 = vsel %vm345, 1, 0
      %v2138 = vcvt.s32.f32 %v2137
      %v2140 = vlaneseq
      %v2141 = vshrl.u32 %v2140, 7
      %v2142 = vsub.s32 0, %v2141
      %v2143 = vrot.slane %v2138, %v2142
      %v2144 = vlaneseq
      %v2145 = vshrl.u32 %v2144, 7
      %v2146 = vsub.s32 1, %v2145
      %v2147 = vrot.slane %v2138, %v2146
      %v2148 = vlaneseq
      %v2149 = vshrl.u32 %v2148, 7
      %v2150 = vsub.s32 2, %v2149
      %v2151 = vrot.slane %v2138, %v2150
      %v2152 = vlaneseq
      %v2153 = vshrl.u32 %v2152, 7
      %v2154 = vsub.s32 3, %v2153
      %v2155 = vrot.slane %v2138, %v2154
      %v2160 = vmul.f32 %v2136, %v2143
      %v2161 = vmul.f32 %v2135, %v2147
      %v2162 = vmul.f32 %v2134, %v2151
      %v2163 = vmul.f32 %v2133, %v2155
      %v2164 = vpack.c.bf16 %v2160, %v2160
      %v2165 = vpack.c.bf16 %v2161, %v2161
      %v2166 = vpack.c.bf16 %v2162, %v2162
      %v2167 = vpack.c.bf16 %v2163, %v2163
      %v2169 = vsel %vm448, %v2123, 0
      %v2172 = vsel %vm452, %v2164, 0
      %v2175 = vsel %vm452, %v2165, 0
      %v2178 = vsel %vm452, %v2166, 0
      %v2181 = vsel %vm452, %v2167, 0
      %2183 = vmatprep.subr.bf16.mxu0 0
      %2184 = vmatpush1.bf16.msra.mxu0 0
      %2185 = vmatprep.subr.bf16.mxu0 0
      %2186 = vmatpush1.bf16.msra.mxu0 0
      %2187 = vmatprep.subr.bf16.mxu0 0
      %2188 = vmatpush1.bf16.msra.mxu0 0
      %2189 = vmatprep.subr.bf16.mxu0 0
      %2190 = vmatpush1.bf16.msra.mxu0 0
      %2191 = vmatprep.subr.bf16.mxu0 0
      %2192 = vmatpush1.bf16.msra.mxu0 0
      %2193 = vmatprep.subr.bf16.mxu0 0
      %2194 = vmatpush1.bf16.msra.mxu0 0
      %2195 = vmatprep.subr.bf16.mxu0 0
      %2196 = vmatpush1.bf16.msra.mxu0 0
      %2197 = vmatprep.subr.bf16.mxu0 %v2175
      %2198 = vmatpush1.bf16.msra.mxu0 %v2172
      %2199 = vmatprep.subr.bf16.mxu0 0
      %2200 = vmatpush2.bf16.msra.mxu0 0
      %2201 = vmatprep.subr.bf16.mxu0 0
      %2202 = vmatpush2.bf16.msra.mxu0 0
      %2203 = vmatprep.subr.bf16.mxu0 0
      %2204 = vmatpush2.bf16.msra.mxu0 0
      %2205 = vmatprep.subr.bf16.mxu0 0
      %2206 = vmatpush2.bf16.msra.mxu0 0
      %2207 = vmatprep.subr.bf16.mxu0 0
      %2208 = vmatpush2.bf16.msra.mxu0 0
      %2209 = vmatprep.subr.bf16.mxu0 0
      %2210 = vmatpush2.bf16.msra.mxu0 0
      %2211 = vmatprep.subr.bf16.mxu0 0
      %2212 = vmatpush2.bf16.msra.mxu0 0
      %2213 = vmatprep.subr.bf16.mxu0 0
      %2214 = vmatpush2.bf16.msra.mxu0 0
      %2215 = vmatprep.mubr.bf16.mxu0 0
      %2216 = vmatmul.mubr.bf16.gmra.mxu0 %v2169
      %v2217 = vpop.f32.mrf.mxu0
      %v2218 = vadd.f32 0.0, %v2217
      %v2219 = vpop.f32.mrf.mxu0
      %v2220 = vadd.f32 0.0, %v2219
      %v2221 = vpop.f32.mrf.mxu0
      %v2222 = vpop.f32.mrf.mxu0
      %2223 = vdwg.mxu0
      %2224 = vmatprep.subr.bf16.mxu0 0
      %2225 = vmatpush1.bf16.msra.mxu0 0
      %2226 = vmatprep.subr.bf16.mxu0 0
      %2227 = vmatpush1.bf16.msra.mxu0 0
      %2228 = vmatprep.subr.bf16.mxu0 0
      %2229 = vmatpush1.bf16.msra.mxu0 0
      %2230 = vmatprep.subr.bf16.mxu0 0
      %2231 = vmatpush1.bf16.msra.mxu0 0
      %2232 = vmatprep.subr.bf16.mxu0 0
      %2233 = vmatpush1.bf16.msra.mxu0 0
      %2234 = vmatprep.subr.bf16.mxu0 0
      %2235 = vmatpush1.bf16.msra.mxu0 0
      %2236 = vmatprep.subr.bf16.mxu0 0
      %2237 = vmatpush1.bf16.msra.mxu0 0
      %2238 = vmatprep.subr.bf16.mxu0 %v2181
      %2239 = vmatpush1.bf16.msra.mxu0 %v2178
      %2240 = vmatprep.subr.bf16.mxu0 0
      %2241 = vmatpush2.bf16.msra.mxu0 0
      %2242 = vmatprep.subr.bf16.mxu0 0
      %2243 = vmatpush2.bf16.msra.mxu0 0
      %2244 = vmatprep.subr.bf16.mxu0 0
      %2245 = vmatpush2.bf16.msra.mxu0 0
      %2246 = vmatprep.subr.bf16.mxu0 0
      %2247 = vmatpush2.bf16.msra.mxu0 0
      %2248 = vmatprep.subr.bf16.mxu0 0
      %2249 = vmatpush2.bf16.msra.mxu0 0
      %2250 = vmatprep.subr.bf16.mxu0 0
      %2251 = vmatpush2.bf16.msra.mxu0 0
      %2252 = vmatprep.subr.bf16.mxu0 0
      %2253 = vmatpush2.bf16.msra.mxu0 0
      %2254 = vmatprep.subr.bf16.mxu0 0
      %2255 = vmatpush2.bf16.msra.mxu0 0
      %2256 = vmatprep.mubr.bf16.mxu0 0
      %2257 = vmatmul.mubr.bf16.gmra.mxu0 %v2169
      %v2258 = vpop.f32.mrf.mxu0
      %v2259 = vadd.f32 0.0, %v2258
      %v2260 = vpop.f32.mrf.mxu0
      %v2261 = vadd.f32 0.0, %v2260
      %v2262 = vpop.f32.mrf.mxu0
      %v2263 = vpop.f32.mrf.mxu0
      %2264 = vdwg.mxu0
      %v2265 = vadd.f32 %v2118, %v2218
      %v2266 = vadd.f32 %v2119, %v2220
      %v2267 = vadd.f32 %v2120, %v2259
      %v2268 = vadd.f32 %v2121, %v2261
      %s2269 = scalar_lea.vmem %s1, 52
      %v2270 = vld [vmem:[%s2269] sm:$0xf]
      %v2271 = vpack.c.bf16 %v334, %v334
      %v2272 = vpack.c.bf16 %v350, %v350
      %v2273 = vpack.c.bf16 %v335, %v335
      %v2274 = vpack.c.bf16 %v351, %v351
      %v2276 = vsel %vm448, %v2270, 0
      %v2279 = vsel %vm452, %v2271, 0
      %v2282 = vsel %vm452, %v2272, 0
      %v2285 = vsel %vm452, %v2273, 0
      %v2288 = vsel %vm452, %v2274, 0
      %2290 = vmatprep.subr.bf16.mxu0 0
      %2291 = vmatpush1.bf16.msra.mxu0 0
      %2292 = vmatprep.subr.bf16.mxu0 0
      %2293 = vmatpush1.bf16.msra.mxu0 0
      %2294 = vmatprep.subr.bf16.mxu0 0
      %2295 = vmatpush1.bf16.msra.mxu0 0
      %2296 = vmatprep.subr.bf16.mxu0 0
      %2297 = vmatpush1.bf16.msra.mxu0 0
      %2298 = vmatprep.subr.bf16.mxu0 0
      %2299 = vmatpush1.bf16.msra.mxu0 0
      %2300 = vmatprep.subr.bf16.mxu0 0
      %2301 = vmatpush1.bf16.msra.mxu0 0
      %2302 = vmatprep.subr.bf16.mxu0 0
      %2303 = vmatpush1.bf16.msra.mxu0 0
      %2304 = vmatprep.subr.bf16.mxu0 %v2282
      %2305 = vmatpush1.bf16.msra.mxu0 %v2279
      %2306 = vmatprep.subr.bf16.mxu0 0
      %2307 = vmatpush2.bf16.msra.mxu0 0
      %2308 = vmatprep.subr.bf16.mxu0 0
      %2309 = vmatpush2.bf16.msra.mxu0 0
      %2310 = vmatprep.subr.bf16.mxu0 0
      %2311 = vmatpush2.bf16.msra.mxu0 0
      %2312 = vmatprep.subr.bf16.mxu0 0
      %2313 = vmatpush2.bf16.msra.mxu0 0
      %2314 = vmatprep.subr.bf16.mxu0 0
      %2315 = vmatpush2.bf16.msra.mxu0 0
      %2316 = vmatprep.subr.bf16.mxu0 0
      %2317 = vmatpush2.bf16.msra.mxu0 0
      %2318 = vmatprep.subr.bf16.mxu0 0
      %2319 = vmatpush2.bf16.msra.mxu0 0
      %2320 = vmatprep.subr.bf16.mxu0 0
      %2321 = vmatpush2.bf16.msra.mxu0 0
      %2322 = vmatprep.mubr.bf16.mxu0 0
      %2323 = vmatmul.mubr.bf16.gmra.mxu0 %v2276
      %v2324 = vpop.f32.mrf.mxu0
      %v2325 = vadd.f32 0.0, %v2324
      %v2326 = vpop.f32.mrf.mxu0
      %v2327 = vadd.f32 0.0, %v2326
      %v2328 = vpop.f32.mrf.mxu0
      %v2329 = vpop.f32.mrf.mxu0
      %2330 = vdwg.mxu0
      %2331 = vmatprep.subr.bf16.mxu0 0
      %2332 = vmatpush1.bf16.msra.mxu0 0
      %2333 = vmatprep.subr.bf16.mxu0 0
      %2334 = vmatpush1.bf16.msra.mxu0 0
      %2335 = vmatprep.subr.bf16.mxu0 0
      %2336 = vmatpush1.bf16.msra.mxu0 0
      %2337 = vmatprep.subr.bf16.mxu0 0
      %2338 = vmatpush1.bf16.msra.mxu0 0
      %2339 = vmatprep.subr.bf16.mxu0 0
      %2340 = vmatpush1.bf16.msra.mxu0 0
      %2341 = vmatprep.subr.bf16.mxu0 0
      %2342 = vmatpush1.bf16.msra.mxu0 0
      %2343 = vmatprep.subr.bf16.mxu0 0
      %2344 = vmatpush1.bf16.msra.mxu0 0
      %2345 = vmatprep.subr.bf16.mxu0 %v2288
      %2346 = vmatpush1.bf16.msra.mxu0 %v2285
      %2347 = vmatprep.subr.bf16.mxu0 0
      %2348 = vmatpush2.bf16.msra.mxu0 0
      %2349 = vmatprep.subr.bf16.mxu0 0
      %2350 = vmatpush2.bf16.msra.mxu0 0
      %2351 = vmatprep.subr.bf16.mxu0 0
      %2352 = vmatpush2.bf16.msra.mxu0 0
      %2353 = vmatprep.subr.bf16.mxu0 0
      %2354 = vmatpush2.bf16.msra.mxu0 0
      %2355 = vmatprep.subr.bf16.mxu0 0
      %2356 = vmatpush2.bf16.msra.mxu0 0
      %2357 = vmatprep.subr.bf16.mxu0 0
      %2358 = vmatpush2.bf16.msra.mxu0 0
      %2359 = vmatprep.subr.bf16.mxu0 0
      %2360 = vmatpush2.bf16.msra.mxu0 0
      %2361 = vmatprep.subr.bf16.mxu0 0
      %2362 = vmatpush2.bf16.msra.mxu0 0
      %2363 = vmatprep.mubr.bf16.mxu0 0
      %2364 = vmatmul.mubr.bf16.gmra.mxu0 %v2276
      %v2365 = vpop.f32.mrf.mxu0
      %v2366 = vadd.f32 0.0, %v2365
      %v2367 = vpop.f32.mrf.mxu0
      %v2368 = vadd.f32 0.0, %v2367
      %v2369 = vpop.f32.mrf.mxu0
      %v2370 = vpop.f32.mrf.mxu0
      %2371 = vdwg.mxu0
      %v2372 = vadd.f32 %v2265, %v2325
      %v2373 = vadd.f32 %v2266, %v2327
      %v2374 = vadd.f32 %v2267, %v2366
      %v2375 = vadd.f32 %v2268, %v2368
      %s2376 = scalar_lea.vmem %s1, 56
      %v2377 = vld [vmem:[%s2376] sm:$0xf]
      %2378 = vrot.lane.b32.xlu0 %v334, 127
      %v2379 = vpop.permute.xlu0 %2378
      %2380 = vrot.lane.b32.xlu0 %v350, 127
      %v2381 = vpop.permute.xlu0 %2380
      %2382 = vrot.lane.b32.xlu0 %v335, 127
      %v2383 = vpop.permute.xlu0 %2382
      %2384 = vrot.lane.b32.xlu0 %v351, 127
      %v2385 = vpop.permute.xlu0 %2384
      %vm2386 = vcmp.lt.s32.totalorder %v363, 127
      %v2387 = vsel %vm2386, %v2383, %v2385
      %v2388 = vsel %vm2386, %v2381, %v2383
      %v2389 = vsel %vm2386, %v2379, %v2381
      %v2390 = vsel %vm2386, %v2385, %v2379
      %v2391 = vsel %vm346, 1, 0
      %v2392 = vcvt.s32.f32 %v2391
      %v2394 = vlaneseq
      %v2395 = vshrl.u32 %v2394, 7
      %v2396 = vsub.s32 0, %v2395
      %v2397 = vrot.slane %v2392, %v2396
      %v2398 = vlaneseq
      %v2399 = vshrl.u32 %v2398, 7
      %v2400 = vsub.s32 1, %v2399
      %v2401 = vrot.slane %v2392, %v2400
      %v2402 = vlaneseq
      %v2403 = vshrl.u32 %v2402, 7
      %v2404 = vsub.s32 2, %v2403
      %v2405 = vrot.slane %v2392, %v2404
      %v2406 = vlaneseq
      %v2407 = vshrl.u32 %v2406, 7
      %v2408 = vsub.s32 3, %v2407
      %v2409 = vrot.slane %v2392, %v2408
      %v2414 = vmul.f32 %v2389, %v2397
      %v2415 = vmul.f32 %v2388, %v2401
      %v2416 = vmul.f32 %v2387, %v2405
      %v2417 = vmul.f32 %v2390, %v2409
      %v2418 = vpack.c.bf16 %v2414, %v2414
      %v2419 = vpack.c.bf16 %v2415, %v2415
      %v2420 = vpack.c.bf16 %v2416, %v2416
      %v2421 = vpack.c.bf16 %v2417, %v2417
      %v2423 = vsel %vm448, %v2377, 0
      %v2426 = vsel %vm452, %v2418, 0
      %v2429 = vsel %vm452, %v2419, 0
      %v2432 = vsel %vm452, %v2420, 0
      %v2435 = vsel %vm452, %v2421, 0
      %2437 = vmatprep.subr.bf16.mxu0 0
      %2438 = vmatpush1.bf16.msra.mxu0 0
      %2439 = vmatprep.subr.bf16.mxu0 0
      %2440 = vmatpush1.bf16.msra.mxu0 0
      %2441 = vmatprep.subr.bf16.mxu0 0
      %2442 = vmatpush1.bf16.msra.mxu0 0
      %2443 = vmatprep.subr.bf16.mxu0 0
      %2444 = vmatpush1.bf16.msra.mxu0 0
      %2445 = vmatprep.subr.bf16.mxu0 0
      %2446 = vmatpush1.bf16.msra.mxu0 0
      %2447 = vmatprep.subr.bf16.mxu0 0
      %2448 = vmatpush1.bf16.msra.mxu0 0
      %2449 = vmatprep.subr.bf16.mxu0 0
      %2450 = vmatpush1.bf16.msra.mxu0 0
      %2451 = vmatprep.subr.bf16.mxu0 %v2429
      %2452 = vmatpush1.bf16.msra.mxu0 %v2426
      %2453 = vmatprep.subr.bf16.mxu0 0
      %2454 = vmatpush2.bf16.msra.mxu0 0
      %2455 = vmatprep.subr.bf16.mxu0 0
      %2456 = vmatpush2.bf16.msra.mxu0 0
      %2457 = vmatprep.subr.bf16.mxu0 0
      %2458 = vmatpush2.bf16.msra.mxu0 0
      %2459 = vmatprep.subr.bf16.mxu0 0
      %2460 = vmatpush2.bf16.msra.mxu0 0
      %2461 = vmatprep.subr.bf16.mxu0 0
      %2462 = vmatpush2.bf16.msra.mxu0 0
      %2463 = vmatprep.subr.bf16.mxu0 0
      %2464 = vmatpush2.bf16.msra.mxu0 0
      %2465 = vmatprep.subr.bf16.mxu0 0
      %2466 = vmatpush2.bf16.msra.mxu0 0
      %2467 = vmatprep.subr.bf16.mxu0 0
      %2468 = vmatpush2.bf16.msra.mxu0 0
      %2469 = vmatprep.mubr.bf16.mxu0 0
      %2470 = vmatmul.mubr.bf16.gmra.mxu0 %v2423
      %v2471 = vpop.f32.mrf.mxu0
      %v2472 = vadd.f32 0.0, %v2471
      %v2473 = vpop.f32.mrf.mxu0
      %v2474 = vadd.f32 0.0, %v2473
      %v2475 = vpop.f32.mrf.mxu0
      %v2476 = vpop.f32.mrf.mxu0
      %2477 = vdwg.mxu0
      %2478 = vmatprep.subr.bf16.mxu0 0
      %2479 = vmatpush1.bf16.msra.mxu0 0
      %2480 = vmatprep.subr.bf16.mxu0 0
      %2481 = vmatpush1.bf16.msra.mxu0 0
      %2482 = vmatprep.subr.bf16.mxu0 0
      %2483 = vmatpush1.bf16.msra.mxu0 0
      %2484 = vmatprep.subr.bf16.mxu0 0
      %2485 = vmatpush1.bf16.msra.mxu0 0
      %2486 = vmatprep.subr.bf16.mxu0 0
      %2487 = vmatpush1.bf16.msra.mxu0 0
      %2488 = vmatprep.subr.bf16.mxu0 0
      %2489 = vmatpush1.bf16.msra.mxu0 0
      %2490 = vmatprep.subr.bf16.mxu0 0
      %2491 = vmatpush1.bf16.msra.mxu0 0
      %2492 = vmatprep.subr.bf16.mxu0 %v2435
      %2493 = vmatpush1.bf16.msra.mxu0 %v2432
      %2494 = vmatprep.subr.bf16.mxu0 0
      %2495 = vmatpush2.bf16.msra.mxu0 0
      %2496 = vmatprep.subr.bf16.mxu0 0
      %2497 = vmatpush2.bf16.msra.mxu0 0
      %2498 = vmatprep.subr.bf16.mxu0 0
      %2499 = vmatpush2.bf16.msra.mxu0 0
      %2500 = vmatprep.subr.bf16.mxu0 0
      %2501 = vmatpush2.bf16.msra.mxu0 0
      %2502 = vmatprep.subr.bf16.mxu0 0
      %2503 = vmatpush2.bf16.msra.mxu0 0
      %2504 = vmatprep.subr.bf16.mxu0 0
      %2505 = vmatpush2.bf16.msra.mxu0 0
      %2506 = vmatprep.subr.bf16.mxu0 0
      %2507 = vmatpush2.bf16.msra.mxu0 0
      %2508 = vmatprep.subr.bf16.mxu0 0
      %2509 = vmatpush2.bf16.msra.mxu0 0
      %2510 = vmatprep.mubr.bf16.mxu0 0
      %2511 = vmatmul.mubr.bf16.gmra.mxu0 %v2423
      %v2512 = vpop.f32.mrf.mxu0
      %v2513 = vadd.f32 0.0, %v2512
      %v2514 = vpop.f32.mrf.mxu0
      %v2515 = vadd.f32 0.0, %v2514
      %v2516 = vpop.f32.mrf.mxu0
      %v2517 = vpop.f32.mrf.mxu0
      %2518 = vdwg.mxu0
      %v2519 = vadd.f32 %v2372, %v2472
      %v2520 = vadd.f32 %v2373, %v2474
      %v2521 = vadd.f32 %v2374, %v2513
      %v2522 = vadd.f32 %v2375, %v2515
      %s2523 = scalar_lea.vmem %s1, 60
      %v2524 = vld [vmem:[%s2523] sm:$0xf]
      %2525 = vrot.lane.b32.xlu0 %v334, 121
      %v2526 = vpop.permute.xlu0 %2525
      %2527 = vrot.lane.b32.xlu0 %v350, 121
      %v2528 = vpop.permute.xlu0 %2527
      %2529 = vrot.lane.b32.xlu0 %v335, 121
      %v2530 = vpop.permute.xlu0 %2529
      %2531 = vrot.lane.b32.xlu0 %v351, 121
      %v2532 = vpop.permute.xlu0 %2531
      %vm2533 = vcmp.lt.s32.totalorder %v363, 121
      %v2534 = vsel %vm2533, %v2530, %v2532
      %v2535 = vsel %vm2533, %v2528, %v2530
      %v2536 = vsel %vm2533, %v2526, %v2528
      %v2537 = vsel %vm2533, %v2532, %v2526
      %vm2538 = vmand %vm344, %vm345
      %v2539 = vsel %vm2538, 1, 0
      %v2540 = vcvt.s32.f32 %v2539
      %v2542 = vlaneseq
      %v2543 = vshrl.u32 %v2542, 7
      %v2544 = vsub.s32 0, %v2543
      %v2545 = vrot.slane %v2540, %v2544
      %v2546 = vlaneseq
      %v2547 = vshrl.u32 %v2546, 7
      %v2548 = vsub.s32 1, %v2547
      %v2549 = vrot.slane %v2540, %v2548
      %v2550 = vlaneseq
      %v2551 = vshrl.u32 %v2550, 7
      %v2552 = vsub.s32 2, %v2551
      %v2553 = vrot.slane %v2540, %v2552
      %v2554 = vlaneseq
      %v2555 = vshrl.u32 %v2554, 7
      %v2556 = vsub.s32 3, %v2555
      %v2557 = vrot.slane %v2540, %v2556
      %v2562 = vmul.f32 %v2536, %v2545
      %v2563 = vmul.f32 %v2535, %v2549
      %v2564 = vmul.f32 %v2534, %v2553
      %v2565 = vmul.f32 %v2537, %v2557
      %v2566 = vpack.c.bf16 %v2562, %v2562
      %v2567 = vpack.c.bf16 %v2563, %v2563
      %v2568 = vpack.c.bf16 %v2564, %v2564
      %v2569 = vpack.c.bf16 %v2565, %v2565
      %v2571 = vsel %vm448, %v2524, 0
      %v2574 = vsel %vm452, %v2566, 0
      %v2577 = vsel %vm452, %v2567, 0
      %v2580 = vsel %vm452, %v2568, 0
      %v2583 = vsel %vm452, %v2569, 0
      %2585 = vmatprep.subr.bf16.mxu0 0
      %2586 = vmatpush1.bf16.msra.mxu0 0
      %2587 = vmatprep.subr.bf16.mxu0 0
      %2588 = vmatpush1.bf16.msra.mxu0 0
      %2589 = vmatprep.subr.bf16.mxu0 0
      %2590 = vmatpush1.bf16.msra.mxu0 0
      %2591 = vmatprep.subr.bf16.mxu0 0
      %2592 = vmatpush1.bf16.msra.mxu0 0
      %2593 = vmatprep.subr.bf16.mxu0 0
      %2594 = vmatpush1.bf16.msra.mxu0 0
      %2595 = vmatprep.subr.bf16.mxu0 0
      %2596 = vmatpush1.bf16.msra.mxu0 0
      %2597 = vmatprep.subr.bf16.mxu0 0
      %2598 = vmatpush1.bf16.msra.mxu0 0
      %2599 = vmatprep.subr.bf16.mxu0 %v2577
      %2600 = vmatpush1.bf16.msra.mxu0 %v2574
      %2601 = vmatprep.subr.bf16.mxu0 0
      %2602 = vmatpush2.bf16.msra.mxu0 0
      %2603 = vmatprep.subr.bf16.mxu0 0
      %2604 = vmatpush2.bf16.msra.mxu0 0
      %2605 = vmatprep.subr.bf16.mxu0 0
      %2606 = vmatpush2.bf16.msra.mxu0 0
      %2607 = vmatprep.subr.bf16.mxu0 0
      %2608 = vmatpush2.bf16.msra.mxu0 0
      %2609 = vmatprep.subr.bf16.mxu0 0
      %2610 = vmatpush2.bf16.msra.mxu0 0
      %2611 = vmatprep.subr.bf16.mxu0 0
      %2612 = vmatpush2.bf16.msra.mxu0 0
      %2613 = vmatprep.subr.bf16.mxu0 0
      %2614 = vmatpush2.bf16.msra.mxu0 0
      %2615 = vmatprep.subr.bf16.mxu0 0
      %2616 = vmatpush2.bf16.msra.mxu0 0
      %2617 = vmatprep.mubr.bf16.mxu0 0
      %2618 = vmatmul.mubr.bf16.gmra.mxu0 %v2571
      %v2619 = vpop.f32.mrf.mxu0
      %v2620 = vadd.f32 0.0, %v2619
      %v2621 = vpop.f32.mrf.mxu0
      %v2622 = vadd.f32 0.0, %v2621
      %v2623 = vpop.f32.mrf.mxu0
      %v2624 = vpop.f32.mrf.mxu0
      %2625 = vdwg.mxu0
      %2626 = vmatprep.subr.bf16.mxu0 0
      %2627 = vmatpush1.bf16.msra.mxu0 0
      %2628 = vmatprep.subr.bf16.mxu0 0
      %2629 = vmatpush1.bf16.msra.mxu0 0
      %2630 = vmatprep.subr.bf16.mxu0 0
      %2631 = vmatpush1.bf16.msra.mxu0 0
      %2632 = vmatprep.subr.bf16.mxu0 0
      %2633 = vmatpush1.bf16.msra.mxu0 0
      %2634 = vmatprep.subr.bf16.mxu0 0
      %2635 = vmatpush1.bf16.msra.mxu0 0
      %2636 = vmatprep.subr.bf16.mxu0 0
      %2637 = vmatpush1.bf16.msra.mxu0 0
      %2638 = vmatprep.subr.bf16.mxu0 0
      %2639 = vmatpush1.bf16.msra.mxu0 0
      %2640 = vmatprep.subr.bf16.mxu0 %v2583
      %2641 = vmatpush1.bf16.msra.mxu0 %v2580
      %2642 = vmatprep.subr.bf16.mxu0 0
      %2643 = vmatpush2.bf16.msra.mxu0 0
      %2644 = vmatprep.subr.bf16.mxu0 0
      %2645 = vmatpush2.bf16.msra.mxu0 0
      %2646 = vmatprep.subr.bf16.mxu0 0
      %2647 = vmatpush2.bf16.msra.mxu0 0
      %2648 = vmatprep.subr.bf16.mxu0 0
      %2649 = vmatpush2.bf16.msra.mxu0 0
      %2650 = vmatprep.subr.bf16.mxu0 0
      %2651 = vmatpush2.bf16.msra.mxu0 0
      %2652 = vmatprep.subr.bf16.mxu0 0
      %2653 = vmatpush2.bf16.msra.mxu0 0
      %2654 = vmatprep.subr.bf16.mxu0 0
      %2655 = vmatpush2.bf16.msra.mxu0 0
      %2656 = vmatprep.subr.bf16.mxu0 0
      %2657 = vmatpush2.bf16.msra.mxu0 0
      %2658 = vmatprep.mubr.bf16.mxu0 0
      %2659 = vmatmul.mubr.bf16.gmra.mxu0 %v2571
      %v2660 = vpop.f32.mrf.mxu0
      %v2661 = vadd.f32 0.0, %v2660
      %v2662 = vpop.f32.mrf.mxu0
      %v2663 = vadd.f32 0.0, %v2662
      %v2664 = vpop.f32.mrf.mxu0
      %v2665 = vpop.f32.mrf.mxu0
      %2666 = vdwg.mxu0
      %v2667 = vadd.f32 %v2519, %v2620
      %v2668 = vadd.f32 %v2520, %v2622
      %v2669 = vadd.f32 %v2521, %v2661
      %v2670 = vadd.f32 %v2522, %v2663
      %s2671 = scalar_lea.vmem %s1, 64
      %v2672 = vld [vmem:[%s2671] sm:$0xf]
      %2673 = vrot.lane.b32.xlu0 %v334, 120
      %v2674 = vpop.permute.xlu0 %2673
      %2675 = vrot.lane.b32.xlu0 %v350, 120
      %v2676 = vpop.permute.xlu0 %2675
      %2677 = vrot.lane.b32.xlu0 %v335, 120
      %v2678 = vpop.permute.xlu0 %2677
      %2679 = vrot.lane.b32.xlu0 %v351, 120
      %v2680 = vpop.permute.xlu0 %2679
      %vm2681 = vcmp.lt.s32.totalorder %v363, 120
      %v2682 = vsel %vm2681, %v2678, %v2680
      %v2683 = vsel %vm2681, %v2676, %v2678
      %v2684 = vsel %vm2681, %v2674, %v2676
      %v2685 = vsel %vm2681, %v2680, %v2674
      %v2686 = vsel %vm344, 1, 0
      %v2687 = vcvt.s32.f32 %v2686
      %v2689 = vlaneseq
      %v2690 = vshrl.u32 %v2689, 7
      %v2691 = vsub.s32 0, %v2690
      %v2692 = vrot.slane %v2687, %v2691
      %v2693 = vlaneseq
      %v2694 = vshrl.u32 %v2693, 7
      %v2695 = vsub.s32 1, %v2694
      %v2696 = vrot.slane %v2687, %v2695
      %v2697 = vlaneseq
      %v2698 = vshrl.u32 %v2697, 7
      %v2699 = vsub.s32 2, %v2698
      %v2700 = vrot.slane %v2687, %v2699
      %v2701 = vlaneseq
      %v2702 = vshrl.u32 %v2701, 7
      %v2703 = vsub.s32 3, %v2702
      %v2704 = vrot.slane %v2687, %v2703
      %v2709 = vmul.f32 %v2684, %v2692
      %v2710 = vmul.f32 %v2683, %v2696
      %v2711 = vmul.f32 %v2682, %v2700
      %v2712 = vmul.f32 %v2685, %v2704
      %v2713 = vpack.c.bf16 %v2709, %v2709
      %v2714 = vpack.c.bf16 %v2710, %v2710
      %v2715 = vpack.c.bf16 %v2711, %v2711
      %v2716 = vpack.c.bf16 %v2712, %v2712
      %v2718 = vsel %vm448, %v2672, 0
      %v2721 = vsel %vm452, %v2713, 0
      %v2724 = vsel %vm452, %v2714, 0
      %v2727 = vsel %vm452, %v2715, 0
      %v2730 = vsel %vm452, %v2716, 0
      %2732 = vmatprep.subr.bf16.mxu0 0
      %2733 = vmatpush1.bf16.msra.mxu0 0
      %2734 = vmatprep.subr.bf16.mxu0 0
      %2735 = vmatpush1.bf16.msra.mxu0 0
      %2736 = vmatprep.subr.bf16.mxu0 0
      %2737 = vmatpush1.bf16.msra.mxu0 0
      %2738 = vmatprep.subr.bf16.mxu0 0
      %2739 = vmatpush1.bf16.msra.mxu0 0
      %2740 = vmatprep.subr.bf16.mxu0 0
      %2741 = vmatpush1.bf16.msra.mxu0 0
      %2742 = vmatprep.subr.bf16.mxu0 0
      %2743 = vmatpush1.bf16.msra.mxu0 0
      %2744 = vmatprep.subr.bf16.mxu0 0
      %2745 = vmatpush1.bf16.msra.mxu0 0
      %2746 = vmatprep.subr.bf16.mxu0 %v2724
      %2747 = vmatpush1.bf16.msra.mxu0 %v2721
      %2748 = vmatprep.subr.bf16.mxu0 0
      %2749 = vmatpush2.bf16.msra.mxu0 0
      %2750 = vmatprep.subr.bf16.mxu0 0
      %2751 = vmatpush2.bf16.msra.mxu0 0
      %2752 = vmatprep.subr.bf16.mxu0 0
      %2753 = vmatpush2.bf16.msra.mxu0 0
      %2754 = vmatprep.subr.bf16.mxu0 0
      %2755 = vmatpush2.bf16.msra.mxu0 0
      %2756 = vmatprep.subr.bf16.mxu0 0
      %2757 = vmatpush2.bf16.msra.mxu0 0
      %2758 = vmatprep.subr.bf16.mxu0 0
      %2759 = vmatpush2.bf16.msra.mxu0 0
      %2760 = vmatprep.subr.bf16.mxu0 0
      %2761 = vmatpush2.bf16.msra.mxu0 0
      %2762 = vmatprep.subr.bf16.mxu0 0
      %2763 = vmatpush2.bf16.msra.mxu0 0
      %2764 = vmatprep.mubr.bf16.mxu0 0
      %2765 = vmatmul.mubr.bf16.gmra.mxu0 %v2718
      %v2766 = vpop.f32.mrf.mxu0
      %v2767 = vadd.f32 0.0, %v2766
      %v2768 = vpop.f32.mrf.mxu0
      %v2769 = vadd.f32 0.0, %v2768
      %v2770 = vpop.f32.mrf.mxu0
      %v2771 = vpop.f32.mrf.mxu0
      %2772 = vdwg.mxu0
      %2773 = vmatprep.subr.bf16.mxu0 0
      %2774 = vmatpush1.bf16.msra.mxu0 0
      %2775 = vmatprep.subr.bf16.mxu0 0
      %2776 = vmatpush1.bf16.msra.mxu0 0
      %2777 = vmatprep.subr.bf16.mxu0 0
      %2778 = vmatpush1.bf16.msra.mxu0 0
      %2779 = vmatprep.subr.bf16.mxu0 0
      %2780 = vmatpush1.bf16.msra.mxu0 0
      %2781 = vmatprep.subr.bf16.mxu0 0
      %2782 = vmatpush1.bf16.msra.mxu0 0
      %2783 = vmatprep.subr.bf16.mxu0 0
      %2784 = vmatpush1.bf16.msra.mxu0 0
      %2785 = vmatprep.subr.bf16.mxu0 0
      %2786 = vmatpush1.bf16.msra.mxu0 0
      %2787 = vmatprep.subr.bf16.mxu0 %v2730
      %2788 = vmatpush1.bf16.msra.mxu0 %v2727
      %2789 = vmatprep.subr.bf16.mxu0 0
      %2790 = vmatpush2.bf16.msra.mxu0 0
      %2791 = vmatprep.subr.bf16.mxu0 0
      %2792 = vmatpush2.bf16.msra.mxu0 0
      %2793 = vmatprep.subr.bf16.mxu0 0
      %2794 = vmatpush2.bf16.msra.mxu0 0
      %2795 = vmatprep.subr.bf16.mxu0 0
      %2796 = vmatpush2.bf16.msra.mxu0 0
      %2797 = vmatprep.subr.bf16.mxu0 0
      %2798 = vmatpush2.bf16.msra.mxu0 0
      %2799 = vmatprep.subr.bf16.mxu0 0
      %2800 = vmatpush2.bf16.msra.mxu0 0
      %2801 = vmatprep.subr.bf16.mxu0 0
      %2802 = vmatpush2.bf16.msra.mxu0 0
      %2803 = vmatprep.subr.bf16.mxu0 0
      %2804 = vmatpush2.bf16.msra.mxu0 0
      %2805 = vmatprep.mubr.bf16.mxu0 0
      %2806 = vmatmul.mubr.bf16.gmra.mxu0 %v2718
      %v2807 = vpop.f32.mrf.mxu0
      %v2808 = vadd.f32 0.0, %v2807
      %v2809 = vpop.f32.mrf.mxu0
      %v2810 = vadd.f32 0.0, %v2809
      %v2811 = vpop.f32.mrf.mxu0
      %v2812 = vpop.f32.mrf.mxu0
      %2813 = vdwg.mxu0
      %v2814 = vadd.f32 %v2667, %v2767
      %v2815 = vadd.f32 %v2668, %v2769
      %v2816 = vadd.f32 %v2669, %v2808
      %v2817 = vadd.f32 %v2670, %v2810
      %s2818 = scalar_lea.vmem %s1, 68
      %v2819 = vld [vmem:[%s2818] sm:$0xf]
      %2820 = vrot.lane.b32.xlu0 %v334, 119
      %v2821 = vpop.permute.xlu0 %2820
      %2822 = vrot.lane.b32.xlu0 %v350, 119
      %v2823 = vpop.permute.xlu0 %2822
      %2824 = vrot.lane.b32.xlu0 %v335, 119
      %v2825 = vpop.permute.xlu0 %2824
      %2826 = vrot.lane.b32.xlu0 %v351, 119
      %v2827 = vpop.permute.xlu0 %2826
      %vm2828 = vcmp.lt.s32.totalorder %v363, 119
      %v2829 = vsel %vm2828, %v2825, %v2827
      %v2830 = vsel %vm2828, %v2823, %v2825
      %v2831 = vsel %vm2828, %v2821, %v2823
      %v2832 = vsel %vm2828, %v2827, %v2821
      %vm2833 = vmand %vm344, %vm346
      %v2834 = vsel %vm2833, 1, 0
      %v2835 = vcvt.s32.f32 %v2834
      %v2837 = vlaneseq
      %v2838 = vshrl.u32 %v2837, 7
      %v2839 = vsub.s32 0, %v2838
      %v2840 = vrot.slane %v2835, %v2839
      %v2841 = vlaneseq
      %v2842 = vshrl.u32 %v2841, 7
      %v2843 = vsub.s32 1, %v2842
      %v2844 = vrot.slane %v2835, %v2843
      %v2845 = vlaneseq
      %v2846 = vshrl.u32 %v2845, 7
      %v2847 = vsub.s32 2, %v2846
      %v2848 = vrot.slane %v2835, %v2847
      %v2849 = vlaneseq
      %v2850 = vshrl.u32 %v2849, 7
      %v2851 = vsub.s32 3, %v2850
      %v2852 = vrot.slane %v2835, %v2851
      %v2857 = vmul.f32 %v2831, %v2840
      %v2858 = vmul.f32 %v2830, %v2844
      %v2859 = vmul.f32 %v2829, %v2848
      %v2860 = vmul.f32 %v2832, %v2852
      %v2861 = vpack.c.bf16 %v2857, %v2857
      %v2862 = vpack.c.bf16 %v2858, %v2858
      %v2863 = vpack.c.bf16 %v2859, %v2859
      %v2864 = vpack.c.bf16 %v2860, %v2860
      %v2866 = vsel %vm448, %v2819, 0
      %v2869 = vsel %vm452, %v2861, 0
      %v2872 = vsel %vm452, %v2862, 0
      %v2875 = vsel %vm452, %v2863, 0
      %v2878 = vsel %vm452, %v2864, 0
      %2880 = vmatprep.subr.bf16.mxu0 0
      %2881 = vmatpush1.bf16.msra.mxu0 0
      %2882 = vmatprep.subr.bf16.mxu0 0
      %2883 = vmatpush1.bf16.msra.mxu0 0
      %2884 = vmatprep.subr.bf16.mxu0 0
      %2885 = vmatpush1.bf16.msra.mxu0 0
      %2886 = vmatprep.subr.bf16.mxu0 0
      %2887 = vmatpush1.bf16.msra.mxu0 0
      %2888 = vmatprep.subr.bf16.mxu0 0
      %2889 = vmatpush1.bf16.msra.mxu0 0
      %2890 = vmatprep.subr.bf16.mxu0 0
      %2891 = vmatpush1.bf16.msra.mxu0 0
      %2892 = vmatprep.subr.bf16.mxu0 0
      %2893 = vmatpush1.bf16.msra.mxu0 0
      %2894 = vmatprep.subr.bf16.mxu0 %v2872
      %2895 = vmatpush1.bf16.msra.mxu0 %v2869
      %2896 = vmatprep.subr.bf16.mxu0 0
      %2897 = vmatpush2.bf16.msra.mxu0 0
      %2898 = vmatprep.subr.bf16.mxu0 0
      %2899 = vmatpush2.bf16.msra.mxu0 0
      %2900 = vmatprep.subr.bf16.mxu0 0
      %2901 = vmatpush2.bf16.msra.mxu0 0
      %2902 = vmatprep.subr.bf16.mxu0 0
      %2903 = vmatpush2.bf16.msra.mxu0 0
      %2904 = vmatprep.subr.bf16.mxu0 0
      %2905 = vmatpush2.bf16.msra.mxu0 0
      %2906 = vmatprep.subr.bf16.mxu0 0
      %2907 = vmatpush2.bf16.msra.mxu0 0
      %2908 = vmatprep.subr.bf16.mxu0 0
      %2909 = vmatpush2.bf16.msra.mxu0 0
      %2910 = vmatprep.subr.bf16.mxu0 0
      %2911 = vmatpush2.bf16.msra.mxu0 0
      %2912 = vmatprep.mubr.bf16.mxu0 0
      %2913 = vmatmul.mubr.bf16.gmra.mxu0 %v2866
      %v2914 = vpop.f32.mrf.mxu0
      %v2915 = vadd.f32 0.0, %v2914
      %v2916 = vpop.f32.mrf.mxu0
      %v2917 = vadd.f32 0.0, %v2916
      %v2918 = vpop.f32.mrf.mxu0
      %v2919 = vpop.f32.mrf.mxu0
      %2920 = vdwg.mxu0
      %2921 = vmatprep.subr.bf16.mxu0 0
      %2922 = vmatpush1.bf16.msra.mxu0 0
      %2923 = vmatprep.subr.bf16.mxu0 0
      %2924 = vmatpush1.bf16.msra.mxu0 0
      %2925 = vmatprep.subr.bf16.mxu0 0
      %2926 = vmatpush1.bf16.msra.mxu0 0
      %2927 = vmatprep.subr.bf16.mxu0 0
      %2928 = vmatpush1.bf16.msra.mxu0 0
      %2929 = vmatprep.subr.bf16.mxu0 0
      %2930 = vmatpush1.bf16.msra.mxu0 0
      %2931 = vmatprep.subr.bf16.mxu0 0
      %2932 = vmatpush1.bf16.msra.mxu0 0
      %2933 = vmatprep.subr.bf16.mxu0 0
      %2934 = vmatpush1.bf16.msra.mxu0 0
      %2935 = vmatprep.subr.bf16.mxu0 %v2878
      %2936 = vmatpush1.bf16.msra.mxu0 %v2875
      %2937 = vmatprep.subr.bf16.mxu0 0
      %2938 = vmatpush2.bf16.msra.mxu0 0
      %2939 = vmatprep.subr.bf16.mxu0 0
      %2940 = vmatpush2.bf16.msra.mxu0 0
      %2941 = vmatprep.subr.bf16.mxu0 0
      %2942 = vmatpush2.bf16.msra.mxu0 0
      %2943 = vmatprep.subr.bf16.mxu0 0
      %2944 = vmatpush2.bf16.msra.mxu0 0
      %2945 = vmatprep.subr.bf16.mxu0 0
      %2946 = vmatpush2.bf16.msra.mxu0 0
      %2947 = vmatprep.subr.bf16.mxu0 0
      %2948 = vmatpush2.bf16.msra.mxu0 0
      %2949 = vmatprep.subr.bf16.mxu0 0
      %2950 = vmatpush2.bf16.msra.mxu0 0
      %2951 = vmatprep.subr.bf16.mxu0 0
      %2952 = vmatpush2.bf16.msra.mxu0 0
      %2953 = vmatprep.mubr.bf16.mxu0 0
      %2954 = vmatmul.mubr.bf16.gmra.mxu0 %v2866
      %v2955 = vpop.f32.mrf.mxu0
      %v2956 = vadd.f32 0.0, %v2955
      %v2957 = vpop.f32.mrf.mxu0
      %v2958 = vadd.f32 0.0, %v2957
      %v2959 = vpop.f32.mrf.mxu0
      %v2960 = vpop.f32.mrf.mxu0
      %2961 = vdwg.mxu0
      %v2962 = vadd.f32 %v2814, %v2915
      %v2963 = vadd.f32 %v2815, %v2917
      %v2964 = vadd.f32 %v2816, %v2956
      %v2965 = vadd.f32 %v2817, %v2958
      %s2966 = scalar_lea.vmem %s1, 72
      %v2967 = vld [vmem:[%s2966] sm:$0xf]
      %vm2968 = vmand %vm342, %vm343
      %vm2969 = vmand %vm2968, %vm345
      %v2970 = vsel %vm2969, 1, 0
      %v2971 = vcvt.s32.f32 %v2970
      %v2973 = vlaneseq
      %v2974 = vshrl.u32 %v2973, 7
      %v2975 = vsub.s32 0, %v2974
      %v2976 = vrot.slane %v2971, %v2975
      %v2977 = vlaneseq
      %v2978 = vshrl.u32 %v2977, 7
      %v2979 = vsub.s32 1, %v2978
      %v2980 = vrot.slane %v2971, %v2979
      %v2981 = vlaneseq
      %v2982 = vshrl.u32 %v2981, 7
      %v2983 = vsub.s32 2, %v2982
      %v2984 = vrot.slane %v2971, %v2983
      %v2985 = vlaneseq
      %v2986 = vshrl.u32 %v2985, 7
      %v2987 = vsub.s32 3, %v2986
      %v2988 = vrot.slane %v2971, %v2987
      %v2993 = vmul.f32 %v367, %v2976
      %v2994 = vmul.f32 %v366, %v2980
      %v2995 = vmul.f32 %v365, %v2984
      %v2996 = vmul.f32 %v368, %v2988
      %v2997 = vpack.c.bf16 %v2993, %v2993
      %v2998 = vpack.c.bf16 %v2994, %v2994
      %v2999 = vpack.c.bf16 %v2995, %v2995
      %v3000 = vpack.c.bf16 %v2996, %v2996
      %v3002 = vsel %vm448, %v2967, 0
      %v3005 = vsel %vm452, %v2997, 0
      %v3008 = vsel %vm452, %v2998, 0
      %v3011 = vsel %vm452, %v2999, 0
      %v3014 = vsel %vm452, %v3000, 0
      %3016 = vmatprep.subr.bf16.mxu0 0
      %3017 = vmatpush1.bf16.msra.mxu0 0
      %3018 = vmatprep.subr.bf16.mxu0 0
      %3019 = vmatpush1.bf16.msra.mxu0 0
      %3020 = vmatprep.subr.bf16.mxu0 0
      %3021 = vmatpush1.bf16.msra.mxu0 0
      %3022 = vmatprep.subr.bf16.mxu0 0
      %3023 = vmatpush1.bf16.msra.mxu0 0
      %3024 = vmatprep.subr.bf16.mxu0 0
      %3025 = vmatpush1.bf16.msra.mxu0 0
      %3026 = vmatprep.subr.bf16.mxu0 0
      %3027 = vmatpush1.bf16.msra.mxu0 0
      %3028 = vmatprep.subr.bf16.mxu0 0
      %3029 = vmatpush1.bf16.msra.mxu0 0
      %3030 = vmatprep.subr.bf16.mxu0 %v3008
      %3031 = vmatpush1.bf16.msra.mxu0 %v3005
      %3032 = vmatprep.subr.bf16.mxu0 0
      %3033 = vmatpush2.bf16.msra.mxu0 0
      %3034 = vmatprep.subr.bf16.mxu0 0
      %3035 = vmatpush2.bf16.msra.mxu0 0
      %3036 = vmatprep.subr.bf16.mxu0 0
      %3037 = vmatpush2.bf16.msra.mxu0 0
      %3038 = vmatprep.subr.bf16.mxu0 0
      %3039 = vmatpush2.bf16.msra.mxu0 0
      %3040 = vmatprep.subr.bf16.mxu0 0
      %3041 = vmatpush2.bf16.msra.mxu0 0
      %3042 = vmatprep.subr.bf16.mxu0 0
      %3043 = vmatpush2.bf16.msra.mxu0 0
      %3044 = vmatprep.subr.bf16.mxu0 0
      %3045 = vmatpush2.bf16.msra.mxu0 0
      %3046 = vmatprep.subr.bf16.mxu0 0
      %3047 = vmatpush2.bf16.msra.mxu0 0
      %3048 = vmatprep.mubr.bf16.mxu0 0
      %3049 = vmatmul.mubr.bf16.gmra.mxu0 %v3002
      %v3050 = vpop.f32.mrf.mxu0
      %v3051 = vadd.f32 0.0, %v3050
      %v3052 = vpop.f32.mrf.mxu0
      %v3053 = vadd.f32 0.0, %v3052
      %v3054 = vpop.f32.mrf.mxu0
      %v3055 = vpop.f32.mrf.mxu0
      %3056 = vdwg.mxu0
      %3057 = vmatprep.subr.bf16.mxu0 0
      %3058 = vmatpush1.bf16.msra.mxu0 0
      %3059 = vmatprep.subr.bf16.mxu0 0
      %3060 = vmatpush1.bf16.msra.mxu0 0
      %3061 = vmatprep.subr.bf16.mxu0 0
      %3062 = vmatpush1.bf16.msra.mxu0 0
      %3063 = vmatprep.subr.bf16.mxu0 0
      %3064 = vmatpush1.bf16.msra.mxu0 0
      %3065 = vmatprep.subr.bf16.mxu0 0
      %3066 = vmatpush1.bf16.msra.mxu0 0
      %3067 = vmatprep.subr.bf16.mxu0 0
      %3068 = vmatpush1.bf16.msra.mxu0 0
      %3069 = vmatprep.subr.bf16.mxu0 0
      %3070 = vmatpush1.bf16.msra.mxu0 0
      %3071 = vmatprep.subr.bf16.mxu0 %v3014
      %3072 = vmatpush1.bf16.msra.mxu0 %v3011
      %3073 = vmatprep.subr.bf16.mxu0 0
      %3074 = vmatpush2.bf16.msra.mxu0 0
      %3075 = vmatprep.subr.bf16.mxu0 0
      %3076 = vmatpush2.bf16.msra.mxu0 0
      %3077 = vmatprep.subr.bf16.mxu0 0
      %3078 = vmatpush2.bf16.msra.mxu0 0
      %3079 = vmatprep.subr.bf16.mxu0 0
      %3080 = vmatpush2.bf16.msra.mxu0 0
      %3081 = vmatprep.subr.bf16.mxu0 0
      %3082 = vmatpush2.bf16.msra.mxu0 0
      %3083 = vmatprep.subr.bf16.mxu0 0
      %3084 = vmatpush2.bf16.msra.mxu0 0
      %3085 = vmatprep.subr.bf16.mxu0 0
      %3086 = vmatpush2.bf16.msra.mxu0 0
      %3087 = vmatprep.subr.bf16.mxu0 0
      %3088 = vmatpush2.bf16.msra.mxu0 0
      %3089 = vmatprep.mubr.bf16.mxu0 0
      %3090 = vmatmul.mubr.bf16.gmra.mxu0 %v3002
      %v3091 = vpop.f32.mrf.mxu0
      %v3092 = vadd.f32 0.0, %v3091
      %v3093 = vpop.f32.mrf.mxu0
      %v3094 = vadd.f32 0.0, %v3093
      %v3095 = vpop.f32.mrf.mxu0
      %v3096 = vpop.f32.mrf.mxu0
      %3097 = vdwg.mxu0
      %v3098 = vadd.f32 %v2962, %v3051
      %v3099 = vadd.f32 %v2963, %v3053
      %v3100 = vadd.f32 %v2964, %v3092
      %v3101 = vadd.f32 %v2965, %v3094
      %s3102 = scalar_lea.vmem %s1, 76
      %v3103 = vld [vmem:[%s3102] sm:$0xf]
      %v3104 = vsel %vm2968, 1, 0
      %v3105 = vcvt.s32.f32 %v3104
      %v3107 = vlaneseq
      %v3108 = vshrl.u32 %v3107, 7
      %v3109 = vsub.s32 0, %v3108
      %v3110 = vrot.slane %v3105, %v3109
      %v3111 = vlaneseq
      %v3112 = vshrl.u32 %v3111, 7
      %v3113 = vsub.s32 1, %v3112
      %v3114 = vrot.slane %v3105, %v3113
      %v3115 = vlaneseq
      %v3116 = vshrl.u32 %v3115, 7
      %v3117 = vsub.s32 2, %v3116
      %v3118 = vrot.slane %v3105, %v3117
      %v3119 = vlaneseq
      %v3120 = vshrl.u32 %v3119, 7
      %v3121 = vsub.s32 3, %v3120
      %v3122 = vrot.slane %v3105, %v3121
      %v3127 = vmul.f32 %v415, %v3110
      %v3128 = vmul.f32 %v414, %v3114
      %v3129 = vmul.f32 %v413, %v3118
      %v3130 = vmul.f32 %v416, %v3122
      %v3131 = vpack.c.bf16 %v3127, %v3127
      %v3132 = vpack.c.bf16 %v3128, %v3128
      %v3133 = vpack.c.bf16 %v3129, %v3129
      %v3134 = vpack.c.bf16 %v3130, %v3130
      %v3136 = vsel %vm448, %v3103, 0
      %v3139 = vsel %vm452, %v3131, 0
      %v3142 = vsel %vm452, %v3132, 0
      %v3145 = vsel %vm452, %v3133, 0
      %v3148 = vsel %vm452, %v3134, 0
      %3150 = vmatprep.subr.bf16.mxu0 0
      %3151 = vmatpush1.bf16.msra.mxu0 0
      %3152 = vmatprep.subr.bf16.mxu0 0
      %3153 = vmatpush1.bf16.msra.mxu0 0
      %3154 = vmatprep.subr.bf16.mxu0 0
      %3155 = vmatpush1.bf16.msra.mxu0 0
      %3156 = vmatprep.subr.bf16.mxu0 0
      %3157 = vmatpush1.bf16.msra.mxu0 0
      %3158 = vmatprep.subr.bf16.mxu0 0
      %3159 = vmatpush1.bf16.msra.mxu0 0
      %3160 = vmatprep.subr.bf16.mxu0 0
      %3161 = vmatpush1.bf16.msra.mxu0 0
      %3162 = vmatprep.subr.bf16.mxu0 0
      %3163 = vmatpush1.bf16.msra.mxu0 0
      %3164 = vmatprep.subr.bf16.mxu0 %v3142
      %3165 = vmatpush1.bf16.msra.mxu0 %v3139
      %3166 = vmatprep.subr.bf16.mxu0 0
      %3167 = vmatpush2.bf16.msra.mxu0 0
      %3168 = vmatprep.subr.bf16.mxu0 0
      %3169 = vmatpush2.bf16.msra.mxu0 0
      %3170 = vmatprep.subr.bf16.mxu0 0
      %3171 = vmatpush2.bf16.msra.mxu0 0
      %3172 = vmatprep.subr.bf16.mxu0 0
      %3173 = vmatpush2.bf16.msra.mxu0 0
      %3174 = vmatprep.subr.bf16.mxu0 0
      %3175 = vmatpush2.bf16.msra.mxu0 0
      %3176 = vmatprep.subr.bf16.mxu0 0
      %3177 = vmatpush2.bf16.msra.mxu0 0
      %3178 = vmatprep.subr.bf16.mxu0 0
      %3179 = vmatpush2.bf16.msra.mxu0 0
      %3180 = vmatprep.subr.bf16.mxu0 0
      %3181 = vmatpush2.bf16.msra.mxu0 0
      %3182 = vmatprep.mubr.bf16.mxu0 0
      %3183 = vmatmul.mubr.bf16.gmra.mxu0 %v3136
      %v3184 = vpop.f32.mrf.mxu0
      %v3185 = vadd.f32 0.0, %v3184
      %v3186 = vpop.f32.mrf.mxu0
      %v3187 = vadd.f32 0.0, %v3186
      %v3188 = vpop.f32.mrf.mxu0
      %v3189 = vpop.f32.mrf.mxu0
      %3190 = vdwg.mxu0
      %3191 = vmatprep.subr.bf16.mxu0 0
      %3192 = vmatpush1.bf16.msra.mxu0 0
      %3193 = vmatprep.subr.bf16.mxu0 0
      %3194 = vmatpush1.bf16.msra.mxu0 0
      %3195 = vmatprep.subr.bf16.mxu0 0
      %3196 = vmatpush1.bf16.msra.mxu0 0
      %3197 = vmatprep.subr.bf16.mxu0 0
      %3198 = vmatpush1.bf16.msra.mxu0 0
      %3199 = vmatprep.subr.bf16.mxu0 0
      %3200 = vmatpush1.bf16.msra.mxu0 0
      %3201 = vmatprep.subr.bf16.mxu0 0
      %3202 = vmatpush1.bf16.msra.mxu0 0
      %3203 = vmatprep.subr.bf16.mxu0 0
      %3204 = vmatpush1.bf16.msra.mxu0 0
      %3205 = vmatprep.subr.bf16.mxu0 %v3148
      %3206 = vmatpush1.bf16.msra.mxu0 %v3145
      %3207 = vmatprep.subr.bf16.mxu0 0
      %3208 = vmatpush2.bf16.msra.mxu0 0
      %3209 = vmatprep.subr.bf16.mxu0 0
      %3210 = vmatpush2.bf16.msra.mxu0 0
      %3211 = vmatprep.subr.bf16.mxu0 0
      %3212 = vmatpush2.bf16.msra.mxu0 0
      %3213 = vmatprep.subr.bf16.mxu0 0
      %3214 = vmatpush2.bf16.msra.mxu0 0
      %3215 = vmatprep.subr.bf16.mxu0 0
      %3216 = vmatpush2.bf16.msra.mxu0 0
      %3217 = vmatprep.subr.bf16.mxu0 0
      %3218 = vmatpush2.bf16.msra.mxu0 0
      %3219 = vmatprep.subr.bf16.mxu0 0
      %3220 = vmatpush2.bf16.msra.mxu0 0
      %3221 = vmatprep.subr.bf16.mxu0 0
      %3222 = vmatpush2.bf16.msra.mxu0 0
      %3223 = vmatprep.mubr.bf16.mxu0 0
      %3224 = vmatmul.mubr.bf16.gmra.mxu0 %v3136
      %v3225 = vpop.f32.mrf.mxu0
      %v3226 = vadd.f32 0.0, %v3225
      %v3227 = vpop.f32.mrf.mxu0
      %v3228 = vadd.f32 0.0, %v3227
      %v3229 = vpop.f32.mrf.mxu0
      %v3230 = vpop.f32.mrf.mxu0
      %3231 = vdwg.mxu0
      %v3232 = vadd.f32 %v3098, %v3185
      %v3233 = vadd.f32 %v3099, %v3187
      %v3234 = vadd.f32 %v3100, %v3226
      %v3235 = vadd.f32 %v3101, %v3228
      %s3236 = scalar_lea.vmem %s1, 80
      %v3237 = vld [vmem:[%s3236] sm:$0xf]
      %vm3238 = vmand %vm2968, %vm346
      %v3239 = vsel %vm3238, 1, 0
      %v3240 = vcvt.s32.f32 %v3239
      %v3242 = vlaneseq
      %v3243 = vshrl.u32 %v3242, 7
      %v3244 = vsub.s32 0, %v3243
      %v3245 = vrot.slane %v3240, %v3244
      %v3246 = vlaneseq
      %v3247 = vshrl.u32 %v3246, 7
      %v3248 = vsub.s32 1, %v3247
      %v3249 = vrot.slane %v3240, %v3248
      %v3250 = vlaneseq
      %v3251 = vshrl.u32 %v3250, 7
      %v3252 = vsub.s32 2, %v3251
      %v3253 = vrot.slane %v3240, %v3252
      %v3254 = vlaneseq
      %v3255 = vshrl.u32 %v3254, 7
      %v3256 = vsub.s32 3, %v3255
      %v3257 = vrot.slane %v3240, %v3256
      %v3262 = vmul.f32 %v657, %v3245
      %v3263 = vmul.f32 %v656, %v3249
      %v3264 = vmul.f32 %v655, %v3253
      %v3265 = vmul.f32 %v658, %v3257
      %v3266 = vpack.c.bf16 %v3262, %v3262
      %v3267 = vpack.c.bf16 %v3263, %v3263
      %v3268 = vpack.c.bf16 %v3264, %v3264
      %v3269 = vpack.c.bf16 %v3265, %v3265
      %v3271 = vsel %vm448, %v3237, 0
      %v3274 = vsel %vm452, %v3266, 0
      %v3277 = vsel %vm452, %v3267, 0
      %v3280 = vsel %vm452, %v3268, 0
      %v3283 = vsel %vm452, %v3269, 0
      %3285 = vmatprep.subr.bf16.mxu0 0
      %3286 = vmatpush1.bf16.msra.mxu0 0
      %3287 = vmatprep.subr.bf16.mxu0 0
      %3288 = vmatpush1.bf16.msra.mxu0 0
      %3289 = vmatprep.subr.bf16.mxu0 0
      %3290 = vmatpush1.bf16.msra.mxu0 0
      %3291 = vmatprep.subr.bf16.mxu0 0
      %3292 = vmatpush1.bf16.msra.mxu0 0
      %3293 = vmatprep.subr.bf16.mxu0 0
      %3294 = vmatpush1.bf16.msra.mxu0 0
      %3295 = vmatprep.subr.bf16.mxu0 0
      %3296 = vmatpush1.bf16.msra.mxu0 0
      %3297 = vmatprep.subr.bf16.mxu0 0
      %3298 = vmatpush1.bf16.msra.mxu0 0
      %3299 = vmatprep.subr.bf16.mxu0 %v3277
      %3300 = vmatpush1.bf16.msra.mxu0 %v3274
      %3301 = vmatprep.subr.bf16.mxu0 0
      %3302 = vmatpush2.bf16.msra.mxu0 0
      %3303 = vmatprep.subr.bf16.mxu0 0
      %3304 = vmatpush2.bf16.msra.mxu0 0
      %3305 = vmatprep.subr.bf16.mxu0 0
      %3306 = vmatpush2.bf16.msra.mxu0 0
      %3307 = vmatprep.subr.bf16.mxu0 0
      %3308 = vmatpush2.bf16.msra.mxu0 0
      %3309 = vmatprep.subr.bf16.mxu0 0
      %3310 = vmatpush2.bf16.msra.mxu0 0
      %3311 = vmatprep.subr.bf16.mxu0 0
      %3312 = vmatpush2.bf16.msra.mxu0 0
      %3313 = vmatprep.subr.bf16.mxu0 0
      %3314 = vmatpush2.bf16.msra.mxu0 0
      %3315 = vmatprep.subr.bf16.mxu0 0
      %3316 = vmatpush2.bf16.msra.mxu0 0
      %3317 = vmatprep.mubr.bf16.mxu0 0
      %3318 = vmatmul.mubr.bf16.gmra.mxu0 %v3271
      %v3319 = vpop.f32.mrf.mxu0
      %v3320 = vadd.f32 0.0, %v3319
      %v3321 = vpop.f32.mrf.mxu0
      %v3322 = vadd.f32 0.0, %v3321
      %v3323 = vpop.f32.mrf.mxu0
      %v3324 = vpop.f32.mrf.mxu0
      %3325 = vdwg.mxu0
      %3326 = vmatprep.subr.bf16.mxu0 0
      %3327 = vmatpush1.bf16.msra.mxu0 0
      %3328 = vmatprep.subr.bf16.mxu0 0
      %3329 = vmatpush1.bf16.msra.mxu0 0
      %3330 = vmatprep.subr.bf16.mxu0 0
      %3331 = vmatpush1.bf16.msra.mxu0 0
      %3332 = vmatprep.subr.bf16.mxu0 0
      %3333 = vmatpush1.bf16.msra.mxu0 0
      %3334 = vmatprep.subr.bf16.mxu0 0
      %3335 = vmatpush1.bf16.msra.mxu0 0
      %3336 = vmatprep.subr.bf16.mxu0 0
      %3337 = vmatpush1.bf16.msra.mxu0 0
      %3338 = vmatprep.subr.bf16.mxu0 0
      %3339 = vmatpush1.bf16.msra.mxu0 0
      %3340 = vmatprep.subr.bf16.mxu0 %v3283
      %3341 = vmatpush1.bf16.msra.mxu0 %v3280
      %3342 = vmatprep.subr.bf16.mxu0 0
      %3343 = vmatpush2.bf16.msra.mxu0 0
      %3344 = vmatprep.subr.bf16.mxu0 0
      %3345 = vmatpush2.bf16.msra.mxu0 0
      %3346 = vmatprep.subr.bf16.mxu0 0
      %3347 = vmatpush2.bf16.msra.mxu0 0
      %3348 = vmatprep.subr.bf16.mxu0 0
      %3349 = vmatpush2.bf16.msra.mxu0 0
      %3350 = vmatprep.subr.bf16.mxu0 0
      %3351 = vmatpush2.bf16.msra.mxu0 0
      %3352 = vmatprep.subr.bf16.mxu0 0
      %3353 = vmatpush2.bf16.msra.mxu0 0
      %3354 = vmatprep.subr.bf16.mxu0 0
      %3355 = vmatpush2.bf16.msra.mxu0 0
      %3356 = vmatprep.subr.bf16.mxu0 0
      %3357 = vmatpush2.bf16.msra.mxu0 0
      %3358 = vmatprep.mubr.bf16.mxu0 0
      %3359 = vmatmul.mubr.bf16.gmra.mxu0 %v3271
      %v3360 = vpop.f32.mrf.mxu0
      %v3361 = vadd.f32 0.0, %v3360
      %v3362 = vpop.f32.mrf.mxu0
      %v3363 = vadd.f32 0.0, %v3362
      %v3364 = vpop.f32.mrf.mxu0
      %v3365 = vpop.f32.mrf.mxu0
      %3366 = vdwg.mxu0
      %v3367 = vadd.f32 %v3232, %v3320
      %v3368 = vadd.f32 %v3233, %v3322
      %v3369 = vadd.f32 %v3234, %v3361
      %v3370 = vadd.f32 %v3235, %v3363
      %s3371 = scalar_lea.vmem %s1, 84
      %v3372 = vld [vmem:[%s3371] sm:$0xf]
      %vm3373 = vmand %vm342, %vm345
      %v3374 = vsel %vm3373, 1, 0
      %v3375 = vcvt.s32.f32 %v3374
      %v3377 = vlaneseq
      %v3378 = vshrl.u32 %v3377, 7
      %v3379 = vsub.s32 0, %v3378
      %v3380 = vrot.slane %v3375, %v3379
      %v3381 = vlaneseq
      %v3382 = vshrl.u32 %v3381, 7
      %v3383 = vsub.s32 1, %v3382
      %v3384 = vrot.slane %v3375, %v3383
      %v3385 = vlaneseq
      %v3386 = vshrl.u32 %v3385, 7
      %v3387 = vsub.s32 2, %v3386
      %v3388 = vrot.slane %v3375, %v3387
      %v3389 = vlaneseq
      %v3390 = vshrl.u32 %v3389, 7
      %v3391 = vsub.s32 3, %v3390
      %v3392 = vrot.slane %v3375, %v3391
      %v3397 = vmul.f32 %v805, %v3380
      %v3398 = vmul.f32 %v804, %v3384
      %v3399 = vmul.f32 %v803, %v3388
      %v3400 = vmul.f32 %v806, %v3392
      %v3401 = vpack.c.bf16 %v3397, %v3397
      %v3402 = vpack.c.bf16 %v3398, %v3398
      %v3403 = vpack.c.bf16 %v3399, %v3399
      %v3404 = vpack.c.bf16 %v3400, %v3400
      %v3406 = vsel %vm448, %v3372, 0
      %v3409 = vsel %vm452, %v3401, 0
      %v3412 = vsel %vm452, %v3402, 0
      %v3415 = vsel %vm452, %v3403, 0
      %v3418 = vsel %vm452, %v3404, 0
      %3420 = vmatprep.subr.bf16.mxu0 0
      %3421 = vmatpush1.bf16.msra.mxu0 0
      %3422 = vmatprep.subr.bf16.mxu0 0
      %3423 = vmatpush1.bf16.msra.mxu0 0
      %3424 = vmatprep.subr.bf16.mxu0 0
      %3425 = vmatpush1.bf16.msra.mxu0 0
      %3426 = vmatprep.subr.bf16.mxu0 0
      %3427 = vmatpush1.bf16.msra.mxu0 0
      %3428 = vmatprep.subr.bf16.mxu0 0
      %3429 = vmatpush1.bf16.msra.mxu0 0
      %3430 = vmatprep.subr.bf16.mxu0 0
      %3431 = vmatpush1.bf16.msra.mxu0 0
      %3432 = vmatprep.subr.bf16.mxu0 0
      %3433 = vmatpush1.bf16.msra.mxu0 0
      %3434 = vmatprep.subr.bf16.mxu0 %v3412
      %3435 = vmatpush1.bf16.msra.mxu0 %v3409
      %3436 = vmatprep.subr.bf16.mxu0 0
      %3437 = vmatpush2.bf16.msra.mxu0 0
      %3438 = vmatprep.subr.bf16.mxu0 0
      %3439 = vmatpush2.bf16.msra.mxu0 0
      %3440 = vmatprep.subr.bf16.mxu0 0
      %3441 = vmatpush2.bf16.msra.mxu0 0
      %3442 = vmatprep.subr.bf16.mxu0 0
      %3443 = vmatpush2.bf16.msra.mxu0 0
      %3444 = vmatprep.subr.bf16.mxu0 0
      %3445 = vmatpush2.bf16.msra.mxu0 0
      %3446 = vmatprep.subr.bf16.mxu0 0
      %3447 = vmatpush2.bf16.msra.mxu0 0
      %3448 = vmatprep.subr.bf16.mxu0 0
      %3449 = vmatpush2.bf16.msra.mxu0 0
      %3450 = vmatprep.subr.bf16.mxu0 0
      %3451 = vmatpush2.bf16.msra.mxu0 0
      %3452 = vmatprep.mubr.bf16.mxu0 0
      %3453 = vmatmul.mubr.bf16.gmra.mxu0 %v3406
      %v3454 = vpop.f32.mrf.mxu0
      %v3455 = vadd.f32 0.0, %v3454
      %v3456 = vpop.f32.mrf.mxu0
      %v3457 = vadd.f32 0.0, %v3456
      %v3458 = vpop.f32.mrf.mxu0
      %v3459 = vpop.f32.mrf.mxu0
      %3460 = vdwg.mxu0
      %3461 = vmatprep.subr.bf16.mxu0 0
      %3462 = vmatpush1.bf16.msra.mxu0 0
      %3463 = vmatprep.subr.bf16.mxu0 0
      %3464 = vmatpush1.bf16.msra.mxu0 0
      %3465 = vmatprep.subr.bf16.mxu0 0
      %3466 = vmatpush1.bf16.msra.mxu0 0
      %3467 = vmatprep.subr.bf16.mxu0 0
      %3468 = vmatpush1.bf16.msra.mxu0 0
      %3469 = vmatprep.subr.bf16.mxu0 0
      %3470 = vmatpush1.bf16.msra.mxu0 0
      %3471 = vmatprep.subr.bf16.mxu0 0
      %3472 = vmatpush1.bf16.msra.mxu0 0
      %3473 = vmatprep.subr.bf16.mxu0 0
      %3474 = vmatpush1.bf16.msra.mxu0 0
      %3475 = vmatprep.subr.bf16.mxu0 %v3418
      %3476 = vmatpush1.bf16.msra.mxu0 %v3415
      %3477 = vmatprep.subr.bf16.mxu0 0
      %3478 = vmatpush2.bf16.msra.mxu0 0
      %3479 = vmatprep.subr.bf16.mxu0 0
      %3480 = vmatpush2.bf16.msra.mxu0 0
      %3481 = vmatprep.subr.bf16.mxu0 0
      %3482 = vmatpush2.bf16.msra.mxu0 0
      %3483 = vmatprep.subr.bf16.mxu0 0
      %3484 = vmatpush2.bf16.msra.mxu0 0
      %3485 = vmatprep.subr.bf16.mxu0 0
      %3486 = vmatpush2.bf16.msra.mxu0 0
      %3487 = vmatprep.subr.bf16.mxu0 0
      %3488 = vmatpush2.bf16.msra.mxu0 0
      %3489 = vmatprep.subr.bf16.mxu0 0
      %3490 = vmatpush2.bf16.msra.mxu0 0
      %3491 = vmatprep.subr.bf16.mxu0 0
      %3492 = vmatpush2.bf16.msra.mxu0 0
      %3493 = vmatprep.mubr.bf16.mxu0 0
      %3494 = vmatmul.mubr.bf16.gmra.mxu0 %v3406
      %v3495 = vpop.f32.mrf.mxu0
      %v3496 = vadd.f32 0.0, %v3495
      %v3497 = vpop.f32.mrf.mxu0
      %v3498 = vadd.f32 0.0, %v3497
      %v3499 = vpop.f32.mrf.mxu0
      %v3500 = vpop.f32.mrf.mxu0
      %3501 = vdwg.mxu0
      %v3502 = vadd.f32 %v3367, %v3455
      %v3503 = vadd.f32 %v3368, %v3457
      %v3504 = vadd.f32 %v3369, %v3496
      %v3505 = vadd.f32 %v3370, %v3498
      %s3506 = scalar_lea.vmem %s1, 88
      %v3507 = vld [vmem:[%s3506] sm:$0xf]
      %v3508 = vsel %vm342, 1, 0
      %v3509 = vcvt.s32.f32 %v3508
      %v3511 = vlaneseq
      %v3512 = vshrl.u32 %v3511, 7
      %v3513 = vsub.s32 0, %v3512
      %v3514 = vrot.slane %v3509, %v3513
      %v3515 = vlaneseq
      %v3516 = vshrl.u32 %v3515, 7
      %v3517 = vsub.s32 1, %v3516
      %v3518 = vrot.slane %v3509, %v3517
      %v3519 = vlaneseq
      %v3520 = vshrl.u32 %v3519, 7
      %v3521 = vsub.s32 2, %v3520
      %v3522 = vrot.slane %v3509, %v3521
      %v3523 = vlaneseq
      %v3524 = vshrl.u32 %v3523, 7
      %v3525 = vsub.s32 3, %v3524
      %v3526 = vrot.slane %v3509, %v3525
      %v3531 = vmul.f32 %v953, %v3514
      %v3532 = vmul.f32 %v952, %v3518
      %v3533 = vmul.f32 %v951, %v3522
      %v3534 = vmul.f32 %v954, %v3526
      %v3535 = vpack.c.bf16 %v3531, %v3531
      %v3536 = vpack.c.bf16 %v3532, %v3532
      %v3537 = vpack.c.bf16 %v3533, %v3533
      %v3538 = vpack.c.bf16 %v3534, %v3534
      %v3540 = vsel %vm448, %v3507, 0
      %v3543 = vsel %vm452, %v3535, 0
      %v3546 = vsel %vm452, %v3536, 0
      %v3549 = vsel %vm452, %v3537, 0
      %v3552 = vsel %vm452, %v3538, 0
      %3554 = vmatprep.subr.bf16.mxu0 0
      %3555 = vmatpush1.bf16.msra.mxu0 0
      %3556 = vmatprep.subr.bf16.mxu0 0
      %3557 = vmatpush1.bf16.msra.mxu0 0
      %3558 = vmatprep.subr.bf16.mxu0 0
      %3559 = vmatpush1.bf16.msra.mxu0 0
      %3560 = vmatprep.subr.bf16.mxu0 0
      %3561 = vmatpush1.bf16.msra.mxu0 0
      %3562 = vmatprep.subr.bf16.mxu0 0
      %3563 = vmatpush1.bf16.msra.mxu0 0
      %3564 = vmatprep.subr.bf16.mxu0 0
      %3565 = vmatpush1.bf16.msra.mxu0 0
      %3566 = vmatprep.subr.bf16.mxu0 0
      %3567 = vmatpush1.bf16.msra.mxu0 0
      %3568 = vmatprep.subr.bf16.mxu0 %v3546
      %3569 = vmatpush1.bf16.msra.mxu0 %v3543
      %3570 = vmatprep.subr.bf16.mxu0 0
      %3571 = vmatpush2.bf16.msra.mxu0 0
      %3572 = vmatprep.subr.bf16.mxu0 0
      %3573 = vmatpush2.bf16.msra.mxu0 0
      %3574 = vmatprep.subr.bf16.mxu0 0
      %3575 = vmatpush2.bf16.msra.mxu0 0
      %3576 = vmatprep.subr.bf16.mxu0 0
      %3577 = vmatpush2.bf16.msra.mxu0 0
      %3578 = vmatprep.subr.bf16.mxu0 0
      %3579 = vmatpush2.bf16.msra.mxu0 0
      %3580 = vmatprep.subr.bf16.mxu0 0
      %3581 = vmatpush2.bf16.msra.mxu0 0
      %3582 = vmatprep.subr.bf16.mxu0 0
      %3583 = vmatpush2.bf16.msra.mxu0 0
      %3584 = vmatprep.subr.bf16.mxu0 0
      %3585 = vmatpush2.bf16.msra.mxu0 0
      %3586 = vmatprep.mubr.bf16.mxu0 0
      %3587 = vmatmul.mubr.bf16.gmra.mxu0 %v3540
      %v3588 = vpop.f32.mrf.mxu0
      %v3589 = vadd.f32 0.0, %v3588
      %v3590 = vpop.f32.mrf.mxu0
      %v3591 = vadd.f32 0.0, %v3590
      %v3592 = vpop.f32.mrf.mxu0
      %v3593 = vpop.f32.mrf.mxu0
      %3594 = vdwg.mxu0
      %3595 = vmatprep.subr.bf16.mxu0 0
      %3596 = vmatpush1.bf16.msra.mxu0 0
      %3597 = vmatprep.subr.bf16.mxu0 0
      %3598 = vmatpush1.bf16.msra.mxu0 0
      %3599 = vmatprep.subr.bf16.mxu0 0
      %3600 = vmatpush1.bf16.msra.mxu0 0
      %3601 = vmatprep.subr.bf16.mxu0 0
      %3602 = vmatpush1.bf16.msra.mxu0 0
      %3603 = vmatprep.subr.bf16.mxu0 0
      %3604 = vmatpush1.bf16.msra.mxu0 0
      %3605 = vmatprep.subr.bf16.mxu0 0
      %3606 = vmatpush1.bf16.msra.mxu0 0
      %3607 = vmatprep.subr.bf16.mxu0 0
      %3608 = vmatpush1.bf16.msra.mxu0 0
      %3609 = vmatprep.subr.bf16.mxu0 %v3552
      %3610 = vmatpush1.bf16.msra.mxu0 %v3549
      %3611 = vmatprep.subr.bf16.mxu0 0
      %3612 = vmatpush2.bf16.msra.mxu0 0
      %3613 = vmatprep.subr.bf16.mxu0 0
      %3614 = vmatpush2.bf16.msra.mxu0 0
      %3615 = vmatprep.subr.bf16.mxu0 0
      %3616 = vmatpush2.bf16.msra.mxu0 0
      %3617 = vmatprep.subr.bf16.mxu0 0
      %3618 = vmatpush2.bf16.msra.mxu0 0
      %3619 = vmatprep.subr.bf16.mxu0 0
      %3620 = vmatpush2.bf16.msra.mxu0 0
      %3621 = vmatprep.subr.bf16.mxu0 0
      %3622 = vmatpush2.bf16.msra.mxu0 0
      %3623 = vmatprep.subr.bf16.mxu0 0
      %3624 = vmatpush2.bf16.msra.mxu0 0
      %3625 = vmatprep.subr.bf16.mxu0 0
      %3626 = vmatpush2.bf16.msra.mxu0 0
      %3627 = vmatprep.mubr.bf16.mxu0 0
      %3628 = vmatmul.mubr.bf16.gmra.mxu0 %v3540
      %v3629 = vpop.f32.mrf.mxu0
      %v3630 = vadd.f32 0.0, %v3629
      %v3631 = vpop.f32.mrf.mxu0
      %v3632 = vadd.f32 0.0, %v3631
      %v3633 = vpop.f32.mrf.mxu0
      %v3634 = vpop.f32.mrf.mxu0
      %3635 = vdwg.mxu0
      %v3636 = vadd.f32 %v3502, %v3589
      %v3637 = vadd.f32 %v3503, %v3591
      %v3638 = vadd.f32 %v3504, %v3630
      %v3639 = vadd.f32 %v3505, %v3632
      %s3640 = scalar_lea.vmem %s1, 92
      %v3641 = vld [vmem:[%s3640] sm:$0xf]
      %vm3642 = vmand %vm342, %vm346
      %v3643 = vsel %vm3642, 1, 0
      %v3644 = vcvt.s32.f32 %v3643
      %v3646 = vlaneseq
      %v3647 = vshrl.u32 %v3646, 7
      %v3648 = vsub.s32 0, %v3647
      %v3649 = vrot.slane %v3644, %v3648
      %v3650 = vlaneseq
      %v3651 = vshrl.u32 %v3650, 7
      %v3652 = vsub.s32 1, %v3651
      %v3653 = vrot.slane %v3644, %v3652
      %v3654 = vlaneseq
      %v3655 = vshrl.u32 %v3654, 7
      %v3656 = vsub.s32 2, %v3655
      %v3657 = vrot.slane %v3644, %v3656
      %v3658 = vlaneseq
      %v3659 = vshrl.u32 %v3658, 7
      %v3660 = vsub.s32 3, %v3659
      %v3661 = vrot.slane %v3644, %v3660
      %v3666 = vmul.f32 %v1100, %v3649
      %v3667 = vmul.f32 %v1099, %v3653
      %v3668 = vmul.f32 %v1098, %v3657
      %v3669 = vmul.f32 %v1101, %v3661
      %v3670 = vpack.c.bf16 %v3666, %v3666
      %v3671 = vpack.c.bf16 %v3667, %v3667
      %v3672 = vpack.c.bf16 %v3668, %v3668
      %v3673 = vpack.c.bf16 %v3669, %v3669
      %v3675 = vsel %vm448, %v3641, 0
      %v3678 = vsel %vm452, %v3670, 0
      %v3681 = vsel %vm452, %v3671, 0
      %v3684 = vsel %vm452, %v3672, 0
      %v3687 = vsel %vm452, %v3673, 0
      %3689 = vmatprep.subr.bf16.mxu0 0
      %3690 = vmatpush1.bf16.msra.mxu0 0
      %3691 = vmatprep.subr.bf16.mxu0 0
      %3692 = vmatpush1.bf16.msra.mxu0 0
      %3693 = vmatprep.subr.bf16.mxu0 0
      %3694 = vmatpush1.bf16.msra.mxu0 0
      %3695 = vmatprep.subr.bf16.mxu0 0
      %3696 = vmatpush1.bf16.msra.mxu0 0
      %3697 = vmatprep.subr.bf16.mxu0 0
      %3698 = vmatpush1.bf16.msra.mxu0 0
      %3699 = vmatprep.subr.bf16.mxu0 0
      %3700 = vmatpush1.bf16.msra.mxu0 0
      %3701 = vmatprep.subr.bf16.mxu0 0
      %3702 = vmatpush1.bf16.msra.mxu0 0
      %3703 = vmatprep.subr.bf16.mxu0 %v3681
      %3704 = vmatpush1.bf16.msra.mxu0 %v3678
      %3705 = vmatprep.subr.bf16.mxu0 0
      %3706 = vmatpush2.bf16.msra.mxu0 0
      %3707 = vmatprep.subr.bf16.mxu0 0
      %3708 = vmatpush2.bf16.msra.mxu0 0
      %3709 = vmatprep.subr.bf16.mxu0 0
      %3710 = vmatpush2.bf16.msra.mxu0 0
      %3711 = vmatprep.subr.bf16.mxu0 0
      %3712 = vmatpush2.bf16.msra.mxu0 0
      %3713 = vmatprep.subr.bf16.mxu0 0
      %3714 = vmatpush2.bf16.msra.mxu0 0
      %3715 = vmatprep.subr.bf16.mxu0 0
      %3716 = vmatpush2.bf16.msra.mxu0 0
      %3717 = vmatprep.subr.bf16.mxu0 0
      %3718 = vmatpush2.bf16.msra.mxu0 0
      %3719 = vmatprep.subr.bf16.mxu0 0
      %3720 = vmatpush2.bf16.msra.mxu0 0
      %3721 = vmatprep.mubr.bf16.mxu0 0
      %3722 = vmatmul.mubr.bf16.gmra.mxu0 %v3675
      %v3723 = vpop.f32.mrf.mxu0
      %v3724 = vadd.f32 0.0, %v3723
      %v3725 = vpop.f32.mrf.mxu0
      %v3726 = vadd.f32 0.0, %v3725
      %v3727 = vpop.f32.mrf.mxu0
      %v3728 = vpop.f32.mrf.mxu0
      %3729 = vdwg.mxu0
      %3730 = vmatprep.subr.bf16.mxu0 0
      %3731 = vmatpush1.bf16.msra.mxu0 0
      %3732 = vmatprep.subr.bf16.mxu0 0
      %3733 = vmatpush1.bf16.msra.mxu0 0
      %3734 = vmatprep.subr.bf16.mxu0 0
      %3735 = vmatpush1.bf16.msra.mxu0 0
      %3736 = vmatprep.subr.bf16.mxu0 0
      %3737 = vmatpush1.bf16.msra.mxu0 0
      %3738 = vmatprep.subr.bf16.mxu0 0
      %3739 = vmatpush1.bf16.msra.mxu0 0
      %3740 = vmatprep.subr.bf16.mxu0 0
      %3741 = vmatpush1.bf16.msra.mxu0 0
      %3742 = vmatprep.subr.bf16.mxu0 0
      %3743 = vmatpush1.bf16.msra.mxu0 0
      %3744 = vmatprep.subr.bf16.mxu0 %v3687
      %3745 = vmatpush1.bf16.msra.mxu0 %v3684
      %3746 = vmatprep.subr.bf16.mxu0 0
      %3747 = vmatpush2.bf16.msra.mxu0 0
      %3748 = vmatprep.subr.bf16.mxu0 0
      %3749 = vmatpush2.bf16.msra.mxu0 0
      %3750 = vmatprep.subr.bf16.mxu0 0
      %3751 = vmatpush2.bf16.msra.mxu0 0
      %3752 = vmatprep.subr.bf16.mxu0 0
      %3753 = vmatpush2.bf16.msra.mxu0 0
      %3754 = vmatprep.subr.bf16.mxu0 0
      %3755 = vmatpush2.bf16.msra.mxu0 0
      %3756 = vmatprep.subr.bf16.mxu0 0
      %3757 = vmatpush2.bf16.msra.mxu0 0
      %3758 = vmatprep.subr.bf16.mxu0 0
      %3759 = vmatpush2.bf16.msra.mxu0 0
      %3760 = vmatprep.subr.bf16.mxu0 0
      %3761 = vmatpush2.bf16.msra.mxu0 0
      %3762 = vmatprep.mubr.bf16.mxu0 0
      %3763 = vmatmul.mubr.bf16.gmra.mxu0 %v3675
      %v3764 = vpop.f32.mrf.mxu0
      %v3765 = vadd.f32 0.0, %v3764
      %v3766 = vpop.f32.mrf.mxu0
      %v3767 = vadd.f32 0.0, %v3766
      %v3768 = vpop.f32.mrf.mxu0
      %v3769 = vpop.f32.mrf.mxu0
      %3770 = vdwg.mxu0
      %v3771 = vadd.f32 %v3636, %v3724
      %v3772 = vadd.f32 %v3637, %v3726
      %v3773 = vadd.f32 %v3638, %v3765
      %v3774 = vadd.f32 %v3639, %v3767
      %s3775 = scalar_lea.vmem %s1, 96
      %v3776 = vld [vmem:[%s3775] sm:$0xf]
      %vm3777 = vmand %vm342, %vm344
      %vm3778 = vmand %vm3777, %vm345
      %v3779 = vsel %vm3778, 1, 0
      %v3780 = vcvt.s32.f32 %v3779
      %v3782 = vlaneseq
      %v3783 = vshrl.u32 %v3782, 7
      %v3784 = vsub.s32 0, %v3783
      %v3785 = vrot.slane %v3780, %v3784
      %v3786 = vlaneseq
      %v3787 = vshrl.u32 %v3786, 7
      %v3788 = vsub.s32 1, %v3787
      %v3789 = vrot.slane %v3780, %v3788
      %v3790 = vlaneseq
      %v3791 = vshrl.u32 %v3790, 7
      %v3792 = vsub.s32 2, %v3791
      %v3793 = vrot.slane %v3780, %v3792
      %v3794 = vlaneseq
      %v3795 = vshrl.u32 %v3794, 7
      %v3796 = vsub.s32 3, %v3795
      %v3797 = vrot.slane %v3780, %v3796
      %v3802 = vmul.f32 %v1248, %v3785
      %v3803 = vmul.f32 %v1247, %v3789
      %v3804 = vmul.f32 %v1246, %v3793
      %v3805 = vmul.f32 %v1249, %v3797
      %v3806 = vpack.c.bf16 %v3802, %v3802
      %v3807 = vpack.c.bf16 %v3803, %v3803
      %v3808 = vpack.c.bf16 %v3804, %v3804
      %v3809 = vpack.c.bf16 %v3805, %v3805
      %v3811 = vsel %vm448, %v3776, 0
      %v3814 = vsel %vm452, %v3806, 0
      %v3817 = vsel %vm452, %v3807, 0
      %v3820 = vsel %vm452, %v3808, 0
      %v3823 = vsel %vm452, %v3809, 0
      %3825 = vmatprep.subr.bf16.mxu0 0
      %3826 = vmatpush1.bf16.msra.mxu0 0
      %3827 = vmatprep.subr.bf16.mxu0 0
      %3828 = vmatpush1.bf16.msra.mxu0 0
      %3829 = vmatprep.subr.bf16.mxu0 0
      %3830 = vmatpush1.bf16.msra.mxu0 0
      %3831 = vmatprep.subr.bf16.mxu0 0
      %3832 = vmatpush1.bf16.msra.mxu0 0
      %3833 = vmatprep.subr.bf16.mxu0 0
      %3834 = vmatpush1.bf16.msra.mxu0 0
      %3835 = vmatprep.subr.bf16.mxu0 0
      %3836 = vmatpush1.bf16.msra.mxu0 0
      %3837 = vmatprep.subr.bf16.mxu0 0
      %3838 = vmatpush1.bf16.msra.mxu0 0
      %3839 = vmatprep.subr.bf16.mxu0 %v3817
      %3840 = vmatpush1.bf16.msra.mxu0 %v3814
      %3841 = vmatprep.subr.bf16.mxu0 0
      %3842 = vmatpush2.bf16.msra.mxu0 0
      %3843 = vmatprep.subr.bf16.mxu0 0
      %3844 = vmatpush2.bf16.msra.mxu0 0
      %3845 = vmatprep.subr.bf16.mxu0 0
      %3846 = vmatpush2.bf16.msra.mxu0 0
      %3847 = vmatprep.subr.bf16.mxu0 0
      %3848 = vmatpush2.bf16.msra.mxu0 0
      %3849 = vmatprep.subr.bf16.mxu0 0
      %3850 = vmatpush2.bf16.msra.mxu0 0
      %3851 = vmatprep.subr.bf16.mxu0 0
      %3852 = vmatpush2.bf16.msra.mxu0 0
      %3853 = vmatprep.subr.bf16.mxu0 0
      %3854 = vmatpush2.bf16.msra.mxu0 0
      %3855 = vmatprep.subr.bf16.mxu0 0
      %3856 = vmatpush2.bf16.msra.mxu0 0
      %3857 = vmatprep.mubr.bf16.mxu0 0
      %3858 = vmatmul.mubr.bf16.gmra.mxu0 %v3811
      %v3859 = vpop.f32.mrf.mxu0
      %v3860 = vadd.f32 0.0, %v3859
      %v3861 = vpop.f32.mrf.mxu0
      %v3862 = vadd.f32 0.0, %v3861
      %v3863 = vpop.f32.mrf.mxu0
      %v3864 = vpop.f32.mrf.mxu0
      %3865 = vdwg.mxu0
      %3866 = vmatprep.subr.bf16.mxu0 0
      %3867 = vmatpush1.bf16.msra.mxu0 0
      %3868 = vmatprep.subr.bf16.mxu0 0
      %3869 = vmatpush1.bf16.msra.mxu0 0
      %3870 = vmatprep.subr.bf16.mxu0 0
      %3871 = vmatpush1.bf16.msra.mxu0 0
      %3872 = vmatprep.subr.bf16.mxu0 0
      %3873 = vmatpush1.bf16.msra.mxu0 0
      %3874 = vmatprep.subr.bf16.mxu0 0
      %3875 = vmatpush1.bf16.msra.mxu0 0
      %3876 = vmatprep.subr.bf16.mxu0 0
      %3877 = vmatpush1.bf16.msra.mxu0 0
      %3878 = vmatprep.subr.bf16.mxu0 0
      %3879 = vmatpush1.bf16.msra.mxu0 0
      %3880 = vmatprep.subr.bf16.mxu0 %v3823
      %3881 = vmatpush1.bf16.msra.mxu0 %v3820
      %3882 = vmatprep.subr.bf16.mxu0 0
      %3883 = vmatpush2.bf16.msra.mxu0 0
      %3884 = vmatprep.subr.bf16.mxu0 0
      %3885 = vmatpush2.bf16.msra.mxu0 0
      %3886 = vmatprep.subr.bf16.mxu0 0
      %3887 = vmatpush2.bf16.msra.mxu0 0
      %3888 = vmatprep.subr.bf16.mxu0 0
      %3889 = vmatpush2.bf16.msra.mxu0 0
      %3890 = vmatprep.subr.bf16.mxu0 0
      %3891 = vmatpush2.bf16.msra.mxu0 0
      %3892 = vmatprep.subr.bf16.mxu0 0
      %3893 = vmatpush2.bf16.msra.mxu0 0
      %3894 = vmatprep.subr.bf16.mxu0 0
      %3895 = vmatpush2.bf16.msra.mxu0 0
      %3896 = vmatprep.subr.bf16.mxu0 0
      %3897 = vmatpush2.bf16.msra.mxu0 0
      %3898 = vmatprep.mubr.bf16.mxu0 0
      %3899 = vmatmul.mubr.bf16.gmra.mxu0 %v3811
      %v3900 = vpop.f32.mrf.mxu0
      %v3901 = vadd.f32 0.0, %v3900
      %v3902 = vpop.f32.mrf.mxu0
      %v3903 = vadd.f32 0.0, %v3902
      %v3904 = vpop.f32.mrf.mxu0
      %v3905 = vpop.f32.mrf.mxu0
      %3906 = vdwg.mxu0
      %v3907 = vadd.f32 %v3771, %v3860
      %v3908 = vadd.f32 %v3772, %v3862
      %v3909 = vadd.f32 %v3773, %v3901
      %v3910 = vadd.f32 %v3774, %v3903
      %s3911 = scalar_lea.vmem %s1, 100
      %v3912 = vld [vmem:[%s3911] sm:$0xf]
      %v3913 = vsel %vm3777, 1, 0
      %v3914 = vcvt.s32.f32 %v3913
      %v3916 = vlaneseq
      %v3917 = vshrl.u32 %v3916, 7
      %v3918 = vsub.s32 0, %v3917
      %v3919 = vrot.slane %v3914, %v3918
      %v3920 = vlaneseq
      %v3921 = vshrl.u32 %v3920, 7
      %v3922 = vsub.s32 1, %v3921
      %v3923 = vrot.slane %v3914, %v3922
      %v3924 = vlaneseq
      %v3925 = vshrl.u32 %v3924, 7
      %v3926 = vsub.s32 2, %v3925
      %v3927 = vrot.slane %v3914, %v3926
      %v3928 = vlaneseq
      %v3929 = vshrl.u32 %v3928, 7
      %v3930 = vsub.s32 3, %v3929
      %v3931 = vrot.slane %v3914, %v3930
      %v3936 = vmul.f32 %v1397, %v3919
      %v3937 = vmul.f32 %v1396, %v3923
      %v3938 = vmul.f32 %v1395, %v3927
      %v3939 = vmul.f32 %v1398, %v3931
      %v3940 = vpack.c.bf16 %v3936, %v3936
      %v3941 = vpack.c.bf16 %v3937, %v3937
      %v3942 = vpack.c.bf16 %v3938, %v3938
      %v3943 = vpack.c.bf16 %v3939, %v3939
      %v3945 = vsel %vm448, %v3912, 0
      %v3948 = vsel %vm452, %v3940, 0
      %v3951 = vsel %vm452, %v3941, 0
      %v3954 = vsel %vm452, %v3942, 0
      %v3957 = vsel %vm452, %v3943, 0
      %3959 = vmatprep.subr.bf16.mxu0 0
      %3960 = vmatpush1.bf16.msra.mxu0 0
      %3961 = vmatprep.subr.bf16.mxu0 0
      %3962 = vmatpush1.bf16.msra.mxu0 0
      %3963 = vmatprep.subr.bf16.mxu0 0
      %3964 = vmatpush1.bf16.msra.mxu0 0
      %3965 = vmatprep.subr.bf16.mxu0 0
      %3966 = vmatpush1.bf16.msra.mxu0 0
      %3967 = vmatprep.subr.bf16.mxu0 0
      %3968 = vmatpush1.bf16.msra.mxu0 0
      %3969 = vmatprep.subr.bf16.mxu0 0
      %3970 = vmatpush1.bf16.msra.mxu0 0
      %3971 = vmatprep.subr.bf16.mxu0 0
      %3972 = vmatpush1.bf16.msra.mxu0 0
      %3973 = vmatprep.subr.bf16.mxu0 %v3951
      %3974 = vmatpush1.bf16.msra.mxu0 %v3948
      %3975 = vmatprep.subr.bf16.mxu0 0
      %3976 = vmatpush2.bf16.msra.mxu0 0
      %3977 = vmatprep.subr.bf16.mxu0 0
      %3978 = vmatpush2.bf16.msra.mxu0 0
      %3979 = vmatprep.subr.bf16.mxu0 0
      %3980 = vmatpush2.bf16.msra.mxu0 0
      %3981 = vmatprep.subr.bf16.mxu0 0
      %3982 = vmatpush2.bf16.msra.mxu0 0
      %3983 = vmatprep.subr.bf16.mxu0 0
      %3984 = vmatpush2.bf16.msra.mxu0 0
      %3985 = vmatprep.subr.bf16.mxu0 0
      %3986 = vmatpush2.bf16.msra.mxu0 0
      %3987 = vmatprep.subr.bf16.mxu0 0
      %3988 = vmatpush2.bf16.msra.mxu0 0
      %3989 = vmatprep.subr.bf16.mxu0 0
      %3990 = vmatpush2.bf16.msra.mxu0 0
      %3991 = vmatprep.mubr.bf16.mxu0 0
      %3992 = vmatmul.mubr.bf16.gmra.mxu0 %v3945
      %v3993 = vpop.f32.mrf.mxu0
      %v3994 = vadd.f32 0.0, %v3993
      %v3995 = vpop.f32.mrf.mxu0
      %v3996 = vadd.f32 0.0, %v3995
      %v3997 = vpop.f32.mrf.mxu0
      %v3998 = vpop.f32.mrf.mxu0
      %3999 = vdwg.mxu0
      %4000 = vmatprep.subr.bf16.mxu0 0
      %4001 = vmatpush1.bf16.msra.mxu0 0
      %4002 = vmatprep.subr.bf16.mxu0 0
      %4003 = vmatpush1.bf16.msra.mxu0 0
      %4004 = vmatprep.subr.bf16.mxu0 0
      %4005 = vmatpush1.bf16.msra.mxu0 0
      %4006 = vmatprep.subr.bf16.mxu0 0
      %4007 = vmatpush1.bf16.msra.mxu0 0
      %4008 = vmatprep.subr.bf16.mxu0 0
      %4009 = vmatpush1.bf16.msra.mxu0 0
      %4010 = vmatprep.subr.bf16.mxu0 0
      %4011 = vmatpush1.bf16.msra.mxu0 0
      %4012 = vmatprep.subr.bf16.mxu0 0
      %4013 = vmatpush1.bf16.msra.mxu0 0
      %4014 = vmatprep.subr.bf16.mxu0 %v3957
      %4015 = vmatpush1.bf16.msra.mxu0 %v3954
      %4016 = vmatprep.subr.bf16.mxu0 0
      %4017 = vmatpush2.bf16.msra.mxu0 0
      %4018 = vmatprep.subr.bf16.mxu0 0
      %4019 = vmatpush2.bf16.msra.mxu0 0
      %4020 = vmatprep.subr.bf16.mxu0 0
      %4021 = vmatpush2.bf16.msra.mxu0 0
      %4022 = vmatprep.subr.bf16.mxu0 0
      %4023 = vmatpush2.bf16.msra.mxu0 0
      %4024 = vmatprep.subr.bf16.mxu0 0
      %4025 = vmatpush2.bf16.msra.mxu0 0
      %4026 = vmatprep.subr.bf16.mxu0 0
      %4027 = vmatpush2.bf16.msra.mxu0 0
      %4028 = vmatprep.subr.bf16.mxu0 0
      %4029 = vmatpush2.bf16.msra.mxu0 0
      %4030 = vmatprep.subr.bf16.mxu0 0
      %4031 = vmatpush2.bf16.msra.mxu0 0
      %4032 = vmatprep.mubr.bf16.mxu0 0
      %4033 = vmatmul.mubr.bf16.gmra.mxu0 %v3945
      %v4034 = vpop.f32.mrf.mxu0
      %v4035 = vadd.f32 0.0, %v4034
      %v4036 = vpop.f32.mrf.mxu0
      %v4037 = vadd.f32 0.0, %v4036
      %v4038 = vpop.f32.mrf.mxu0
      %v4039 = vpop.f32.mrf.mxu0
      %4040 = vdwg.mxu0
      %v4041 = vadd.f32 %v3907, %v3994
      %v4042 = vadd.f32 %v3908, %v3996
      %v4043 = vadd.f32 %v3909, %v4035
      %v4044 = vadd.f32 %v3910, %v4037
      %s4045 = scalar_lea.vmem %s1, 104
      %v4046 = vld [vmem:[%s4045] sm:$0xf]
      %vm4047 = vmand %vm3777, %vm346
      %v4048 = vsel %vm4047, 1, 0
      %v4049 = vcvt.s32.f32 %v4048
      %v4051 = vlaneseq
      %v4052 = vshrl.u32 %v4051, 7
      %v4053 = vsub.s32 0, %v4052
      %v4054 = vrot.slane %v4049, %v4053
      %v4055 = vlaneseq
      %v4056 = vshrl.u32 %v4055, 7
      %v4057 = vsub.s32 1, %v4056
      %v4058 = vrot.slane %v4049, %v4057
      %v4059 = vlaneseq
      %v4060 = vshrl.u32 %v4059, 7
      %v4061 = vsub.s32 2, %v4060
      %v4062 = vrot.slane %v4049, %v4061
      %v4063 = vlaneseq
      %v4064 = vshrl.u32 %v4063, 7
      %v4065 = vsub.s32 3, %v4064
      %v4066 = vrot.slane %v4049, %v4065
      %v4071 = vmul.f32 %v1544, %v4054
      %v4072 = vmul.f32 %v1543, %v4058
      %v4073 = vmul.f32 %v1542, %v4062
      %v4074 = vmul.f32 %v1545, %v4066
      %v4075 = vpack.c.bf16 %v4071, %v4071
      %v4076 = vpack.c.bf16 %v4072, %v4072
      %v4077 = vpack.c.bf16 %v4073, %v4073
      %v4078 = vpack.c.bf16 %v4074, %v4074
      %v4080 = vsel %vm448, %v4046, 0
      %v4083 = vsel %vm452, %v4075, 0
      %v4086 = vsel %vm452, %v4076, 0
      %v4089 = vsel %vm452, %v4077, 0
      %v4092 = vsel %vm452, %v4078, 0
      %4094 = vmatprep.subr.bf16.mxu0 0
      %4095 = vmatpush1.bf16.msra.mxu0 0
      %4096 = vmatprep.subr.bf16.mxu0 0
      %4097 = vmatpush1.bf16.msra.mxu0 0
      %4098 = vmatprep.subr.bf16.mxu0 0
      %4099 = vmatpush1.bf16.msra.mxu0 0
      %4100 = vmatprep.subr.bf16.mxu0 0
      %4101 = vmatpush1.bf16.msra.mxu0 0
      %4102 = vmatprep.subr.bf16.mxu0 0
      %4103 = vmatpush1.bf16.msra.mxu0 0
      %4104 = vmatprep.subr.bf16.mxu0 0
      %4105 = vmatpush1.bf16.msra.mxu0 0
      %4106 = vmatprep.subr.bf16.mxu0 0
      %4107 = vmatpush1.bf16.msra.mxu0 0
      %4108 = vmatprep.subr.bf16.mxu0 %v4086
      %4109 = vmatpush1.bf16.msra.mxu0 %v4083
      %4110 = vmatprep.subr.bf16.mxu0 0
      %4111 = vmatpush2.bf16.msra.mxu0 0
      %4112 = vmatprep.subr.bf16.mxu0 0
      %4113 = vmatpush2.bf16.msra.mxu0 0
      %4114 = vmatprep.subr.bf16.mxu0 0
      %4115 = vmatpush2.bf16.msra.mxu0 0
      %4116 = vmatprep.subr.bf16.mxu0 0
      %4117 = vmatpush2.bf16.msra.mxu0 0
      %4118 = vmatprep.subr.bf16.mxu0 0
      %4119 = vmatpush2.bf16.msra.mxu0 0
      %4120 = vmatprep.subr.bf16.mxu0 0
      %4121 = vmatpush2.bf16.msra.mxu0 0
      %4122 = vmatprep.subr.bf16.mxu0 0
      %4123 = vmatpush2.bf16.msra.mxu0 0
      %4124 = vmatprep.subr.bf16.mxu0 0
      %4125 = vmatpush2.bf16.msra.mxu0 0
      %4126 = vmatprep.mubr.bf16.mxu0 0
      %4127 = vmatmul.mubr.bf16.gmra.mxu0 %v4080
      %v4128 = vpop.f32.mrf.mxu0
      %v4129 = vadd.f32 0.0, %v4128
      %v4130 = vpop.f32.mrf.mxu0
      %v4131 = vadd.f32 0.0, %v4130
      %v4132 = vpop.f32.mrf.mxu0
      %v4133 = vpop.f32.mrf.mxu0
      %4134 = vdwg.mxu0
      %4135 = vmatprep.subr.bf16.mxu0 0
      %4136 = vmatpush1.bf16.msra.mxu0 0
      %4137 = vmatprep.subr.bf16.mxu0 0
      %4138 = vmatpush1.bf16.msra.mxu0 0
      %4139 = vmatprep.subr.bf16.mxu0 0
      %4140 = vmatpush1.bf16.msra.mxu0 0
      %4141 = vmatprep.subr.bf16.mxu0 0
      %4142 = vmatpush1.bf16.msra.mxu0 0
      %4143 = vmatprep.subr.bf16.mxu0 0
      %4144 = vmatpush1.bf16.msra.mxu0 0
      %4145 = vmatprep.subr.bf16.mxu0 0
      %4146 = vmatpush1.bf16.msra.mxu0 0
      %4147 = vmatprep.subr.bf16.mxu0 0
      %4148 = vmatpush1.bf16.msra.mxu0 0
      %4149 = vmatprep.subr.bf16.mxu0 %v4092
      %4150 = vmatpush1.bf16.msra.mxu0 %v4089
      %4151 = vmatprep.subr.bf16.mxu0 0
      %4152 = vmatpush2.bf16.msra.mxu0 0
      %4153 = vmatprep.subr.bf16.mxu0 0
      %4154 = vmatpush2.bf16.msra.mxu0 0
      %4155 = vmatprep.subr.bf16.mxu0 0
      %4156 = vmatpush2.bf16.msra.mxu0 0
      %4157 = vmatprep.subr.bf16.mxu0 0
      %4158 = vmatpush2.bf16.msra.mxu0 0
      %4159 = vmatprep.subr.bf16.mxu0 0
      %4160 = vmatpush2.bf16.msra.mxu0 0
      %4161 = vmatprep.subr.bf16.mxu0 0
      %4162 = vmatpush2.bf16.msra.mxu0 0
      %4163 = vmatprep.subr.bf16.mxu0 0
      %4164 = vmatpush2.bf16.msra.mxu0 0
      %4165 = vmatprep.subr.bf16.mxu0 0
      %4166 = vmatpush2.bf16.msra.mxu0 0
      %4167 = vmatprep.mubr.bf16.mxu0 0
      %4168 = vmatmul.mubr.bf16.gmra.mxu0 %v4080
      %v4169 = vpop.f32.mrf.mxu0
      %v4170 = vadd.f32 0.0, %v4169
      %v4171 = vpop.f32.mrf.mxu0
      %v4172 = vadd.f32 0.0, %v4171
      %v4173 = vpop.f32.mrf.mxu0
      %v4174 = vpop.f32.mrf.mxu0
      %4175 = vdwg.mxu0
      %v4176 = vadd.f32 %v4041, %v4129
      %v4177 = vadd.f32 %v4042, %v4131
      %v4178 = vadd.f32 %v4043, %v4170
      %v4179 = vadd.f32 %v4044, %v4172
      %v4180 = vpack.c.bf16 %v4176, %v4176
      %v4181 = vpack.c.bf16 %v4177, %v4177
      %v4182 = vpack.c.bf16 %v4178, %v4178
      %v4183 = vpack.c.bf16 %v4179, %v4179
      %v4188 = vunpack.c.l.b16 %v4180
      %v4189 = vunpack.c.l.b16 %v4181
      %v4190 = vunpack.c.l.b16 %v4182
      %v4191 = vunpack.c.l.b16 %v4183
      %v4192 = vpack.c.b16 %v4189, %v4188
      %v4193 = vpack.c.b16 %v4191, %v4190
      %4196 = vst [vmem:[%s291] sm:$0xff] %v4192
      %4197 = vst [vmem:[%s291 + $0x8] sm:$0xff] %v4193
      %v4198 = vadd.f32 %v4176, %v4177
      %v4199 = vadd.f32 %v4198, %v4178
      %v4200 = vadd.f32 %v4199, %v4179
      %4201 = vadd.xlane.f32.xlu0 %v4200
      %v4202 = vpop.xlane.xlu0 %4201
      %vm4203 = vcmask 7168
      %4204 = vst.msk [vmem:[%s295] sm:$0xff] %vm4203, %v4202
      %v4205 = vmul.f32 %v4176, %v4176
      %v4206 = vmul.f32 %v4177, %v4177
      %v4207 = vmul.f32 %v4178, %v4178
      %v4208 = vmul.f32 %v4179, %v4179
      %v4209 = vadd.f32 %v4205, %v4206
      %v4210 = vadd.f32 %v4209, %v4207
      %v4211 = vadd.f32 %v4210, %v4208
      %4212 = vadd.xlane.f32.xlu0 %v4211
      %v4213 = vpop.xlane.xlu0 %4212
      %4214 = vst.msk [vmem:[%s299] sm:$0xff] %vm4203, %v4213
      %p4215 = scmp.lt.s32.totalorder %s19, 1
      %s4216 = scalar_select %p4215, %s19, 1
      %s4217 = smul.addr %s4216, 4
      %s4218 = smul.addr %s4217, 4
      %s4219 = scalar_lea.vmem %s5, %s4218
      %p4220 = scmp.lt.s32.totalorder %s19, 1
      %s4221 = scalar_select %p4220, %s19, 1
      %s4222 = smul.addr %s4221, 8
      %s4223 = scalar_lea.vmem %s6, %s4222
      %p4224 = scmp.lt.s32.totalorder %s19, 1
      %s4225 = scalar_select %p4224, %s19, 1
      %s4226 = smul.addr %s4225, 8
      %s4227 = scalar_lea.vmem %s7, %s4226
      // Predicated region
      $region41: #{double_conv_forward.4} parent=39 // pred_check
        %p4228 = pneg %p147
      $region42: #{double_conv_forward.4} parent=39 // pred_check_branch
        %4230 = sbr.rel (%p4228) target = $region44
      $region43: #{double_conv_forward.4} parent=39 // pred_region
        _
      $region44: #{double_conv_forward.4} parent=39 // pred_fallthru
        _
      // Predicated region
      $region45: #{double_conv_forward.4} parent=39 // pred_check
        %p4231 = pneg %p173
      $region46: #{double_conv_forward.4} parent=39 // pred_check_branch
        %4233 = sbr.rel (%p4231) target = $region48
      $region47: #{double_conv_forward.4} parent=39 // pred_region
        _
      $region48: #{double_conv_forward.4} parent=39 // pred_fallthru
        _
      // Predicated region
      $region49: #{double_conv_forward.4} parent=39 // pred_check
        %p4234 = pneg %p199
      $region50: #{double_conv_forward.4} parent=39 // pred_check_branch
        %4236 = sbr.rel (%p4234) target = $region52
      $region51: #{double_conv_forward.4} parent=39 // pred_region
        _
      $region52: #{double_conv_forward.4} parent=39 // pred_fallthru
        _
    $region40: #{double_conv_forward.4} parent=5 // pred_fallthru
      _
    %p4237 = scmp.le.s32.totalorder 2, %s14
    // Predicated region
    $region53: #{double_conv_forward.4} parent=5 // pred_check
      %p4238 = pneg %p4237
    $region54: #{double_conv_forward.4} parent=5 // pred_check_branch
      %4240 = sbr.rel (%p4238) target = $region56
    $region55: #{double_conv_forward.4} parent=5 // pred_region
      %s4241 = ssub.s32 %s14, 2
      // Predicated region
      $region57: #{double_conv_forward.4} parent=55 // pred_check
        %p4242 = pneg %p153
      $region58: #{double_conv_forward.4} parent=55 // pred_check_branch
        %4244 = sbr.rel (%p4242) target = $region60
      $region59: #{double_conv_forward.4} parent=55 // pred_region
        %p4245 = scmp.lt.s32.totalorder %s20, 1
        %s4246 = scalar_select %p4245, %s20, 1
        %s4247 = smul.addr %s4246, 4
        %s4248 = smul.addr %s4247, 4
        %s4249 = scalar_lea.vmem %s5, %s4248
      $region60: #{double_conv_forward.4} parent=55 // pred_fallthru
        _
      // Predicated region
      $region61: #{double_conv_forward.4} parent=55 // pred_check
        %p4250 = pneg %p179
      $region62: #{double_conv_forward.4} parent=55 // pred_check_branch
        %4252 = sbr.rel (%p4250) target = $region64
      $region63: #{double_conv_forward.4} parent=55 // pred_region
        %p4253 = scmp.lt.s32.totalorder %s20, 1
        %s4254 = scalar_select %p4253, %s20, 1
        %s4255 = smul.addr %s4254, 8
        %s4256 = scalar_lea.vmem %s6, %s4255
      $region64: #{double_conv_forward.4} parent=55 // pred_fallthru
        _
      // Predicated region
      $region65: #{double_conv_forward.4} parent=55 // pred_check
        %p4257 = pneg %p205
      $region66: #{double_conv_forward.4} parent=55 // pred_check_branch
        %4259 = sbr.rel (%p4257) target = $region68
      $region67: #{double_conv_forward.4} parent=55 // pred_region
        %p4260 = scmp.lt.s32.totalorder %s20, 1
        %s4261 = scalar_select %p4260, %s20, 1
        %s4262 = smul.addr %s4261, 8
        %s4263 = scalar_lea.vmem %s7, %s4262
      $region68: #{double_conv_forward.4} parent=55 // pred_fallthru
        _
    $region56: #{double_conv_forward.4} parent=5 // pred_fallthru
      _
  $region6: #{double_conv_forward.4} parent=0 // loop_footer
    %s18 = sadd.s32 1, %s14
  $region7: #{double_conv_forward.4} parent=0 // loop_footer_branch
    %13 = sbr.rel target = $region3
  $region8: #{double_conv_forward.4} parent=0 // loop_exit
    _

</llo_original>
